<compile_context>
chip_gen: v6e
topology: v6e:2x2x1
jax: 0.10.0
libtpu: 0.0.40
codegen_flags: <defaults>
</compile_context>

<pallas_src>
import jax
import jax.numpy as jnp
from jax.experimental import pallas as pl
from jax.experimental.pallas import tpu as pltpu

ALPHA = 0.2  # LeakyReLU negative slope


# ----------------------------------------------------------------------------
# Kernel A: fused feature-GAT + temporal-GAT + concat + GRU input projection.
# One grid step per batch element (parallel -> shards across TCs on v7x).
# ----------------------------------------------------------------------------
def _gat_gru_in_kernel(x_ref, fw_ref, fblin_ref, fa_ref, fbias_ref,
                       tw_ref, tblin_ref, ta_ref, tbias_ref,
                       wih_ref, bih_ref, o_ref):
    x = x_ref[0].astype(jnp.float32)                                    # (T, K)
    T, K = x.shape

    def gatv2(v, w_ref, blin_ref, a_ref, bias_ref):
        # v: (N, D) nodes; w = [Wl | Wr] concatenated host-side -> one matmul.
        w = w_ref[...]
        E = w.shape[1] // 2
        proj = jnp.dot(v, w, preferred_element_type=jnp.float32)        # (N, 2E)
        left, right = proj[:, :E], proj[:, E:]
        z = left[:, None, :] + right[None, :, :] + blin_ref[...][None, :, :]
        z = jnp.where(z > 0, z, ALPHA * z)                              # LeakyReLU
        e = jnp.sum(z * a_ref[...][None, :, :], axis=-1) + bias_ref[...]
        e = e - jnp.max(e, axis=-1, keepdims=True)                      # stable softmax
        p = jnp.exp(e)
        att = p * pl.reciprocal(jnp.sum(p, axis=-1, keepdims=True), approx=True)
        return jax.nn.sigmoid(jnp.dot(att, v, preferred_element_type=jnp.float32))

    # Feature GAT: nodes = features (transpose inside the kernel).
    h_feat = gatv2(x.T, fw_ref, fblin_ref, fa_ref, fbias_ref).T         # (T, K)
    # Temporal GAT: nodes = timesteps.
    h_temp = gatv2(x, tw_ref, tblin_ref, ta_ref, tbias_ref)             # (T, K)

    # GRU input projection of concat([x, h_feat, h_temp], -1), hoisted here so
    # the recurrence kernel only carries h @ W_hh.
    wih = wih_ref[...]                                                  # (3K, 3H)
    gx = (jnp.dot(x, wih[:K], preferred_element_type=jnp.float32)
          + jnp.dot(h_feat, wih[K:2 * K], preferred_element_type=jnp.float32)
          + jnp.dot(h_temp, wih[2 * K:], preferred_element_type=jnp.float32)
          + bih_ref[...])                                               # (T, 3H)
    o_ref[0] = gx.astype(o_ref.dtype)


def gat_gru_input(x, fw, fblin, fa, fbias, tw, tblin, ta, tbias, wih, bih):
    B, T, K = x.shape
    Ef2, Et2 = fw.shape[1], tw.shape[1]
    H3 = wih.shape[1]
    return pl.pallas_call(
        _gat_gru_in_kernel,
        out_shape=jax.ShapeDtypeStruct((B, T, H3), x.dtype),
        grid=(B,),
        in_specs=[
            pl.BlockSpec((1, T, K), lambda b: (b, 0, 0)),
            pl.BlockSpec((T, Ef2), lambda b: (0, 0)),
            pl.BlockSpec((1, Ef2 // 2), lambda b: (0, 0)),
            pl.BlockSpec((1, Ef2 // 2), lambda b: (0, 0)),
            pl.BlockSpec((K, K), lambda b: (0, 0)),
            pl.BlockSpec((K, Et2), lambda b: (0, 0)),
            pl.BlockSpec((1, Et2 // 2), lambda b: (0, 0)),
            pl.BlockSpec((1, Et2 // 2), lambda b: (0, 0)),
            pl.BlockSpec((T, T), lambda b: (0, 0)),
            pl.BlockSpec((3 * K, H3), lambda b: (0, 0)),
            pl.BlockSpec((1, H3), lambda b: (0, 0)),
        ],
        out_specs=pl.BlockSpec((1, T, H3), lambda b: (b, 0, 0)),
        compiler_params=pltpu.CompilerParams(dimension_semantics=("parallel",)),
    )(x, fw, fblin, fa, fbias, tw, tblin, ta, tbias, wih, bih)


# ----------------------------------------------------------------------------
# Kernel B: forecast-GRU + MLP head + reconstruction GRU decoder + FC.
# Whole batch processed in one invocation; T-length recurrences fully unrolled.
# ----------------------------------------------------------------------------
def _gru_cell(gx, h, whh, bhh, H):
    # torch gate order [r, z, n]; gx already contains x_t @ W_ih + b_ih.
    gh = jnp.dot(h, whh, preferred_element_type=jnp.float32) + bhh      # (B, 3H)
    r = jax.nn.sigmoid(gx[:, :H] + gh[:, :H])
    zg = jax.nn.sigmoid(gx[:, H:2 * H] + gh[:, H:2 * H])
    n = jnp.tanh(gx[:, 2 * H:] + r * gh[:, 2 * H:])
    return (1.0 - zg) * n + zg * h


def _head_kernel(gx_ref, whh_ref, bhh_ref,
                 w1_ref, b1_ref, w2_ref, b2_ref,
                 wr_ref, bihr_ref, whhr_ref, bhhr_ref, wfc_ref, bfc_ref,
                 pred_ref, rec_ref):
    gx_all = gx_ref[...].astype(jnp.float32)                            # (B, T, 3H)
    B, T, _ = gx_all.shape
    H = whh_ref.shape[0]
    Hr = whhr_ref.shape[0]
    whh, bhh = whh_ref[...], bhh_ref[...]

    # Forecast GRU (input projection already hoisted into kernel A).
    h = jnp.zeros((B, H), jnp.float32)
    for t in range(T):                                                  # unrolled
        h = _gru_cell(gx_all[:, t, :], h, whh, bhh, H)

    # Forecasting MLP: Linear -> ReLU -> Linear.
    h1 = jnp.maximum(
        jnp.dot(h, w1_ref[...], preferred_element_type=jnp.float32) + b1_ref[...], 0.0)
    pred_ref[...] = (jnp.dot(h1, w2_ref[...], preferred_element_type=jnp.float32)
                     + b2_ref[...]).astype(pred_ref.dtype)

    # Reconstruction decoder.  repeat_interleave(h_end).view(B,T,Hin) is folded
    # into w_eff[t]  (gx_r[:,t,:] = h_end @ w_eff[t] + b_ih_r); all input
    # projections are off the recurrence critical path.
    bihr, whhr, bhhr = bihr_ref[...], whhr_ref[...], bhhr_ref[...]
    wfc, bfc = wfc_ref[...], bfc_ref[...]
    gxr = [jnp.dot(h, wr_ref[t], preferred_element_type=jnp.float32) + bihr
           for t in range(T)]
    hr = jnp.zeros((B, Hr), jnp.float32)
    for t in range(T):                                                  # unrolled
        hr = _gru_cell(gxr[t], hr, whhr, bhhr, Hr)
        yt = jnp.dot(hr, wfc, preferred_element_type=jnp.float32) + bfc  # (B, OUT)
        rec_ref[:, t:t + 1, :] = yt[:, None, :].astype(rec_ref.dtype)


def gatrans_head(gx, whh, bhh, w1, b1, w2, b2, w_eff, bihr, whhr, bhhr, wfc, bfc):
    B, T, H3 = gx.shape
    H = whh.shape[0]
    FH = w1.shape[1]
    Hr = whhr.shape[0]
    OUT = wfc.shape[1]

    def full(shape):
        return pl.BlockSpec(shape, lambda *i: (0,) * len(shape))

    return pl.pallas_call(
        _head_kernel,
        out_shape=(jax.ShapeDtypeStruct((B, OUT), gx.dtype),
                   jax.ShapeDtypeStruct((B, T, OUT), gx.dtype)),
        grid=(1,),
        in_specs=[
            full((B, T, H3)),
            full((H, 3 * H)), full((1, 3 * H)),
            full((H, FH)), full((1, FH)), full((FH, OUT)), full((1, OUT)),
            full((T, H, 3 * Hr)), full((1, 3 * Hr)),
            full((Hr, 3 * Hr)), full((1, 3 * Hr)),
            full((Hr, OUT)), full((1, OUT)),
        ],
        out_specs=[full((B, OUT)), full((B, T, OUT))],
        compiler_params=pltpu.CompilerParams(dimension_semantics=("arbitrary",)),
    )(gx, whh, bhh, w1, b1, w2, b2, w_eff, bihr, whhr, bhhr, wfc, bfc)


# ----------------------------------------------------------------------------
# Parameter init (deterministic, synthetic; weights in (in, out) layout) and
# host-side preparation of fused / folded weights (done once, outside jit).
# ----------------------------------------------------------------------------
def _uni(key, shape, scale):
    return jax.random.uniform(key, shape, jnp.float32, -scale, scale)


def init_params(key, n_features, window_size, out_dim, gru_hid, fore_hid, recon_hid):
    ks = jax.random.split(key, 24)
    k, n = n_features, window_size
    feat_E = 2 * window_size
    temp_E = 2 * n_features

    p = {}
    sf = 1.0 / (2 * n) ** 0.5
    p["feat"] = dict(
        wl=_uni(ks[0], (n, feat_E), sf), wr=_uni(ks[1], (n, feat_E), sf),
        blin=_uni(ks[2], (1, feat_E), sf),
        a=_uni(ks[3], (1, feat_E), 1.414 * (6.0 / (feat_E + 1)) ** 0.5),
        bias=jnp.zeros((k, k), jnp.float32),
    )
    st = 1.0 / (2 * k) ** 0.5
    p["temp"] = dict(
        wl=_uni(ks[4], (k, temp_E), st), wr=_uni(ks[5], (k, temp_E), st),
        blin=_uni(ks[6], (1, temp_E), st),
        a=_uni(ks[7], (1, temp_E), 1.414 * (6.0 / (temp_E + 1)) ** 0.5),
        bias=jnp.zeros((n, n), jnp.float32),
    )
    gin, gh = 3 * k, gru_hid
    sg = 1.0 / gh ** 0.5
    p["gru"] = dict(
        wih=_uni(ks[8], (gin, 3 * gh), sg), whh=_uni(ks[9], (gh, 3 * gh), sg),
        bih=_uni(ks[10], (1, 3 * gh), sg), bhh=_uni(ks[11], (1, 3 * gh), sg),
    )
    fh = fore_hid
    p["forecast"] = dict(
        w1=_uni(ks[12], (gh, fh), 1.0 / gh ** 0.5), b1=_uni(ks[13], (1, fh), 1.0 / gh ** 0.5),
        w2=_uni(ks[14], (fh, out_dim), 1.0 / fh ** 0.5), b2=_uni(ks[15], (1, out_dim), 1.0 / fh ** 0.5),
    )
    rh = recon_hid
    sr = 1.0 / rh ** 0.5
    p["recon"] = dict(
        wih=_uni(ks[16], (gh, 3 * rh), sr), whh=_uni(ks[17], (rh, 3 * rh), sr),
        bih=_uni(ks[18], (1, 3 * rh), sr), bhh=_uni(ks[19], (1, 3 * rh), sr),
        wfc=_uni(ks[20], (rh, out_dim), sr), bfc=_uni(ks[21], (1, out_dim), sr),
    )
    return p


def prepare_params(p, window_size):
    """Host-side (one-time) weight fusion: concat Wl|Wr; fold the recon
    repeat_interleave(...).view(...) selection into the recon W_ih."""
    T = window_size
    H = p["gru"]["whh"].shape[0]
    # sel[i, t, c] = 1 iff h_rep[b, t, c] == h_end[b, i]  (torch repeat_interleave+view)
    sel = jnp.repeat(jnp.eye(H, dtype=jnp.float32), T, axis=1).reshape(H, T, H)
    w_eff = jnp.einsum("itc,cg->tig", sel, p["recon"]["wih"])           # (T, H, 3Hr)
    return dict(
        feat=dict(w=jnp.concatenate([p["feat"]["wl"], p["feat"]["wr"]], axis=1),
                  blin=p["feat"]["blin"], a=p["feat"]["a"], bias=p["feat"]["bias"]),
        temp=dict(w=jnp.concatenate([p["temp"]["wl"], p["temp"]["wr"]], axis=1),
                  blin=p["temp"]["blin"], a=p["temp"]["a"], bias=p["temp"]["bias"]),
        gru=dict(wih=p["gru"]["wih"], whh=p["gru"]["whh"],
                 bih=p["gru"]["bih"], bhh=p["gru"]["bhh"]),
        forecast=dict(**p["forecast"]),
        recon=dict(w_eff=w_eff, bih=p["recon"]["bih"], whh=p["recon"]["whh"],
                   bhh=p["recon"]["bhh"], wfc=p["recon"]["wfc"], bfc=p["recon"]["bfc"]),
    )


# ----------------------------------------------------------------------------
# Full forward (mirrors GATrans.forward; `y` is accepted but unused, exactly
# like the live code path of the PyTorch module).
# ----------------------------------------------------------------------------
def gatrans_forward(params, x, y):
    del y  # unused by the active forward path
    pf, pt, pg = params["feat"], params["temp"], params["gru"]
    gx = gat_gru_input(x, pf["w"], pf["blin"], pf["a"], pf["bias"],
                       pt["w"], pt["blin"], pt["a"], pt["bias"],
                       pg["wih"], pg["bih"])                            # (B, T, 3H)
    pfc, pr = params["forecast"], params["recon"]
    predictions, recons = gatrans_head(
        gx, pg["whh"], pg["bhh"],
        pfc["w1"], pfc["b1"], pfc["w2"], pfc["b2"],
        pr["w_eff"], pr["bih"], pr["whh"], pr["bhh"], pr["wfc"], pr["bfc"])
    return predictions, recons

# TODO(synk): dropout (p=0.2) is treated as inference-mode identity; transformer
#             encoder/decoder + positional encoding are dead code in forward().


if __name__ == "__main__":
    B, T, K = 2, 8, 4          # batch, window_size, n_features
    OUT_DIM, GRU_HID, F_HID, R_HID = 4, 32, 32, 32

    key = jax.random.PRNGKey(0)
    kx, ky, kp = jax.random.split(key, 3)
    x = jax.random.normal(kx, (B, T, K), jnp.float32)
    y = jax.random.normal(ky, (B, T, K), jnp.float32)   # unused (matches torch forward)
    raw = init_params(kp, K, T, OUT_DIM, GRU_HID, F_HID, R_HID)
    params = jax.tree_util.tree_map(lambda a: a, prepare_params(raw, T))

    fwd = jax.jit(gatrans_forward)
    preds, recons = fwd(params, x, y)
    jax.block_until_ready((preds, recons))

    assert preds.shape == (B, OUT_DIM)
    assert recons.shape == (B, T, OUT_DIM)
    assert bool(jnp.all(jnp.isfinite(preds))) and bool(jnp.all(jnp.isfinite(recons)))
    print("KERNEL_OK")
</pallas_src>

<mosaic_0001>
module attributes {stable_mosaic.version = 11 : i64} {
  func.func @_gat_gru_in_kernel(%arg0: i32, %arg1: memref<1x8x4xf32, #tpu.memory_space<vmem>>, %arg2: memref<8x32xf32, #tpu.memory_space<vmem>>, %arg3: memref<1x16xf32, #tpu.memory_space<vmem>>, %arg4: memref<1x16xf32, #tpu.memory_space<vmem>>, %arg5: memref<4x4xf32, #tpu.memory_space<vmem>>, %arg6: memref<4x16xf32, #tpu.memory_space<vmem>>, %arg7: memref<1x8xf32, #tpu.memory_space<vmem>>, %arg8: memref<1x8xf32, #tpu.memory_space<vmem>>, %arg9: memref<8x8xf32, #tpu.memory_space<vmem>>, %arg10: memref<12x96xf32, #tpu.memory_space<vmem>>, %arg11: memref<1x96xf32, #tpu.memory_space<vmem>>, %arg12: memref<1x8x96xf32, #tpu.memory_space<vmem>>) attributes {dimension_semantics = [#tpu.dimension_semantics<parallel>], iteration_bounds = array<i64: 2>, scalar_prefetch = 0 : i64, scratch_operands = 0 : i64, tpu.core_type = #tpu.core_type<tc>, window_params = [{transform_indices = @transform_0, window_bounds = array<i64: 1, 8, 4>}, {pipeline_mode = #tpu.pipeline_mode<synchronous>, transform_indices = @transform_1, window_bounds = array<i64: 8, 32>}, {pipeline_mode = #tpu.pipeline_mode<synchronous>, transform_indices = @transform_2, window_bounds = array<i64: 1, 16>}, {pipeline_mode = #tpu.pipeline_mode<synchronous>, transform_indices = @transform_3, window_bounds = array<i64: 1, 16>}, {pipeline_mode = #tpu.pipeline_mode<synchronous>, transform_indices = @transform_4, window_bounds = array<i64: 4, 4>}, {pipeline_mode = #tpu.pipeline_mode<synchronous>, transform_indices = @transform_5, window_bounds = array<i64: 4, 16>}, {pipeline_mode = #tpu.pipeline_mode<synchronous>, transform_indices = @transform_6, window_bounds = array<i64: 1, 8>}, {pipeline_mode = #tpu.pipeline_mode<synchronous>, transform_indices = @transform_7, window_bounds = array<i64: 1, 8>}, {pipeline_mode = #tpu.pipeline_mode<synchronous>, transform_indices = @transform_8, window_bounds = array<i64: 8, 8>}, {pipeline_mode = #tpu.pipeline_mode<synchronous>, transform_indices = @transform_9, window_bounds = array<i64: 12, 96>}, {pipeline_mode = #tpu.pipeline_mode<synchronous>, transform_indices = @transform_10, window_bounds = array<i64: 1, 96>}, {transform_indices = @transform_11, window_bounds = array<i64: 1, 8, 96>}]} {
    %c0 = arith.constant 0 : index
    %c0_0 = arith.constant 0 : index
    %c0_1 = arith.constant 0 : index
    %0 = vector.load %arg1[%c0, %c0_0, %c0_1] : memref<1x8x4xf32, #tpu.memory_space<vmem>>, vector<1x8x4xf32>
    %1 = vector.shape_cast %0 : vector<1x8x4xf32> to vector<8x4xf32>
    %2 = tpu.transpose %1, [1, 0] : vector<8x4xf32> -> vector<4x8xf32>
    %c0_2 = arith.constant 0 : index
    %c0_3 = arith.constant 0 : index
    %3 = vector.load %arg2[%c0_2, %c0_3] : memref<8x32xf32, #tpu.memory_space<vmem>>, vector<8x32xf32>
    %cst = arith.constant dense<0.000000e+00> : vector<4x32xf32>
    %4 = tpu.matmul %2, %3, %cst {dimension_numbers = #tpu.dot_dimension_numbers<[1], [0], [0], [1], [0, 0, 1, 1], [], []>} : vector<4x8xf32>, vector<8x32xf32>, vector<4x32xf32> -> vector<4x32xf32>
    %5 = vector.extract_strided_slice %4 {offsets = [0, 0], sizes = [4, 16], strides = [1, 1]} : vector<4x32xf32> to vector<4x16xf32>
    %6 = vector.extract_strided_slice %4 {offsets = [0, 16], sizes = [4, 16], strides = [1, 1]} : vector<4x32xf32> to vector<4x16xf32>
    %7 = vector.shape_cast %5 : vector<4x16xf32> to vector<4x1x16xf32>
    %8 = vector.shape_cast %6 : vector<4x16xf32> to vector<1x4x16xf32>
    %9 = vector.broadcast %7 : vector<4x1x16xf32> to vector<4x4x16xf32>
    %10 = vector.broadcast %8 : vector<1x4x16xf32> to vector<4x4x16xf32>
    %11 = arith.addf %9, %10 : vector<4x4x16xf32>
    %c0_4 = arith.constant 0 : index
    %c0_5 = arith.constant 0 : index
    %12 = vector.load %arg3[%c0_4, %c0_5] : memref<1x16xf32, #tpu.memory_space<vmem>>, vector<1x16xf32>
    %13 = vector.shape_cast %12 : vector<1x16xf32> to vector<1x1x16xf32>
    %14 = vector.broadcast %13 : vector<1x1x16xf32> to vector<4x4x16xf32>
    %15 = arith.addf %11, %14 : vector<4x4x16xf32>
    %cst_6 = arith.constant 0.000000e+00 : f32
    %16 = vector.broadcast %cst_6 : f32 to vector<4x4x16xf32>
    %17 = arith.cmpf ogt, %15, %16 : vector<4x4x16xf32>
    %cst_7 = arith.constant 2.000000e-01 : f32
    %18 = vector.broadcast %cst_7 : f32 to vector<4x4x16xf32>
    %19 = arith.mulf %18, %15 : vector<4x4x16xf32>
    %20 = arith.select %17, %15, %19 : vector<4x4x16xi1>, vector<4x4x16xf32>
    %c0_8 = arith.constant 0 : index
    %c0_9 = arith.constant 0 : index
    %21 = vector.load %arg4[%c0_8, %c0_9] : memref<1x16xf32, #tpu.memory_space<vmem>>, vector<1x16xf32>
    %22 = vector.shape_cast %21 : vector<1x16xf32> to vector<1x1x16xf32>
    %23 = vector.broadcast %22 : vector<1x1x16xf32> to vector<4x4x16xf32>
    %24 = arith.mulf %20, %23 : vector<4x4x16xf32>
    %cst_10 = arith.constant dense<0.000000e+00> : vector<4x4xf32>
    %25 = vector.multi_reduction <add>, %24, %cst_10 [2] : vector<4x4x16xf32> to vector<4x4xf32>
    %c0_11 = arith.constant 0 : index
    %c0_12 = arith.constant 0 : index
    %26 = vector.load %arg5[%c0_11, %c0_12] : memref<4x4xf32, #tpu.memory_space<vmem>>, vector<4x4xf32>
    %27 = arith.addf %25, %26 : vector<4x4xf32>
    %cst_13 = arith.constant dense<0xFF800000> : vector<4xf32>
    %28 = vector.multi_reduction <maximumf>, %27, %cst_13 [1] : vector<4x4xf32> to vector<4xf32>
    %29 = vector.shape_cast %28 : vector<4xf32> to vector<4x1xf32>
    %30 = vector.broadcast %29 : vector<4x1xf32> to vector<4x4xf32>
    %31 = arith.subf %27, %30 : vector<4x4xf32>
    %32 = math.exp %31 : vector<4x4xf32>
    %cst_14 = arith.constant dense<0.000000e+00> : vector<4xf32>
    %33 = vector.multi_reduction <add>, %32, %cst_14 [1] : vector<4x4xf32> to vector<4xf32>
    %34 = vector.shape_cast %33 : vector<4xf32> to vector<4x1xf32>
    %35 = tpu.reciprocal %34 {approx = true} : vector<4x1xf32> -> vector<4x1xf32>
    %36 = vector.broadcast %35 : vector<4x1xf32> to vector<4x4xf32>
    %37 = arith.mulf %32, %36 : vector<4x4xf32>
    %cst_15 = arith.constant dense<0.000000e+00> : vector<4x8xf32>
    %38 = tpu.matmul %37, %2, %cst_15 {dimension_numbers = #tpu.dot_dimension_numbers<[1], [0], [0], [1], [0, 0, 1, 1], [], []>} : vector<4x4xf32>, vector<4x8xf32>, vector<4x8xf32> -> vector<4x8xf32>
    %39 = arith.negf %38 : vector<4x8xf32>
    %40 = math.exp %39 : vector<4x8xf32>
    %cst_16 = arith.constant 1.000000e+00 : f32
    %41 = vector.broadcast %cst_16 : f32 to vector<4x8xf32>
    %42 = arith.addf %41, %40 : vector<4x8xf32>
    %43 = arith.divf %41, %42 : vector<4x8xf32>
    %44 = tpu.transpose %43, [1, 0] : vector<4x8xf32> -> vector<8x4xf32>
    %c0_17 = arith.constant 0 : index
    %c0_18 = arith.constant 0 : index
    %45 = vector.load %arg6[%c0_17, %c0_18] : memref<4x16xf32, #tpu.memory_space<vmem>>, vector<4x16xf32>
    %cst_19 = arith.constant dense<0.000000e+00> : vector<8x16xf32>
    %46 = tpu.matmul %1, %45, %cst_19 {dimension_numbers = #tpu.dot_dimension_numbers<[1], [0], [0], [1], [0, 0, 1, 1], [], []>} : vector<8x4xf32>, vector<4x16xf32>, vector<8x16xf32> -> vector<8x16xf32>
    %47 = vector.extract_strided_slice %46 {offsets = [0, 0], sizes = [8, 8], strides = [1, 1]} : vector<8x16xf32> to vector<8x8xf32>
    %48 = vector.extract_strided_slice %46 {offsets = [0, 8], sizes = [8, 8], strides = [1, 1]} : vector<8x16xf32> to vector<8x8xf32>
    %49 = vector.shape_cast %47 : vector<8x8xf32> to vector<8x1x8xf32>
    %50 = vector.shape_cast %48 : vector<8x8xf32> to vector<1x8x8xf32>
    %51 = vector.broadcast %49 : vector<8x1x8xf32> to vector<8x8x8xf32>
    %52 = vector.broadcast %50 : vector<1x8x8xf32> to vector<8x8x8xf32>
    %53 = arith.addf %51, %52 : vector<8x8x8xf32>
    %c0_20 = arith.constant 0 : index
    %c0_21 = arith.constant 0 : index
    %54 = vector.load %arg7[%c0_20, %c0_21] : memref<1x8xf32, #tpu.memory_space<vmem>>, vector<1x8xf32>
    %55 = vector.shape_cast %54 : vector<1x8xf32> to vector<1x1x8xf32>
    %56 = vector.broadcast %55 : vector<1x1x8xf32> to vector<8x8x8xf32>
    %57 = arith.addf %53, %56 : vector<8x8x8xf32>
    %cst_22 = arith.constant 0.000000e+00 : f32
    %58 = vector.broadcast %cst_22 : f32 to vector<8x8x8xf32>
    %59 = arith.cmpf ogt, %57, %58 : vector<8x8x8xf32>
    %cst_23 = arith.constant 2.000000e-01 : f32
    %60 = vector.broadcast %cst_23 : f32 to vector<8x8x8xf32>
    %61 = arith.mulf %60, %57 : vector<8x8x8xf32>
    %62 = arith.select %59, %57, %61 : vector<8x8x8xi1>, vector<8x8x8xf32>
    %c0_24 = arith.constant 0 : index
    %c0_25 = arith.constant 0 : index
    %63 = vector.load %arg8[%c0_24, %c0_25] : memref<1x8xf32, #tpu.memory_space<vmem>>, vector<1x8xf32>
    %64 = vector.shape_cast %63 : vector<1x8xf32> to vector<1x1x8xf32>
    %65 = vector.broadcast %64 : vector<1x1x8xf32> to vector<8x8x8xf32>
    %66 = arith.mulf %62, %65 : vector<8x8x8xf32>
    %cst_26 = arith.constant dense<0.000000e+00> : vector<8x8xf32>
    %67 = vector.multi_reduction <add>, %66, %cst_26 [2] : vector<8x8x8xf32> to vector<8x8xf32>
    %c0_27 = arith.constant 0 : index
    %c0_28 = arith.constant 0 : index
    %68 = vector.load %arg9[%c0_27, %c0_28] : memref<8x8xf32, #tpu.memory_space<vmem>>, vector<8x8xf32>
    %69 = arith.addf %67, %68 : vector<8x8xf32>
    %cst_29 = arith.constant dense<0xFF800000> : vector<8xf32>
    %70 = vector.multi_reduction <maximumf>, %69, %cst_29 [1] : vector<8x8xf32> to vector<8xf32>
    %71 = vector.shape_cast %70 : vector<8xf32> to vector<8x1xf32>
    %72 = vector.broadcast %71 : vector<8x1xf32> to vector<8x8xf32>
    %73 = arith.subf %69, %72 : vector<8x8xf32>
    %74 = math.exp %73 : vector<8x8xf32>
    %cst_30 = arith.constant dense<0.000000e+00> : vector<8xf32>
    %75 = vector.multi_reduction <add>, %74, %cst_30 [1] : vector<8x8xf32> to vector<8xf32>
    %76 = vector.shape_cast %75 : vector<8xf32> to vector<8x1xf32>
    %77 = tpu.reciprocal %76 {approx = true} : vector<8x1xf32> -> vector<8x1xf32>
    %78 = vector.broadcast %77 : vector<8x1xf32> to vector<8x8xf32>
    %79 = arith.mulf %74, %78 : vector<8x8xf32>
    %cst_31 = arith.constant dense<0.000000e+00> : vector<8x4xf32>
    %80 = tpu.matmul %79, %1, %cst_31 {dimension_numbers = #tpu.dot_dimension_numbers<[1], [0], [0], [1], [0, 0, 1, 1], [], []>} : vector<8x8xf32>, vector<8x4xf32>, vector<8x4xf32> -> vector<8x4xf32>
    %81 = arith.negf %80 : vector<8x4xf32>
    %82 = math.exp %81 : vector<8x4xf32>
    %cst_32 = arith.constant 1.000000e+00 : f32
    %83 = vector.broadcast %cst_32 : f32 to vector<8x4xf32>
    %84 = arith.addf %83, %82 : vector<8x4xf32>
    %85 = arith.divf %83, %84 : vector<8x4xf32>
    %c0_33 = arith.constant 0 : index
    %c0_34 = arith.constant 0 : index
    %86 = vector.load %arg10[%c0_33, %c0_34] : memref<12x96xf32, #tpu.memory_space<vmem>>, vector<12x96xf32>
    %87 = vector.extract_strided_slice %86 {offsets = [0, 0], sizes = [4, 96], strides = [1, 1]} : vector<12x96xf32> to vector<4x96xf32>
    %cst_35 = arith.constant dense<0.000000e+00> : vector<8x96xf32>
    %88 = tpu.matmul %1, %87, %cst_35 {dimension_numbers = #tpu.dot_dimension_numbers<[1], [0], [0], [1], [0, 0, 1, 1], [], []>} : vector<8x4xf32>, vector<4x96xf32>, vector<8x96xf32> -> vector<8x96xf32>
    %89 = vector.extract_strided_slice %86 {offsets = [4, 0], sizes = [4, 96], strides = [1, 1]} : vector<12x96xf32> to vector<4x96xf32>
    %cst_36 = arith.constant dense<0.000000e+00> : vector<8x96xf32>
    %90 = tpu.matmul %44, %89, %cst_36 {dimension_numbers = #tpu.dot_dimension_numbers<[1], [0], [0], [1], [0, 0, 1, 1], [], []>} : vector<8x4xf32>, vector<4x96xf32>, vector<8x96xf32> -> vector<8x96xf32>
    %91 = arith.addf %88, %90 : vector<8x96xf32>
    %92 = vector.extract_strided_slice %86 {offsets = [8, 0], sizes = [4, 96], strides = [1, 1]} : vector<12x96xf32> to vector<4x96xf32>
    %cst_37 = arith.constant dense<0.000000e+00> : vector<8x96xf32>
    %93 = tpu.matmul %85, %92, %cst_37 {dimension_numbers = #tpu.dot_dimension_numbers<[1], [0], [0], [1], [0, 0, 1, 1], [], []>} : vector<8x4xf32>, vector<4x96xf32>, vector<8x96xf32> -> vector<8x96xf32>
    %94 = arith.addf %91, %93 : vector<8x96xf32>
    %c0_38 = arith.constant 0 : index
    %c0_39 = arith.constant 0 : index
    %95 = vector.load %arg11[%c0_38, %c0_39] : memref<1x96xf32, #tpu.memory_space<vmem>>, vector<1x96xf32>
    %96 = vector.broadcast %95 : vector<1x96xf32> to vector<8x96xf32>
    %97 = arith.addf %94, %96 : vector<8x96xf32>
    %c0_40 = arith.constant 0 : index
    %c0_41 = arith.constant 0 : index
    %c0_42 = arith.constant 0 : index
    %98 = vector.load %arg12[%c0_40, %c0_41, %c0_42] : memref<1x8x96xf32, #tpu.memory_space<vmem>>, vector<1x8x96xf32>
    %99 = vector.shape_cast %98 : vector<1x8x96xf32> to vector<8x96xf32>
    %100 = vector.shape_cast %97 : vector<8x96xf32> to vector<1x8x96xf32>
    tpu.vector_store %arg12[%c0_40, %c0_41, %c0_42], %100 {strides = array<i32>} : memref<1x8x96xf32, #tpu.memory_space<vmem>>, vector<1x8x96xf32>,
    return
  }
  func.func @transform_0(%arg0: i32) -> (i32, i32, i32) {
    %c0_i32 = arith.constant 0 : i32
    %c0_i32_0 = arith.constant 0 : i32
    %c0_i32_1 = arith.constant 0 : i32
    return %arg0, %c0_i32, %c0_i32_0 : i32, i32, i32
  }
  func.func @transform_1(%arg0: i32) -> (i32, i32) {
    %c0_i32 = arith.constant 0 : i32
    %c0_i32_0 = arith.constant 0 : i32
    %c0_i32_1 = arith.constant 0 : i32
    return %c0_i32, %c0_i32_0 : i32, i32
  }
  func.func @transform_2(%arg0: i32) -> (i32, i32) {
    %c0_i32 = arith.constant 0 : i32
    %c0_i32_0 = arith.constant 0 : i32
    %c0_i32_1 = arith.constant 0 : i32
    return %c0_i32, %c0_i32_0 : i32, i32
  }
  func.func @transform_3(%arg0: i32) -> (i32, i32) {
    %c0_i32 = arith.constant 0 : i32
    %c0_i32_0 = arith.constant 0 : i32
    %c0_i32_1 = arith.constant 0 : i32
    return %c0_i32, %c0_i32_0 : i32, i32
  }
  func.func @transform_4(%arg0: i32) -> (i32, i32) {
    %c0_i32 = arith.constant 0 : i32
    %c0_i32_0 = arith.constant 0 : i32
    %c0_i32_1 = arith.constant 0 : i32
    return %c0_i32, %c0_i32_0 : i32, i32
  }
  func.func @transform_5(%arg0: i32) -> (i32, i32) {
    %c0_i32 = arith.constant 0 : i32
    %c0_i32_0 = arith.constant 0 : i32
    %c0_i32_1 = arith.constant 0 : i32
    return %c0_i32, %c0_i32_0 : i32, i32
  }
  func.func @transform_6(%arg0: i32) -> (i32, i32) {
    %c0_i32 = arith.constant 0 : i32
    %c0_i32_0 = arith.constant 0 : i32
    %c0_i32_1 = arith.constant 0 : i32
    return %c0_i32, %c0_i32_0 : i32, i32
  }
  func.func @transform_7(%arg0: i32) -> (i32, i32) {
    %c0_i32 = arith.constant 0 : i32
    %c0_i32_0 = arith.constant 0 : i32
    %c0_i32_1 = arith.constant 0 : i32
    return %c0_i32, %c0_i32_0 : i32, i32
  }
  func.func @transform_8(%arg0: i32) -> (i32, i32) {
    %c0_i32 = arith.constant 0 : i32
    %c0_i32_0 = arith.constant 0 : i32
    %c0_i32_1 = arith.constant 0 : i32
    return %c0_i32, %c0_i32_0 : i32, i32
  }
  func.func @transform_9(%arg0: i32) -> (i32, i32) {
    %c0_i32 = arith.constant 0 : i32
    %c0_i32_0 = arith.constant 0 : i32
    %c0_i32_1 = arith.constant 0 : i32
    return %c0_i32, %c0_i32_0 : i32, i32
  }
  func.func @transform_10(%arg0: i32) -> (i32, i32) {
    %c0_i32 = arith.constant 0 : i32
    %c0_i32_0 = arith.constant 0 : i32
    %c0_i32_1 = arith.constant 0 : i32
    return %c0_i32, %c0_i32_0 : i32, i32
  }
  func.func @transform_11(%arg0: i32) -> (i32, i32, i32) {
    %c0_i32 = arith.constant 0 : i32
    %c0_i32_0 = arith.constant 0 : i32
    %c0_i32_1 = arith.constant 0 : i32
    return %arg0, %c0_i32, %c0_i32_0 : i32, i32, i32
  }
}

module attributes {stable_mosaic.version = 11 : i64} {
  func.func @_head_kernel(%arg0: i32, %arg1: memref<2x8x96xf32, #tpu.memory_space<vmem>>, %arg2: memref<32x96xf32, #tpu.memory_space<vmem>>, %arg3: memref<1x96xf32, #tpu.memory_space<vmem>>, %arg4: memref<32x32xf32, #tpu.memory_space<vmem>>, %arg5: memref<1x32xf32, #tpu.memory_space<vmem>>, %arg6: memref<32x4xf32, #tpu.memory_space<vmem>>, %arg7: memref<1x4xf32, #tpu.memory_space<vmem>>, %arg8: memref<8x32x96xf32, #tpu.memory_space<vmem>>, %arg9: memref<1x96xf32, #tpu.memory_space<vmem>>, %arg10: memref<32x96xf32, #tpu.memory_space<vmem>>, %arg11: memref<1x96xf32, #tpu.memory_space<vmem>>, %arg12: memref<32x4xf32, #tpu.memory_space<vmem>>, %arg13: memref<1x4xf32, #tpu.memory_space<vmem>>, %arg14: memref<2x4xf32, #tpu.memory_space<vmem>>, %arg15: memref<2x8x4xf32, #tpu.memory_space<vmem>>) attributes {dimension_semantics = [#tpu.dimension_semantics<arbitrary>], iteration_bounds = array<i64: 1>, scalar_prefetch = 0 : i64, scratch_operands = 0 : i64, tpu.core_type = #tpu.core_type<tc>, window_params = [{pipeline_mode = #tpu.pipeline_mode<synchronous>, transform_indices = @transform_0, window_bounds = array<i64: 2, 8, 96>}, {pipeline_mode = #tpu.pipeline_mode<synchronous>, transform_indices = @transform_1, window_bounds = array<i64: 32, 96>}, {pipeline_mode = #tpu.pipeline_mode<synchronous>, transform_indices = @transform_2, window_bounds = array<i64: 1, 96>}, {pipeline_mode = #tpu.pipeline_mode<synchronous>, transform_indices = @transform_3, window_bounds = array<i64: 32, 32>}, {pipeline_mode = #tpu.pipeline_mode<synchronous>, transform_indices = @transform_4, window_bounds = array<i64: 1, 32>}, {pipeline_mode = #tpu.pipeline_mode<synchronous>, transform_indices = @transform_5, window_bounds = array<i64: 32, 4>}, {pipeline_mode = #tpu.pipeline_mode<synchronous>, transform_indices = @transform_6, window_bounds = array<i64: 1, 4>}, {pipeline_mode = #tpu.pipeline_mode<synchronous>, transform_indices = @transform_7, window_bounds = array<i64: 8, 32, 96>}, {pipeline_mode = #tpu.pipeline_mode<synchronous>, transform_indices = @transform_8, window_bounds = array<i64: 1, 96>}, {pipeline_mode = #tpu.pipeline_mode<synchronous>, transform_indices = @transform_9, window_bounds = array<i64: 32, 96>}, {pipeline_mode = #tpu.pipeline_mode<synchronous>, transform_indices = @transform_10, window_bounds = array<i64: 1, 96>}, {pipeline_mode = #tpu.pipeline_mode<synchronous>, transform_indices = @transform_11, window_bounds = array<i64: 32, 4>}, {pipeline_mode = #tpu.pipeline_mode<synchronous>, transform_indices = @transform_12, window_bounds = array<i64: 1, 4>}, {pipeline_mode = #tpu.pipeline_mode<synchronous>, transform_indices = @transform_13, window_bounds = array<i64: 2, 4>}, {pipeline_mode = #tpu.pipeline_mode<synchronous>, transform_indices = @transform_14, window_bounds = array<i64: 2, 8, 4>}]} {
    %c0 = arith.constant 0 : index
    %c0_0 = arith.constant 0 : index
    %c0_1 = arith.constant 0 : index
    %0 = vector.load %arg1[%c0, %c0_0, %c0_1] : memref<2x8x96xf32, #tpu.memory_space<vmem>>, vector<2x8x96xf32>
    %c0_2 = arith.constant 0 : index
    %c0_3 = arith.constant 0 : index
    %1 = vector.load %arg2[%c0_2, %c0_3] : memref<32x96xf32, #tpu.memory_space<vmem>>, vector<32x96xf32>
    %c0_4 = arith.constant 0 : index
    %c0_5 = arith.constant 0 : index
    %2 = vector.load %arg3[%c0_4, %c0_5] : memref<1x96xf32, #tpu.memory_space<vmem>>, vector<1x96xf32>
    %cst = arith.constant 0.000000e+00 : f32
    %3 = vector.broadcast %cst : f32 to vector<2x32xf32>
    %4 = vector.extract_strided_slice %0 {offsets = [0, 0, 0], sizes = [2, 1, 96], strides = [1, 1, 1]} : vector<2x8x96xf32> to vector<2x1x96xf32>
    %5 = vector.shape_cast %4 : vector<2x1x96xf32> to vector<2x96xf32>
    %cst_6 = arith.constant dense<0.000000e+00> : vector<2x96xf32>
    %6 = tpu.matmul %3, %1, %cst_6 {dimension_numbers = #tpu.dot_dimension_numbers<[1], [0], [0], [1], [0, 0, 1, 1], [], []>} : vector<2x32xf32>, vector<32x96xf32>, vector<2x96xf32> -> vector<2x96xf32>
    %7 = vector.broadcast %2 : vector<1x96xf32> to vector<2x96xf32>
    %8 = arith.addf %6, %7 : vector<2x96xf32>
    %9 = vector.extract_strided_slice %5 {offsets = [0, 0], sizes = [2, 32], strides = [1, 1]} : vector<2x96xf32> to vector<2x32xf32>
    %10 = vector.extract_strided_slice %8 {offsets = [0, 0], sizes = [2, 32], strides = [1, 1]} : vector<2x96xf32> to vector<2x32xf32>
    %11 = arith.addf %9, %10 : vector<2x32xf32>
    %12 = arith.negf %11 : vector<2x32xf32>
    %13 = math.exp %12 : vector<2x32xf32>
    %cst_7 = arith.constant 1.000000e+00 : f32
    %14 = vector.broadcast %cst_7 : f32 to vector<2x32xf32>
    %15 = arith.addf %14, %13 : vector<2x32xf32>
    %16 = arith.divf %14, %15 : vector<2x32xf32>
    %17 = vector.extract_strided_slice %5 {offsets = [0, 32], sizes = [2, 32], strides = [1, 1]} : vector<2x96xf32> to vector<2x32xf32>
    %18 = vector.extract_strided_slice %8 {offsets = [0, 32], sizes = [2, 32], strides = [1, 1]} : vector<2x96xf32> to vector<2x32xf32>
    %19 = arith.addf %17, %18 : vector<2x32xf32>
    %20 = arith.negf %19 : vector<2x32xf32>
    %21 = math.exp %20 : vector<2x32xf32>
    %cst_8 = arith.constant 1.000000e+00 : f32
    %22 = vector.broadcast %cst_8 : f32 to vector<2x32xf32>
    %23 = arith.addf %22, %21 : vector<2x32xf32>
    %24 = arith.divf %22, %23 : vector<2x32xf32>
    %25 = vector.extract_strided_slice %5 {offsets = [0, 64], sizes = [2, 32], strides = [1, 1]} : vector<2x96xf32> to vector<2x32xf32>
    %26 = vector.extract_strided_slice %8 {offsets = [0, 64], sizes = [2, 32], strides = [1, 1]} : vector<2x96xf32> to vector<2x32xf32>
    %27 = arith.mulf %16, %26 : vector<2x32xf32>
    %28 = arith.addf %25, %27 : vector<2x32xf32>
    %29 = math.tanh %28 : vector<2x32xf32>
    %cst_9 = arith.constant 1.000000e+00 : f32
    %30 = vector.broadcast %cst_9 : f32 to vector<2x32xf32>
    %31 = arith.subf %30, %24 : vector<2x32xf32>
    %32 = arith.mulf %31, %29 : vector<2x32xf32>
    %33 = arith.mulf %24, %3 : vector<2x32xf32>
    %34 = arith.addf %32, %33 : vector<2x32xf32>
    %35 = vector.extract_strided_slice %0 {offsets = [0, 1, 0], sizes = [2, 1, 96], strides = [1, 1, 1]} : vector<2x8x96xf32> to vector<2x1x96xf32>
    %36 = vector.shape_cast %35 : vector<2x1x96xf32> to vector<2x96xf32>
    %cst_10 = arith.constant dense<0.000000e+00> : vector<2x96xf32>
    %37 = tpu.matmul %34, %1, %cst_10 {dimension_numbers = #tpu.dot_dimension_numbers<[1], [0], [0], [1], [0, 0, 1, 1], [], []>} : vector<2x32xf32>, vector<32x96xf32>, vector<2x96xf32> -> vector<2x96xf32>
    %38 = vector.broadcast %2 : vector<1x96xf32> to vector<2x96xf32>
    %39 = arith.addf %37, %38 : vector<2x96xf32>
    %40 = vector.extract_strided_slice %36 {offsets = [0, 0], sizes = [2, 32], strides = [1, 1]} : vector<2x96xf32> to vector<2x32xf32>
    %41 = vector.extract_strided_slice %39 {offsets = [0, 0], sizes = [2, 32], strides = [1, 1]} : vector<2x96xf32> to vector<2x32xf32>
    %42 = arith.addf %40, %41 : vector<2x32xf32>
    %43 = arith.negf %42 : vector<2x32xf32>
    %44 = math.exp %43 : vector<2x32xf32>
    %cst_11 = arith.constant 1.000000e+00 : f32
    %45 = vector.broadcast %cst_11 : f32 to vector<2x32xf32>
    %46 = arith.addf %45, %44 : vector<2x32xf32>
    %47 = arith.divf %45, %46 : vector<2x32xf32>
    %48 = vector.extract_strided_slice %36 {offsets = [0, 32], sizes = [2, 32], strides = [1, 1]} : vector<2x96xf32> to vector<2x32xf32>
    %49 = vector.extract_strided_slice %39 {offsets = [0, 32], sizes = [2, 32], strides = [1, 1]} : vector<2x96xf32> to vector<2x32xf32>
    %50 = arith.addf %48, %49 : vector<2x32xf32>
    %51 = arith.negf %50 : vector<2x32xf32>
    %52 = math.exp %51 : vector<2x32xf32>
    %cst_12 = arith.constant 1.000000e+00 : f32
    %53 = vector.broadcast %cst_12 : f32 to vector<2x32xf32>
    %54 = arith.addf %53, %52 : vector<2x32xf32>
    %55 = arith.divf %53, %54 : vector<2x32xf32>
    %56 = vector.extract_strided_slice %36 {offsets = [0, 64], sizes = [2, 32], strides = [1, 1]} : vector<2x96xf32> to vector<2x32xf32>
    %57 = vector.extract_strided_slice %39 {offsets = [0, 64], sizes = [2, 32], strides = [1, 1]} : vector<2x96xf32> to vector<2x32xf32>
    %58 = arith.mulf %47, %57 : vector<2x32xf32>
    %59 = arith.addf %56, %58 : vector<2x32xf32>
    %60 = math.tanh %59 : vector<2x32xf32>
    %cst_13 = arith.constant 1.000000e+00 : f32
    %61 = vector.broadcast %cst_13 : f32 to vector<2x32xf32>
    %62 = arith.subf %61, %55 : vector<2x32xf32>
    %63 = arith.mulf %62, %60 : vector<2x32xf32>
    %64 = arith.mulf %55, %34 : vector<2x32xf32>
    %65 = arith.addf %63, %64 : vector<2x32xf32>
    %66 = vector.extract_strided_slice %0 {offsets = [0, 2, 0], sizes = [2, 1, 96], strides = [1, 1, 1]} : vector<2x8x96xf32> to vector<2x1x96xf32>
    %67 = vector.shape_cast %66 : vector<2x1x96xf32> to vector<2x96xf32>
    %cst_14 = arith.constant dense<0.000000e+00> : vector<2x96xf32>
    %68 = tpu.matmul %65, %1, %cst_14 {dimension_numbers = #tpu.dot_dimension_numbers<[1], [0], [0], [1], [0, 0, 1, 1], [], []>} : vector<2x32xf32>, vector<32x96xf32>, vector<2x96xf32> -> vector<2x96xf32>
    %69 = vector.broadcast %2 : vector<1x96xf32> to vector<2x96xf32>
    %70 = arith.addf %68, %69 : vector<2x96xf32>
    %71 = vector.extract_strided_slice %67 {offsets = [0, 0], sizes = [2, 32], strides = [1, 1]} : vector<2x96xf32> to vector<2x32xf32>
    %72 = vector.extract_strided_slice %70 {offsets = [0, 0], sizes = [2, 32], strides = [1, 1]} : vector<2x96xf32> to vector<2x32xf32>
    %73 = arith.addf %71, %72 : vector<2x32xf32>
    %74 = arith.negf %73 : vector<2x32xf32>
    %75 = math.exp %74 : vector<2x32xf32>
    %cst_15 = arith.constant 1.000000e+00 : f32
    %76 = vector.broadcast %cst_15 : f32 to vector<2x32xf32>
    %77 = arith.addf %76, %75 : vector<2x32xf32>
    %78 = arith.divf %76, %77 : vector<2x32xf32>
    %79 = vector.extract_strided_slice %67 {offsets = [0, 32], sizes = [2, 32], strides = [1, 1]} : vector<2x96xf32> to vector<2x32xf32>
    %80 = vector.extract_strided_slice %70 {offsets = [0, 32], sizes = [2, 32], strides = [1, 1]} : vector<2x96xf32> to vector<2x32xf32>
    %81 = arith.addf %79, %80 : vector<2x32xf32>
    %82 = arith.negf %81 : vector<2x32xf32>
    %83 = math.exp %82 : vector<2x32xf32>
    %cst_16 = arith.constant 1.000000e+00 : f32
    %84 = vector.broadcast %cst_16 : f32 to vector<2x32xf32>
    %85 = arith.addf %84, %83 : vector<2x32xf32>
    %86 = arith.divf %84, %85 : vector<2x32xf32>
    %87 = vector.extract_strided_slice %67 {offsets = [0, 64], sizes = [2, 32], strides = [1, 1]} : vector<2x96xf32> to vector<2x32xf32>
    %88 = vector.extract_strided_slice %70 {offsets = [0, 64], sizes = [2, 32], strides = [1, 1]} : vector<2x96xf32> to vector<2x32xf32>
    %89 = arith.mulf %78, %88 : vector<2x32xf32>
    %90 = arith.addf %87, %89 : vector<2x32xf32>
    %91 = math.tanh %90 : vector<2x32xf32>
    %cst_17 = arith.constant 1.000000e+00 : f32
    %92 = vector.broadcast %cst_17 : f32 to vector<2x32xf32>
    %93 = arith.subf %92, %86 : vector<2x32xf32>
    %94 = arith.mulf %93, %91 : vector<2x32xf32>
    %95 = arith.mulf %86, %65 : vector<2x32xf32>
    %96 = arith.addf %94, %95 : vector<2x32xf32>
    %97 = vector.extract_strided_slice %0 {offsets = [0, 3, 0], sizes = [2, 1, 96], strides = [1, 1, 1]} : vector<2x8x96xf32> to vector<2x1x96xf32>
    %98 = vector.shape_cast %97 : vector<2x1x96xf32> to vector<2x96xf32>
    %cst_18 = arith.constant dense<0.000000e+00> : vector<2x96xf32>
    %99 = tpu.matmul %96, %1, %cst_18 {dimension_numbers = #tpu.dot_dimension_numbers<[1], [0], [0], [1], [0, 0, 1, 1], [], []>} : vector<2x32xf32>, vector<32x96xf32>, vector<2x96xf32> -> vector<2x96xf32>
    %100 = vector.broadcast %2 : vector<1x96xf32> to vector<2x96xf32>
    %101 = arith.addf %99, %100 : vector<2x96xf32>
    %102 = vector.extract_strided_slice %98 {offsets = [0, 0], sizes = [2, 32], strides = [1, 1]} : vector<2x96xf32> to vector<2x32xf32>
    %103 = vector.extract_strided_slice %101 {offsets = [0, 0], sizes = [2, 32], strides = [1, 1]} : vector<2x96xf32> to vector<2x32xf32>
    %104 = arith.addf %102, %103 : vector<2x32xf32>
    %105 = arith.negf %104 : vector<2x32xf32>
    %106 = math.exp %105 : vector<2x32xf32>
    %cst_19 = arith.constant 1.000000e+00 : f32
    %107 = vector.broadcast %cst_19 : f32 to vector<2x32xf32>
    %108 = arith.addf %107, %106 : vector<2x32xf32>
    %109 = arith.divf %107, %108 : vector<2x32xf32>
    %110 = vector.extract_strided_slice %98 {offsets = [0, 32], sizes = [2, 32], strides = [1, 1]} : vector<2x96xf32> to vector<2x32xf32>
    %111 = vector.extract_strided_slice %101 {offsets = [0, 32], sizes = [2, 32], strides = [1, 1]} : vector<2x96xf32> to vector<2x32xf32>
    %112 = arith.addf %110, %111 : vector<2x32xf32>
    %113 = arith.negf %112 : vector<2x32xf32>
    %114 = math.exp %113 : vector<2x32xf32>
    %cst_20 = arith.constant 1.000000e+00 : f32
    %115 = vector.broadcast %cst_20 : f32 to vector<2x32xf32>
    %116 = arith.addf %115, %114 : vector<2x32xf32>
    %117 = arith.divf %115, %116 : vector<2x32xf32>
    %118 = vector.extract_strided_slice %98 {offsets = [0, 64], sizes = [2, 32], strides = [1, 1]} : vector<2x96xf32> to vector<2x32xf32>
    %119 = vector.extract_strided_slice %101 {offsets = [0, 64], sizes = [2, 32], strides = [1, 1]} : vector<2x96xf32> to vector<2x32xf32>
    %120 = arith.mulf %109, %119 : vector<2x32xf32>
    %121 = arith.addf %118, %120 : vector<2x32xf32>
    %122 = math.tanh %121 : vector<2x32xf32>
    %cst_21 = arith.constant 1.000000e+00 : f32
    %123 = vector.broadcast %cst_21 : f32 to vector<2x32xf32>
    %124 = arith.subf %123, %117 : vector<2x32xf32>
    %125 = arith.mulf %124, %122 : vector<2x32xf32>
    %126 = arith.mulf %117, %96 : vector<2x32xf32>
    %127 = arith.addf %125, %126 : vector<2x32xf32>
    %128 = vector.extract_strided_slice %0 {offsets = [0, 4, 0], sizes = [2, 1, 96], strides = [1, 1, 1]} : vector<2x8x96xf32> to vector<2x1x96xf32>
    %129 = vector.shape_cast %128 : vector<2x1x96xf32> to vector<2x96xf32>
    %cst_22 = arith.constant dense<0.000000e+00> : vector<2x96xf32>
    %130 = tpu.matmul %127, %1, %cst_22 {dimension_numbers = #tpu.dot_dimension_numbers<[1], [0], [0], [1], [0, 0, 1, 1], [], []>} : vector<2x32xf32>, vector<32x96xf32>, vector<2x96xf32> -> vector<2x96xf32>
    %131 = vector.broadcast %2 : vector<1x96xf32> to vector<2x96xf32>
    %132 = arith.addf %130, %131 : vector<2x96xf32>
    %133 = vector.extract_strided_slice %129 {offsets = [0, 0], sizes = [2, 32], strides = [1, 1]} : vector<2x96xf32> to vector<2x32xf32>
    %134 = vector.extract_strided_slice %132 {offsets = [0, 0], sizes = [2, 32], strides = [1, 1]} : vector<2x96xf32> to vector<2x32xf32>
    %135 = arith.addf %133, %134 : vector<2x32xf32>
    %136 = arith.negf %135 : vector<2x32xf32>
    %137 = math.exp %136 : vector<2x32xf32>
    %cst_23 = arith.constant 1.000000e+00 : f32
    %138 = vector.broadcast %cst_23 : f32 to vector<2x32xf32>
    %139 = arith.addf %138, %137 : vector<2x32xf32>
    %140 = arith.divf %138, %139 : vector<2x32xf32>
    %141 = vector.extract_strided_slice %129 {offsets = [0, 32], sizes = [2, 32], strides = [1, 1]} : vector<2x96xf32> to vector<2x32xf32>
    %142 = vector.extract_strided_slice %132 {offsets = [0, 32], sizes = [2, 32], strides = [1, 1]} : vector<2x96xf32> to vector<2x32xf32>
    %143 = arith.addf %141, %142 : vector<2x32xf32>
    %144 = arith.negf %143 : vector<2x32xf32>
    %145 = math.exp %144 : vector<2x32xf32>
    %cst_24 = arith.constant 1.000000e+00 : f32
    %146 = vector.broadcast %cst_24 : f32 to vector<2x32xf32>
    %147 = arith.addf %146, %145 : vector<2x32xf32>
    %148 = arith.divf %146, %147 : vector<2x32xf32>
    %149 = vector.extract_strided_slice %129 {offsets = [0, 64], sizes = [2, 32], strides = [1, 1]} : vector<2x96xf32> to vector<2x32xf32>
    %150 = vector.extract_strided_slice %132 {offsets = [0, 64], sizes = [2, 32], strides = [1, 1]} : vector<2x96xf32> to vector<2x32xf32>
    %151 = arith.mulf %140, %150 : vector<2x32xf32>
    %152 = arith.addf %149, %151 : vector<2x32xf32>
    %153 = math.tanh %152 : vector<2x32xf32>
    %cst_25 = arith.constant 1.000000e+00 : f32
    %154 = vector.broadcast %cst_25 : f32 to vector<2x32xf32>
    %155 = arith.subf %154, %148 : vector<2x32xf32>
    %156 = arith.mulf %155, %153 : vector<2x32xf32>
    %157 = arith.mulf %148, %127 : vector<2x32xf32>
    %158 = arith.addf %156, %157 : vector<2x32xf32>
    %159 = vector.extract_strided_slice %0 {offsets = [0, 5, 0], sizes = [2, 1, 96], strides = [1, 1, 1]} : vector<2x8x96xf32> to vector<2x1x96xf32>
    %160 = vector.shape_cast %159 : vector<2x1x96xf32> to vector<2x96xf32>
    %cst_26 = arith.constant dense<0.000000e+00> : vector<2x96xf32>
    %161 = tpu.matmul %158, %1, %cst_26 {dimension_numbers = #tpu.dot_dimension_numbers<[1], [0], [0], [1], [0, 0, 1, 1], [], []>} : vector<2x32xf32>, vector<32x96xf32>, vector<2x96xf32> -> vector<2x96xf32>
    %162 = vector.broadcast %2 : vector<1x96xf32> to vector<2x96xf32>
    %163 = arith.addf %161, %162 : vector<2x96xf32>
    %164 = vector.extract_strided_slice %160 {offsets = [0, 0], sizes = [2, 32], strides = [1, 1]} : vector<2x96xf32> to vector<2x32xf32>
    %165 = vector.extract_strided_slice %163 {offsets = [0, 0], sizes = [2, 32], strides = [1, 1]} : vector<2x96xf32> to vector<2x32xf32>
    %166 = arith.addf %164, %165 : vector<2x32xf32>
    %167 = arith.negf %166 : vector<2x32xf32>
    %168 = math.exp %167 : vector<2x32xf32>
    %cst_27 = arith.constant 1.000000e+00 : f32
    %169 = vector.broadcast %cst_27 : f32 to vector<2x32xf32>
    %170 = arith.addf %169, %168 : vector<2x32xf32>
    %171 = arith.divf %169, %170 : vector<2x32xf32>
    %172 = vector.extract_strided_slice %160 {offsets = [0, 32], sizes = [2, 32], strides = [1, 1]} : vector<2x96xf32> to vector<2x32xf32>
    %173 = vector.extract_strided_slice %163 {offsets = [0, 32], sizes = [2, 32], strides = [1, 1]} : vector<2x96xf32> to vector<2x32xf32>
    %174 = arith.addf %172, %173 : vector<2x32xf32>
    %175 = arith.negf %174 : vector<2x32xf32>
    %176 = math.exp %175 : vector<2x32xf32>
    %cst_28 = arith.constant 1.000000e+00 : f32
    %177 = vector.broadcast %cst_28 : f32 to vector<2x32xf32>
    %178 = arith.addf %177, %176 : vector<2x32xf32>
    %179 = arith.divf %177, %178 : vector<2x32xf32>
    %180 = vector.extract_strided_slice %160 {offsets = [0, 64], sizes = [2, 32], strides = [1, 1]} : vector<2x96xf32> to vector<2x32xf32>
    %181 = vector.extract_strided_slice %163 {offsets = [0, 64], sizes = [2, 32], strides = [1, 1]} : vector<2x96xf32> to vector<2x32xf32>
    %182 = arith.mulf %171, %181 : vector<2x32xf32>
    %183 = arith.addf %180, %182 : vector<2x32xf32>
    %184 = math.tanh %183 : vector<2x32xf32>
    %cst_29 = arith.constant 1.000000e+00 : f32
    %185 = vector.broadcast %cst_29 : f32 to vector<2x32xf32>
    %186 = arith.subf %185, %179 : vector<2x32xf32>
    %187 = arith.mulf %186, %184 : vector<2x32xf32>
    %188 = arith.mulf %179, %158 : vector<2x32xf32>
    %189 = arith.addf %187, %188 : vector<2x32xf32>
    %190 = vector.extract_strided_slice %0 {offsets = [0, 6, 0], sizes = [2, 1, 96], strides = [1, 1, 1]} : vector<2x8x96xf32> to vector<2x1x96xf32>
    %191 = vector.shape_cast %190 : vector<2x1x96xf32> to vector<2x96xf32>
    %cst_30 = arith.constant dense<0.000000e+00> : vector<2x96xf32>
    %192 = tpu.matmul %189, %1, %cst_30 {dimension_numbers = #tpu.dot_dimension_numbers<[1], [0], [0], [1], [0, 0, 1, 1], [], []>} : vector<2x32xf32>, vector<32x96xf32>, vector<2x96xf32> -> vector<2x96xf32>
    %193 = vector.broadcast %2 : vector<1x96xf32> to vector<2x96xf32>
    %194 = arith.addf %192, %193 : vector<2x96xf32>
    %195 = vector.extract_strided_slice %191 {offsets = [0, 0], sizes = [2, 32], strides = [1, 1]} : vector<2x96xf32> to vector<2x32xf32>
    %196 = vector.extract_strided_slice %194 {offsets = [0, 0], sizes = [2, 32], strides = [1, 1]} : vector<2x96xf32> to vector<2x32xf32>
    %197 = arith.addf %195, %196 : vector<2x32xf32>
    %198 = arith.negf %197 : vector<2x32xf32>
    %199 = math.exp %198 : vector<2x32xf32>
    %cst_31 = arith.constant 1.000000e+00 : f32
    %200 = vector.broadcast %cst_31 : f32 to vector<2x32xf32>
    %201 = arith.addf %200, %199 : vector<2x32xf32>
    %202 = arith.divf %200, %201 : vector<2x32xf32>
    %203 = vector.extract_strided_slice %191 {offsets = [0, 32], sizes = [2, 32], strides = [1, 1]} : vector<2x96xf32> to vector<2x32xf32>
    %204 = vector.extract_strided_slice %194 {offsets = [0, 32], sizes = [2, 32], strides = [1, 1]} : vector<2x96xf32> to vector<2x32xf32>
    %205 = arith.addf %203, %204 : vector<2x32xf32>
    %206 = arith.negf %205 : vector<2x32xf32>
    %207 = math.exp %206 : vector<2x32xf32>
    %cst_32 = arith.constant 1.000000e+00 : f32
    %208 = vector.broadcast %cst_32 : f32 to vector<2x32xf32>
    %209 = arith.addf %208, %207 : vector<2x32xf32>
    %210 = arith.divf %208, %209 : vector<2x32xf32>
    %211 = vector.extract_strided_slice %191 {offsets = [0, 64], sizes = [2, 32], strides = [1, 1]} : vector<2x96xf32> to vector<2x32xf32>
    %212 = vector.extract_strided_slice %194 {offsets = [0, 64], sizes = [2, 32], strides = [1, 1]} : vector<2x96xf32> to vector<2x32xf32>
    %213 = arith.mulf %202, %212 : vector<2x32xf32>
    %214 = arith.addf %211, %213 : vector<2x32xf32>
    %215 = math.tanh %214 : vector<2x32xf32>
    %cst_33 = arith.constant 1.000000e+00 : f32
    %216 = vector.broadcast %cst_33 : f32 to vector<2x32xf32>
    %217 = arith.subf %216, %210 : vector<2x32xf32>
    %218 = arith.mulf %217, %215 : vector<2x32xf32>
    %219 = arith.mulf %210, %189 : vector<2x32xf32>
    %220 = arith.addf %218, %219 : vector<2x32xf32>
    %221 = vector.extract_strided_slice %0 {offsets = [0, 7, 0], sizes = [2, 1, 96], strides = [1, 1, 1]} : vector<2x8x96xf32> to vector<2x1x96xf32>
    %222 = vector.shape_cast %221 : vector<2x1x96xf32> to vector<2x96xf32>
    %cst_34 = arith.constant dense<0.000000e+00> : vector<2x96xf32>
    %223 = tpu.matmul %220, %1, %cst_34 {dimension_numbers = #tpu.dot_dimension_numbers<[1], [0], [0], [1], [0, 0, 1, 1], [], []>} : vector<2x32xf32>, vector<32x96xf32>, vector<2x96xf32> -> vector<2x96xf32>
    %224 = vector.broadcast %2 : vector<1x96xf32> to vector<2x96xf32>
    %225 = arith.addf %223, %224 : vector<2x96xf32>
    %226 = vector.extract_strided_slice %222 {offsets = [0, 0], sizes = [2, 32], strides = [1, 1]} : vector<2x96xf32> to vector<2x32xf32>
    %227 = vector.extract_strided_slice %225 {offsets = [0, 0], sizes = [2, 32], strides = [1, 1]} : vector<2x96xf32> to vector<2x32xf32>
    %228 = arith.addf %226, %227 : vector<2x32xf32>
    %229 = arith.negf %228 : vector<2x32xf32>
    %230 = math.exp %229 : vector<2x32xf32>
    %cst_35 = arith.constant 1.000000e+00 : f32
    %231 = vector.broadcast %cst_35 : f32 to vector<2x32xf32>
    %232 = arith.addf %231, %230 : vector<2x32xf32>
    %233 = arith.divf %231, %232 : vector<2x32xf32>
    %234 = vector.extract_strided_slice %222 {offsets = [0, 32], sizes = [2, 32], strides = [1, 1]} : vector<2x96xf32> to vector<2x32xf32>
    %235 = vector.extract_strided_slice %225 {offsets = [0, 32], sizes = [2, 32], strides = [1, 1]} : vector<2x96xf32> to vector<2x32xf32>
    %236 = arith.addf %234, %235 : vector<2x32xf32>
    %237 = arith.negf %236 : vector<2x32xf32>
    %238 = math.exp %237 : vector<2x32xf32>
    %cst_36 = arith.constant 1.000000e+00 : f32
    %239 = vector.broadcast %cst_36 : f32 to vector<2x32xf32>
    %240 = arith.addf %239, %238 : vector<2x32xf32>
    %241 = arith.divf %239, %240 : vector<2x32xf32>
    %242 = vector.extract_strided_slice %222 {offsets = [0, 64], sizes = [2, 32], strides = [1, 1]} : vector<2x96xf32> to vector<2x32xf32>
    %243 = vector.extract_strided_slice %225 {offsets = [0, 64], sizes = [2, 32], strides = [1, 1]} : vector<2x96xf32> to vector<2x32xf32>
    %244 = arith.mulf %233, %243 : vector<2x32xf32>
    %245 = arith.addf %242, %244 : vector<2x32xf32>
    %246 = math.tanh %245 : vector<2x32xf32>
    %cst_37 = arith.constant 1.000000e+00 : f32
    %247 = vector.broadcast %cst_37 : f32 to vector<2x32xf32>
    %248 = arith.subf %247, %241 : vector<2x32xf32>
    %249 = arith.mulf %248, %246 : vector<2x32xf32>
    %250 = arith.mulf %241, %220 : vector<2x32xf32>
    %251 = arith.addf %249, %250 : vector<2x32xf32>
    %c0_38 = arith.constant 0 : index
    %c0_39 = arith.constant 0 : index
    %252 = vector.load %arg4[%c0_38, %c0_39] : memref<32x32xf32, #tpu.memory_space<vmem>>, vector<32x32xf32>
    %cst_40 = arith.constant dense<0.000000e+00> : vector<2x32xf32>
    %253 = tpu.matmul %251, %252, %cst_40 {dimension_numbers = #tpu.dot_dimension_numbers<[1], [0], [0], [1], [0, 0, 1, 1], [], []>} : vector<2x32xf32>, vector<32x32xf32>, vector<2x32xf32> -> vector<2x32xf32>
    %c0_41 = arith.constant 0 : index
    %c0_42 = arith.constant 0 : index
    %254 = vector.load %arg5[%c0_41, %c0_42] : memref<1x32xf32, #tpu.memory_space<vmem>>, vector<1x32xf32>
    %255 = vector.broadcast %254 : vector<1x32xf32> to vector<2x32xf32>
    %256 = arith.addf %253, %255 : vector<2x32xf32>
    %cst_43 = arith.constant 0.000000e+00 : f32
    %257 = vector.broadcast %cst_43 : f32 to vector<2x32xf32>
    %258 = arith.maximumf %256, %257 : vector<2x32xf32>
    %c0_44 = arith.constant 0 : index
    %c0_45 = arith.constant 0 : index
    %259 = vector.load %arg6[%c0_44, %c0_45] : memref<32x4xf32, #tpu.memory_space<vmem>>, vector<32x4xf32>
    %cst_46 = arith.constant dense<0.000000e+00> : vector<2x4xf32>
    %260 = tpu.matmul %258, %259, %cst_46 {dimension_numbers = #tpu.dot_dimension_numbers<[1], [0], [0], [1], [0, 0, 1, 1], [], []>} : vector<2x32xf32>, vector<32x4xf32>, vector<2x4xf32> -> vector<2x4xf32>
    %c0_47 = arith.constant 0 : index
    %c0_48 = arith.constant 0 : index
    %261 = vector.load %arg7[%c0_47, %c0_48] : memref<1x4xf32, #tpu.memory_space<vmem>>, vector<1x4xf32>
    %262 = vector.broadcast %261 : vector<1x4xf32> to vector<2x4xf32>
    %263 = arith.addf %260, %262 : vector<2x4xf32>
    %c0_49 = arith.constant 0 : index
    %c0_50 = arith.constant 0 : index
    %264 = vector.load %arg14[%c0_49, %c0_50] : memref<2x4xf32, #tpu.memory_space<vmem>>, vector<2x4xf32>
    tpu.vector_store %arg14[%c0_49, %c0_50], %263 {strides = array<i32>} : memref<2x4xf32, #tpu.memory_space<vmem>>, vector<2x4xf32>,
    %c0_51 = arith.constant 0 : index
    %c0_52 = arith.constant 0 : index
    %265 = vector.load %arg9[%c0_51, %c0_52] : memref<1x96xf32, #tpu.memory_space<vmem>>, vector<1x96xf32>
    %c0_53 = arith.constant 0 : index
    %c0_54 = arith.constant 0 : index
    %266 = vector.load %arg10[%c0_53, %c0_54] : memref<32x96xf32, #tpu.memory_space<vmem>>, vector<32x96xf32>
    %c0_55 = arith.constant 0 : index
    %c0_56 = arith.constant 0 : index
    %267 = vector.load %arg11[%c0_55, %c0_56] : memref<1x96xf32, #tpu.memory_space<vmem>>, vector<1x96xf32>
    %c0_57 = arith.constant 0 : index
    %c0_58 = arith.constant 0 : index
    %268 = vector.load %arg12[%c0_57, %c0_58] : memref<32x4xf32, #tpu.memory_space<vmem>>, vector<32x4xf32>
    %c0_59 = arith.constant 0 : index
    %c0_60 = arith.constant 0 : index
    %269 = vector.load %arg13[%c0_59, %c0_60] : memref<1x4xf32, #tpu.memory_space<vmem>>, vector<1x4xf32>
    %c0_61 = arith.constant 0 : index
    %c0_62 = arith.constant 0 : index
    %c0_63 = arith.constant 0 : index
    %270 = vector.load %arg8[%c0_61, %c0_62, %c0_63] : memref<8x32x96xf32, #tpu.memory_space<vmem>>, vector<1x32x96xf32>
    %271 = vector.shape_cast %270 : vector<1x32x96xf32> to vector<32x96xf32>
    %cst_64 = arith.constant dense<0.000000e+00> : vector<2x96xf32>
    %272 = tpu.matmul %251, %271, %cst_64 {dimension_numbers = #tpu.dot_dimension_numbers<[1], [0], [0], [1], [0, 0, 1, 1], [], []>} : vector<2x32xf32>, vector<32x96xf32>, vector<2x96xf32> -> vector<2x96xf32>
    %273 = vector.broadcast %265 : vector<1x96xf32> to vector<2x96xf32>
    %274 = arith.addf %272, %273 : vector<2x96xf32>
    %c1 = arith.constant 1 : index
    %c0_65 = arith.constant 0 : index
    %c0_66 = arith.constant 0 : index
    %275 = vector.load %arg8[%c1, %c0_65, %c0_66] : memref<8x32x96xf32, #tpu.memory_space<vmem>>, vector<1x32x96xf32>
    %276 = vector.shape_cast %275 : vector<1x32x96xf32> to vector<32x96xf32>
    %cst_67 = arith.constant dense<0.000000e+00> : vector<2x96xf32>
    %277 = tpu.matmul %251, %276, %cst_67 {dimension_numbers = #tpu.dot_dimension_numbers<[1], [0], [0], [1], [0, 0, 1, 1], [], []>} : vector<2x32xf32>, vector<32x96xf32>, vector<2x96xf32> -> vector<2x96xf32>
    %278 = vector.broadcast %265 : vector<1x96xf32> to vector<2x96xf32>
    %279 = arith.addf %277, %278 : vector<2x96xf32>
    %c2 = arith.constant 2 : index
    %c0_68 = arith.constant 0 : index
    %c0_69 = arith.constant 0 : index
    %280 = vector.load %arg8[%c2, %c0_68, %c0_69] : memref<8x32x96xf32, #tpu.memory_space<vmem>>, vector<1x32x96xf32>
    %281 = vector.shape_cast %280 : vector<1x32x96xf32> to vector<32x96xf32>
    %cst_70 = arith.constant dense<0.000000e+00> : vector<2x96xf32>
    %282 = tpu.matmul %251, %281, %cst_70 {dimension_numbers = #tpu.dot_dimension_numbers<[1], [0], [0], [1], [0, 0, 1, 1], [], []>} : vector<2x32xf32>, vector<32x96xf32>, vector<2x96xf32> -> vector<2x96xf32>
    %283 = vector.broadcast %265 : vector<1x96xf32> to vector<2x96xf32>
    %284 = arith.addf %282, %283 : vector<2x96xf32>
    %c3 = arith.constant 3 : index
    %c0_71 = arith.constant 0 : index
    %c0_72 = arith.constant 0 : index
    %285 = vector.load %arg8[%c3, %c0_71, %c0_72] : memref<8x32x96xf32, #tpu.memory_space<vmem>>, vector<1x32x96xf32>
    %286 = vector.shape_cast %285 : vector<1x32x96xf32> to vector<32x96xf32>
    %cst_73 = arith.constant dense<0.000000e+00> : vector<2x96xf32>
    %287 = tpu.matmul %251, %286, %cst_73 {dimension_numbers = #tpu.dot_dimension_numbers<[1], [0], [0], [1], [0, 0, 1, 1], [], []>} : vector<2x32xf32>, vector<32x96xf32>, vector<2x96xf32> -> vector<2x96xf32>
    %288 = vector.broadcast %265 : vector<1x96xf32> to vector<2x96xf32>
    %289 = arith.addf %287, %288 : vector<2x96xf32>
    %c4 = arith.constant 4 : index
    %c0_74 = arith.constant 0 : index
    %c0_75 = arith.constant 0 : index
    %290 = vector.load %arg8[%c4, %c0_74, %c0_75] : memref<8x32x96xf32, #tpu.memory_space<vmem>>, vector<1x32x96xf32>
    %291 = vector.shape_cast %290 : vector<1x32x96xf32> to vector<32x96xf32>
    %cst_76 = arith.constant dense<0.000000e+00> : vector<2x96xf32>
    %292 = tpu.matmul %251, %291, %cst_76 {dimension_numbers = #tpu.dot_dimension_numbers<[1], [0], [0], [1], [0, 0, 1, 1], [], []>} : vector<2x32xf32>, vector<32x96xf32>, vector<2x96xf32> -> vector<2x96xf32>
    %293 = vector.broadcast %265 : vector<1x96xf32> to vector<2x96xf32>
    %294 = arith.addf %292, %293 : vector<2x96xf32>
    %c5 = arith.constant 5 : index
    %c0_77 = arith.constant 0 : index
    %c0_78 = arith.constant 0 : index
    %295 = vector.load %arg8[%c5, %c0_77, %c0_78] : memref<8x32x96xf32, #tpu.memory_space<vmem>>, vector<1x32x96xf32>
    %296 = vector.shape_cast %295 : vector<1x32x96xf32> to vector<32x96xf32>
    %cst_79 = arith.constant dense<0.000000e+00> : vector<2x96xf32>
    %297 = tpu.matmul %251, %296, %cst_79 {dimension_numbers = #tpu.dot_dimension_numbers<[1], [0], [0], [1], [0, 0, 1, 1], [], []>} : vector<2x32xf32>, vector<32x96xf32>, vector<2x96xf32> -> vector<2x96xf32>
    %298 = vector.broadcast %265 : vector<1x96xf32> to vector<2x96xf32>
    %299 = arith.addf %297, %298 : vector<2x96xf32>
    %c6 = arith.constant 6 : index
    %c0_80 = arith.constant 0 : index
    %c0_81 = arith.constant 0 : index
    %300 = vector.load %arg8[%c6, %c0_80, %c0_81] : memref<8x32x96xf32, #tpu.memory_space<vmem>>, vector<1x32x96xf32>
    %301 = vector.shape_cast %300 : vector<1x32x96xf32> to vector<32x96xf32>
    %cst_82 = arith.constant dense<0.000000e+00> : vector<2x96xf32>
    %302 = tpu.matmul %251, %301, %cst_82 {dimension_numbers = #tpu.dot_dimension_numbers<[1], [0], [0], [1], [0, 0, 1, 1], [], []>} : vector<2x32xf32>, vector<32x96xf32>, vector<2x96xf32> -> vector<2x96xf32>
    %303 = vector.broadcast %265 : vector<1x96xf32> to vector<2x96xf32>
    %304 = arith.addf %302, %303 : vector<2x96xf32>
    %c7 = arith.constant 7 : index
    %c0_83 = arith.constant 0 : index
    %c0_84 = arith.constant 0 : index
    %305 = vector.load %arg8[%c7, %c0_83, %c0_84] : memref<8x32x96xf32, #tpu.memory_space<vmem>>, vector<1x32x96xf32>
    %306 = vector.shape_cast %305 : vector<1x32x96xf32> to vector<32x96xf32>
    %cst_85 = arith.constant dense<0.000000e+00> : vector<2x96xf32>
    %307 = tpu.matmul %251, %306, %cst_85 {dimension_numbers = #tpu.dot_dimension_numbers<[1], [0], [0], [1], [0, 0, 1, 1], [], []>} : vector<2x32xf32>, vector<32x96xf32>, vector<2x96xf32> -> vector<2x96xf32>
    %308 = vector.broadcast %265 : vector<1x96xf32> to vector<2x96xf32>
    %309 = arith.addf %307, %308 : vector<2x96xf32>
    %cst_86 = arith.constant 0.000000e+00 : f32
    %310 = vector.broadcast %cst_86 : f32 to vector<2x32xf32>
    %cst_87 = arith.constant dense<0.000000e+00> : vector<2x96xf32>
    %311 = tpu.matmul %310, %266, %cst_87 {dimension_numbers = #tpu.dot_dimension_numbers<[1], [0], [0], [1], [0, 0, 1, 1], [], []>} : vector<2x32xf32>, vector<32x96xf32>, vector<2x96xf32> -> vector<2x96xf32>
    %312 = vector.broadcast %267 : vector<1x96xf32> to vector<2x96xf32>
    %313 = arith.addf %311, %312 : vector<2x96xf32>
    %314 = vector.extract_strided_slice %274 {offsets = [0, 0], sizes = [2, 32], strides = [1, 1]} : vector<2x96xf32> to vector<2x32xf32>
    %315 = vector.extract_strided_slice %313 {offsets = [0, 0], sizes = [2, 32], strides = [1, 1]} : vector<2x96xf32> to vector<2x32xf32>
    %316 = arith.addf %314, %315 : vector<2x32xf32>
    %317 = arith.negf %316 : vector<2x32xf32>
    %318 = math.exp %317 : vector<2x32xf32>
    %cst_88 = arith.constant 1.000000e+00 : f32
    %319 = vector.broadcast %cst_88 : f32 to vector<2x32xf32>
    %320 = arith.addf %319, %318 : vector<2x32xf32>
    %321 = arith.divf %319, %320 : vector<2x32xf32>
    %322 = vector.extract_strided_slice %274 {offsets = [0, 32], sizes = [2, 32], strides = [1, 1]} : vector<2x96xf32> to vector<2x32xf32>
    %323 = vector.extract_strided_slice %313 {offsets = [0, 32], sizes = [2, 32], strides = [1, 1]} : vector<2x96xf32> to vector<2x32xf32>
    %324 = arith.addf %322, %323 : vector<2x32xf32>
    %325 = arith.negf %324 : vector<2x32xf32>
    %326 = math.exp %325 : vector<2x32xf32>
    %cst_89 = arith.constant 1.000000e+00 : f32
    %327 = vector.broadcast %cst_89 : f32 to vector<2x32xf32>
    %328 = arith.addf %327, %326 : vector<2x32xf32>
    %329 = arith.divf %327, %328 : vector<2x32xf32>
    %330 = vector.extract_strided_slice %274 {offsets = [0, 64], sizes = [2, 32], strides = [1, 1]} : vector<2x96xf32> to vector<2x32xf32>
    %331 = vector.extract_strided_slice %313 {offsets = [0, 64], sizes = [2, 32], strides = [1, 1]} : vector<2x96xf32> to vector<2x32xf32>
    %332 = arith.mulf %321, %331 : vector<2x32xf32>
    %333 = arith.addf %330, %332 : vector<2x32xf32>
    %334 = math.tanh %333 : vector<2x32xf32>
    %cst_90 = arith.constant 1.000000e+00 : f32
    %335 = vector.broadcast %cst_90 : f32 to vector<2x32xf32>
    %336 = arith.subf %335, %329 : vector<2x32xf32>
    %337 = arith.mulf %336, %334 : vector<2x32xf32>
    %338 = arith.mulf %329, %310 : vector<2x32xf32>
    %339 = arith.addf %337, %338 : vector<2x32xf32>
    %cst_91 = arith.constant dense<0.000000e+00> : vector<2x4xf32>
    %340 = tpu.matmul %339, %268, %cst_91 {dimension_numbers = #tpu.dot_dimension_numbers<[1], [0], [0], [1], [0, 0, 1, 1], [], []>} : vector<2x32xf32>, vector<32x4xf32>, vector<2x4xf32> -> vector<2x4xf32>
    %341 = vector.broadcast %269 : vector<1x4xf32> to vector<2x4xf32>
    %342 = arith.addf %340, %341 : vector<2x4xf32>
    %343 = vector.shape_cast %342 : vector<2x4xf32> to vector<2x1x4xf32>
    %c0_92 = arith.constant 0 : index
    %c0_93 = arith.constant 0 : index
    %c0_94 = arith.constant 0 : index
    %344 = vector.load %arg15[%c0_92, %c0_93, %c0_94] : memref<2x8x4xf32, #tpu.memory_space<vmem>>, vector<2x1x4xf32>
    tpu.vector_store %arg15[%c0_92, %c0_93, %c0_94], %343 {strides = array<i32>} : memref<2x8x4xf32, #tpu.memory_space<vmem>>, vector<2x1x4xf32>,
    %cst_95 = arith.constant dense<0.000000e+00> : vector<2x96xf32>
    %345 = tpu.matmul %339, %266, %cst_95 {dimension_numbers = #tpu.dot_dimension_numbers<[1], [0], [0], [1], [0, 0, 1, 1], [], []>} : vector<2x32xf32>, vector<32x96xf32>, vector<2x96xf32> -> vector<2x96xf32>
    %346 = vector.broadcast %267 : vector<1x96xf32> to vector<2x96xf32>
    %347 = arith.addf %345, %346 : vector<2x96xf32>
    %348 = vector.extract_strided_slice %279 {offsets = [0, 0], sizes = [2, 32], strides = [1, 1]} : vector<2x96xf32> to vector<2x32xf32>
    %349 = vector.extract_strided_slice %347 {offsets = [0, 0], sizes = [2, 32], strides = [1, 1]} : vector<2x96xf32> to vector<2x32xf32>
    %350 = arith.addf %348, %349 : vector<2x32xf32>
    %351 = arith.negf %350 : vector<2x32xf32>
    %352 = math.exp %351 : vector<2x32xf32>
    %cst_96 = arith.constant 1.000000e+00 : f32
    %353 = vector.broadcast %cst_96 : f32 to vector<2x32xf32>
    %354 = arith.addf %353, %352 : vector<2x32xf32>
    %355 = arith.divf %353, %354 : vector<2x32xf32>
    %356 = vector.extract_strided_slice %279 {offsets = [0, 32], sizes = [2, 32], strides = [1, 1]} : vector<2x96xf32> to vector<2x32xf32>
    %357 = vector.extract_strided_slice %347 {offsets = [0, 32], sizes = [2, 32], strides = [1, 1]} : vector<2x96xf32> to vector<2x32xf32>
    %358 = arith.addf %356, %357 : vector<2x32xf32>
    %359 = arith.negf %358 : vector<2x32xf32>
    %360 = math.exp %359 : vector<2x32xf32>
    %cst_97 = arith.constant 1.000000e+00 : f32
    %361 = vector.broadcast %cst_97 : f32 to vector<2x32xf32>
    %362 = arith.addf %361, %360 : vector<2x32xf32>
    %363 = arith.divf %361, %362 : vector<2x32xf32>
    %364 = vector.extract_strided_slice %279 {offsets = [0, 64], sizes = [2, 32], strides = [1, 1]} : vector<2x96xf32> to vector<2x32xf32>
    %365 = vector.extract_strided_slice %347 {offsets = [0, 64], sizes = [2, 32], strides = [1, 1]} : vector<2x96xf32> to vector<2x32xf32>
    %366 = arith.mulf %355, %365 : vector<2x32xf32>
    %367 = arith.addf %364, %366 : vector<2x32xf32>
    %368 = math.tanh %367 : vector<2x32xf32>
    %cst_98 = arith.constant 1.000000e+00 : f32
    %369 = vector.broadcast %cst_98 : f32 to vector<2x32xf32>
    %370 = arith.subf %369, %363 : vector<2x32xf32>
    %371 = arith.mulf %370, %368 : vector<2x32xf32>
    %372 = arith.mulf %363, %339 : vector<2x32xf32>
    %373 = arith.addf %371, %372 : vector<2x32xf32>
    %cst_99 = arith.constant dense<0.000000e+00> : vector<2x4xf32>
    %374 = tpu.matmul %373, %268, %cst_99 {dimension_numbers = #tpu.dot_dimension_numbers<[1], [0], [0], [1], [0, 0, 1, 1], [], []>} : vector<2x32xf32>, vector<32x4xf32>, vector<2x4xf32> -> vector<2x4xf32>
    %375 = vector.broadcast %269 : vector<1x4xf32> to vector<2x4xf32>
    %376 = arith.addf %374, %375 : vector<2x4xf32>
    %377 = vector.shape_cast %376 : vector<2x4xf32> to vector<2x1x4xf32>
    %c0_100 = arith.constant 0 : index
    %c1_101 = arith.constant 1 : index
    %c0_102 = arith.constant 0 : index
    %378 = vector.load %arg15[%c0_100, %c1_101, %c0_102] : memref<2x8x4xf32, #tpu.memory_space<vmem>>, vector<2x1x4xf32>
    tpu.vector_store %arg15[%c0_100, %c1_101, %c0_102], %377 {strides = array<i32>} : memref<2x8x4xf32, #tpu.memory_space<vmem>>, vector<2x1x4xf32>,
    %cst_103 = arith.constant dense<0.000000e+00> : vector<2x96xf32>
    %379 = tpu.matmul %373, %266, %cst_103 {dimension_numbers = #tpu.dot_dimension_numbers<[1], [0], [0], [1], [0, 0, 1, 1], [], []>} : vector<2x32xf32>, vector<32x96xf32>, vector<2x96xf32> -> vector<2x96xf32>
    %380 = vector.broadcast %267 : vector<1x96xf32> to vector<2x96xf32>
    %381 = arith.addf %379, %380 : vector<2x96xf32>
    %382 = vector.extract_strided_slice %284 {offsets = [0, 0], sizes = [2, 32], strides = [1, 1]} : vector<2x96xf32> to vector<2x32xf32>
    %383 = vector.extract_strided_slice %381 {offsets = [0, 0], sizes = [2, 32], strides = [1, 1]} : vector<2x96xf32> to vector<2x32xf32>
    %384 = arith.addf %382, %383 : vector<2x32xf32>
    %385 = arith.negf %384 : vector<2x32xf32>
    %386 = math.exp %385 : vector<2x32xf32>
    %cst_104 = arith.constant 1.000000e+00 : f32
    %387 = vector.broadcast %cst_104 : f32 to vector<2x32xf32>
    %388 = arith.addf %387, %386 : vector<2x32xf32>
    %389 = arith.divf %387, %388 : vector<2x32xf32>
    %390 = vector.extract_strided_slice %284 {offsets = [0, 32], sizes = [2, 32], strides = [1, 1]} : vector<2x96xf32> to vector<2x32xf32>
    %391 = vector.extract_strided_slice %381 {offsets = [0, 32], sizes = [2, 32], strides = [1, 1]} : vector<2x96xf32> to vector<2x32xf32>
    %392 = arith.addf %390, %391 : vector<2x32xf32>
    %393 = arith.negf %392 : vector<2x32xf32>
    %394 = math.exp %393 : vector<2x32xf32>
    %cst_105 = arith.constant 1.000000e+00 : f32
    %395 = vector.broadcast %cst_105 : f32 to vector<2x32xf32>
    %396 = arith.addf %395, %394 : vector<2x32xf32>
    %397 = arith.divf %395, %396 : vector<2x32xf32>
    %398 = vector.extract_strided_slice %284 {offsets = [0, 64], sizes = [2, 32], strides = [1, 1]} : vector<2x96xf32> to vector<2x32xf32>
    %399 = vector.extract_strided_slice %381 {offsets = [0, 64], sizes = [2, 32], strides = [1, 1]} : vector<2x96xf32> to vector<2x32xf32>
    %400 = arith.mulf %389, %399 : vector<2x32xf32>
    %401 = arith.addf %398, %400 : vector<2x32xf32>
    %402 = math.tanh %401 : vector<2x32xf32>
    %cst_106 = arith.constant 1.000000e+00 : f32
    %403 = vector.broadcast %cst_106 : f32 to vector<2x32xf32>
    %404 = arith.subf %403, %397 : vector<2x32xf32>
    %405 = arith.mulf %404, %402 : vector<2x32xf32>
    %406 = arith.mulf %397, %373 : vector<2x32xf32>
    %407 = arith.addf %405, %406 : vector<2x32xf32>
    %cst_107 = arith.constant dense<0.000000e+00> : vector<2x4xf32>
    %408 = tpu.matmul %407, %268, %cst_107 {dimension_numbers = #tpu.dot_dimension_numbers<[1], [0], [0], [1], [0, 0, 1, 1], [], []>} : vector<2x32xf32>, vector<32x4xf32>, vector<2x4xf32> -> vector<2x4xf32>
    %409 = vector.broadcast %269 : vector<1x4xf32> to vector<2x4xf32>
    %410 = arith.addf %408, %409 : vector<2x4xf32>
    %411 = vector.shape_cast %410 : vector<2x4xf32> to vector<2x1x4xf32>
    %c0_108 = arith.constant 0 : index
    %c2_109 = arith.constant 2 : index
    %c0_110 = arith.constant 0 : index
    %412 = vector.load %arg15[%c0_108, %c2_109, %c0_110] : memref<2x8x4xf32, #tpu.memory_space<vmem>>, vector<2x1x4xf32>
    tpu.vector_store %arg15[%c0_108, %c2_109, %c0_110], %411 {strides = array<i32>} : memref<2x8x4xf32, #tpu.memory_space<vmem>>, vector<2x1x4xf32>,
    %cst_111 = arith.constant dense<0.000000e+00> : vector<2x96xf32>
    %413 = tpu.matmul %407, %266, %cst_111 {dimension_numbers = #tpu.dot_dimension_numbers<[1], [0], [0], [1], [0, 0, 1, 1], [], []>} : vector<2x32xf32>, vector<32x96xf32>, vector<2x96xf32> -> vector<2x96xf32>
    %414 = vector.broadcast %267 : vector<1x96xf32> to vector<2x96xf32>
    %415 = arith.addf %413, %414 : vector<2x96xf32>
    %416 = vector.extract_strided_slice %289 {offsets = [0, 0], sizes = [2, 32], strides = [1, 1]} : vector<2x96xf32> to vector<2x32xf32>
    %417 = vector.extract_strided_slice %415 {offsets = [0, 0], sizes = [2, 32], strides = [1, 1]} : vector<2x96xf32> to vector<2x32xf32>
    %418 = arith.addf %416, %417 : vector<2x32xf32>
    %419 = arith.negf %418 : vector<2x32xf32>
    %420 = math.exp %419 : vector<2x32xf32>
    %cst_112 = arith.constant 1.000000e+00 : f32
    %421 = vector.broadcast %cst_112 : f32 to vector<2x32xf32>
    %422 = arith.addf %421, %420 : vector<2x32xf32>
    %423 = arith.divf %421, %422 : vector<2x32xf32>
    %424 = vector.extract_strided_slice %289 {offsets = [0, 32], sizes = [2, 32], strides = [1, 1]} : vector<2x96xf32> to vector<2x32xf32>
    %425 = vector.extract_strided_slice %415 {offsets = [0, 32], sizes = [2, 32], strides = [1, 1]} : vector<2x96xf32> to vector<2x32xf32>
    %426 = arith.addf %424, %425 : vector<2x32xf32>
    %427 = arith.negf %426 : vector<2x32xf32>
    %428 = math.exp %427 : vector<2x32xf32>
    %cst_113 = arith.constant 1.000000e+00 : f32
    %429 = vector.broadcast %cst_113 : f32 to vector<2x32xf32>
    %430 = arith.addf %429, %428 : vector<2x32xf32>
    %431 = arith.divf %429, %430 : vector<2x32xf32>
    %432 = vector.extract_strided_slice %289 {offsets = [0, 64], sizes = [2, 32], strides = [1, 1]} : vector<2x96xf32> to vector<2x32xf32>
    %433 = vector.extract_strided_slice %415 {offsets = [0, 64], sizes = [2, 32], strides = [1, 1]} : vector<2x96xf32> to vector<2x32xf32>
    %434 = arith.mulf %423, %433 : vector<2x32xf32>
    %435 = arith.addf %432, %434 : vector<2x32xf32>
    %436 = math.tanh %435 : vector<2x32xf32>
    %cst_114 = arith.constant 1.000000e+00 : f32
    %437 = vector.broadcast %cst_114 : f32 to vector<2x32xf32>
    %438 = arith.subf %437, %431 : vector<2x32xf32>
    %439 = arith.mulf %438, %436 : vector<2x32xf32>
    %440 = arith.mulf %431, %407 : vector<2x32xf32>
    %441 = arith.addf %439, %440 : vector<2x32xf32>
    %cst_115 = arith.constant dense<0.000000e+00> : vector<2x4xf32>
    %442 = tpu.matmul %441, %268, %cst_115 {dimension_numbers = #tpu.dot_dimension_numbers<[1], [0], [0], [1], [0, 0, 1, 1], [], []>} : vector<2x32xf32>, vector<32x4xf32>, vector<2x4xf32> -> vector<2x4xf32>
    %443 = vector.broadcast %269 : vector<1x4xf32> to vector<2x4xf32>
    %444 = arith.addf %442, %443 : vector<2x4xf32>
    %445 = vector.shape_cast %444 : vector<2x4xf32> to vector<2x1x4xf32>
    %c0_116 = arith.constant 0 : index
    %c3_117 = arith.constant 3 : index
    %c0_118 = arith.constant 0 : index
    %446 = vector.load %arg15[%c0_116, %c3_117, %c0_118] : memref<2x8x4xf32, #tpu.memory_space<vmem>>, vector<2x1x4xf32>
    tpu.vector_store %arg15[%c0_116, %c3_117, %c0_118], %445 {strides = array<i32>} : memref<2x8x4xf32, #tpu.memory_space<vmem>>, vector<2x1x4xf32>,
    %cst_119 = arith.constant dense<0.000000e+00> : vector<2x96xf32>
    %447 = tpu.matmul %441, %266, %cst_119 {dimension_numbers = #tpu.dot_dimension_numbers<[1], [0], [0], [1], [0, 0, 1, 1], [], []>} : vector<2x32xf32>, vector<32x96xf32>, vector<2x96xf32> -> vector<2x96xf32>
    %448 = vector.broadcast %267 : vector<1x96xf32> to vector<2x96xf32>
    %449 = arith.addf %447, %448 : vector<2x96xf32>
    %450 = vector.extract_strided_slice %294 {offsets = [0, 0], sizes = [2, 32], strides = [1, 1]} : vector<2x96xf32> to vector<2x32xf32>
    %451 = vector.extract_strided_slice %449 {offsets = [0, 0], sizes = [2, 32], strides = [1, 1]} : vector<2x96xf32> to vector<2x32xf32>
    %452 = arith.addf %450, %451 : vector<2x32xf32>
    %453 = arith.negf %452 : vector<2x32xf32>
    %454 = math.exp %453 : vector<2x32xf32>
    %cst_120 = arith.constant 1.000000e+00 : f32
    %455 = vector.broadcast %cst_120 : f32 to vector<2x32xf32>
    %456 = arith.addf %455, %454 : vector<2x32xf32>
    %457 = arith.divf %455, %456 : vector<2x32xf32>
    %458 = vector.extract_strided_slice %294 {offsets = [0, 32], sizes = [2, 32], strides = [1, 1]} : vector<2x96xf32> to vector<2x32xf32>
    %459 = vector.extract_strided_slice %449 {offsets = [0, 32], sizes = [2, 32], strides = [1, 1]} : vector<2x96xf32> to vector<2x32xf32>
    %460 = arith.addf %458, %459 : vector<2x32xf32>
    %461 = arith.negf %460 : vector<2x32xf32>
    %462 = math.exp %461 : vector<2x32xf32>
    %cst_121 = arith.constant 1.000000e+00 : f32
    %463 = vector.broadcast %cst_121 : f32 to vector<2x32xf32>
    %464 = arith.addf %463, %462 : vector<2x32xf32>
    %465 = arith.divf %463, %464 : vector<2x32xf32>
    %466 = vector.extract_strided_slice %294 {offsets = [0, 64], sizes = [2, 32], strides = [1, 1]} : vector<2x96xf32> to vector<2x32xf32>
    %467 = vector.extract_strided_slice %449 {offsets = [0, 64], sizes = [2, 32], strides = [1, 1]} : vector<2x96xf32> to vector<2x32xf32>
    %468 = arith.mulf %457, %467 : vector<2x32xf32>
    %469 = arith.addf %466, %468 : vector<2x32xf32>
    %470 = math.tanh %469 : vector<2x32xf32>
    %cst_122 = arith.constant 1.000000e+00 : f32
    %471 = vector.broadcast %cst_122 : f32 to vector<2x32xf32>
    %472 = arith.subf %471, %465 : vector<2x32xf32>
    %473 = arith.mulf %472, %470 : vector<2x32xf32>
    %474 = arith.mulf %465, %441 : vector<2x32xf32>
    %475 = arith.addf %473, %474 : vector<2x32xf32>
    %cst_123 = arith.constant dense<0.000000e+00> : vector<2x4xf32>
    %476 = tpu.matmul %475, %268, %cst_123 {dimension_numbers = #tpu.dot_dimension_numbers<[1], [0], [0], [1], [0, 0, 1, 1], [], []>} : vector<2x32xf32>, vector<32x4xf32>, vector<2x4xf32> -> vector<2x4xf32>
    %477 = vector.broadcast %269 : vector<1x4xf32> to vector<2x4xf32>
    %478 = arith.addf %476, %477 : vector<2x4xf32>
    %479 = vector.shape_cast %478 : vector<2x4xf32> to vector<2x1x4xf32>
    %c0_124 = arith.constant 0 : index
    %c4_125 = arith.constant 4 : index
    %c0_126 = arith.constant 0 : index
    %480 = vector.load %arg15[%c0_124, %c4_125, %c0_126] : memref<2x8x4xf32, #tpu.memory_space<vmem>>, vector<2x1x4xf32>
    tpu.vector_store %arg15[%c0_124, %c4_125, %c0_126], %479 {strides = array<i32>} : memref<2x8x4xf32, #tpu.memory_space<vmem>>, vector<2x1x4xf32>,
    %cst_127 = arith.constant dense<0.000000e+00> : vector<2x96xf32>
    %481 = tpu.matmul %475, %266, %cst_127 {dimension_numbers = #tpu.dot_dimension_numbers<[1], [0], [0], [1], [0, 0, 1, 1], [], []>} : vector<2x32xf32>, vector<32x96xf32>, vector<2x96xf32> -> vector<2x96xf32>
    %482 = vector.broadcast %267 : vector<1x96xf32> to vector<2x96xf32>
    %483 = arith.addf %481, %482 : vector<2x96xf32>
    %484 = vector.extract_strided_slice %299 {offsets = [0, 0], sizes = [2, 32], strides = [1, 1]} : vector<2x96xf32> to vector<2x32xf32>
    %485 = vector.extract_strided_slice %483 {offsets = [0, 0], sizes = [2, 32], strides = [1, 1]} : vector<2x96xf32> to vector<2x32xf32>
    %486 = arith.addf %484, %485 : vector<2x32xf32>
    %487 = arith.negf %486 : vector<2x32xf32>
    %488 = math.exp %487 : vector<2x32xf32>
    %cst_128 = arith.constant 1.000000e+00 : f32
    %489 = vector.broadcast %cst_128 : f32 to vector<2x32xf32>
    %490 = arith.addf %489, %488 : vector<2x32xf32>
    %491 = arith.divf %489, %490 : vector<2x32xf32>
    %492 = vector.extract_strided_slice %299 {offsets = [0, 32], sizes = [2, 32], strides = [1, 1]} : vector<2x96xf32> to vector<2x32xf32>
    %493 = vector.extract_strided_slice %483 {offsets = [0, 32], sizes = [2, 32], strides = [1, 1]} : vector<2x96xf32> to vector<2x32xf32>
    %494 = arith.addf %492, %493 : vector<2x32xf32>
    %495 = arith.negf %494 : vector<2x32xf32>
    %496 = math.exp %495 : vector<2x32xf32>
    %cst_129 = arith.constant 1.000000e+00 : f32
    %497 = vector.broadcast %cst_129 : f32 to vector<2x32xf32>
    %498 = arith.addf %497, %496 : vector<2x32xf32>
    %499 = arith.divf %497, %498 : vector<2x32xf32>
    %500 = vector.extract_strided_slice %299 {offsets = [0, 64], sizes = [2, 32], strides = [1, 1]} : vector<2x96xf32> to vector<2x32xf32>
    %501 = vector.extract_strided_slice %483 {offsets = [0, 64], sizes = [2, 32], strides = [1, 1]} : vector<2x96xf32> to vector<2x32xf32>
    %502 = arith.mulf %491, %501 : vector<2x32xf32>
    %503 = arith.addf %500, %502 : vector<2x32xf32>
    %504 = math.tanh %503 : vector<2x32xf32>
    %cst_130 = arith.constant 1.000000e+00 : f32
    %505 = vector.broadcast %cst_130 : f32 to vector<2x32xf32>
    %506 = arith.subf %505, %499 : vector<2x32xf32>
    %507 = arith.mulf %506, %504 : vector<2x32xf32>
    %508 = arith.mulf %499, %475 : vector<2x32xf32>
    %509 = arith.addf %507, %508 : vector<2x32xf32>
    %cst_131 = arith.constant dense<0.000000e+00> : vector<2x4xf32>
    %510 = tpu.matmul %509, %268, %cst_131 {dimension_numbers = #tpu.dot_dimension_numbers<[1], [0], [0], [1], [0, 0, 1, 1], [], []>} : vector<2x32xf32>, vector<32x4xf32>, vector<2x4xf32> -> vector<2x4xf32>
    %511 = vector.broadcast %269 : vector<1x4xf32> to vector<2x4xf32>
    %512 = arith.addf %510, %511 : vector<2x4xf32>
    %513 = vector.shape_cast %512 : vector<2x4xf32> to vector<2x1x4xf32>
    %c0_132 = arith.constant 0 : index
    %c5_133 = arith.constant 5 : index
    %c0_134 = arith.constant 0 : index
    %514 = vector.load %arg15[%c0_132, %c5_133, %c0_134] : memref<2x8x4xf32, #tpu.memory_space<vmem>>, vector<2x1x4xf32>
    tpu.vector_store %arg15[%c0_132, %c5_133, %c0_134], %513 {strides = array<i32>} : memref<2x8x4xf32, #tpu.memory_space<vmem>>, vector<2x1x4xf32>,
    %cst_135 = arith.constant dense<0.000000e+00> : vector<2x96xf32>
    %515 = tpu.matmul %509, %266, %cst_135 {dimension_numbers = #tpu.dot_dimension_numbers<[1], [0], [0], [1], [0, 0, 1, 1], [], []>} : vector<2x32xf32>, vector<32x96xf32>, vector<2x96xf32> -> vector<2x96xf32>
    %516 = vector.broadcast %267 : vector<1x96xf32> to vector<2x96xf32>
    %517 = arith.addf %515, %516 : vector<2x96xf32>
    %518 = vector.extract_strided_slice %304 {offsets = [0, 0], sizes = [2, 32], strides = [1, 1]} : vector<2x96xf32> to vector<2x32xf32>
    %519 = vector.extract_strided_slice %517 {offsets = [0, 0], sizes = [2, 32], strides = [1, 1]} : vector<2x96xf32> to vector<2x32xf32>
    %520 = arith.addf %518, %519 : vector<2x32xf32>
    %521 = arith.negf %520 : vector<2x32xf32>
    %522 = math.exp %521 : vector<2x32xf32>
    %cst_136 = arith.constant 1.000000e+00 : f32
    %523 = vector.broadcast %cst_136 : f32 to vector<2x32xf32>
    %524 = arith.addf %523, %522 : vector<2x32xf32>
    %525 = arith.divf %523, %524 : vector<2x32xf32>
    %526 = vector.extract_strided_slice %304 {offsets = [0, 32], sizes = [2, 32], strides = [1, 1]} : vector<2x96xf32> to vector<2x32xf32>
    %527 = vector.extract_strided_slice %517 {offsets = [0, 32], sizes = [2, 32], strides = [1, 1]} : vector<2x96xf32> to vector<2x32xf32>
    %528 = arith.addf %526, %527 : vector<2x32xf32>
    %529 = arith.negf %528 : vector<2x32xf32>
    %530 = math.exp %529 : vector<2x32xf32>
    %cst_137 = arith.constant 1.000000e+00 : f32
    %531 = vector.broadcast %cst_137 : f32 to vector<2x32xf32>
    %532 = arith.addf %531, %530 : vector<2x32xf32>
    %533 = arith.divf %531, %532 : vector<2x32xf32>
    %534 = vector.extract_strided_slice %304 {offsets = [0, 64], sizes = [2, 32], strides = [1, 1]} : vector<2x96xf32> to vector<2x32xf32>
    %535 = vector.extract_strided_slice %517 {offsets = [0, 64], sizes = [2, 32], strides = [1, 1]} : vector<2x96xf32> to vector<2x32xf32>
    %536 = arith.mulf %525, %535 : vector<2x32xf32>
    %537 = arith.addf %534, %536 : vector<2x32xf32>
    %538 = math.tanh %537 : vector<2x32xf32>
    %cst_138 = arith.constant 1.000000e+00 : f32
    %539 = vector.broadcast %cst_138 : f32 to vector<2x32xf32>
    %540 = arith.subf %539, %533 : vector<2x32xf32>
    %541 = arith.mulf %540, %538 : vector<2x32xf32>
    %542 = arith.mulf %533, %509 : vector<2x32xf32>
    %543 = arith.addf %541, %542 : vector<2x32xf32>
    %cst_139 = arith.constant dense<0.000000e+00> : vector<2x4xf32>
    %544 = tpu.matmul %543, %268, %cst_139 {dimension_numbers = #tpu.dot_dimension_numbers<[1], [0], [0], [1], [0, 0, 1, 1], [], []>} : vector<2x32xf32>, vector<32x4xf32>, vector<2x4xf32> -> vector<2x4xf32>
    %545 = vector.broadcast %269 : vector<1x4xf32> to vector<2x4xf32>
    %546 = arith.addf %544, %545 : vector<2x4xf32>
    %547 = vector.shape_cast %546 : vector<2x4xf32> to vector<2x1x4xf32>
    %c0_140 = arith.constant 0 : index
    %c6_141 = arith.constant 6 : index
    %c0_142 = arith.constant 0 : index
    %548 = vector.load %arg15[%c0_140, %c6_141, %c0_142] : memref<2x8x4xf32, #tpu.memory_space<vmem>>, vector<2x1x4xf32>
    tpu.vector_store %arg15[%c0_140, %c6_141, %c0_142], %547 {strides = array<i32>} : memref<2x8x4xf32, #tpu.memory_space<vmem>>, vector<2x1x4xf32>,
    %cst_143 = arith.constant dense<0.000000e+00> : vector<2x96xf32>
    %549 = tpu.matmul %543, %266, %cst_143 {dimension_numbers = #tpu.dot_dimension_numbers<[1], [0], [0], [1], [0, 0, 1, 1], [], []>} : vector<2x32xf32>, vector<32x96xf32>, vector<2x96xf32> -> vector<2x96xf32>
    %550 = vector.broadcast %267 : vector<1x96xf32> to vector<2x96xf32>
    %551 = arith.addf %549, %550 : vector<2x96xf32>
    %552 = vector.extract_strided_slice %309 {offsets = [0, 0], sizes = [2, 32], strides = [1, 1]} : vector<2x96xf32> to vector<2x32xf32>
    %553 = vector.extract_strided_slice %551 {offsets = [0, 0], sizes = [2, 32], strides = [1, 1]} : vector<2x96xf32> to vector<2x32xf32>
    %554 = arith.addf %552, %553 : vector<2x32xf32>
    %555 = arith.negf %554 : vector<2x32xf32>
    %556 = math.exp %555 : vector<2x32xf32>
    %cst_144 = arith.constant 1.000000e+00 : f32
    %557 = vector.broadcast %cst_144 : f32 to vector<2x32xf32>
    %558 = arith.addf %557, %556 : vector<2x32xf32>
    %559 = arith.divf %557, %558 : vector<2x32xf32>
    %560 = vector.extract_strided_slice %309 {offsets = [0, 32], sizes = [2, 32], strides = [1, 1]} : vector<2x96xf32> to vector<2x32xf32>
    %561 = vector.extract_strided_slice %551 {offsets = [0, 32], sizes = [2, 32], strides = [1, 1]} : vector<2x96xf32> to vector<2x32xf32>
    %562 = arith.addf %560, %561 : vector<2x32xf32>
    %563 = arith.negf %562 : vector<2x32xf32>
    %564 = math.exp %563 : vector<2x32xf32>
    %cst_145 = arith.constant 1.000000e+00 : f32
    %565 = vector.broadcast %cst_145 : f32 to vector<2x32xf32>
    %566 = arith.addf %565, %564 : vector<2x32xf32>
    %567 = arith.divf %565, %566 : vector<2x32xf32>
    %568 = vector.extract_strided_slice %309 {offsets = [0, 64], sizes = [2, 32], strides = [1, 1]} : vector<2x96xf32> to vector<2x32xf32>
    %569 = vector.extract_strided_slice %551 {offsets = [0, 64], sizes = [2, 32], strides = [1, 1]} : vector<2x96xf32> to vector<2x32xf32>
    %570 = arith.mulf %559, %569 : vector<2x32xf32>
    %571 = arith.addf %568, %570 : vector<2x32xf32>
    %572 = math.tanh %571 : vector<2x32xf32>
    %cst_146 = arith.constant 1.000000e+00 : f32
    %573 = vector.broadcast %cst_146 : f32 to vector<2x32xf32>
    %574 = arith.subf %573, %567 : vector<2x32xf32>
    %575 = arith.mulf %574, %572 : vector<2x32xf32>
    %576 = arith.mulf %567, %543 : vector<2x32xf32>
    %577 = arith.addf %575, %576 : vector<2x32xf32>
    %cst_147 = arith.constant dense<0.000000e+00> : vector<2x4xf32>
    %578 = tpu.matmul %577, %268, %cst_147 {dimension_numbers = #tpu.dot_dimension_numbers<[1], [0], [0], [1], [0, 0, 1, 1], [], []>} : vector<2x32xf32>, vector<32x4xf32>, vector<2x4xf32> -> vector<2x4xf32>
    %579 = vector.broadcast %269 : vector<1x4xf32> to vector<2x4xf32>
    %580 = arith.addf %578, %579 : vector<2x4xf32>
    %581 = vector.shape_cast %580 : vector<2x4xf32> to vector<2x1x4xf32>
    %c0_148 = arith.constant 0 : index
    %c7_149 = arith.constant 7 : index
    %c0_150 = arith.constant 0 : index
    %582 = vector.load %arg15[%c0_148, %c7_149, %c0_150] : memref<2x8x4xf32, #tpu.memory_space<vmem>>, vector<2x1x4xf32>
    tpu.vector_store %arg15[%c0_148, %c7_149, %c0_150], %581 {strides = array<i32>} : memref<2x8x4xf32, #tpu.memory_space<vmem>>, vector<2x1x4xf32>,
    return
  }
  func.func @transform_0(%arg0: i32) -> (i32, i32, i32) {
    %c0_i32 = arith.constant 0 : i32
    %c0_i32_0 = arith.constant 0 : i32
    %c0_i32_1 = arith.constant 0 : i32
    %c0_i32_2 = arith.constant 0 : i32
    return %c0_i32, %c0_i32_0, %c0_i32_1 : i32, i32, i32
  }
  func.func @transform_1(%arg0: i32) -> (i32, i32) {
    %c0_i32 = arith.constant 0 : i32
    %c0_i32_0 = arith.constant 0 : i32
    %c0_i32_1 = arith.constant 0 : i32
    return %c0_i32, %c0_i32_0 : i32, i32
  }
  func.func @transform_2(%arg0: i32) -> (i32, i32) {
    %c0_i32 = arith.constant 0 : i32
    %c0_i32_0 = arith.constant 0 : i32
    %c0_i32_1 = arith.constant 0 : i32
    return %c0_i32, %c0_i32_0 : i32, i32
  }
  func.func @transform_3(%arg0: i32) -> (i32, i32) {
    %c0_i32 = arith.constant 0 : i32
    %c0_i32_0 = arith.constant 0 : i32
    %c0_i32_1 = arith.constant 0 : i32
    return %c0_i32, %c0_i32_0 : i32, i32
  }
  func.func @transform_4(%arg0: i32) -> (i32, i32) {
    %c0_i32 = arith.constant 0 : i32
    %c0_i32_0 = arith.constant 0 : i32
    %c0_i32_1 = arith.constant 0 : i32
    return %c0_i32, %c0_i32_0 : i32, i32
  }
  func.func @transform_5(%arg0: i32) -> (i32, i32) {
    %c0_i32 = arith.constant 0 : i32
    %c0_i32_0 = arith.constant 0 : i32
    %c0_i32_1 = arith.constant 0 : i32
    return %c0_i32, %c0_i32_0 : i32, i32
  }
  func.func @transform_6(%arg0: i32) -> (i32, i32) {
    %c0_i32 = arith.constant 0 : i32
    %c0_i32_0 = arith.constant 0 : i32
    %c0_i32_1 = arith.constant 0 : i32
    return %c0_i32, %c0_i32_0 : i32, i32
  }
  func.func @transform_7(%arg0: i32) -> (i32, i32, i32) {
    %c0_i32 = arith.constant 0 : i32
    %c0_i32_0 = arith.constant 0 : i32
    %c0_i32_1 = arith.constant 0 : i32
    %c0_i32_2 = arith.constant 0 : i32
    return %c0_i32, %c0_i32_0, %c0_i32_1 : i32, i32, i32
  }
  func.func @transform_8(%arg0: i32) -> (i32, i32) {
    %c0_i32 = arith.constant 0 : i32
    %c0_i32_0 = arith.constant 0 : i32
    %c0_i32_1 = arith.constant 0 : i32
    return %c0_i32, %c0_i32_0 : i32, i32
  }
  func.func @transform_9(%arg0: i32) -> (i32, i32) {
    %c0_i32 = arith.constant 0 : i32
    %c0_i32_0 = arith.constant 0 : i32
    %c0_i32_1 = arith.constant 0 : i32
    return %c0_i32, %c0_i32_0 : i32, i32
  }
  func.func @transform_10(%arg0: i32) -> (i32, i32) {
    %c0_i32 = arith.constant 0 : i32
    %c0_i32_0 = arith.constant 0 : i32
    %c0_i32_1 = arith.constant 0 : i32
    return %c0_i32, %c0_i32_0 : i32, i32
  }
  func.func @transform_11(%arg0: i32) -> (i32, i32) {
    %c0_i32 = arith.constant 0 : i32
    %c0_i32_0 = arith.constant 0 : i32
    %c0_i32_1 = arith.constant 0 : i32
    return %c0_i32, %c0_i32_0 : i32, i32
  }
  func.func @transform_12(%arg0: i32) -> (i32, i32) {
    %c0_i32 = arith.constant 0 : i32
    %c0_i32_0 = arith.constant 0 : i32
    %c0_i32_1 = arith.constant 0 : i32
    return %c0_i32, %c0_i32_0 : i32, i32
  }
  func.func @transform_13(%arg0: i32) -> (i32, i32) {
    %c0_i32 = arith.constant 0 : i32
    %c0_i32_0 = arith.constant 0 : i32
    %c0_i32_1 = arith.constant 0 : i32
    return %c0_i32, %c0_i32_0 : i32, i32
  }
  func.func @transform_14(%arg0: i32) -> (i32, i32, i32) {
    %c0_i32 = arith.constant 0 : i32
    %c0_i32_0 = arith.constant 0 : i32
    %c0_i32_1 = arith.constant 0 : i32
    %c0_i32_2 = arith.constant 0 : i32
    return %c0_i32, %c0_i32_0, %c0_i32_1 : i32, i32, i32
  }
}

</mosaic_0001>

<llo_original>
// kernel: gatrans_forward.2
$region0: #{gatrans_forward.2}
  #allocation0 [shape = 'u32[]', space=smem, size = 0x4, offset = 0x4, fixed_abs, tag = 'smem constant byte address 0x4 - core index']
  #allocation1 [shape = 'u32[144,128]{1,0:T(1,128)}', space=vmem, size = 0x12000, scoped, tag = 'internal scratch']
  %s0 = inlined_call_operand.vmem [shape: f32[2,8,4], index: 0, kind: input, shape index: {}]
  %s1 = inlined_call_operand.vmem [shape: f32[8,32], index: 1, kind: input, shape index: {}]
  %s2 = inlined_call_operand.hbm [shape: f32[1,16], index: 2, kind: input, shape index: {}]
  %s3 = inlined_call_operand.hbm [shape: f32[1,16], index: 3, kind: input, shape index: {}]
  %s4 = inlined_call_operand.hbm [shape: f32[4,4], index: 4, kind: input, shape index: {}]
  %s5 = inlined_call_operand.vmem [shape: f32[4,16], index: 5, kind: input, shape index: {}]
  %s6 = inlined_call_operand.vmem [shape: f32[1,8], index: 6, kind: input, shape index: {}]
  %s7 = inlined_call_operand.vmem [shape: f32[1,8], index: 7, kind: input, shape index: {}]
  %s8 = inlined_call_operand.vmem [shape: f32[8,8], index: 8, kind: input, shape index: {}]
  %s9 = inlined_call_operand.vmem [shape: f32[12,96], index: 9, kind: input, shape index: {}]
  %s10 = inlined_call_operand.hbm [shape: f32[1,96], index: 10, kind: input, shape index: {}]
  %s11 = inlined_call_operand.vmem [shape: f32[2,8,96], index: 11, kind: output, shape index: {}]
  %s12 = sld [smem:[#allocation0]]
  $region93: #{gatrans_forward.2} parent=0
    _
  %s14 = ssub.s32 1, %s12
  %s15 = scalar_select 0, %s14, %s12
  $region1: #{gatrans_forward.2} parent=0
    #allocation2 [shape = 'u8[512]{0}', space=vmem, size = 0x400, scoped, tag = 'input window, operand 2, single buffered']
    #allocation3 [shape = 's32[2]{0}', space=sflag, size = 0x8, scoped, tag = 'scoped memory for gatrans_forward.2']
    #allocation4 [shape = 'u8[512]{0}', space=vmem, size = 0x400, scoped, tag = 'input window, operand 3, single buffered']
    #allocation5 [shape = 's32[1]{0}', space=sflag, size = 0x4, scoped, tag = 'scoped memory for gatrans_forward.2']
    #allocation6 [shape = 'u8[2048]{0}', space=vmem, size = 0x800, scoped, tag = 'input window, operand 4, single buffered']
    #allocation7 [shape = 'u8[512]{0}', space=vmem, size = 0x400, scoped, tag = 'input window, operand 10, single buffered']
    #allocation8 [shape = 's32[1]{0}', space=sflag, size = 0x4, scoped, tag = 'scoped memory for gatrans_forward.2']
    %16 = vsyncpa [#allocation3], 0
    %17 = vsyncpa [#allocation5], 0
    %18 = vsyncpa [#allocation8], 0
    loop: start=0, step=1, limit=4
    $region2: #{gatrans_forward.2} parent=1 // loop_pre_header
      _
    $region3: #{gatrans_forward.2} parent=1 // loop_header
      %s20 = sphi 0, %s24
      %p21 = scmp.ge.s32.totalorder %s20, 4
      %s30 = sphi 0, %s32
      %s33 = sphi 0, %s30
      %s34 = sphi 0, %s33
      %s50 = sphi 0, %s34
      %s54 = sphi 0, %s54
      %s56 = sphi 0, %s54
      %s57 = sphi 0, %s56
      %s71 = sphi 0, %s57
      %s75 = sphi 0, %s75
      %s77 = sphi 0, %s75
      %s78 = sphi 0, %s77
      %s92 = sphi 0, %s78
      %s96 = sphi 0, %s96
      %s98 = sphi 0, %s96
      %s99 = sphi 0, %s98
      %s113 = sphi 0, %s99
      %s117 = sphi 0, %s117
      %s119 = sphi 0, %s117
      %s120 = sphi 0, %s119
      %s134 = sphi 0, %s120
      %s138 = sphi 0, %s138
      %s140 = sphi 0, %s138
      %s141 = sphi 0, %s140
      %s155 = sphi 0, %s141
      %s159 = sphi 0, %s159
      %s161 = sphi 0, %s159
      %s162 = sphi 0, %s161
      %s176 = sphi 0, %s162
      %s180 = sphi 0, %s180
      %s182 = sphi 0, %s180
      %s183 = sphi 0, %s182
      %s197 = sphi 0, %s183
      %s201 = sphi 0, %s201
      %s203 = sphi 0, %s201
      %s204 = sphi 0, %s203
      %s218 = sphi 0, %s204
      %s222 = sphi 0, %s222
      %s224 = sphi 0, %s222
      %s225 = sphi 0, %s224
      %s239 = sphi 0, %s225
      %s243 = sphi 0, %s243
      %s245 = sphi 0, %s243
      %s246 = sphi 0, %s245
      %s260 = sphi 0, %s246
      %s266 = sphi 0, %s268
      %s269 = sphi 0, %s266
      %s270 = sphi 0, %s269
      %s286 = sphi 0, %s270
    $region4: #{gatrans_forward.2} parent=1 // loop_header_branch
      %23 = sbr.rel (%p21) target = $region8
    $region5: #{gatrans_forward.2} parent=1 // loop_body
      %s25 = ssub.s32 %s20, 1
      %s26 = ssub.s32 %s20, 2
      %s27 = sadd.s32 %s20, 1
      %s28 = ssub.s32 %s20, %s27
      %p29 = scmp.eq.s32.totalorder %s28, 0
      %s31 = sadd.s32 %s30, 1
      %s32 = scalar_select %p29, %s30, %s31
      %p35 = pneg %p29
      %p36 = scmp.eq.s32.totalorder %s20, 1
      %p37 = por %p35, %p36
      %p38 = scmp.ne.s32.totalorder %s30, %s33
      %p39 = scmp.eq.s32.totalorder %s20, 0
      %p40 = por %p38, %p39
      %p41 = scmp.ne.s32.totalorder %s30, %s33
      %p42 = scmp.eq.s32.totalorder %s25, 1
      %p43 = por %p41, %p42
      %p44 = scmp.ne.s32.totalorder %s33, %s34
      %p45 = scmp.eq.s32.totalorder %s25, 0
      %p46 = por %p44, %p45
      %p47 = scmp.ne.s32.totalorder %s33, %s34
      %p48 = scmp.eq.s32.totalorder %s26, 1
      %p49 = por %p47, %p48
      %p51 = scmp.ne.s32.totalorder %s34, %s50
      %p52 = scmp.eq.s32.totalorder %s26, 0
      %p53 = por %p51, %p52
      %s55 = sadd.s32 %s54, 1
      %p58 = scmp.eq.s32.totalorder %s20, 1
      %p59 = scmp.ne.s32.totalorder %s54, %s56
      %p60 = scmp.eq.s32.totalorder %s20, 0
      %p61 = por %p59, %p60
      %p62 = scmp.ne.s32.totalorder %s54, %s56
      %p63 = scmp.eq.s32.totalorder %s25, 1
      %p64 = por %p62, %p63
      %p65 = scmp.ne.s32.totalorder %s56, %s57
      %p66 = scmp.eq.s32.totalorder %s25, 0
      %p67 = por %p65, %p66
      %p68 = scmp.ne.s32.totalorder %s56, %s57
      %p69 = scmp.eq.s32.totalorder %s26, 1
      %p70 = por %p68, %p69
      %p72 = scmp.ne.s32.totalorder %s57, %s71
      %p73 = scmp.eq.s32.totalorder %s26, 0
      %p74 = por %p72, %p73
      %s76 = sadd.s32 %s75, 1
      %p79 = scmp.eq.s32.totalorder %s20, 1
      %p80 = scmp.ne.s32.totalorder %s75, %s77
      %p81 = scmp.eq.s32.totalorder %s20, 0
      %p82 = por %p80, %p81
      %p83 = scmp.ne.s32.totalorder %s75, %s77
      %p84 = scmp.eq.s32.totalorder %s25, 1
      %p85 = por %p83, %p84
      %p86 = scmp.ne.s32.totalorder %s77, %s78
      %p87 = scmp.eq.s32.totalorder %s25, 0
      %p88 = por %p86, %p87
      %p89 = scmp.ne.s32.totalorder %s77, %s78
      %p90 = scmp.eq.s32.totalorder %s26, 1
      %p91 = por %p89, %p90
      %p93 = scmp.ne.s32.totalorder %s78, %s92
      %p94 = scmp.eq.s32.totalorder %s26, 0
      %p95 = por %p93, %p94
      %s97 = sadd.s32 %s96, 1
      %p100 = scmp.eq.s32.totalorder %s20, 1
      %p101 = scmp.ne.s32.totalorder %s96, %s98
      %p102 = scmp.eq.s32.totalorder %s20, 0
      %p103 = por %p101, %p102
      %p104 = scmp.ne.s32.totalorder %s96, %s98
      %p105 = scmp.eq.s32.totalorder %s25, 1
      %p106 = por %p104, %p105
      %p107 = scmp.ne.s32.totalorder %s98, %s99
      %p108 = scmp.eq.s32.totalorder %s25, 0
      %p109 = por %p107, %p108
      %p110 = scmp.ne.s32.totalorder %s98, %s99
      %p111 = scmp.eq.s32.totalorder %s26, 1
      %p112 = por %p110, %p111
      %p114 = scmp.ne.s32.totalorder %s99, %s113
      %p115 = scmp.eq.s32.totalorder %s26, 0
      %p116 = por %p114, %p115
      %s118 = sadd.s32 %s117, 1
      %p121 = scmp.eq.s32.totalorder %s20, 1
      %p122 = scmp.ne.s32.totalorder %s117, %s119
      %p123 = scmp.eq.s32.totalorder %s20, 0
      %p124 = por %p122, %p123
      %p125 = scmp.ne.s32.totalorder %s117, %s119
      %p126 = scmp.eq.s32.totalorder %s25, 1
      %p127 = por %p125, %p126
      %p128 = scmp.ne.s32.totalorder %s119, %s120
      %p129 = scmp.eq.s32.totalorder %s25, 0
      %p130 = por %p128, %p129
      %p131 = scmp.ne.s32.totalorder %s119, %s120
      %p132 = scmp.eq.s32.totalorder %s26, 1
      %p133 = por %p131, %p132
      %p135 = scmp.ne.s32.totalorder %s120, %s134
      %p136 = scmp.eq.s32.totalorder %s26, 0
      %p137 = por %p135, %p136
      %s139 = sadd.s32 %s138, 1
      %p142 = scmp.eq.s32.totalorder %s20, 1
      %p143 = scmp.ne.s32.totalorder %s138, %s140
      %p144 = scmp.eq.s32.totalorder %s20, 0
      %p145 = por %p143, %p144
      %p146 = scmp.ne.s32.totalorder %s138, %s140
      %p147 = scmp.eq.s32.totalorder %s25, 1
      %p148 = por %p146, %p147
      %p149 = scmp.ne.s32.totalorder %s140, %s141
      %p150 = scmp.eq.s32.totalorder %s25, 0
      %p151 = por %p149, %p150
      %p152 = scmp.ne.s32.totalorder %s140, %s141
      %p153 = scmp.eq.s32.totalorder %s26, 1
      %p154 = por %p152, %p153
      %p156 = scmp.ne.s32.totalorder %s141, %s155
      %p157 = scmp.eq.s32.totalorder %s26, 0
      %p158 = por %p156, %p157
      %s160 = sadd.s32 %s159, 1
      %p163 = scmp.eq.s32.totalorder %s20, 1
      %p164 = scmp.ne.s32.totalorder %s159, %s161
      %p165 = scmp.eq.s32.totalorder %s20, 0
      %p166 = por %p164, %p165
      %p167 = scmp.ne.s32.totalorder %s159, %s161
      %p168 = scmp.eq.s32.totalorder %s25, 1
      %p169 = por %p167, %p168
      %p170 = scmp.ne.s32.totalorder %s161, %s162
      %p171 = scmp.eq.s32.totalorder %s25, 0
      %p172 = por %p170, %p171
      %p173 = scmp.ne.s32.totalorder %s161, %s162
      %p174 = scmp.eq.s32.totalorder %s26, 1
      %p175 = por %p173, %p174
      %p177 = scmp.ne.s32.totalorder %s162, %s176
      %p178 = scmp.eq.s32.totalorder %s26, 0
      %p179 = por %p177, %p178
      %s181 = sadd.s32 %s180, 1
      %p184 = scmp.eq.s32.totalorder %s20, 1
      %p185 = scmp.ne.s32.totalorder %s180, %s182
      %p186 = scmp.eq.s32.totalorder %s20, 0
      %p187 = por %p185, %p186
      %p188 = scmp.ne.s32.totalorder %s180, %s182
      %p189 = scmp.eq.s32.totalorder %s25, 1
      %p190 = por %p188, %p189
      %p191 = scmp.ne.s32.totalorder %s182, %s183
      %p192 = scmp.eq.s32.totalorder %s25, 0
      %p193 = por %p191, %p192
      %p194 = scmp.ne.s32.totalorder %s182, %s183
      %p195 = scmp.eq.s32.totalorder %s26, 1
      %p196 = por %p194, %p195
      %p198 = scmp.ne.s32.totalorder %s183, %s197
      %p199 = scmp.eq.s32.totalorder %s26, 0
      %p200 = por %p198, %p199
      %s202 = sadd.s32 %s201, 1
      %p205 = scmp.eq.s32.totalorder %s20, 1
      %p206 = scmp.ne.s32.totalorder %s201, %s203
      %p207 = scmp.eq.s32.totalorder %s20, 0
      %p208 = por %p206, %p207
      %p209 = scmp.ne.s32.totalorder %s201, %s203
      %p210 = scmp.eq.s32.totalorder %s25, 1
      %p211 = por %p209, %p210
      %p212 = scmp.ne.s32.totalorder %s203, %s204
      %p213 = scmp.eq.s32.totalorder %s25, 0
      %p214 = por %p212, %p213
      %p215 = scmp.ne.s32.totalorder %s203, %s204
      %p216 = scmp.eq.s32.totalorder %s26, 1
      %p217 = por %p215, %p216
      %p219 = scmp.ne.s32.totalorder %s204, %s218
      %p220 = scmp.eq.s32.totalorder %s26, 0
      %p221 = por %p219, %p220
      %s223 = sadd.s32 %s222, 1
      %p226 = scmp.eq.s32.totalorder %s20, 1
      %p227 = scmp.ne.s32.totalorder %s222, %s224
      %p228 = scmp.eq.s32.totalorder %s20, 0
      %p229 = por %p227, %p228
      %p230 = scmp.ne.s32.totalorder %s222, %s224
      %p231 = scmp.eq.s32.totalorder %s25, 1
      %p232 = por %p230, %p231
      %p233 = scmp.ne.s32.totalorder %s224, %s225
      %p234 = scmp.eq.s32.totalorder %s25, 0
      %p235 = por %p233, %p234
      %p236 = scmp.ne.s32.totalorder %s224, %s225
      %p237 = scmp.eq.s32.totalorder %s26, 1
      %p238 = por %p236, %p237
      %p240 = scmp.ne.s32.totalorder %s225, %s239
      %p241 = scmp.eq.s32.totalorder %s26, 0
      %p242 = por %p240, %p241
      %s244 = sadd.s32 %s243, 1
      %p247 = scmp.eq.s32.totalorder %s20, 1
      %p248 = scmp.ne.s32.totalorder %s243, %s245
      %p249 = scmp.eq.s32.totalorder %s20, 0
      %p250 = por %p248, %p249
      %p251 = scmp.ne.s32.totalorder %s243, %s245
      %p252 = scmp.eq.s32.totalorder %s25, 1
      %p253 = por %p251, %p252
      %p254 = scmp.ne.s32.totalorder %s245, %s246
      %p255 = scmp.eq.s32.totalorder %s25, 0
      %p256 = por %p254, %p255
      %p257 = scmp.ne.s32.totalorder %s245, %s246
      %p258 = scmp.eq.s32.totalorder %s26, 1
      %p259 = por %p257, %p258
      %p261 = scmp.ne.s32.totalorder %s246, %s260
      %p262 = scmp.eq.s32.totalorder %s26, 0
      %p263 = por %p261, %p262
      %s264 = ssub.s32 %s20, %s27
      %p265 = scmp.eq.s32.totalorder %s264, 0
      %s267 = sadd.s32 %s266, 1
      %s268 = scalar_select %p265, %s266, %s267
      %p271 = pneg %p265
      %p272 = scmp.eq.s32.totalorder %s20, 1
      %p273 = por %p271, %p272
      %p274 = scmp.ne.s32.totalorder %s266, %s269
      %p275 = scmp.eq.s32.totalorder %s20, 0
      %p276 = por %p274, %p275
      %p277 = scmp.ne.s32.totalorder %s266, %s269
      %p278 = scmp.eq.s32.totalorder %s25, 1
      %p279 = por %p277, %p278
      %p280 = scmp.ne.s32.totalorder %s269, %s270
      %p281 = scmp.eq.s32.totalorder %s25, 0
      %p282 = por %p280, %p281
      %p283 = scmp.ne.s32.totalorder %s269, %s270
      %p284 = scmp.eq.s32.totalorder %s26, 1
      %p285 = por %p283, %p284
      %p287 = scmp.ne.s32.totalorder %s270, %s286
      %p288 = scmp.eq.s32.totalorder %s26, 0
      %p289 = por %p287, %p288
      %p290 = scmp.le.s32.totalorder 1, %s20
      %p291 = scmp.lt.s32.totalorder %s20, 3
      %p292 = pnand %p290, %p291
      %p293 = pneg %p292
      // Predicated region
      $region9: #{gatrans_forward.2} parent=5 // pred_check
        _
      $region10: #{gatrans_forward.2} parent=5 // pred_check_branch
        %295 = sbr.rel (%p292) target = $region12
      $region11: #{gatrans_forward.2} parent=5 // pred_region
        %s296 = ssub.s32 %s20, 1
        // Predicated region
        $region13: #{gatrans_forward.2} parent=11 // pred_check
          %p297 = pneg %p67
        $region14: #{gatrans_forward.2} parent=11 // pred_check_branch
          %299 = sbr.rel (%p297) target = $region16
        $region15: #{gatrans_forward.2} parent=11 // pred_region
          _
        $region16: #{gatrans_forward.2} parent=11 // pred_fallthru
          _
        // Predicated region
        $region17: #{gatrans_forward.2} parent=11 // pred_check
          %p300 = pneg %p88
        $region18: #{gatrans_forward.2} parent=11 // pred_check_branch
          %302 = sbr.rel (%p300) target = $region20
        $region19: #{gatrans_forward.2} parent=11 // pred_region
          %s304 = ssub.s32 16, 16
          %305 = vsyncadd [#allocation3], %s304
          %s307 = sshll.u32 [#allocation2], 4
          %s308 = int_to_ptr.vmem [resolvable:$true] %s307
          %310 = dma.hbm_to_vmem [thread:$0]  %s2, 16, %s308, [#allocation3]
        $region20: #{gatrans_forward.2} parent=11 // pred_fallthru
          _
        // Predicated region
        $region21: #{gatrans_forward.2} parent=11 // pred_check
          %p311 = pneg %p109
        $region22: #{gatrans_forward.2} parent=11 // pred_check_branch
          %313 = sbr.rel (%p311) target = $region24
        $region23: #{gatrans_forward.2} parent=11 // pred_region
          %s315 = ssub.s32 16, 16
          %316 = vsyncadd [#allocation5], %s315
          %s318 = sshll.u32 [#allocation4], 4
          %s319 = int_to_ptr.vmem [resolvable:$true] %s318
          %321 = dma.hbm_to_vmem [thread:$0]  %s3, 16, %s319, [#allocation5]
        $region24: #{gatrans_forward.2} parent=11 // pred_fallthru
          _
        // Predicated region
        $region25: #{gatrans_forward.2} parent=11 // pred_check
          %p322 = pneg %p130
        $region26: #{gatrans_forward.2} parent=11 // pred_check_branch
          %324 = sbr.rel (%p322) target = $region28
        $region27: #{gatrans_forward.2} parent=11 // pred_region
          %s326 = ssub.s32 64, 64
          %327 = vsyncadd [#allocation5], %s326
          %s329 = sshll.u32 [#allocation6], 4
          %s330 = int_to_ptr.vmem [resolvable:$true] %s329
          %332 = dma.hbm_to_vmem [thread:$0]  %s4, 64, %s330, [#allocation5]
        $region28: #{gatrans_forward.2} parent=11 // pred_fallthru
          _
        // Predicated region
        $region29: #{gatrans_forward.2} parent=11 // pred_check
          %p333 = pneg %p151
        $region30: #{gatrans_forward.2} parent=11 // pred_check_branch
          %335 = sbr.rel (%p333) target = $region32
        $region31: #{gatrans_forward.2} parent=11 // pred_region
          _
        $region32: #{gatrans_forward.2} parent=11 // pred_fallthru
          _
        // Predicated region
        $region33: #{gatrans_forward.2} parent=11 // pred_check
          %p336 = pneg %p172
        $region34: #{gatrans_forward.2} parent=11 // pred_check_branch
          %338 = sbr.rel (%p336) target = $region36
        $region35: #{gatrans_forward.2} parent=11 // pred_region
          _
        $region36: #{gatrans_forward.2} parent=11 // pred_fallthru
          _
        // Predicated region
        $region37: #{gatrans_forward.2} parent=11 // pred_check
          %p339 = pneg %p193
        $region38: #{gatrans_forward.2} parent=11 // pred_check_branch
          %341 = sbr.rel (%p339) target = $region40
        $region39: #{gatrans_forward.2} parent=11 // pred_region
          _
        $region40: #{gatrans_forward.2} parent=11 // pred_fallthru
          _
        // Predicated region
        $region41: #{gatrans_forward.2} parent=11 // pred_check
          %p342 = pneg %p214
        $region42: #{gatrans_forward.2} parent=11 // pred_check_branch
          %344 = sbr.rel (%p342) target = $region44
        $region43: #{gatrans_forward.2} parent=11 // pred_region
          _
        $region44: #{gatrans_forward.2} parent=11 // pred_fallthru
          _
        // Predicated region
        $region45: #{gatrans_forward.2} parent=11 // pred_check
          %p345 = pneg %p235
        $region46: #{gatrans_forward.2} parent=11 // pred_check_branch
          %347 = sbr.rel (%p345) target = $region48
        $region47: #{gatrans_forward.2} parent=11 // pred_region
          _
        $region48: #{gatrans_forward.2} parent=11 // pred_fallthru
          _
        // Predicated region
        $region49: #{gatrans_forward.2} parent=11 // pred_check
          %p348 = pneg %p256
        $region50: #{gatrans_forward.2} parent=11 // pred_check_branch
          %350 = sbr.rel (%p348) target = $region52
        $region51: #{gatrans_forward.2} parent=11 // pred_region
          %s352 = ssub.s32 16, 16
          %353 = vsyncadd [#allocation8], %s352
          %s355 = sshll.u32 [#allocation7], 4
          %s356 = int_to_ptr.vmem [resolvable:$true] %s355
          %358 = dma.hbm_to_vmem [thread:$0]  %s10, 16, %s356, [#allocation8]
        $region52: #{gatrans_forward.2} parent=11 // pred_fallthru
          _
      $region12: #{gatrans_forward.2} parent=5 // pred_fallthru
        _
      %p359 = scmp.lt.s32.totalorder %s20, 2
      // Predicated region
      $region53: #{gatrans_forward.2} parent=5 // pred_check
        %p360 = pneg %p359
      $region54: #{gatrans_forward.2} parent=5 // pred_check_branch
        %362 = sbr.rel (%p360) target = $region56
      $region55: #{gatrans_forward.2} parent=5 // pred_region
        // Predicated region
        $region57: #{gatrans_forward.2} parent=55 // pred_check
          %p363 = pneg %p40
        $region58: #{gatrans_forward.2} parent=55 // pred_check_branch
          %365 = sbr.rel (%p363) target = $region60
        $region59: #{gatrans_forward.2} parent=55 // pred_region
          %p366 = scmp.lt.s32.totalorder %s20, 1
          %s367 = scalar_select %p366, %s20, 1
          %s368 = smul.addr %s367, 8
          %s369 = scalar_lea.vmem %s0, %s368
        $region60: #{gatrans_forward.2} parent=55 // pred_fallthru
          _
      $region56: #{gatrans_forward.2} parent=5 // pred_fallthru
        _
      %p370 = scmp.le.s32.totalorder 1, %s20
      %p371 = scmp.lt.s32.totalorder %s20, 3
      %p372 = pnand %p370, %p371
      %p373 = pneg %p372
      // Predicated region
      $region61: #{gatrans_forward.2} parent=5 // pred_check
        _
      $region62: #{gatrans_forward.2} parent=5 // pred_check_branch
        %375 = sbr.rel (%p372) target = $region64
      $region63: #{gatrans_forward.2} parent=5 // pred_region
        %s376 = ssub.s32 %s20, 1
        // Predicated region
        $region65: #{gatrans_forward.2} parent=63 // pred_check
          %p377 = pneg %p88
        $region66: #{gatrans_forward.2} parent=63 // pred_check_branch
          %379 = sbr.rel (%p377) target = $region68
        $region67: #{gatrans_forward.2} parent=63 // pred_region
          %380 = dma.done [#allocation3], 16
        $region68: #{gatrans_forward.2} parent=63 // pred_fallthru
          _
        // Predicated region
        $region69: #{gatrans_forward.2} parent=63 // pred_check
          %p381 = pneg %p109
        $region70: #{gatrans_forward.2} parent=63 // pred_check_branch
          %383 = sbr.rel (%p381) target = $region72
        $region71: #{gatrans_forward.2} parent=63 // pred_region
          %384 = dma.done [#allocation5], 16
        $region72: #{gatrans_forward.2} parent=63 // pred_fallthru
          _
        // Predicated region
        $region73: #{gatrans_forward.2} parent=63 // pred_check
          %p385 = pneg %p130
        $region74: #{gatrans_forward.2} parent=63 // pred_check_branch
          %387 = sbr.rel (%p385) target = $region76
        $region75: #{gatrans_forward.2} parent=63 // pred_region
          %388 = dma.done [#allocation5], 64
        $region76: #{gatrans_forward.2} parent=63 // pred_fallthru
          _
        // Predicated region
        $region77: #{gatrans_forward.2} parent=63 // pred_check
          %p389 = pneg %p256
        $region78: #{gatrans_forward.2} parent=63 // pred_check_branch
          %391 = sbr.rel (%p389) target = $region80
        $region79: #{gatrans_forward.2} parent=63 // pred_region
          %392 = dma.done [#allocation8], 16
        $region80: #{gatrans_forward.2} parent=63 // pred_fallthru
          _
        %p393 = scmp.lt.s32.totalorder %s25, 1
        %s394 = scalar_select %p393, %s25, 1
        %s395 = smul.addr %s394, 8
        %s396 = scalar_lea.vmem %s0, %s395
        %p397 = pneg %p46
        %p398 = pneg %p43
        %p399 = pneg %p67
        %p400 = pneg %p64
        %p401 = pneg %p88
        %p402 = pneg %p85
        %p403 = pneg %p109
        %p404 = pneg %p106
        %p405 = pneg %p130
        %p406 = pneg %p127
        %p407 = pneg %p151
        %p408 = pneg %p148
        %p409 = pneg %p172
        %p410 = pneg %p169
        %p411 = pneg %p193
        %p412 = pneg %p190
        %p413 = pneg %p214
        %p414 = pneg %p211
        %p415 = pneg %p235
        %p416 = pneg %p232
        %p417 = pneg %p256
        %p418 = pneg %p253
        %p419 = pneg %p282
        %p420 = pneg %p279
        %p421 = scmp.lt.s32.totalorder %s25, 1
        %s422 = scalar_select %p421, %s25, 1
        %s423 = smul.addr %s422, 8
        %s424 = scalar_lea.vmem %s11, %s423
        %p425 = scmp.lt.s32.totalorder %s25, 1
        %s426 = scalar_select %p425, %s25, 1
        %s427 = smul.addr %s426, 8
        %s428 = scalar_lea.vmem %s0, %s427
        %p429 = scmp.lt.s32.totalorder %s25, 1
        %s430 = scalar_select %p429, %s25, 1
        %s431 = smul.addr %s430, 8
        %s432 = scalar_lea.vmem %s11, %s431
        %v433 = vld [vmem:[%s428] sm:$0xff]
        %434 = vxpose.xlu0.b32.start [1/16] %v433, 128
        %435 = vxpose.xlu0.b32.cont [2/16] 0.0, 128
        %436 = vxpose.xlu0.b32.cont [3/16] 0.0, 128
        %437 = vxpose.xlu0.b32.cont [4/16] 0.0, 128
        %438 = vxpose.xlu0.b32.cont [5/16] 0.0, 128
        %439 = vxpose.xlu0.b32.cont [6/16] 0.0, 128
        %440 = vxpose.xlu0.b32.cont [7/16] 0.0, 128
        %441 = vxpose.xlu0.b32.cont [8/16] 0.0, 128
        %442 = vxpose.xlu0.b32.cont [9/16] 0.0, 128
        %443 = vxpose.xlu0.b32.cont [10/16] 0.0, 128
        %444 = vxpose.xlu0.b32.cont [11/16] 0.0, 128
        %445 = vxpose.xlu0.b32.cont [12/16] 0.0, 128
        %446 = vxpose.xlu0.b32.cont [13/16] 0.0, 128
        %447 = vxpose.xlu0.b32.cont [14/16] 0.0, 128
        %448 = vxpose.xlu0.b32.cont [15/16] 0.0, 128
        %449 = vxpose.xlu0.b32.end [16/16] 0.0, 128
        %v450 = vpop.trf.xlu0
        %v451 = vpop.trf.xlu0
        %v452 = vpop.trf.xlu0
        %v453 = vpop.trf.xlu0
        %v454 = vpop.trf.xlu0
        %v455 = vpop.trf.xlu0
        %v456 = vpop.trf.xlu0
        %v457 = vpop.trf.xlu0
        %v458 = vpop.trf.xlu0
        %v459 = vpop.trf.xlu0
        %v460 = vpop.trf.xlu0
        %v461 = vpop.trf.xlu0
        %v462 = vpop.trf.xlu0
        %v463 = vpop.trf.xlu0
        %v464 = vpop.trf.xlu0
        %v465 = vpop.trf.xlu0
        %v466 = vld [vmem:[%s1] sm:$0xff]
        %vm467 = vcmask 64512
        %v469 = vsel %vm467, %v450, 0
        %471 = vmatprep.subr.mxu0 0.0
        %472 = vmatpush1.msra.mxu0 0.0
        %473 = vmatprep.subr.mxu0 0.0
        %474 = vmatpush1.msra.mxu0 0.0
        %475 = vmatprep.subr.mxu0 0.0
        %476 = vmatpush1.msra.mxu0 0.0
        %477 = vmatprep.subr.mxu0 0.0
        %478 = vmatpush1.msra.mxu0 0.0
        %479 = vmatprep.subr.mxu0 0.0
        %480 = vmatpush1.msra.mxu0 0.0
        %481 = vmatprep.subr.mxu0 0.0
        %482 = vmatpush1.msra.mxu0 0.0
        %483 = vmatprep.subr.mxu0 0.0
        %484 = vmatpush1.msra.mxu0 0.0
        %485 = vmatprep.subr.mxu0 0.0
        %486 = vmatpush1.msra.mxu0 0.0
        %487 = vmatprep.subr.mxu0 0.0
        %488 = vmatpush1.msra.mxu0 0.0
        %489 = vmatprep.subr.mxu0 0.0
        %490 = vmatpush1.msra.mxu0 0.0
        %491 = vmatprep.subr.mxu0 0.0
        %492 = vmatpush1.msra.mxu0 0.0
        %493 = vmatprep.subr.mxu0 0.0
        %494 = vmatpush1.msra.mxu0 0.0
        %495 = vmatprep.subr.mxu0 0.0
        %496 = vmatpush1.msra.mxu0 0.0
        %497 = vmatprep.subr.mxu0 0.0
        %498 = vmatpush1.msra.mxu0 0.0
        %499 = vmatprep.subr.mxu0 0.0
        %500 = vmatpush1.msra.mxu0 0.0
        %501 = vmatprep.subr.mxu0 0.0
        %502 = vmatpush1.msra.mxu0 %v466
        %503 = vmatprep.subr.mxu0 0.0
        %504 = vmatpush2.msra.mxu0 0.0
        %505 = vmatprep.subr.mxu0 0.0
        %506 = vmatpush2.msra.mxu0 0.0
        %507 = vmatprep.subr.mxu0 0.0
        %508 = vmatpush2.msra.mxu0 0.0
        %509 = vmatprep.subr.mxu0 0.0
        %510 = vmatpush2.msra.mxu0 0.0
        %511 = vmatprep.subr.mxu0 0.0
        %512 = vmatpush2.msra.mxu0 0.0
        %513 = vmatprep.subr.mxu0 0.0
        %514 = vmatpush2.msra.mxu0 0.0
        %515 = vmatprep.subr.mxu0 0.0
        %516 = vmatpush2.msra.mxu0 0.0
        %517 = vmatprep.subr.mxu0 0.0
        %518 = vmatpush2.msra.mxu0 0.0
        %519 = vmatprep.subr.mxu0 0.0
        %520 = vmatpush2.msra.mxu0 0.0
        %521 = vmatprep.subr.mxu0 0.0
        %522 = vmatpush2.msra.mxu0 0.0
        %523 = vmatprep.subr.mxu0 0.0
        %524 = vmatpush2.msra.mxu0 0.0
        %525 = vmatprep.subr.mxu0 0.0
        %526 = vmatpush2.msra.mxu0 0.0
        %527 = vmatprep.subr.mxu0 0.0
        %528 = vmatpush2.msra.mxu0 0.0
        %529 = vmatprep.subr.mxu0 0.0
        %530 = vmatpush2.msra.mxu0 0.0
        %531 = vmatprep.subr.mxu0 0.0
        %532 = vmatpush2.msra.mxu0 0.0
        %533 = vmatprep.subr.mxu0 0.0
        %534 = vmatpush2.msra.mxu0 0.0
        %535 = vmatprep.mubr.f32.mxu0 0.0
        %536 = vmatmul.mubr.f32.gmra.mxu0 %v469
        %v537 = vpop.f32.mrf.mxu0
        %v538 = vadd.f32 0.0, %v537
        %v539 = vpop.f32.mrf.mxu0
        %540 = vdwg.mxu0
        %v543 = vunpack.c.l.s4 1966171168
        %v544 = vunpack.c.0.s8 %v543
        %v545 = vlaneseq
        %v546 = vshrl.u32 %v545, 7
        %v547 = vsub.s32 %v544, %v546
        %v548 = vrot.slane %v538, %v547
        %v549 = vcombine.high %v548, %v548
        %v551 = vunpack.c.l.s4 1966171168
        %v552 = vunpack.c.0.s8 %v551
        %v553 = vlaneseq
        %v554 = vshrl.u32 %v553, 7
        %v555 = vsub.s32 %v552, %v554
        %v556 = vrot.slane %v548, %v555
        %v558 = vunpack.c.l.s4 1966171168
        %v559 = vunpack.c.0.s8 %v558
        %v560 = vlaneseq
        %v561 = vshrl.u32 %v560, 7
        %v562 = vsub.s32 %v559, %v561
        %v563 = vrot.slane %v549, %v562
        %v564 = vcombine.high %v556, %v556
        %v565 = vcombine.high %v563, %v563
        %v566 = vlaneseq
        %v567 = vshrl.u32 %v566, 7
        %v568 = vsub.s32 0, %v567
        %v569 = vrot.slane %v556, %v568
        %v570 = vlaneseq
        %v571 = vshrl.u32 %v570, 7
        %v572 = vsub.s32 0, %v571
        %v573 = vrot.slane %v563, %v572
        %v574 = vlaneseq
        %v575 = vshrl.u32 %v574, 7
        %v576 = vsub.s32 0, %v575
        %v577 = vrot.slane %v564, %v576
        %v578 = vlaneseq
        %v579 = vshrl.u32 %v578, 7
        %v580 = vsub.s32 0, %v579
        %v581 = vrot.slane %v565, %v580
        %586 = vrot.lane.b32.xlu0 %v538, 112
        %v587 = vpop.permute.xlu0 %586
        %v589 = vadd.f32 %v569, %v587
        %v590 = vadd.f32 %v573, %v587
        %v591 = vadd.f32 %v577, %v587
        %v592 = vadd.f32 %v581, %v587
        %v593 = vld [vmem:[#allocation2] sm:$0x1]
        %v595 = vlaneseq
        %v596 = vshrl.u32 %v595, 7
        %v597 = vsub.s32 0, %v596
        %v598 = vrot.slane %v593, %v597
        %v600 = vadd.f32 %v589, %v598
        %v601 = vadd.f32 %v590, %v598
        %v602 = vadd.f32 %v591, %v598
        %v603 = vadd.f32 %v592, %v598
        %vm604 = vcmp.gt.f32.partialorder %v600, 0.0
        %vm605 = vcmp.gt.f32.partialorder %v601, 0.0
        %vm606 = vcmp.gt.f32.partialorder %v602, 0.0
        %vm607 = vcmp.gt.f32.partialorder %v603, 0.0
        %v608 = vmul.f32 %v600, 0.2
        %v609 = vmul.f32 %v601, 0.2
        %v610 = vmul.f32 %v602, 0.2
        %v611 = vmul.f32 %v603, 0.2
        %v612 = vsel %vm604, %v600, %v608
        %v613 = vsel %vm605, %v601, %v609
        %v614 = vsel %vm606, %v602, %v610
        %v615 = vsel %vm607, %v603, %v611
        %v616 = vld [vmem:[#allocation4] sm:$0x1]
        %v618 = vlaneseq
        %v619 = vshrl.u32 %v618, 7
        %v620 = vsub.s32 0, %v619
        %v621 = vrot.slane %v616, %v620
        %v623 = vmul.f32 %v612, %v621
        %v624 = vmul.f32 %v613, %v621
        %v625 = vmul.f32 %v614, %v621
        %v626 = vmul.f32 %v615, %v621
        %vm627 = vcmask 125952
        %v628 = vsel %vm627, %v623, 0.0
        %629 = vadd.xlane.f32.xlu0 %v628
        %v630 = vpop.xlane.xlu0 %629
        %v631 = vsel %vm627, %v624, 0.0
        %632 = vadd.xlane.f32.xlu0 %v631
        %v633 = vpop.xlane.xlu0 %632
        %v634 = vsel %vm627, %v625, 0.0
        %635 = vadd.xlane.f32.xlu0 %v634
        %v636 = vpop.xlane.xlu0 %635
        %v637 = vsel %vm627, %v626, 0.0
        %638 = vadd.xlane.f32.xlu0 %v637
        %v639 = vpop.xlane.xlu0 %638
        %v640 = vld [vmem:[#allocation6] sm:$0xf]
        %v642 = vlaneseq
        %v643 = vshrl.u32 %v642, 7
        %v644 = vsub.s32 0, %v643
        %v645 = vrot.slane %v640, %v644
        %647 = vbcast.lane.b32.xlu0 %v645, 256
        %v648 = vpop.permute.xlu0 %647
        %v649 = vlaneseq
        %v650 = vshrl.u32 %v649, 7
        %v651 = vsub.s32 1, %v650
        %v652 = vrot.slane %v640, %v651
        %654 = vbcast.lane.b32.xlu0 %v652, 256
        %v655 = vpop.permute.xlu0 %654
        %v656 = vlaneseq
        %v657 = vshrl.u32 %v656, 7
        %v658 = vsub.s32 2, %v657
        %v659 = vrot.slane %v640, %v658
        %661 = vbcast.lane.b32.xlu0 %v659, 256
        %v662 = vpop.permute.xlu0 %661
        %v663 = vlaneseq
        %v664 = vshrl.u32 %v663, 7
        %v665 = vsub.s32 3, %v664
        %v666 = vrot.slane %v640, %v665
        %668 = vbcast.lane.b32.xlu0 %v666, 256
        %v669 = vpop.permute.xlu0 %668
        %v674 = vadd.f32 %v630, %v648
        %v675 = vadd.f32 %v633, %v655
        %v676 = vadd.f32 %v636, %v662
        %v677 = vadd.f32 %v639, %v669
        %682 = vset.pattern.permute.xlu0 0
        %683 = vperm.xlu0 %682, %v674
        %v684 = vpop.permute.xlu0 %683
        %685 = vset.pattern.permute.xlu0 0
        %686 = vperm.xlu0 %685, %v675
        %v687 = vpop.permute.xlu0 %686
        %688 = vset.pattern.permute.xlu0 0
        %689 = vperm.xlu0 %688, %v676
        %v690 = vpop.permute.xlu0 %689
        %691 = vset.pattern.permute.xlu0 0
        %692 = vperm.xlu0 %691, %v677
        %v693 = vpop.permute.xlu0 %692
        %v694 = vlaneseq
        %v695 = vand.u32 %v694, 127
        %v696 = vlaneseq
        %v697 = vshrl.u32 %v696, 7
        %v698 = vsub.s32 %v695, %v697
        %v699 = vrot.slane %v684, %v698
        %v700 = vlaneseq
        %v701 = vshrl.u32 %v700, 7
        %v702 = vsub.s32 %v695, %v701
        %v703 = vrot.slane %v687, %v702
        %v704 = vlaneseq
        %v705 = vshrl.u32 %v704, 7
        %v706 = vsub.s32 %v695, %v705
        %v707 = vrot.slane %v690, %v706
        %v708 = vlaneseq
        %v709 = vshrl.u32 %v708, 7
        %v710 = vsub.s32 %v695, %v709
        %v711 = vrot.slane %v693, %v710
        %vm712 = vcmask 1041409
        %v713 = vsel %vm712, %v703, %v699
        %vm714 = vcmask 1042434
        %v715 = vsel %vm714, %v707, %v713
        %vm716 = vcmask 1043459
        %v717 = vsel %vm716, %v711, %v715
        %vm719 = vcmask 27648
        %v720 = vsel %vm719, %v717, -inf
        %721 = vmax.xlane.f32.xlu0 %v720
        %v722 = vpop.xlane.xlu0 %721
        %v724 = vlaneseq
        %v725 = vshrl.u32 %v724, 7
        %v726 = vsub.s32 0, %v725
        %v727 = vrot.slane %v722, %v726
        %v728 = vlaneseq
        %v729 = vshrl.u32 %v728, 7
        %v730 = vsub.s32 1, %v729
        %v731 = vrot.slane %v722, %v730
        %v732 = vlaneseq
        %v733 = vshrl.u32 %v732, 7
        %v734 = vsub.s32 2, %v733
        %v735 = vrot.slane %v722, %v734
        %v736 = vlaneseq
        %v737 = vshrl.u32 %v736, 7
        %v738 = vsub.s32 3, %v737
        %v739 = vrot.slane %v722, %v738
        %v744 = vsub.f32 %v674, %v727
        %v745 = vsub.f32 %v675, %v731
        %v746 = vsub.f32 %v676, %v735
        %v747 = vsub.f32 %v677, %v739
        %v748 = vmul.f32 %v744, 1.442695
        %v749 = vpow.pop %v748
        %v750 = vmul.f32 %v745, 1.442695
        %v751 = vpow.pop %v750
        %v752 = vmul.f32 %v746, 1.442695
        %v753 = vpow.pop %v752
        %v754 = vmul.f32 %v747, 1.442695
        %v755 = vpow.pop %v754
        %760 = vset.pattern.permute.xlu0 0
        %761 = vperm.xlu0 %760, %v749
        %v762 = vpop.permute.xlu0 %761
        %763 = vset.pattern.permute.xlu0 0
        %764 = vperm.xlu0 %763, %v751
        %v765 = vpop.permute.xlu0 %764
        %766 = vset.pattern.permute.xlu0 0
        %767 = vperm.xlu0 %766, %v753
        %v768 = vpop.permute.xlu0 %767
        %769 = vset.pattern.permute.xlu0 0
        %770 = vperm.xlu0 %769, %v755
        %v771 = vpop.permute.xlu0 %770
        %v772 = vlaneseq
        %v773 = vshrl.u32 %v772, 7
        %v774 = vsub.s32 %v695, %v773
        %v775 = vrot.slane %v762, %v774
        %v776 = vlaneseq
        %v777 = vshrl.u32 %v776, 7
        %v778 = vsub.s32 %v695, %v777
        %v779 = vrot.slane %v765, %v778
        %v780 = vlaneseq
        %v781 = vshrl.u32 %v780, 7
        %v782 = vsub.s32 %v695, %v781
        %v783 = vrot.slane %v768, %v782
        %v784 = vlaneseq
        %v785 = vshrl.u32 %v784, 7
        %v786 = vsub.s32 %v695, %v785
        %v787 = vrot.slane %v771, %v786
        %v788 = vsel %vm712, %v779, %v775
        %v789 = vsel %vm714, %v783, %v788
        %v790 = vsel %vm716, %v787, %v789
        %v792 = vsel %vm719, %v790, 0.0
        %793 = vadd.xlane.f32.xlu0 %v792
        %v794 = vpop.xlane.xlu0 %793
        %v795 = vrcp.pop %v794
        %v797 = vlaneseq
        %v798 = vshrl.u32 %v797, 7
        %v799 = vsub.s32 0, %v798
        %v800 = vrot.slane %v795, %v799
        %v801 = vlaneseq
        %v802 = vshrl.u32 %v801, 7
        %v803 = vsub.s32 1, %v802
        %v804 = vrot.slane %v795, %v803
        %v805 = vlaneseq
        %v806 = vshrl.u32 %v805, 7
        %v807 = vsub.s32 2, %v806
        %v808 = vrot.slane %v795, %v807
        %v809 = vlaneseq
        %v810 = vshrl.u32 %v809, 7
        %v811 = vsub.s32 3, %v810
        %v812 = vrot.slane %v795, %v811
        %v817 = vmul.f32 %v749, %v800
        %v818 = vmul.f32 %v751, %v804
        %v819 = vmul.f32 %v753, %v808
        %v820 = vmul.f32 %v755, %v812
        %825 = vset.pattern.permute.xlu0 0
        %826 = vperm.xlu0 %825, %v817
        %v827 = vpop.permute.xlu0 %826
        %828 = vset.pattern.permute.xlu0 0
        %829 = vperm.xlu0 %828, %v818
        %v830 = vpop.permute.xlu0 %829
        %831 = vset.pattern.permute.xlu0 0
        %832 = vperm.xlu0 %831, %v819
        %v833 = vpop.permute.xlu0 %832
        %834 = vset.pattern.permute.xlu0 0
        %835 = vperm.xlu0 %834, %v820
        %v836 = vpop.permute.xlu0 %835
        %v837 = vlaneseq
        %v838 = vshrl.u32 %v837, 7
        %v839 = vsub.s32 %v695, %v838
        %v840 = vrot.slane %v827, %v839
        %v841 = vlaneseq
        %v842 = vshrl.u32 %v841, 7
        %v843 = vsub.s32 %v695, %v842
        %v844 = vrot.slane %v830, %v843
        %v845 = vlaneseq
        %v846 = vshrl.u32 %v845, 7
        %v847 = vsub.s32 %v695, %v846
        %v848 = vrot.slane %v833, %v847
        %v849 = vlaneseq
        %v850 = vshrl.u32 %v849, 7
        %v851 = vsub.s32 %v695, %v850
        %v852 = vrot.slane %v836, %v851
        %v853 = vsel %vm712, %v844, %v840
        %v854 = vsel %vm714, %v848, %v853
        %v855 = vsel %vm716, %v852, %v854
        %vm856 = vcmask 31744
        %v857 = vsel %vm856, %v855, 0
        %vm859 = vcmask 1043456
        %v860 = vsel %vm859, %v450, 0
        %862 = vmatprep.subr.mxu0 0.0
        %863 = vmatpush1.msra.mxu0 0.0
        %864 = vmatprep.subr.mxu0 0.0
        %865 = vmatpush1.msra.mxu0 0.0
        %866 = vmatprep.subr.mxu0 0.0
        %867 = vmatpush1.msra.mxu0 0.0
        %868 = vmatprep.subr.mxu0 0.0
        %869 = vmatpush1.msra.mxu0 0.0
        %870 = vmatprep.subr.mxu0 0.0
        %871 = vmatpush1.msra.mxu0 0.0
        %872 = vmatprep.subr.mxu0 0.0
        %873 = vmatpush1.msra.mxu0 0.0
        %874 = vmatprep.subr.mxu0 0.0
        %875 = vmatpush1.msra.mxu0 0.0
        %876 = vmatprep.subr.mxu0 0.0
        %877 = vmatpush1.msra.mxu0 0.0
        %878 = vmatprep.subr.mxu0 0.0
        %879 = vmatpush1.msra.mxu0 0.0
        %880 = vmatprep.subr.mxu0 0.0
        %881 = vmatpush1.msra.mxu0 0.0
        %882 = vmatprep.subr.mxu0 0.0
        %883 = vmatpush1.msra.mxu0 0.0
        %884 = vmatprep.subr.mxu0 0.0
        %885 = vmatpush1.msra.mxu0 0.0
        %886 = vmatprep.subr.mxu0 0.0
        %887 = vmatpush1.msra.mxu0 0.0
        %888 = vmatprep.subr.mxu0 0.0
        %889 = vmatpush1.msra.mxu0 0.0
        %890 = vmatprep.subr.mxu0 0.0
        %891 = vmatpush1.msra.mxu0 0.0
        %892 = vmatprep.subr.mxu0 0.0
        %893 = vmatpush1.msra.mxu0 %v860
        %894 = vmatprep.subr.mxu0 0.0
        %895 = vmatpush2.msra.mxu0 0.0
        %896 = vmatprep.subr.mxu0 0.0
        %897 = vmatpush2.msra.mxu0 0.0
        %898 = vmatprep.subr.mxu0 0.0
        %899 = vmatpush2.msra.mxu0 0.0
        %900 = vmatprep.subr.mxu0 0.0
        %901 = vmatpush2.msra.mxu0 0.0
        %902 = vmatprep.subr.mxu0 0.0
        %903 = vmatpush2.msra.mxu0 0.0
        %904 = vmatprep.subr.mxu0 0.0
        %905 = vmatpush2.msra.mxu0 0.0
        %906 = vmatprep.subr.mxu0 0.0
        %907 = vmatpush2.msra.mxu0 0.0
        %908 = vmatprep.subr.mxu0 0.0
        %909 = vmatpush2.msra.mxu0 0.0
        %910 = vmatprep.subr.mxu0 0.0
        %911 = vmatpush2.msra.mxu0 0.0
        %912 = vmatprep.subr.mxu0 0.0
        %913 = vmatpush2.msra.mxu0 0.0
        %914 = vmatprep.subr.mxu0 0.0
        %915 = vmatpush2.msra.mxu0 0.0
        %916 = vmatprep.subr.mxu0 0.0
        %917 = vmatpush2.msra.mxu0 0.0
        %918 = vmatprep.subr.mxu0 0.0
        %919 = vmatpush2.msra.mxu0 0.0
        %920 = vmatprep.subr.mxu0 0.0
        %921 = vmatpush2.msra.mxu0 0.0
        %922 = vmatprep.subr.mxu0 0.0
        %923 = vmatpush2.msra.mxu0 0.0
        %924 = vmatprep.subr.mxu0 0.0
        %925 = vmatpush2.msra.mxu0 0.0
        %926 = vmatprep.mubr.f32.mxu0 0.0
        %927 = vmatmul.mubr.f32.gmra.mxu0 %v857
        %v928 = vpop.f32.mrf.mxu0
        %v929 = vadd.f32 0.0, %v928
        %v930 = vpop.f32.mrf.mxu0
        %931 = vdwg.mxu0
        %v932 = vxor.u32 %v929, 2147483648
        %v933 = vmul.f32 %v932, 1.442695
        %v934 = vpow.pop %v933
        %v935 = vadd.f32 %v934, 1.0
        %v936 = vrcp.pop %v935
        %v937 = vmul.f32 1.0, %v936
        %938 = vxpose.xlu0.b32.start [1/16] %v937, 128
        %939 = vxpose.xlu0.b32.cont [2/16] 0.0, 128
        %940 = vxpose.xlu0.b32.cont [3/16] 0.0, 128
        %941 = vxpose.xlu0.b32.cont [4/16] 0.0, 128
        %942 = vxpose.xlu0.b32.cont [5/16] 0.0, 128
        %943 = vxpose.xlu0.b32.cont [6/16] 0.0, 128
        %944 = vxpose.xlu0.b32.cont [7/16] 0.0, 128
        %945 = vxpose.xlu0.b32.cont [8/16] 0.0, 128
        %946 = vxpose.xlu0.b32.cont [9/16] 0.0, 128
        %947 = vxpose.xlu0.b32.cont [10/16] 0.0, 128
        %948 = vxpose.xlu0.b32.cont [11/16] 0.0, 128
        %949 = vxpose.xlu0.b32.cont [12/16] 0.0, 128
        %950 = vxpose.xlu0.b32.cont [13/16] 0.0, 128
        %951 = vxpose.xlu0.b32.cont [14/16] 0.0, 128
        %952 = vxpose.xlu0.b32.cont [15/16] 0.0, 128
        %953 = vxpose.xlu0.b32.end [16/16] 0.0, 128
        %v954 = vpop.trf.xlu0
        %v955 = vpop.trf.xlu0
        %v956 = vpop.trf.xlu0
        %v957 = vpop.trf.xlu0
        %v958 = vpop.trf.xlu0
        %v959 = vpop.trf.xlu0
        %v960 = vpop.trf.xlu0
        %v961 = vpop.trf.xlu0
        %v962 = vpop.trf.xlu0
        %v963 = vpop.trf.xlu0
        %v964 = vpop.trf.xlu0
        %v965 = vpop.trf.xlu0
        %v966 = vpop.trf.xlu0
        %v967 = vpop.trf.xlu0
        %v968 = vpop.trf.xlu0
        %v969 = vpop.trf.xlu0
        %v970 = vld [vmem:[%s5] sm:$0xf]
        %v972 = vsel %vm856, %v433, 0
        %v975 = vsel %vm859, %v970, 0
        %977 = vmatprep.subr.mxu0 0.0
        %978 = vmatpush1.msra.mxu0 0.0
        %979 = vmatprep.subr.mxu0 0.0
        %980 = vmatpush1.msra.mxu0 0.0
        %981 = vmatprep.subr.mxu0 0.0
        %982 = vmatpush1.msra.mxu0 0.0
        %983 = vmatprep.subr.mxu0 0.0
        %984 = vmatpush1.msra.mxu0 0.0
        %985 = vmatprep.subr.mxu0 0.0
        %986 = vmatpush1.msra.mxu0 0.0
        %987 = vmatprep.subr.mxu0 0.0
        %988 = vmatpush1.msra.mxu0 0.0
        %989 = vmatprep.subr.mxu0 0.0
        %990 = vmatpush1.msra.mxu0 0.0
        %991 = vmatprep.subr.mxu0 0.0
        %992 = vmatpush1.msra.mxu0 0.0
        %993 = vmatprep.subr.mxu0 0.0
        %994 = vmatpush1.msra.mxu0 0.0
        %995 = vmatprep.subr.mxu0 0.0
        %996 = vmatpush1.msra.mxu0 0.0
        %997 = vmatprep.subr.mxu0 0.0
        %998 = vmatpush1.msra.mxu0 0.0
        %999 = vmatprep.subr.mxu0 0.0
        %1000 = vmatpush1.msra.mxu0 0.0
        %1001 = vmatprep.subr.mxu0 0.0
        %1002 = vmatpush1.msra.mxu0 0.0
        %1003 = vmatprep.subr.mxu0 0.0
        %1004 = vmatpush1.msra.mxu0 0.0
        %1005 = vmatprep.subr.mxu0 0.0
        %1006 = vmatpush1.msra.mxu0 0.0
        %1007 = vmatprep.subr.mxu0 0.0
        %1008 = vmatpush1.msra.mxu0 %v975
        %1009 = vmatprep.subr.mxu0 0.0
        %1010 = vmatpush2.msra.mxu0 0.0
        %1011 = vmatprep.subr.mxu0 0.0
        %1012 = vmatpush2.msra.mxu0 0.0
        %1013 = vmatprep.subr.mxu0 0.0
        %1014 = vmatpush2.msra.mxu0 0.0
        %1015 = vmatprep.subr.mxu0 0.0
        %1016 = vmatpush2.msra.mxu0 0.0
        %1017 = vmatprep.subr.mxu0 0.0
        %1018 = vmatpush2.msra.mxu0 0.0
        %1019 = vmatprep.subr.mxu0 0.0
        %1020 = vmatpush2.msra.mxu0 0.0
        %1021 = vmatprep.subr.mxu0 0.0
        %1022 = vmatpush2.msra.mxu0 0.0
        %1023 = vmatprep.subr.mxu0 0.0
        %1024 = vmatpush2.msra.mxu0 0.0
        %1025 = vmatprep.subr.mxu0 0.0
        %1026 = vmatpush2.msra.mxu0 0.0
        %1027 = vmatprep.subr.mxu0 0.0
        %1028 = vmatpush2.msra.mxu0 0.0
        %1029 = vmatprep.subr.mxu0 0.0
        %1030 = vmatpush2.msra.mxu0 0.0
        %1031 = vmatprep.subr.mxu0 0.0
        %1032 = vmatpush2.msra.mxu0 0.0
        %1033 = vmatprep.subr.mxu0 0.0
        %1034 = vmatpush2.msra.mxu0 0.0
        %1035 = vmatprep.subr.mxu0 0.0
        %1036 = vmatpush2.msra.mxu0 0.0
        %1037 = vmatprep.subr.mxu0 0.0
        %1038 = vmatpush2.msra.mxu0 0.0
        %1039 = vmatprep.subr.mxu0 0.0
        %1040 = vmatpush2.msra.mxu0 0.0
        %1041 = vmatprep.mubr.f32.mxu0 0.0
        %1042 = vmatmul.mubr.f32.gmra.mxu0 %v972
        %v1043 = vpop.f32.mrf.mxu0
        %v1044 = vadd.f32 0.0, %v1043
        %v1045 = vpop.f32.mrf.mxu0
        %1046 = vdwg.mxu0
        %v1048 = vcombine.high %v1044, %v1044
        %v1050 = vunpack.c.l.s4 1966171168
        %v1051 = vunpack.c.0.s8 %v1050
        %v1052 = vlaneseq
        %v1053 = vshrl.u32 %v1052, 7
        %v1054 = vsub.s32 %v1051, %v1053
        %v1055 = vrot.slane %v1044, %v1054
        %v1057 = vunpack.c.l.s4 1966171168
        %v1058 = vunpack.c.0.s8 %v1057
        %v1059 = vlaneseq
        %v1060 = vshrl.u32 %v1059, 7
        %v1061 = vsub.s32 %v1058, %v1060
        %v1062 = vrot.slane %v1048, %v1061
        %v1063 = vcombine.high %v1055, %v1055
        %v1064 = vcombine.high %v1062, %v1062
        %v1066 = vunpack.c.l.s4 1966171168
        %v1067 = vunpack.c.0.s8 %v1066
        %v1068 = vlaneseq
        %v1069 = vshrl.u32 %v1068, 7
        %v1070 = vsub.s32 %v1067, %v1069
        %v1071 = vrot.slane %v1055, %v1070
        %v1073 = vunpack.c.l.s4 1966171168
        %v1074 = vunpack.c.0.s8 %v1073
        %v1075 = vlaneseq
        %v1076 = vshrl.u32 %v1075, 7
        %v1077 = vsub.s32 %v1074, %v1076
        %v1078 = vrot.slane %v1062, %v1077
        %v1080 = vunpack.c.l.s4 1966171168
        %v1081 = vunpack.c.0.s8 %v1080
        %v1082 = vlaneseq
        %v1083 = vshrl.u32 %v1082, 7
        %v1084 = vsub.s32 %v1081, %v1083
        %v1085 = vrot.slane %v1063, %v1084
        %v1087 = vunpack.c.l.s4 1966171168
        %v1088 = vunpack.c.0.s8 %v1087
        %v1089 = vlaneseq
        %v1090 = vshrl.u32 %v1089, 7
        %v1091 = vsub.s32 %v1088, %v1090
        %v1092 = vrot.slane %v1064, %v1091
        %v1093 = vcombine.high %v1071, %v1071
        %v1094 = vcombine.high %v1078, %v1078
        %v1095 = vcombine.high %v1085, %v1085
        %v1096 = vcombine.high %v1092, %v1092
        %v1097 = vlaneseq
        %v1098 = vshrl.u32 %v1097, 7
        %v1099 = vsub.s32 0, %v1098
        %v1100 = vrot.slane %v1071, %v1099
        %v1101 = vlaneseq
        %v1102 = vshrl.u32 %v1101, 7
        %v1103 = vsub.s32 0, %v1102
        %v1104 = vrot.slane %v1085, %v1103
        %v1105 = vlaneseq
        %v1106 = vshrl.u32 %v1105, 7
        %v1107 = vsub.s32 0, %v1106
        %v1108 = vrot.slane %v1093, %v1107
        %v1109 = vlaneseq
        %v1110 = vshrl.u32 %v1109, 7
        %v1111 = vsub.s32 0, %v1110
        %v1112 = vrot.slane %v1095, %v1111
        %v1113 = vlaneseq
        %v1114 = vshrl.u32 %v1113, 7
        %v1115 = vsub.s32 0, %v1114
        %v1116 = vrot.slane %v1078, %v1115
        %v1117 = vlaneseq
        %v1118 = vshrl.u32 %v1117, 7
        %v1119 = vsub.s32 0, %v1118
        %v1120 = vrot.slane %v1092, %v1119
        %v1121 = vlaneseq
        %v1122 = vshrl.u32 %v1121, 7
        %v1123 = vsub.s32 0, %v1122
        %v1124 = vrot.slane %v1094, %v1123
        %v1125 = vlaneseq
        %v1126 = vshrl.u32 %v1125, 7
        %v1127 = vsub.s32 0, %v1126
        %v1128 = vrot.slane %v1096, %v1127
        %1137 = vrot.lane.b32.xlu0 %v1044, 120
        %v1138 = vpop.permute.xlu0 %1137
        %v1140 = vadd.f32 %v1100, %v1138
        %v1141 = vadd.f32 %v1104, %v1138
        %v1142 = vadd.f32 %v1108, %v1138
        %v1143 = vadd.f32 %v1112, %v1138
        %v1144 = vadd.f32 %v1116, %v1138
        %v1145 = vadd.f32 %v1120, %v1138
        %v1146 = vadd.f32 %v1124, %v1138
        %v1147 = vadd.f32 %v1128, %v1138
        %v1148 = vld [vmem:[%s6] sm:$0x1]
        %v1150 = vlaneseq
        %v1151 = vshrl.u32 %v1150, 7
        %v1152 = vsub.s32 0, %v1151
        %v1153 = vrot.slane %v1148, %v1152
        %v1155 = vadd.f32 %v1140, %v1153
        %v1156 = vadd.f32 %v1141, %v1153
        %v1157 = vadd.f32 %v1142, %v1153
        %v1158 = vadd.f32 %v1143, %v1153
        %v1159 = vadd.f32 %v1144, %v1153
        %v1160 = vadd.f32 %v1145, %v1153
        %v1161 = vadd.f32 %v1146, %v1153
        %v1162 = vadd.f32 %v1147, %v1153
        %vm1163 = vcmp.gt.f32.partialorder %v1155, 0.0
        %vm1164 = vcmp.gt.f32.partialorder %v1156, 0.0
        %vm1165 = vcmp.gt.f32.partialorder %v1157, 0.0
        %vm1166 = vcmp.gt.f32.partialorder %v1158, 0.0
        %vm1167 = vcmp.gt.f32.partialorder %v1159, 0.0
        %vm1168 = vcmp.gt.f32.partialorder %v1160, 0.0
        %vm1169 = vcmp.gt.f32.partialorder %v1161, 0.0
        %vm1170 = vcmp.gt.f32.partialorder %v1162, 0.0
        %v1171 = vmul.f32 %v1155, 0.2
        %v1172 = vmul.f32 %v1156, 0.2
        %v1173 = vmul.f32 %v1157, 0.2
        %v1174 = vmul.f32 %v1158, 0.2
        %v1175 = vmul.f32 %v1159, 0.2
        %v1176 = vmul.f32 %v1160, 0.2
        %v1177 = vmul.f32 %v1161, 0.2
        %v1178 = vmul.f32 %v1162, 0.2
        %v1179 = vsel %vm1163, %v1155, %v1171
        %v1180 = vsel %vm1164, %v1156, %v1172
        %v1181 = vsel %vm1165, %v1157, %v1173
        %v1182 = vsel %vm1166, %v1158, %v1174
        %v1183 = vsel %vm1167, %v1159, %v1175
        %v1184 = vsel %vm1168, %v1160, %v1176
        %v1185 = vsel %vm1169, %v1161, %v1177
        %v1186 = vsel %vm1170, %v1162, %v1178
        %v1187 = vld [vmem:[%s7] sm:$0x1]
        %v1189 = vlaneseq
        %v1190 = vshrl.u32 %v1189, 7
        %v1191 = vsub.s32 0, %v1190
        %v1192 = vrot.slane %v1187, %v1191
        %v1194 = vmul.f32 %v1179, %v1192
        %v1195 = vmul.f32 %v1180, %v1192
        %v1196 = vmul.f32 %v1181, %v1192
        %v1197 = vmul.f32 %v1182, %v1192
        %v1198 = vmul.f32 %v1183, %v1192
        %v1199 = vmul.f32 %v1184, %v1192
        %v1200 = vmul.f32 %v1185, %v1192
        %v1201 = vmul.f32 %v1186, %v1192
        %v1202 = vsel %vm467, %v1194, 0.0
        %1203 = vadd.xlane.f32.xlu0 %v1202
        %v1204 = vpop.xlane.xlu0 %1203
        %v1205 = vsel %vm467, %v1195, 0.0
        %1206 = vadd.xlane.f32.xlu0 %v1205
        %v1207 = vpop.xlane.xlu0 %1206
        %v1208 = vsel %vm467, %v1196, 0.0
        %1209 = vadd.xlane.f32.xlu0 %v1208
        %v1210 = vpop.xlane.xlu0 %1209
        %v1211 = vsel %vm467, %v1197, 0.0
        %1212 = vadd.xlane.f32.xlu0 %v1211
        %v1213 = vpop.xlane.xlu0 %1212
        %v1214 = vsel %vm467, %v1198, 0.0
        %1215 = vadd.xlane.f32.xlu0 %v1214
        %v1216 = vpop.xlane.xlu0 %1215
        %v1217 = vsel %vm467, %v1199, 0.0
        %1218 = vadd.xlane.f32.xlu0 %v1217
        %v1219 = vpop.xlane.xlu0 %1218
        %v1220 = vsel %vm467, %v1200, 0.0
        %1221 = vadd.xlane.f32.xlu0 %v1220
        %v1222 = vpop.xlane.xlu0 %1221
        %v1223 = vsel %vm467, %v1201, 0.0
        %1224 = vadd.xlane.f32.xlu0 %v1223
        %v1225 = vpop.xlane.xlu0 %1224
        %v1226 = vld [vmem:[%s8] sm:$0xff]
        %v1228 = vlaneseq
        %v1229 = vshrl.u32 %v1228, 7
        %v1230 = vsub.s32 0, %v1229
        %v1231 = vrot.slane %v1226, %v1230
        %1233 = vbcast.lane.b32.xlu0 %v1231, 256
        %v1234 = vpop.permute.xlu0 %1233
        %v1235 = vlaneseq
        %v1236 = vshrl.u32 %v1235, 7
        %v1237 = vsub.s32 1, %v1236
        %v1238 = vrot.slane %v1226, %v1237
        %1240 = vbcast.lane.b32.xlu0 %v1238, 256
        %v1241 = vpop.permute.xlu0 %1240
        %v1242 = vlaneseq
        %v1243 = vshrl.u32 %v1242, 7
        %v1244 = vsub.s32 2, %v1243
        %v1245 = vrot.slane %v1226, %v1244
        %1247 = vbcast.lane.b32.xlu0 %v1245, 256
        %v1248 = vpop.permute.xlu0 %1247
        %v1249 = vlaneseq
        %v1250 = vshrl.u32 %v1249, 7
        %v1251 = vsub.s32 3, %v1250
        %v1252 = vrot.slane %v1226, %v1251
        %1254 = vbcast.lane.b32.xlu0 %v1252, 256
        %v1255 = vpop.permute.xlu0 %1254
        %v1256 = vlaneseq
        %v1257 = vshrl.u32 %v1256, 7
        %v1258 = vsub.s32 4, %v1257
        %v1259 = vrot.slane %v1226, %v1258
        %1261 = vbcast.lane.b32.xlu0 %v1259, 256
        %v1262 = vpop.permute.xlu0 %1261
        %v1263 = vlaneseq
        %v1264 = vshrl.u32 %v1263, 7
        %v1265 = vsub.s32 5, %v1264
        %v1266 = vrot.slane %v1226, %v1265
        %1268 = vbcast.lane.b32.xlu0 %v1266, 256
        %v1269 = vpop.permute.xlu0 %1268
        %v1270 = vlaneseq
        %v1271 = vshrl.u32 %v1270, 7
        %v1272 = vsub.s32 6, %v1271
        %v1273 = vrot.slane %v1226, %v1272
        %1275 = vbcast.lane.b32.xlu0 %v1273, 256
        %v1276 = vpop.permute.xlu0 %1275
        %v1277 = vlaneseq
        %v1278 = vshrl.u32 %v1277, 7
        %v1279 = vsub.s32 7, %v1278
        %v1280 = vrot.slane %v1226, %v1279
        %1282 = vbcast.lane.b32.xlu0 %v1280, 256
        %v1283 = vpop.permute.xlu0 %1282
        %v1292 = vadd.f32 %v1204, %v1234
        %v1293 = vadd.f32 %v1207, %v1241
        %v1294 = vadd.f32 %v1210, %v1248
        %v1295 = vadd.f32 %v1213, %v1255
        %v1296 = vadd.f32 %v1216, %v1262
        %v1297 = vadd.f32 %v1219, %v1269
        %v1298 = vadd.f32 %v1222, %v1276
        %v1299 = vadd.f32 %v1225, %v1283
        %1308 = vset.pattern.permute.xlu0 0
        %1309 = vperm.xlu0 %1308, %v1292
        %v1310 = vpop.permute.xlu0 %1309
        %1311 = vset.pattern.permute.xlu0 0
        %1312 = vperm.xlu0 %1311, %v1293
        %v1313 = vpop.permute.xlu0 %1312
        %1314 = vset.pattern.permute.xlu0 0
        %1315 = vperm.xlu0 %1314, %v1294
        %v1316 = vpop.permute.xlu0 %1315
        %1317 = vset.pattern.permute.xlu0 0
        %1318 = vperm.xlu0 %1317, %v1295
        %v1319 = vpop.permute.xlu0 %1318
        %1320 = vset.pattern.permute.xlu0 0
        %1321 = vperm.xlu0 %1320, %v1296
        %v1322 = vpop.permute.xlu0 %1321
        %1323 = vset.pattern.permute.xlu0 0
        %1324 = vperm.xlu0 %1323, %v1297
        %v1325 = vpop.permute.xlu0 %1324
        %1326 = vset.pattern.permute.xlu0 0
        %1327 = vperm.xlu0 %1326, %v1298
        %v1328 = vpop.permute.xlu0 %1327
        %1329 = vset.pattern.permute.xlu0 0
        %1330 = vperm.xlu0 %1329, %v1299
        %v1331 = vpop.permute.xlu0 %1330
        %v1332 = vlaneseq
        %v1333 = vshrl.u32 %v1332, 7
        %v1334 = vsub.s32 %v695, %v1333
        %v1335 = vrot.slane %v1310, %v1334
        %v1336 = vlaneseq
        %v1337 = vshrl.u32 %v1336, 7
        %v1338 = vsub.s32 %v695, %v1337
        %v1339 = vrot.slane %v1313, %v1338
        %v1340 = vlaneseq
        %v1341 = vshrl.u32 %v1340, 7
        %v1342 = vsub.s32 %v695, %v1341
        %v1343 = vrot.slane %v1316, %v1342
        %v1344 = vlaneseq
        %v1345 = vshrl.u32 %v1344, 7
        %v1346 = vsub.s32 %v695, %v1345
        %v1347 = vrot.slane %v1319, %v1346
        %v1348 = vlaneseq
        %v1349 = vshrl.u32 %v1348, 7
        %v1350 = vsub.s32 %v695, %v1349
        %v1351 = vrot.slane %v1322, %v1350
        %v1352 = vlaneseq
        %v1353 = vshrl.u32 %v1352, 7
        %v1354 = vsub.s32 %v695, %v1353
        %v1355 = vrot.slane %v1325, %v1354
        %v1356 = vlaneseq
        %v1357 = vshrl.u32 %v1356, 7
        %v1358 = vsub.s32 %v695, %v1357
        %v1359 = vrot.slane %v1328, %v1358
        %v1360 = vlaneseq
        %v1361 = vshrl.u32 %v1360, 7
        %v1362 = vsub.s32 %v695, %v1361
        %v1363 = vrot.slane %v1331, %v1362
        %v1364 = vsel %vm712, %v1339, %v1335
        %v1365 = vsel %vm714, %v1343, %v1364
        %v1366 = vsel %vm716, %v1347, %v1365
        %vm1367 = vcmask 1044484
        %v1368 = vsel %vm1367, %v1351, %v1366
        %vm1369 = vcmask 1045509
        %v1370 = vsel %vm1369, %v1355, %v1368
        %vm1371 = vcmask 1046534
        %v1372 = vsel %vm1371, %v1359, %v1370
        %vm1373 = vcmask 1047559
        %v1374 = vsel %vm1373, %v1363, %v1372
        %v1376 = vsel %vm467, %v1374, -inf
        %1377 = vmax.xlane.f32.xlu0 %v1376
        %v1378 = vpop.xlane.xlu0 %1377
        %v1380 = vlaneseq
        %v1381 = vshrl.u32 %v1380, 7
        %v1382 = vsub.s32 0, %v1381
        %v1383 = vrot.slane %v1378, %v1382
        %v1384 = vlaneseq
        %v1385 = vshrl.u32 %v1384, 7
        %v1386 = vsub.s32 1, %v1385
        %v1387 = vrot.slane %v1378, %v1386
        %v1388 = vlaneseq
        %v1389 = vshrl.u32 %v1388, 7
        %v1390 = vsub.s32 2, %v1389
        %v1391 = vrot.slane %v1378, %v1390
        %v1392 = vlaneseq
        %v1393 = vshrl.u32 %v1392, 7
        %v1394 = vsub.s32 3, %v1393
        %v1395 = vrot.slane %v1378, %v1394
        %v1396 = vlaneseq
        %v1397 = vshrl.u32 %v1396, 7
        %v1398 = vsub.s32 4, %v1397
        %v1399 = vrot.slane %v1378, %v1398
        %v1400 = vlaneseq
        %v1401 = vshrl.u32 %v1400, 7
        %v1402 = vsub.s32 5, %v1401
        %v1403 = vrot.slane %v1378, %v1402
        %v1404 = vlaneseq
        %v1405 = vshrl.u32 %v1404, 7
        %v1406 = vsub.s32 6, %v1405
        %v1407 = vrot.slane %v1378, %v1406
        %v1408 = vlaneseq
        %v1409 = vshrl.u32 %v1408, 7
        %v1410 = vsub.s32 7, %v1409
        %v1411 = vrot.slane %v1378, %v1410
        %v1420 = vsub.f32 %v1292, %v1383
        %v1421 = vsub.f32 %v1293, %v1387
        %v1422 = vsub.f32 %v1294, %v1391
        %v1423 = vsub.f32 %v1295, %v1395
        %v1424 = vsub.f32 %v1296, %v1399
        %v1425 = vsub.f32 %v1297, %v1403
        %v1426 = vsub.f32 %v1298, %v1407
        %v1427 = vsub.f32 %v1299, %v1411
        %v1428 = vmul.f32 %v1420, 1.442695
        %v1429 = vpow.pop %v1428
        %v1430 = vmul.f32 %v1421, 1.442695
        %v1431 = vpow.pop %v1430
        %v1432 = vmul.f32 %v1422, 1.442695
        %v1433 = vpow.pop %v1432
        %v1434 = vmul.f32 %v1423, 1.442695
        %v1435 = vpow.pop %v1434
        %v1436 = vmul.f32 %v1424, 1.442695
        %v1437 = vpow.pop %v1436
        %v1438 = vmul.f32 %v1425, 1.442695
        %v1439 = vpow.pop %v1438
        %v1440 = vmul.f32 %v1426, 1.442695
        %v1441 = vpow.pop %v1440
        %v1442 = vmul.f32 %v1427, 1.442695
        %v1443 = vpow.pop %v1442
        %1452 = vset.pattern.permute.xlu0 0
        %1453 = vperm.xlu0 %1452, %v1429
        %v1454 = vpop.permute.xlu0 %1453
        %1455 = vset.pattern.permute.xlu0 0
        %1456 = vperm.xlu0 %1455, %v1431
        %v1457 = vpop.permute.xlu0 %1456
        %1458 = vset.pattern.permute.xlu0 0
        %1459 = vperm.xlu0 %1458, %v1433
        %v1460 = vpop.permute.xlu0 %1459
        %1461 = vset.pattern.permute.xlu0 0
        %1462 = vperm.xlu0 %1461, %v1435
        %v1463 = vpop.permute.xlu0 %1462
        %1464 = vset.pattern.permute.xlu0 0
        %1465 = vperm.xlu0 %1464, %v1437
        %v1466 = vpop.permute.xlu0 %1465
        %1467 = vset.pattern.permute.xlu0 0
        %1468 = vperm.xlu0 %1467, %v1439
        %v1469 = vpop.permute.xlu0 %1468
        %1470 = vset.pattern.permute.xlu0 0
        %1471 = vperm.xlu0 %1470, %v1441
        %v1472 = vpop.permute.xlu0 %1471
        %1473 = vset.pattern.permute.xlu0 0
        %1474 = vperm.xlu0 %1473, %v1443
        %v1475 = vpop.permute.xlu0 %1474
        %v1476 = vlaneseq
        %v1477 = vshrl.u32 %v1476, 7
        %v1478 = vsub.s32 %v695, %v1477
        %v1479 = vrot.slane %v1454, %v1478
        %v1480 = vlaneseq
        %v1481 = vshrl.u32 %v1480, 7
        %v1482 = vsub.s32 %v695, %v1481
        %v1483 = vrot.slane %v1457, %v1482
        %v1484 = vlaneseq
        %v1485 = vshrl.u32 %v1484, 7
        %v1486 = vsub.s32 %v695, %v1485
        %v1487 = vrot.slane %v1460, %v1486
        %v1488 = vlaneseq
        %v1489 = vshrl.u32 %v1488, 7
        %v1490 = vsub.s32 %v695, %v1489
        %v1491 = vrot.slane %v1463, %v1490
        %v1492 = vlaneseq
        %v1493 = vshrl.u32 %v1492, 7
        %v1494 = vsub.s32 %v695, %v1493
        %v1495 = vrot.slane %v1466, %v1494
        %v1496 = vlaneseq
        %v1497 = vshrl.u32 %v1496, 7
        %v1498 = vsub.s32 %v695, %v1497
        %v1499 = vrot.slane %v1469, %v1498
        %v1500 = vlaneseq
        %v1501 = vshrl.u32 %v1500, 7
        %v1502 = vsub.s32 %v695, %v1501
        %v1503 = vrot.slane %v1472, %v1502
        %v1504 = vlaneseq
        %v1505 = vshrl.u32 %v1504, 7
        %v1506 = vsub.s32 %v695, %v1505
        %v1507 = vrot.slane %v1475, %v1506
        %v1508 = vsel %vm712, %v1483, %v1479
        %v1509 = vsel %vm714, %v1487, %v1508
        %v1510 = vsel %vm716, %v1491, %v1509
        %v1511 = vsel %vm1367, %v1495, %v1510
        %v1512 = vsel %vm1369, %v1499, %v1511
        %v1513 = vsel %vm1371, %v1503, %v1512
        %v1514 = vsel %vm1373, %v1507, %v1513
        %v1516 = vsel %vm467, %v1514, 0.0
        %1517 = vadd.xlane.f32.xlu0 %v1516
        %v1518 = vpop.xlane.xlu0 %1517
        %v1519 = vrcp.pop %v1518
        %v1521 = vlaneseq
        %v1522 = vshrl.u32 %v1521, 7
        %v1523 = vsub.s32 0, %v1522
        %v1524 = vrot.slane %v1519, %v1523
        %v1525 = vlaneseq
        %v1526 = vshrl.u32 %v1525, 7
        %v1527 = vsub.s32 1, %v1526
        %v1528 = vrot.slane %v1519, %v1527
        %v1529 = vlaneseq
        %v1530 = vshrl.u32 %v1529, 7
        %v1531 = vsub.s32 2, %v1530
        %v1532 = vrot.slane %v1519, %v1531
        %v1533 = vlaneseq
        %v1534 = vshrl.u32 %v1533, 7
        %v1535 = vsub.s32 3, %v1534
        %v1536 = vrot.slane %v1519, %v1535
        %v1537 = vlaneseq
        %v1538 = vshrl.u32 %v1537, 7
        %v1539 = vsub.s32 4, %v1538
        %v1540 = vrot.slane %v1519, %v1539
        %v1541 = vlaneseq
        %v1542 = vshrl.u32 %v1541, 7
        %v1543 = vsub.s32 5, %v1542
        %v1544 = vrot.slane %v1519, %v1543
        %v1545 = vlaneseq
        %v1546 = vshrl.u32 %v1545, 7
        %v1547 = vsub.s32 6, %v1546
        %v1548 = vrot.slane %v1519, %v1547
        %v1549 = vlaneseq
        %v1550 = vshrl.u32 %v1549, 7
        %v1551 = vsub.s32 7, %v1550
        %v1552 = vrot.slane %v1519, %v1551
        %v1561 = vmul.f32 %v1429, %v1524
        %v1562 = vmul.f32 %v1431, %v1528
        %v1563 = vmul.f32 %v1433, %v1532
        %v1564 = vmul.f32 %v1435, %v1536
        %v1565 = vmul.f32 %v1437, %v1540
        %v1566 = vmul.f32 %v1439, %v1544
        %v1567 = vmul.f32 %v1441, %v1548
        %v1568 = vmul.f32 %v1443, %v1552
        %1577 = vset.pattern.permute.xlu0 0
        %1578 = vperm.xlu0 %1577, %v1561
        %v1579 = vpop.permute.xlu0 %1578
        %1580 = vset.pattern.permute.xlu0 0
        %1581 = vperm.xlu0 %1580, %v1562
        %v1582 = vpop.permute.xlu0 %1581
        %1583 = vset.pattern.permute.xlu0 0
        %1584 = vperm.xlu0 %1583, %v1563
        %v1585 = vpop.permute.xlu0 %1584
        %1586 = vset.pattern.permute.xlu0 0
        %1587 = vperm.xlu0 %1586, %v1564
        %v1588 = vpop.permute.xlu0 %1587
        %1589 = vset.pattern.permute.xlu0 0
        %1590 = vperm.xlu0 %1589, %v1565
        %v1591 = vpop.permute.xlu0 %1590
        %1592 = vset.pattern.permute.xlu0 0
        %1593 = vperm.xlu0 %1592, %v1566
        %v1594 = vpop.permute.xlu0 %1593
        %1595 = vset.pattern.permute.xlu0 0
        %1596 = vperm.xlu0 %1595, %v1567
        %v1597 = vpop.permute.xlu0 %1596
        %1598 = vset.pattern.permute.xlu0 0
        %1599 = vperm.xlu0 %1598, %v1568
        %v1600 = vpop.permute.xlu0 %1599
        %v1601 = vlaneseq
        %v1602 = vshrl.u32 %v1601, 7
        %v1603 = vsub.s32 %v695, %v1602
        %v1604 = vrot.slane %v1579, %v1603
        %v1605 = vlaneseq
        %v1606 = vshrl.u32 %v1605, 7
        %v1607 = vsub.s32 %v695, %v1606
        %v1608 = vrot.slane %v1582, %v1607
        %v1609 = vlaneseq
        %v1610 = vshrl.u32 %v1609, 7
        %v1611 = vsub.s32 %v695, %v1610
        %v1612 = vrot.slane %v1585, %v1611
        %v1613 = vlaneseq
        %v1614 = vshrl.u32 %v1613, 7
        %v1615 = vsub.s32 %v695, %v1614
        %v1616 = vrot.slane %v1588, %v1615
        %v1617 = vlaneseq
        %v1618 = vshrl.u32 %v1617, 7
        %v1619 = vsub.s32 %v695, %v1618
        %v1620 = vrot.slane %v1591, %v1619
        %v1621 = vlaneseq
        %v1622 = vshrl.u32 %v1621, 7
        %v1623 = vsub.s32 %v695, %v1622
        %v1624 = vrot.slane %v1594, %v1623
        %v1625 = vlaneseq
        %v1626 = vshrl.u32 %v1625, 7
        %v1627 = vsub.s32 %v695, %v1626
        %v1628 = vrot.slane %v1597, %v1627
        %v1629 = vlaneseq
        %v1630 = vshrl.u32 %v1629, 7
        %v1631 = vsub.s32 %v695, %v1630
        %v1632 = vrot.slane %v1600, %v1631
        %v1633 = vsel %vm712, %v1608, %v1604
        %v1634 = vsel %vm714, %v1612, %v1633
        %v1635 = vsel %vm716, %v1616, %v1634
        %v1636 = vsel %vm1367, %v1620, %v1635
        %v1637 = vsel %vm1369, %v1624, %v1636
        %v1638 = vsel %vm1371, %v1628, %v1637
        %v1639 = vsel %vm1373, %v1632, %v1638
        %v1640 = vsel %vm467, %v1639, 0
        %1642 = vmatprep.subr.mxu0 0.0
        %1643 = vmatpush1.msra.mxu0 0.0
        %1644 = vmatprep.subr.mxu0 0.0
        %1645 = vmatpush1.msra.mxu0 0.0
        %1646 = vmatprep.subr.mxu0 0.0
        %1647 = vmatpush1.msra.mxu0 0.0
        %1648 = vmatprep.subr.mxu0 0.0
        %1649 = vmatpush1.msra.mxu0 0.0
        %1650 = vmatprep.subr.mxu0 0.0
        %1651 = vmatpush1.msra.mxu0 0.0
        %1652 = vmatprep.subr.mxu0 0.0
        %1653 = vmatpush1.msra.mxu0 0.0
        %1654 = vmatprep.subr.mxu0 0.0
        %1655 = vmatpush1.msra.mxu0 0.0
        %1656 = vmatprep.subr.mxu0 0.0
        %1657 = vmatpush1.msra.mxu0 0.0
        %1658 = vmatprep.subr.mxu0 0.0
        %1659 = vmatpush1.msra.mxu0 0.0
        %1660 = vmatprep.subr.mxu0 0.0
        %1661 = vmatpush1.msra.mxu0 0.0
        %1662 = vmatprep.subr.mxu0 0.0
        %1663 = vmatpush1.msra.mxu0 0.0
        %1664 = vmatprep.subr.mxu0 0.0
        %1665 = vmatpush1.msra.mxu0 0.0
        %1666 = vmatprep.subr.mxu0 0.0
        %1667 = vmatpush1.msra.mxu0 0.0
        %1668 = vmatprep.subr.mxu0 0.0
        %1669 = vmatpush1.msra.mxu0 0.0
        %1670 = vmatprep.subr.mxu0 0.0
        %1671 = vmatpush1.msra.mxu0 0.0
        %1672 = vmatprep.subr.mxu0 0.0
        %1673 = vmatpush1.msra.mxu0 %v433
        %1674 = vmatprep.subr.mxu0 0.0
        %1675 = vmatpush2.msra.mxu0 0.0
        %1676 = vmatprep.subr.mxu0 0.0
        %1677 = vmatpush2.msra.mxu0 0.0
        %1678 = vmatprep.subr.mxu0 0.0
        %1679 = vmatpush2.msra.mxu0 0.0
        %1680 = vmatprep.subr.mxu0 0.0
        %1681 = vmatpush2.msra.mxu0 0.0
        %1682 = vmatprep.subr.mxu0 0.0
        %1683 = vmatpush2.msra.mxu0 0.0
        %1684 = vmatprep.subr.mxu0 0.0
        %1685 = vmatpush2.msra.mxu0 0.0
        %1686 = vmatprep.subr.mxu0 0.0
        %1687 = vmatpush2.msra.mxu0 0.0
        %1688 = vmatprep.subr.mxu0 0.0
        %1689 = vmatpush2.msra.mxu0 0.0
        %1690 = vmatprep.subr.mxu0 0.0
        %1691 = vmatpush2.msra.mxu0 0.0
        %1692 = vmatprep.subr.mxu0 0.0
        %1693 = vmatpush2.msra.mxu0 0.0
        %1694 = vmatprep.subr.mxu0 0.0
        %1695 = vmatpush2.msra.mxu0 0.0
        %1696 = vmatprep.subr.mxu0 0.0
        %1697 = vmatpush2.msra.mxu0 0.0
        %1698 = vmatprep.subr.mxu0 0.0
        %1699 = vmatpush2.msra.mxu0 0.0
        %1700 = vmatprep.subr.mxu0 0.0
        %1701 = vmatpush2.msra.mxu0 0.0
        %1702 = vmatprep.subr.mxu0 0.0
        %1703 = vmatpush2.msra.mxu0 0.0
        %1704 = vmatprep.subr.mxu0 0.0
        %1705 = vmatpush2.msra.mxu0 0.0
        %1706 = vmatprep.mubr.f32.mxu0 0.0
        %1707 = vmatmul.mubr.f32.gmra.mxu0 %v1640
        %v1708 = vpop.f32.mrf.mxu0
        %v1709 = vadd.f32 0.0, %v1708
        %v1710 = vpop.f32.mrf.mxu0
        %1711 = vdwg.mxu0
        %v1712 = vxor.u32 %v1709, 2147483648
        %v1713 = vmul.f32 %v1712, 1.442695
        %v1714 = vpow.pop %v1713
        %v1715 = vadd.f32 %v1714, 1.0
        %v1716 = vrcp.pop %v1715
        %v1717 = vmul.f32 1.0, %v1716
        %v1718 = vld [vmem:[%s9] sm:$0xff]
        %v1719 = vld [vmem:[%s9 + $0x8] sm:$0xf]
        %v1721 = vrot.slane %v1718, 4
        %v1723 = vsel %vm856, %v954, 0
        %v1725 = vsel %vm859, %v1721, 0
        %1727 = vmatprep.subr.mxu0 0.0
        %1728 = vmatpush1.msra.mxu0 0.0
        %1729 = vmatprep.subr.mxu0 0.0
        %1730 = vmatpush1.msra.mxu0 0.0
        %1731 = vmatprep.subr.mxu0 0.0
        %1732 = vmatpush1.msra.mxu0 0.0
        %1733 = vmatprep.subr.mxu0 0.0
        %1734 = vmatpush1.msra.mxu0 0.0
        %1735 = vmatprep.subr.mxu0 0.0
        %1736 = vmatpush1.msra.mxu0 0.0
        %1737 = vmatprep.subr.mxu0 0.0
        %1738 = vmatpush1.msra.mxu0 0.0
        %1739 = vmatprep.subr.mxu0 0.0
        %1740 = vmatpush1.msra.mxu0 0.0
        %1741 = vmatprep.subr.mxu0 0.0
        %1742 = vmatpush1.msra.mxu0 0.0
        %1743 = vmatprep.subr.mxu0 0.0
        %1744 = vmatpush1.msra.mxu0 0.0
        %1745 = vmatprep.subr.mxu0 0.0
        %1746 = vmatpush1.msra.mxu0 0.0
        %1747 = vmatprep.subr.mxu0 0.0
        %1748 = vmatpush1.msra.mxu0 0.0
        %1749 = vmatprep.subr.mxu0 0.0
        %1750 = vmatpush1.msra.mxu0 0.0
        %1751 = vmatprep.subr.mxu0 0.0
        %1752 = vmatpush1.msra.mxu0 0.0
        %1753 = vmatprep.subr.mxu0 0.0
        %1754 = vmatpush1.msra.mxu0 0.0
        %1755 = vmatprep.subr.mxu0 0.0
        %1756 = vmatpush1.msra.mxu0 0.0
        %1757 = vmatprep.subr.mxu0 0.0
        %1758 = vmatpush1.msra.mxu0 %v1725
        %1759 = vmatprep.subr.mxu0 0.0
        %1760 = vmatpush2.msra.mxu0 0.0
        %1761 = vmatprep.subr.mxu0 0.0
        %1762 = vmatpush2.msra.mxu0 0.0
        %1763 = vmatprep.subr.mxu0 0.0
        %1764 = vmatpush2.msra.mxu0 0.0
        %1765 = vmatprep.subr.mxu0 0.0
        %1766 = vmatpush2.msra.mxu0 0.0
        %1767 = vmatprep.subr.mxu0 0.0
        %1768 = vmatpush2.msra.mxu0 0.0
        %1769 = vmatprep.subr.mxu0 0.0
        %1770 = vmatpush2.msra.mxu0 0.0
        %1771 = vmatprep.subr.mxu0 0.0
        %1772 = vmatpush2.msra.mxu0 0.0
        %1773 = vmatprep.subr.mxu0 0.0
        %1774 = vmatpush2.msra.mxu0 0.0
        %1775 = vmatprep.subr.mxu0 0.0
        %1776 = vmatpush2.msra.mxu0 0.0
        %1777 = vmatprep.subr.mxu0 0.0
        %1778 = vmatpush2.msra.mxu0 0.0
        %1779 = vmatprep.subr.mxu0 0.0
        %1780 = vmatpush2.msra.mxu0 0.0
        %1781 = vmatprep.subr.mxu0 0.0
        %1782 = vmatpush2.msra.mxu0 0.0
        %1783 = vmatprep.subr.mxu0 0.0
        %1784 = vmatpush2.msra.mxu0 0.0
        %1785 = vmatprep.subr.mxu0 0.0
        %1786 = vmatpush2.msra.mxu0 0.0
        %1787 = vmatprep.subr.mxu0 0.0
        %1788 = vmatpush2.msra.mxu0 0.0
        %1789 = vmatprep.subr.mxu0 0.0
        %1790 = vmatpush2.msra.mxu0 0.0
        %1791 = vmatprep.mubr.f32.mxu0 0.0
        %1792 = vmatmul.mubr.f32.gmra.mxu0 %v1723
        %v1793 = vpop.f32.mrf.mxu0
        %v1794 = vadd.f32 0.0, %v1793
        %v1795 = vpop.f32.mrf.mxu0
        %1796 = vdwg.mxu0
        %v1797 = vsel %vm859, %v1718, 0
        %1799 = vmatprep.subr.mxu0 0.0
        %1800 = vmatpush1.msra.mxu0 0.0
        %1801 = vmatprep.subr.mxu0 0.0
        %1802 = vmatpush1.msra.mxu0 0.0
        %1803 = vmatprep.subr.mxu0 0.0
        %1804 = vmatpush1.msra.mxu0 0.0
        %1805 = vmatprep.subr.mxu0 0.0
        %1806 = vmatpush1.msra.mxu0 0.0
        %1807 = vmatprep.subr.mxu0 0.0
        %1808 = vmatpush1.msra.mxu0 0.0
        %1809 = vmatprep.subr.mxu0 0.0
        %1810 = vmatpush1.msra.mxu0 0.0
        %1811 = vmatprep.subr.mxu0 0.0
        %1812 = vmatpush1.msra.mxu0 0.0
        %1813 = vmatprep.subr.mxu0 0.0
        %1814 = vmatpush1.msra.mxu0 0.0
        %1815 = vmatprep.subr.mxu0 0.0
        %1816 = vmatpush1.msra.mxu0 0.0
        %1817 = vmatprep.subr.mxu0 0.0
        %1818 = vmatpush1.msra.mxu0 0.0
        %1819 = vmatprep.subr.mxu0 0.0
        %1820 = vmatpush1.msra.mxu0 0.0
        %1821 = vmatprep.subr.mxu0 0.0
        %1822 = vmatpush1.msra.mxu0 0.0
        %1823 = vmatprep.subr.mxu0 0.0
        %1824 = vmatpush1.msra.mxu0 0.0
        %1825 = vmatprep.subr.mxu0 0.0
        %1826 = vmatpush1.msra.mxu0 0.0
        %1827 = vmatprep.subr.mxu0 0.0
        %1828 = vmatpush1.msra.mxu0 0.0
        %1829 = vmatprep.subr.mxu0 0.0
        %1830 = vmatpush1.msra.mxu0 %v1797
        %1831 = vmatprep.subr.mxu0 0.0
        %1832 = vmatpush2.msra.mxu0 0.0
        %1833 = vmatprep.subr.mxu0 0.0
        %1834 = vmatpush2.msra.mxu0 0.0
        %1835 = vmatprep.subr.mxu0 0.0
        %1836 = vmatpush2.msra.mxu0 0.0
        %1837 = vmatprep.subr.mxu0 0.0
        %1838 = vmatpush2.msra.mxu0 0.0
        %1839 = vmatprep.subr.mxu0 0.0
        %1840 = vmatpush2.msra.mxu0 0.0
        %1841 = vmatprep.subr.mxu0 0.0
        %1842 = vmatpush2.msra.mxu0 0.0
        %1843 = vmatprep.subr.mxu0 0.0
        %1844 = vmatpush2.msra.mxu0 0.0
        %1845 = vmatprep.subr.mxu0 0.0
        %1846 = vmatpush2.msra.mxu0 0.0
        %1847 = vmatprep.subr.mxu0 0.0
        %1848 = vmatpush2.msra.mxu0 0.0
        %1849 = vmatprep.subr.mxu0 0.0
        %1850 = vmatpush2.msra.mxu0 0.0
        %1851 = vmatprep.subr.mxu0 0.0
        %1852 = vmatpush2.msra.mxu0 0.0
        %1853 = vmatprep.subr.mxu0 0.0
        %1854 = vmatpush2.msra.mxu0 0.0
        %1855 = vmatprep.subr.mxu0 0.0
        %1856 = vmatpush2.msra.mxu0 0.0
        %1857 = vmatprep.subr.mxu0 0.0
        %1858 = vmatpush2.msra.mxu0 0.0
        %1859 = vmatprep.subr.mxu0 0.0
        %1860 = vmatpush2.msra.mxu0 0.0
        %1861 = vmatprep.subr.mxu0 0.0
        %1862 = vmatpush2.msra.mxu0 0.0
        %1863 = vmatprep.mubr.f32.mxu0 0.0
        %1864 = vmatmul.mubr.f32.gmra.mxu0 %v972
        %v1865 = vpop.f32.mrf.mxu0
        %v1866 = vadd.f32 %v1794, %v1865
        %v1867 = vpop.f32.mrf.mxu0
        %1868 = vdwg.mxu0
        %v1870 = vsel %vm856, %v1717, 0
        %v1873 = vsel %vm859, %v1719, 0
        %1875 = vmatprep.subr.mxu0 0.0
        %1876 = vmatpush1.msra.mxu0 0.0
        %1877 = vmatprep.subr.mxu0 0.0
        %1878 = vmatpush1.msra.mxu0 0.0
        %1879 = vmatprep.subr.mxu0 0.0
        %1880 = vmatpush1.msra.mxu0 0.0
        %1881 = vmatprep.subr.mxu0 0.0
        %1882 = vmatpush1.msra.mxu0 0.0
        %1883 = vmatprep.subr.mxu0 0.0
        %1884 = vmatpush1.msra.mxu0 0.0
        %1885 = vmatprep.subr.mxu0 0.0
        %1886 = vmatpush1.msra.mxu0 0.0
        %1887 = vmatprep.subr.mxu0 0.0
        %1888 = vmatpush1.msra.mxu0 0.0
        %1889 = vmatprep.subr.mxu0 0.0
        %1890 = vmatpush1.msra.mxu0 0.0
        %1891 = vmatprep.subr.mxu0 0.0
        %1892 = vmatpush1.msra.mxu0 0.0
        %1893 = vmatprep.subr.mxu0 0.0
        %1894 = vmatpush1.msra.mxu0 0.0
        %1895 = vmatprep.subr.mxu0 0.0
        %1896 = vmatpush1.msra.mxu0 0.0
        %1897 = vmatprep.subr.mxu0 0.0
        %1898 = vmatpush1.msra.mxu0 0.0
        %1899 = vmatprep.subr.mxu0 0.0
        %1900 = vmatpush1.msra.mxu0 0.0
        %1901 = vmatprep.subr.mxu0 0.0
        %1902 = vmatpush1.msra.mxu0 0.0
        %1903 = vmatprep.subr.mxu0 0.0
        %1904 = vmatpush1.msra.mxu0 0.0
        %1905 = vmatprep.subr.mxu0 0.0
        %1906 = vmatpush1.msra.mxu0 %v1873
        %1907 = vmatprep.subr.mxu0 0.0
        %1908 = vmatpush2.msra.mxu0 0.0
        %1909 = vmatprep.subr.mxu0 0.0
        %1910 = vmatpush2.msra.mxu0 0.0
        %1911 = vmatprep.subr.mxu0 0.0
        %1912 = vmatpush2.msra.mxu0 0.0
        %1913 = vmatprep.subr.mxu0 0.0
        %1914 = vmatpush2.msra.mxu0 0.0
        %1915 = vmatprep.subr.mxu0 0.0
        %1916 = vmatpush2.msra.mxu0 0.0
        %1917 = vmatprep.subr.mxu0 0.0
        %1918 = vmatpush2.msra.mxu0 0.0
        %1919 = vmatprep.subr.mxu0 0.0
        %1920 = vmatpush2.msra.mxu0 0.0
        %1921 = vmatprep.subr.mxu0 0.0
        %1922 = vmatpush2.msra.mxu0 0.0
        %1923 = vmatprep.subr.mxu0 0.0
        %1924 = vmatpush2.msra.mxu0 0.0
        %1925 = vmatprep.subr.mxu0 0.0
        %1926 = vmatpush2.msra.mxu0 0.0
        %1927 = vmatprep.subr.mxu0 0.0
        %1928 = vmatpush2.msra.mxu0 0.0
        %1929 = vmatprep.subr.mxu0 0.0
        %1930 = vmatpush2.msra.mxu0 0.0
        %1931 = vmatprep.subr.mxu0 0.0
        %1932 = vmatpush2.msra.mxu0 0.0
        %1933 = vmatprep.subr.mxu0 0.0
        %1934 = vmatpush2.msra.mxu0 0.0
        %1935 = vmatprep.subr.mxu0 0.0
        %1936 = vmatpush2.msra.mxu0 0.0
        %1937 = vmatprep.subr.mxu0 0.0
        %1938 = vmatpush2.msra.mxu0 0.0
        %1939 = vmatprep.mubr.f32.mxu0 0.0
        %1940 = vmatmul.mubr.f32.gmra.mxu0 %v1870
        %v1941 = vpop.f32.mrf.mxu0
        %v1942 = vadd.f32 0.0, %v1941
        %v1943 = vpop.f32.mrf.mxu0
        %1944 = vdwg.mxu0
        %v1945 = vadd.f32 %v1866, %v1942
        %v1946 = vld [vmem:[#allocation7] sm:$0x1]
        %v1948 = vlaneseq
        %v1949 = vshrl.u32 %v1948, 7
        %v1950 = vsub.s32 0, %v1949
        %v1951 = vrot.slane %v1946, %v1950
        %v1953 = vadd.f32 %v1945, %v1951
        %vm1954 = vcmask 785408
        %1955 = vst.msk [vmem:[%s432] sm:$0xff] %vm1954, %v1953
        %p1956 = scmp.lt.s32.totalorder %s25, 1
        %s1957 = scalar_select %p1956, %s25, 1
        %s1958 = smul.addr %s1957, 8
        %s1959 = scalar_lea.vmem %s11, %s1958
        // Predicated region
        $region81: #{gatrans_forward.2} parent=63 // pred_check
          %p1960 = pneg %p279
        $region82: #{gatrans_forward.2} parent=63 // pred_check_branch
          %1962 = sbr.rel (%p1960) target = $region84
        $region83: #{gatrans_forward.2} parent=63 // pred_region
          _
        $region84: #{gatrans_forward.2} parent=63 // pred_fallthru
          _
      $region64: #{gatrans_forward.2} parent=5 // pred_fallthru
        _
      %p1963 = scmp.le.s32.totalorder 2, %s20
      // Predicated region
      $region85: #{gatrans_forward.2} parent=5 // pred_check
        %p1964 = pneg %p1963
      $region86: #{gatrans_forward.2} parent=5 // pred_check_branch
        %1966 = sbr.rel (%p1964) target = $region88
      $region87: #{gatrans_forward.2} parent=5 // pred_region
        %s1967 = ssub.s32 %s20, 2
        // Predicated region
        $region89: #{gatrans_forward.2} parent=87 // pred_check
          %p1968 = pneg %p285
        $region90: #{gatrans_forward.2} parent=87 // pred_check_branch
          %1970 = sbr.rel (%p1968) target = $region92
        $region91: #{gatrans_forward.2} parent=87 // pred_region
          %p1971 = scmp.lt.s32.totalorder %s26, 1
          %s1972 = scalar_select %p1971, %s26, 1
          %s1973 = smul.addr %s1972, 8
          %s1974 = scalar_lea.vmem %s11, %s1973
        $region92: #{gatrans_forward.2} parent=87 // pred_fallthru
          _
      $region88: #{gatrans_forward.2} parent=5 // pred_fallthru
        _
    $region6: #{gatrans_forward.2} parent=1 // loop_footer
      %s24 = sadd.s32 1, %s20
    $region7: #{gatrans_forward.2} parent=1 // loop_footer_branch
      %19 = sbr.rel target = $region3
    $region8: #{gatrans_forward.2} parent=1 // loop_exit
      _
    %1975 = vsyncpa [#allocation3], 1
    %s1976 = scalar_lea.sflag [#allocation3], 1
    %1977 = vsyncpa %s1976, 1
    %1978 = vsyncpa [#allocation5], 1
    %1979 = vsyncpa [#allocation8], 1

// kernel: gatrans_forward.3
$region0: #{gatrans_forward.3}
  #allocation0 [shape = 'u32[]', space=smem, size = 0x4, offset = 0x4, fixed_abs, tag = 'smem constant byte address 0x4 - core index']
  #allocation1 [shape = 'u32[144,128]{1,0:T(1,128)}', space=vmem, size = 0x12000, scoped, tag = 'internal scratch']
  %s0 = inlined_call_operand.vmem [shape: f32[2,8,96], index: 0, kind: input, shape index: {}]
  %s1 = inlined_call_operand.vmem [shape: f32[32,96], index: 1, kind: input, shape index: {}]
  %s2 = inlined_call_operand.vmem [shape: f32[1,96], index: 2, kind: input, shape index: {}]
  %s3 = inlined_call_operand.vmem [shape: f32[32,32], index: 3, kind: input, shape index: {}]
  %s4 = inlined_call_operand.vmem [shape: f32[1,32], index: 4, kind: input, shape index: {}]
  %s5 = inlined_call_operand.vmem [shape: f32[32,4], index: 5, kind: input, shape index: {}]
  %s6 = inlined_call_operand.vmem [shape: f32[1,4], index: 6, kind: input, shape index: {}]
  %s7 = inlined_call_operand.hbm [shape: f32[8,32,96], index: 7, kind: input, shape index: {}]
  %s8 = inlined_call_operand.vmem [shape: f32[1,96], index: 8, kind: input, shape index: {}]
  %s9 = inlined_call_operand.vmem [shape: f32[32,96], index: 9, kind: input, shape index: {}]
  %s10 = inlined_call_operand.vmem [shape: f32[1,96], index: 10, kind: input, shape index: {}]
  %s11 = inlined_call_operand.vmem [shape: f32[32,4], index: 11, kind: input, shape index: {}]
  %s12 = inlined_call_operand.vmem [shape: f32[1,4], index: 12, kind: input, shape index: {}]
  %s13 = inlined_call_operand.hbm [shape: f32[2,4], index: 13, kind: output, shape index: {0}]
  %s14 = inlined_call_operand.vmem [shape: f32[2,8,4], index: 14, kind: output, shape index: {1}]
  %15 = xla_tuple %s13, %s14
  %s16 = sld [smem:[#allocation0]]
  $region74: #{gatrans_forward.3} parent=0
    _
  %s18 = ssub.s32 1, %s16
  %s19 = scalar_select 0, %s18, %s16
  $region1: #{gatrans_forward.3} parent=0
    #allocation2 [shape = 'u8[131072]{0}', space=vmem, size = 0x20000, scoped, tag = 'input window, operand 7, single buffered']
    #allocation3 [shape = 's32[1]{0}', space=sflag, size = 0x4, scoped, tag = 'scoped memory for gatrans_forward.3']
    #allocation4 [shape = 's32[1]{0}', space=sflag, size = 0x4, scoped, tag = 'scoped memory for gatrans_forward.3']
    #allocation5 [shape = 'u8[1024]{0}', space=vmem, size = 0x400, scoped, tag = 'output window, operand 0, single buffered']
    %20 = vsyncpa [#allocation3], 0
    %21 = vsyncpa [#allocation4], 0
    // Predicated region
    $region2: #{gatrans_forward.3} parent=1 // pred_check
      _
    $region3: #{gatrans_forward.3} parent=1 // pred_check_branch
      %23 = sbr.rel (0) target = $region5
    $region4: #{gatrans_forward.3} parent=1 // pred_region
      _
    $region5: #{gatrans_forward.3} parent=1 // pred_fallthru
      _
    // Predicated region
    $region6: #{gatrans_forward.3} parent=1 // pred_check
      _
    $region7: #{gatrans_forward.3} parent=1 // pred_check_branch
      %25 = sbr.rel (0) target = $region9
    $region8: #{gatrans_forward.3} parent=1 // pred_region
      _
    $region9: #{gatrans_forward.3} parent=1 // pred_fallthru
      _
    // Predicated region
    $region10: #{gatrans_forward.3} parent=1 // pred_check
      _
    $region11: #{gatrans_forward.3} parent=1 // pred_check_branch
      %27 = sbr.rel (0) target = $region13
    $region12: #{gatrans_forward.3} parent=1 // pred_region
      _
    $region13: #{gatrans_forward.3} parent=1 // pred_fallthru
      _
    // Predicated region
    $region14: #{gatrans_forward.3} parent=1 // pred_check
      _
    $region15: #{gatrans_forward.3} parent=1 // pred_check_branch
      %29 = sbr.rel (0) target = $region17
    $region16: #{gatrans_forward.3} parent=1 // pred_region
      _
    $region17: #{gatrans_forward.3} parent=1 // pred_fallthru
      _
    // Predicated region
    $region18: #{gatrans_forward.3} parent=1 // pred_check
      _
    $region19: #{gatrans_forward.3} parent=1 // pred_check_branch
      %31 = sbr.rel (0) target = $region21
    $region20: #{gatrans_forward.3} parent=1 // pred_region
      _
    $region21: #{gatrans_forward.3} parent=1 // pred_fallthru
      _
    // Predicated region
    $region22: #{gatrans_forward.3} parent=1 // pred_check
      _
    $region23: #{gatrans_forward.3} parent=1 // pred_check_branch
      %33 = sbr.rel (0) target = $region25
    $region24: #{gatrans_forward.3} parent=1 // pred_region
      _
    $region25: #{gatrans_forward.3} parent=1 // pred_fallthru
      _
    // Predicated region
    $region26: #{gatrans_forward.3} parent=1 // pred_check
      _
    $region27: #{gatrans_forward.3} parent=1 // pred_check_branch
      %35 = sbr.rel (0) target = $region29
    $region28: #{gatrans_forward.3} parent=1 // pred_region
      _
    $region29: #{gatrans_forward.3} parent=1 // pred_fallthru
      _
    // Predicated region
    $region30: #{gatrans_forward.3} parent=1 // pred_check
      _
    $region31: #{gatrans_forward.3} parent=1 // pred_check_branch
      %37 = sbr.rel (0) target = $region33
    $region32: #{gatrans_forward.3} parent=1 // pred_region
      %s39 = ssub.s32 4096, 4096
      %40 = vsyncadd [#allocation3], %s39
      %s41 = sshll.u32 [#allocation2], 4
      %s42 = int_to_ptr.vmem [resolvable:$true] %s41
      %47 = dma.hbm_to_vmem [thread:$0]  %s7, 4096, %s42, [#allocation3], 128, 128, 8
    $region33: #{gatrans_forward.3} parent=1 // pred_fallthru
      _
    // Predicated region
    $region34: #{gatrans_forward.3} parent=1 // pred_check
      _
    $region35: #{gatrans_forward.3} parent=1 // pred_check_branch
      %49 = sbr.rel (0) target = $region37
    $region36: #{gatrans_forward.3} parent=1 // pred_region
      _
    $region37: #{gatrans_forward.3} parent=1 // pred_fallthru
      _
    // Predicated region
    $region38: #{gatrans_forward.3} parent=1 // pred_check
      _
    $region39: #{gatrans_forward.3} parent=1 // pred_check_branch
      %51 = sbr.rel (0) target = $region41
    $region40: #{gatrans_forward.3} parent=1 // pred_region
      _
    $region41: #{gatrans_forward.3} parent=1 // pred_fallthru
      _
    // Predicated region
    $region42: #{gatrans_forward.3} parent=1 // pred_check
      _
    $region43: #{gatrans_forward.3} parent=1 // pred_check_branch
      %53 = sbr.rel (0) target = $region45
    $region44: #{gatrans_forward.3} parent=1 // pred_region
      _
    $region45: #{gatrans_forward.3} parent=1 // pred_fallthru
      _
    // Predicated region
    $region46: #{gatrans_forward.3} parent=1 // pred_check
      _
    $region47: #{gatrans_forward.3} parent=1 // pred_check_branch
      %55 = sbr.rel (0) target = $region49
    $region48: #{gatrans_forward.3} parent=1 // pred_region
      _
    $region49: #{gatrans_forward.3} parent=1 // pred_fallthru
      _
    // Predicated region
    $region50: #{gatrans_forward.3} parent=1 // pred_check
      _
    $region51: #{gatrans_forward.3} parent=1 // pred_check_branch
      %57 = sbr.rel (0) target = $region53
    $region52: #{gatrans_forward.3} parent=1 // pred_region
      _
    $region53: #{gatrans_forward.3} parent=1 // pred_fallthru
      _
    // Predicated region
    $region54: #{gatrans_forward.3} parent=1 // pred_check
      _
    $region55: #{gatrans_forward.3} parent=1 // pred_check_branch
      %59 = sbr.rel (0) target = $region57
    $region56: #{gatrans_forward.3} parent=1 // pred_region
      %60 = dma.done [#allocation3], 4096
    $region57: #{gatrans_forward.3} parent=1 // pred_fallthru
      _
    %v61 = vld [vmem:[%s0] sm:$0xff]
    %v62 = vld [vmem:[%s0 + $0x8] sm:$0xff]
    %v63 = vld [vmem:[%s1] sm:$0xff]
    %v64 = vld [vmem:[%s1 + $0x8] sm:$0xff]
    %v65 = vld [vmem:[%s1 + $0x10] sm:$0xff]
    %v66 = vld [vmem:[%s1 + $0x18] sm:$0xff]
    %v67 = vld [vmem:[%s2] sm:$0x1]
    %v69 = vlaneseq
    %v70 = vshrl.u32 %v69, 7
    %v71 = vsub.s32 0, %v70
    %v72 = vrot.slane %v67, %v71
    %vm74 = vcmask 261120
    %v76 = vsel %vm74, 0.0, 0
    %78 = vmatprep.subr.mxu0 0.0
    %79 = vmatpush1.msra.mxu0 0.0
    %80 = vmatprep.subr.mxu0 0.0
    %81 = vmatpush1.msra.mxu0 0.0
    %82 = vmatprep.subr.mxu0 0.0
    %83 = vmatpush1.msra.mxu0 0.0
    %84 = vmatprep.subr.mxu0 0.0
    %85 = vmatpush1.msra.mxu0 0.0
    %86 = vmatprep.subr.mxu0 0.0
    %87 = vmatpush1.msra.mxu0 0.0
    %88 = vmatprep.subr.mxu0 0.0
    %89 = vmatpush1.msra.mxu0 0.0
    %90 = vmatprep.subr.mxu0 0.0
    %91 = vmatpush1.msra.mxu0 0.0
    %92 = vmatprep.subr.mxu0 0.0
    %93 = vmatpush1.msra.mxu0 0.0
    %94 = vmatprep.subr.mxu0 0.0
    %95 = vmatpush1.msra.mxu0 0.0
    %96 = vmatprep.subr.mxu0 0.0
    %97 = vmatpush1.msra.mxu0 0.0
    %98 = vmatprep.subr.mxu0 0.0
    %99 = vmatpush1.msra.mxu0 0.0
    %100 = vmatprep.subr.mxu0 0.0
    %101 = vmatpush1.msra.mxu0 0.0
    %102 = vmatprep.subr.mxu0 0.0
    %103 = vmatpush1.msra.mxu0 %v66
    %104 = vmatprep.subr.mxu0 0.0
    %105 = vmatpush1.msra.mxu0 %v65
    %106 = vmatprep.subr.mxu0 0.0
    %107 = vmatpush1.msra.mxu0 %v64
    %108 = vmatprep.subr.mxu0 0.0
    %109 = vmatpush1.msra.mxu0 %v63
    %110 = vmatprep.subr.mxu0 0.0
    %111 = vmatpush2.msra.mxu0 0.0
    %112 = vmatprep.subr.mxu0 0.0
    %113 = vmatpush2.msra.mxu0 0.0
    %114 = vmatprep.subr.mxu0 0.0
    %115 = vmatpush2.msra.mxu0 0.0
    %116 = vmatprep.subr.mxu0 0.0
    %117 = vmatpush2.msra.mxu0 0.0
    %118 = vmatprep.subr.mxu0 0.0
    %119 = vmatpush2.msra.mxu0 0.0
    %120 = vmatprep.subr.mxu0 0.0
    %121 = vmatpush2.msra.mxu0 0.0
    %122 = vmatprep.subr.mxu0 0.0
    %123 = vmatpush2.msra.mxu0 0.0
    %124 = vmatprep.subr.mxu0 0.0
    %125 = vmatpush2.msra.mxu0 0.0
    %126 = vmatprep.subr.mxu0 0.0
    %127 = vmatpush2.msra.mxu0 0.0
    %128 = vmatprep.subr.mxu0 0.0
    %129 = vmatpush2.msra.mxu0 0.0
    %130 = vmatprep.subr.mxu0 0.0
    %131 = vmatpush2.msra.mxu0 0.0
    %132 = vmatprep.subr.mxu0 0.0
    %133 = vmatpush2.msra.mxu0 0.0
    %134 = vmatprep.subr.mxu0 0.0
    %135 = vmatpush2.msra.mxu0 0.0
    %136 = vmatprep.subr.mxu0 0.0
    %137 = vmatpush2.msra.mxu0 0.0
    %138 = vmatprep.subr.mxu0 0.0
    %139 = vmatpush2.msra.mxu0 0.0
    %140 = vmatprep.subr.mxu0 0.0
    %141 = vmatpush2.msra.mxu0 0.0
    %142 = vmatprep.mubr.f32.mxu0 0.0
    %143 = vmatmul.mubr.f32.gmra.mxu0 %v76
    %v144 = vpop.f32.mrf.mxu0
    %v145 = vadd.f32 %v72, %v144
    %v146 = vpop.f32.mrf.mxu0
    %147 = vdwg.mxu0
    %v149 = vrot.slane %v145, 1
    %v152 = vadd.f32 %v61, %v145
    %v153 = vadd.f32 %v62, %v149
    %v154 = vxor.u32 %v152, 2147483648
    %v155 = vxor.u32 %v153, 2147483648
    %v156 = vmul.f32 %v154, 1.442695
    %v157 = vpow.pop %v156
    %v158 = vmul.f32 %v155, 1.442695
    %v159 = vpow.pop %v158
    %v160 = vadd.f32 %v157, 1.0
    %v161 = vadd.f32 %v159, 1.0
    %v162 = vrcp.pop %v160
    %v163 = vmul.f32 1.0, %v162
    %v164 = vrcp.pop %v161
    %v165 = vmul.f32 1.0, %v164
    %166 = vrot.lane.b32.xlu0 %v145, 64
    %v167 = vpop.permute.xlu0 %166
    %168 = vrot.lane.b32.xlu0 %v149, 64
    %v169 = vpop.permute.xlu0 %168
    %v172 = vmul.f32 %v163, %v167
    %v173 = vmul.f32 %v165, %v169
    %176 = vrot.lane.b32.xlu0 %v172, 64
    %v177 = vpop.permute.xlu0 %176
    %178 = vrot.lane.b32.xlu0 %v173, 64
    %v179 = vpop.permute.xlu0 %178
    %v182 = vadd.f32 %v61, %v177
    %v183 = vadd.f32 %v62, %v179
    %v184 = vtanh.pop %v182
    %v185 = vtanh.pop %v183
    %v186 = vsub.f32 1.0, %v163
    %v187 = vsub.f32 1.0, %v165
    %190 = vrot.lane.b32.xlu0 %v184, 96
    %v191 = vpop.permute.xlu0 %190
    %192 = vrot.lane.b32.xlu0 %v185, 96
    %v193 = vpop.permute.xlu0 %192
    %v196 = vmul.f32 %v186, %v191
    %v197 = vmul.f32 %v187, %v193
    %v198 = vmul.f32 %v163, 0.0
    %v199 = vmul.f32 %v165, 0.0
    %v200 = vadd.f32 %v196, %v198
    %v201 = vadd.f32 %v197, %v199
    %v204 = vrot.slane %v201, 7
    %vm205 = vcmask 1041409
    %v206 = vsel %vm205, %v204, %v200
    %207 = vrot.lane.b32.xlu0 %v206, 96
    %v208 = vpop.permute.xlu0 %207
    %v209 = vsel %vm74, %v208, 0
    %211 = vmatprep.subr.mxu0 0.0
    %212 = vmatpush1.msra.mxu0 0.0
    %213 = vmatprep.subr.mxu0 0.0
    %214 = vmatpush1.msra.mxu0 0.0
    %215 = vmatprep.subr.mxu0 0.0
    %216 = vmatpush1.msra.mxu0 0.0
    %217 = vmatprep.subr.mxu0 0.0
    %218 = vmatpush1.msra.mxu0 0.0
    %219 = vmatprep.subr.mxu0 0.0
    %220 = vmatpush1.msra.mxu0 0.0
    %221 = vmatprep.subr.mxu0 0.0
    %222 = vmatpush1.msra.mxu0 0.0
    %223 = vmatprep.subr.mxu0 0.0
    %224 = vmatpush1.msra.mxu0 0.0
    %225 = vmatprep.subr.mxu0 0.0
    %226 = vmatpush1.msra.mxu0 0.0
    %227 = vmatprep.subr.mxu0 0.0
    %228 = vmatpush1.msra.mxu0 0.0
    %229 = vmatprep.subr.mxu0 0.0
    %230 = vmatpush1.msra.mxu0 0.0
    %231 = vmatprep.subr.mxu0 0.0
    %232 = vmatpush1.msra.mxu0 0.0
    %233 = vmatprep.subr.mxu0 0.0
    %234 = vmatpush1.msra.mxu0 0.0
    %235 = vmatprep.subr.mxu0 0.0
    %236 = vmatpush1.msra.mxu0 %v66
    %237 = vmatprep.subr.mxu0 0.0
    %238 = vmatpush1.msra.mxu0 %v65
    %239 = vmatprep.subr.mxu0 0.0
    %240 = vmatpush1.msra.mxu0 %v64
    %241 = vmatprep.subr.mxu0 0.0
    %242 = vmatpush1.msra.mxu0 %v63
    %243 = vmatprep.subr.mxu0 0.0
    %244 = vmatpush2.msra.mxu0 0.0
    %245 = vmatprep.subr.mxu0 0.0
    %246 = vmatpush2.msra.mxu0 0.0
    %247 = vmatprep.subr.mxu0 0.0
    %248 = vmatpush2.msra.mxu0 0.0
    %249 = vmatprep.subr.mxu0 0.0
    %250 = vmatpush2.msra.mxu0 0.0
    %251 = vmatprep.subr.mxu0 0.0
    %252 = vmatpush2.msra.mxu0 0.0
    %253 = vmatprep.subr.mxu0 0.0
    %254 = vmatpush2.msra.mxu0 0.0
    %255 = vmatprep.subr.mxu0 0.0
    %256 = vmatpush2.msra.mxu0 0.0
    %257 = vmatprep.subr.mxu0 0.0
    %258 = vmatpush2.msra.mxu0 0.0
    %259 = vmatprep.subr.mxu0 0.0
    %260 = vmatpush2.msra.mxu0 0.0
    %261 = vmatprep.subr.mxu0 0.0
    %262 = vmatpush2.msra.mxu0 0.0
    %263 = vmatprep.subr.mxu0 0.0
    %264 = vmatpush2.msra.mxu0 0.0
    %265 = vmatprep.subr.mxu0 0.0
    %266 = vmatpush2.msra.mxu0 0.0
    %267 = vmatprep.subr.mxu0 0.0
    %268 = vmatpush2.msra.mxu0 0.0
    %269 = vmatprep.subr.mxu0 0.0
    %270 = vmatpush2.msra.mxu0 0.0
    %271 = vmatprep.subr.mxu0 0.0
    %272 = vmatpush2.msra.mxu0 0.0
    %273 = vmatprep.subr.mxu0 0.0
    %274 = vmatpush2.msra.mxu0 0.0
    %275 = vmatprep.mubr.f32.mxu0 0.0
    %276 = vmatmul.mubr.f32.gmra.mxu0 %v209
    %v277 = vpop.f32.mrf.mxu0
    %v278 = vadd.f32 %v72, %v277
    %v279 = vpop.f32.mrf.mxu0
    %280 = vdwg.mxu0
    %v282 = vrot.slane %v278, 7
    %v285 = vadd.f32 %v61, %v282
    %v286 = vadd.f32 %v62, %v278
    %v287 = vxor.u32 %v285, 2147483648
    %v288 = vxor.u32 %v286, 2147483648
    %v289 = vmul.f32 %v287, 1.442695
    %v290 = vpow.pop %v289
    %v291 = vmul.f32 %v288, 1.442695
    %v292 = vpow.pop %v291
    %v293 = vadd.f32 %v290, 1.0
    %v294 = vadd.f32 %v292, 1.0
    %v295 = vrcp.pop %v293
    %v296 = vmul.f32 1.0, %v295
    %v297 = vrcp.pop %v294
    %v298 = vmul.f32 1.0, %v297
    %299 = vrot.lane.b32.xlu0 %v282, 64
    %v300 = vpop.permute.xlu0 %299
    %301 = vrot.lane.b32.xlu0 %v278, 64
    %v302 = vpop.permute.xlu0 %301
    %v305 = vmul.f32 %v296, %v300
    %v306 = vmul.f32 %v298, %v302
    %309 = vrot.lane.b32.xlu0 %v305, 64
    %v310 = vpop.permute.xlu0 %309
    %311 = vrot.lane.b32.xlu0 %v306, 64
    %v312 = vpop.permute.xlu0 %311
    %v315 = vadd.f32 %v61, %v310
    %v316 = vadd.f32 %v62, %v312
    %v317 = vtanh.pop %v315
    %v318 = vtanh.pop %v316
    %v319 = vsub.f32 1.0, %v296
    %v320 = vsub.f32 1.0, %v298
    %323 = vrot.lane.b32.xlu0 %v317, 96
    %v324 = vpop.permute.xlu0 %323
    %325 = vrot.lane.b32.xlu0 %v318, 96
    %v326 = vpop.permute.xlu0 %325
    %v329 = vmul.f32 %v319, %v324
    %v330 = vmul.f32 %v320, %v326
    %v331 = vrot.slane %v200, 7
    %v334 = vmul.f32 %v296, %v331
    %v335 = vmul.f32 %v298, %v204
    %v336 = vadd.f32 %v329, %v334
    %v337 = vadd.f32 %v330, %v335
    %v340 = vrot.slane %v336, 1
    %v341 = vsel %vm205, %v337, %v340
    %342 = vrot.lane.b32.xlu0 %v341, 96
    %v343 = vpop.permute.xlu0 %342
    %v344 = vsel %vm74, %v343, 0
    %346 = vmatprep.subr.mxu0 0.0
    %347 = vmatpush1.msra.mxu0 0.0
    %348 = vmatprep.subr.mxu0 0.0
    %349 = vmatpush1.msra.mxu0 0.0
    %350 = vmatprep.subr.mxu0 0.0
    %351 = vmatpush1.msra.mxu0 0.0
    %352 = vmatprep.subr.mxu0 0.0
    %353 = vmatpush1.msra.mxu0 0.0
    %354 = vmatprep.subr.mxu0 0.0
    %355 = vmatpush1.msra.mxu0 0.0
    %356 = vmatprep.subr.mxu0 0.0
    %357 = vmatpush1.msra.mxu0 0.0
    %358 = vmatprep.subr.mxu0 0.0
    %359 = vmatpush1.msra.mxu0 0.0
    %360 = vmatprep.subr.mxu0 0.0
    %361 = vmatpush1.msra.mxu0 0.0
    %362 = vmatprep.subr.mxu0 0.0
    %363 = vmatpush1.msra.mxu0 0.0
    %364 = vmatprep.subr.mxu0 0.0
    %365 = vmatpush1.msra.mxu0 0.0
    %366 = vmatprep.subr.mxu0 0.0
    %367 = vmatpush1.msra.mxu0 0.0
    %368 = vmatprep.subr.mxu0 0.0
    %369 = vmatpush1.msra.mxu0 0.0
    %370 = vmatprep.subr.mxu0 0.0
    %371 = vmatpush1.msra.mxu0 %v66
    %372 = vmatprep.subr.mxu0 0.0
    %373 = vmatpush1.msra.mxu0 %v65
    %374 = vmatprep.subr.mxu0 0.0
    %375 = vmatpush1.msra.mxu0 %v64
    %376 = vmatprep.subr.mxu0 0.0
    %377 = vmatpush1.msra.mxu0 %v63
    %378 = vmatprep.subr.mxu0 0.0
    %379 = vmatpush2.msra.mxu0 0.0
    %380 = vmatprep.subr.mxu0 0.0
    %381 = vmatpush2.msra.mxu0 0.0
    %382 = vmatprep.subr.mxu0 0.0
    %383 = vmatpush2.msra.mxu0 0.0
    %384 = vmatprep.subr.mxu0 0.0
    %385 = vmatpush2.msra.mxu0 0.0
    %386 = vmatprep.subr.mxu0 0.0
    %387 = vmatpush2.msra.mxu0 0.0
    %388 = vmatprep.subr.mxu0 0.0
    %389 = vmatpush2.msra.mxu0 0.0
    %390 = vmatprep.subr.mxu0 0.0
    %391 = vmatpush2.msra.mxu0 0.0
    %392 = vmatprep.subr.mxu0 0.0
    %393 = vmatpush2.msra.mxu0 0.0
    %394 = vmatprep.subr.mxu0 0.0
    %395 = vmatpush2.msra.mxu0 0.0
    %396 = vmatprep.subr.mxu0 0.0
    %397 = vmatpush2.msra.mxu0 0.0
    %398 = vmatprep.subr.mxu0 0.0
    %399 = vmatpush2.msra.mxu0 0.0
    %400 = vmatprep.subr.mxu0 0.0
    %401 = vmatpush2.msra.mxu0 0.0
    %402 = vmatprep.subr.mxu0 0.0
    %403 = vmatpush2.msra.mxu0 0.0
    %404 = vmatprep.subr.mxu0 0.0
    %405 = vmatpush2.msra.mxu0 0.0
    %406 = vmatprep.subr.mxu0 0.0
    %407 = vmatpush2.msra.mxu0 0.0
    %408 = vmatprep.subr.mxu0 0.0
    %409 = vmatpush2.msra.mxu0 0.0
    %410 = vmatprep.mubr.f32.mxu0 0.0
    %411 = vmatmul.mubr.f32.gmra.mxu0 %v344
    %v412 = vpop.f32.mrf.mxu0
    %v413 = vadd.f32 %v72, %v412
    %v414 = vpop.f32.mrf.mxu0
    %415 = vdwg.mxu0
    %v417 = vrot.slane %v413, 6
    %v418 = vrot.slane %v413, 7
    %v421 = vadd.f32 %v61, %v417
    %v422 = vadd.f32 %v62, %v418
    %v423 = vxor.u32 %v421, 2147483648
    %v424 = vxor.u32 %v422, 2147483648
    %v425 = vmul.f32 %v423, 1.442695
    %v426 = vpow.pop %v425
    %v427 = vmul.f32 %v424, 1.442695
    %v428 = vpow.pop %v427
    %v429 = vadd.f32 %v426, 1.0
    %v430 = vadd.f32 %v428, 1.0
    %v431 = vrcp.pop %v429
    %v432 = vmul.f32 1.0, %v431
    %v433 = vrcp.pop %v430
    %v434 = vmul.f32 1.0, %v433
    %435 = vrot.lane.b32.xlu0 %v417, 64
    %v436 = vpop.permute.xlu0 %435
    %437 = vrot.lane.b32.xlu0 %v418, 64
    %v438 = vpop.permute.xlu0 %437
    %v441 = vmul.f32 %v432, %v436
    %v442 = vmul.f32 %v434, %v438
    %445 = vrot.lane.b32.xlu0 %v441, 64
    %v446 = vpop.permute.xlu0 %445
    %447 = vrot.lane.b32.xlu0 %v442, 64
    %v448 = vpop.permute.xlu0 %447
    %v451 = vadd.f32 %v61, %v446
    %v452 = vadd.f32 %v62, %v448
    %v453 = vtanh.pop %v451
    %v454 = vtanh.pop %v452
    %v455 = vsub.f32 1.0, %v432
    %v456 = vsub.f32 1.0, %v434
    %459 = vrot.lane.b32.xlu0 %v453, 96
    %v460 = vpop.permute.xlu0 %459
    %461 = vrot.lane.b32.xlu0 %v454, 96
    %v462 = vpop.permute.xlu0 %461
    %v465 = vmul.f32 %v455, %v460
    %v466 = vmul.f32 %v456, %v462
    %v467 = vrot.slane %v336, 7
    %v468 = vrot.slane %v337, 7
    %v471 = vmul.f32 %v432, %v467
    %v472 = vmul.f32 %v434, %v468
    %v473 = vadd.f32 %v465, %v471
    %v474 = vadd.f32 %v466, %v472
    %v477 = vrot.slane %v473, 2
    %v478 = vrot.slane %v474, 1
    %v479 = vsel %vm205, %v478, %v477
    %480 = vrot.lane.b32.xlu0 %v479, 96
    %v481 = vpop.permute.xlu0 %480
    %v482 = vsel %vm74, %v481, 0
    %484 = vmatprep.subr.mxu0 0.0
    %485 = vmatpush1.msra.mxu0 0.0
    %486 = vmatprep.subr.mxu0 0.0
    %487 = vmatpush1.msra.mxu0 0.0
    %488 = vmatprep.subr.mxu0 0.0
    %489 = vmatpush1.msra.mxu0 0.0
    %490 = vmatprep.subr.mxu0 0.0
    %491 = vmatpush1.msra.mxu0 0.0
    %492 = vmatprep.subr.mxu0 0.0
    %493 = vmatpush1.msra.mxu0 0.0
    %494 = vmatprep.subr.mxu0 0.0
    %495 = vmatpush1.msra.mxu0 0.0
    %496 = vmatprep.subr.mxu0 0.0
    %497 = vmatpush1.msra.mxu0 0.0
    %498 = vmatprep.subr.mxu0 0.0
    %499 = vmatpush1.msra.mxu0 0.0
    %500 = vmatprep.subr.mxu0 0.0
    %501 = vmatpush1.msra.mxu0 0.0
    %502 = vmatprep.subr.mxu0 0.0
    %503 = vmatpush1.msra.mxu0 0.0
    %504 = vmatprep.subr.mxu0 0.0
    %505 = vmatpush1.msra.mxu0 0.0
    %506 = vmatprep.subr.mxu0 0.0
    %507 = vmatpush1.msra.mxu0 0.0
    %508 = vmatprep.subr.mxu0 0.0
    %509 = vmatpush1.msra.mxu0 %v66
    %510 = vmatprep.subr.mxu0 0.0
    %511 = vmatpush1.msra.mxu0 %v65
    %512 = vmatprep.subr.mxu0 0.0
    %513 = vmatpush1.msra.mxu0 %v64
    %514 = vmatprep.subr.mxu0 0.0
    %515 = vmatpush1.msra.mxu0 %v63
    %516 = vmatprep.subr.mxu0 0.0
    %517 = vmatpush2.msra.mxu0 0.0
    %518 = vmatprep.subr.mxu0 0.0
    %519 = vmatpush2.msra.mxu0 0.0
    %520 = vmatprep.subr.mxu0 0.0
    %521 = vmatpush2.msra.mxu0 0.0
    %522 = vmatprep.subr.mxu0 0.0
    %523 = vmatpush2.msra.mxu0 0.0
    %524 = vmatprep.subr.mxu0 0.0
    %525 = vmatpush2.msra.mxu0 0.0
    %526 = vmatprep.subr.mxu0 0.0
    %527 = vmatpush2.msra.mxu0 0.0
    %528 = vmatprep.subr.mxu0 0.0
    %529 = vmatpush2.msra.mxu0 0.0
    %530 = vmatprep.subr.mxu0 0.0
    %531 = vmatpush2.msra.mxu0 0.0
    %532 = vmatprep.subr.mxu0 0.0
    %533 = vmatpush2.msra.mxu0 0.0
    %534 = vmatprep.subr.mxu0 0.0
    %535 = vmatpush2.msra.mxu0 0.0
    %536 = vmatprep.subr.mxu0 0.0
    %537 = vmatpush2.msra.mxu0 0.0
    %538 = vmatprep.subr.mxu0 0.0
    %539 = vmatpush2.msra.mxu0 0.0
    %540 = vmatprep.subr.mxu0 0.0
    %541 = vmatpush2.msra.mxu0 0.0
    %542 = vmatprep.subr.mxu0 0.0
    %543 = vmatpush2.msra.mxu0 0.0
    %544 = vmatprep.subr.mxu0 0.0
    %545 = vmatpush2.msra.mxu0 0.0
    %546 = vmatprep.subr.mxu0 0.0
    %547 = vmatpush2.msra.mxu0 0.0
    %548 = vmatprep.mubr.f32.mxu0 0.0
    %549 = vmatmul.mubr.f32.gmra.mxu0 %v482
    %v550 = vpop.f32.mrf.mxu0
    %v551 = vadd.f32 %v72, %v550
    %v552 = vpop.f32.mrf.mxu0
    %553 = vdwg.mxu0
    %v555 = vrot.slane %v551, 5
    %v556 = vrot.slane %v551, 6
    %v559 = vadd.f32 %v61, %v555
    %v560 = vadd.f32 %v62, %v556
    %v561 = vxor.u32 %v559, 2147483648
    %v562 = vxor.u32 %v560, 2147483648
    %v563 = vmul.f32 %v561, 1.442695
    %v564 = vpow.pop %v563
    %v565 = vmul.f32 %v562, 1.442695
    %v566 = vpow.pop %v565
    %v567 = vadd.f32 %v564, 1.0
    %v568 = vadd.f32 %v566, 1.0
    %v569 = vrcp.pop %v567
    %v570 = vmul.f32 1.0, %v569
    %v571 = vrcp.pop %v568
    %v572 = vmul.f32 1.0, %v571
    %573 = vrot.lane.b32.xlu0 %v555, 64
    %v574 = vpop.permute.xlu0 %573
    %575 = vrot.lane.b32.xlu0 %v556, 64
    %v576 = vpop.permute.xlu0 %575
    %v579 = vmul.f32 %v570, %v574
    %v580 = vmul.f32 %v572, %v576
    %583 = vrot.lane.b32.xlu0 %v579, 64
    %v584 = vpop.permute.xlu0 %583
    %585 = vrot.lane.b32.xlu0 %v580, 64
    %v586 = vpop.permute.xlu0 %585
    %v589 = vadd.f32 %v61, %v584
    %v590 = vadd.f32 %v62, %v586
    %v591 = vtanh.pop %v589
    %v592 = vtanh.pop %v590
    %v593 = vsub.f32 1.0, %v570
    %v594 = vsub.f32 1.0, %v572
    %597 = vrot.lane.b32.xlu0 %v591, 96
    %v598 = vpop.permute.xlu0 %597
    %599 = vrot.lane.b32.xlu0 %v592, 96
    %v600 = vpop.permute.xlu0 %599
    %v603 = vmul.f32 %v593, %v598
    %v604 = vmul.f32 %v594, %v600
    %v605 = vrot.slane %v473, 7
    %v606 = vrot.slane %v474, 7
    %v609 = vmul.f32 %v570, %v605
    %v610 = vmul.f32 %v572, %v606
    %v611 = vadd.f32 %v603, %v609
    %v612 = vadd.f32 %v604, %v610
    %v615 = vrot.slane %v611, 3
    %v616 = vrot.slane %v612, 2
    %v617 = vsel %vm205, %v616, %v615
    %618 = vrot.lane.b32.xlu0 %v617, 96
    %v619 = vpop.permute.xlu0 %618
    %v620 = vsel %vm74, %v619, 0
    %622 = vmatprep.subr.mxu0 0.0
    %623 = vmatpush1.msra.mxu0 0.0
    %624 = vmatprep.subr.mxu0 0.0
    %625 = vmatpush1.msra.mxu0 0.0
    %626 = vmatprep.subr.mxu0 0.0
    %627 = vmatpush1.msra.mxu0 0.0
    %628 = vmatprep.subr.mxu0 0.0
    %629 = vmatpush1.msra.mxu0 0.0
    %630 = vmatprep.subr.mxu0 0.0
    %631 = vmatpush1.msra.mxu0 0.0
    %632 = vmatprep.subr.mxu0 0.0
    %633 = vmatpush1.msra.mxu0 0.0
    %634 = vmatprep.subr.mxu0 0.0
    %635 = vmatpush1.msra.mxu0 0.0
    %636 = vmatprep.subr.mxu0 0.0
    %637 = vmatpush1.msra.mxu0 0.0
    %638 = vmatprep.subr.mxu0 0.0
    %639 = vmatpush1.msra.mxu0 0.0
    %640 = vmatprep.subr.mxu0 0.0
    %641 = vmatpush1.msra.mxu0 0.0
    %642 = vmatprep.subr.mxu0 0.0
    %643 = vmatpush1.msra.mxu0 0.0
    %644 = vmatprep.subr.mxu0 0.0
    %645 = vmatpush1.msra.mxu0 0.0
    %646 = vmatprep.subr.mxu0 0.0
    %647 = vmatpush1.msra.mxu0 %v66
    %648 = vmatprep.subr.mxu0 0.0
    %649 = vmatpush1.msra.mxu0 %v65
    %650 = vmatprep.subr.mxu0 0.0
    %651 = vmatpush1.msra.mxu0 %v64
    %652 = vmatprep.subr.mxu0 0.0
    %653 = vmatpush1.msra.mxu0 %v63
    %654 = vmatprep.subr.mxu0 0.0
    %655 = vmatpush2.msra.mxu0 0.0
    %656 = vmatprep.subr.mxu0 0.0
    %657 = vmatpush2.msra.mxu0 0.0
    %658 = vmatprep.subr.mxu0 0.0
    %659 = vmatpush2.msra.mxu0 0.0
    %660 = vmatprep.subr.mxu0 0.0
    %661 = vmatpush2.msra.mxu0 0.0
    %662 = vmatprep.subr.mxu0 0.0
    %663 = vmatpush2.msra.mxu0 0.0
    %664 = vmatprep.subr.mxu0 0.0
    %665 = vmatpush2.msra.mxu0 0.0
    %666 = vmatprep.subr.mxu0 0.0
    %667 = vmatpush2.msra.mxu0 0.0
    %668 = vmatprep.subr.mxu0 0.0
    %669 = vmatpush2.msra.mxu0 0.0
    %670 = vmatprep.subr.mxu0 0.0
    %671 = vmatpush2.msra.mxu0 0.0
    %672 = vmatprep.subr.mxu0 0.0
    %673 = vmatpush2.msra.mxu0 0.0
    %674 = vmatprep.subr.mxu0 0.0
    %675 = vmatpush2.msra.mxu0 0.0
    %676 = vmatprep.subr.mxu0 0.0
    %677 = vmatpush2.msra.mxu0 0.0
    %678 = vmatprep.subr.mxu0 0.0
    %679 = vmatpush2.msra.mxu0 0.0
    %680 = vmatprep.subr.mxu0 0.0
    %681 = vmatpush2.msra.mxu0 0.0
    %682 = vmatprep.subr.mxu0 0.0
    %683 = vmatpush2.msra.mxu0 0.0
    %684 = vmatprep.subr.mxu0 0.0
    %685 = vmatpush2.msra.mxu0 0.0
    %686 = vmatprep.mubr.f32.mxu0 0.0
    %687 = vmatmul.mubr.f32.gmra.mxu0 %v620
    %v688 = vpop.f32.mrf.mxu0
    %v689 = vadd.f32 %v72, %v688
    %v690 = vpop.f32.mrf.mxu0
    %691 = vdwg.mxu0
    %v693 = vrot.slane %v689, 4
    %v694 = vrot.slane %v689, 5
    %v697 = vadd.f32 %v61, %v693
    %v698 = vadd.f32 %v62, %v694
    %v699 = vxor.u32 %v697, 2147483648
    %v700 = vxor.u32 %v698, 2147483648
    %v701 = vmul.f32 %v699, 1.442695
    %v702 = vpow.pop %v701
    %v703 = vmul.f32 %v700, 1.442695
    %v704 = vpow.pop %v703
    %v705 = vadd.f32 %v702, 1.0
    %v706 = vadd.f32 %v704, 1.0
    %v707 = vrcp.pop %v705
    %v708 = vmul.f32 1.0, %v707
    %v709 = vrcp.pop %v706
    %v710 = vmul.f32 1.0, %v709
    %711 = vrot.lane.b32.xlu0 %v693, 64
    %v712 = vpop.permute.xlu0 %711
    %713 = vrot.lane.b32.xlu0 %v694, 64
    %v714 = vpop.permute.xlu0 %713
    %v717 = vmul.f32 %v708, %v712
    %v718 = vmul.f32 %v710, %v714
    %721 = vrot.lane.b32.xlu0 %v717, 64
    %v722 = vpop.permute.xlu0 %721
    %723 = vrot.lane.b32.xlu0 %v718, 64
    %v724 = vpop.permute.xlu0 %723
    %v727 = vadd.f32 %v61, %v722
    %v728 = vadd.f32 %v62, %v724
    %v729 = vtanh.pop %v727
    %v730 = vtanh.pop %v728
    %v731 = vsub.f32 1.0, %v708
    %v732 = vsub.f32 1.0, %v710
    %735 = vrot.lane.b32.xlu0 %v729, 96
    %v736 = vpop.permute.xlu0 %735
    %737 = vrot.lane.b32.xlu0 %v730, 96
    %v738 = vpop.permute.xlu0 %737
    %v741 = vmul.f32 %v731, %v736
    %v742 = vmul.f32 %v732, %v738
    %v743 = vrot.slane %v611, 7
    %v744 = vrot.slane %v612, 7
    %v747 = vmul.f32 %v708, %v743
    %v748 = vmul.f32 %v710, %v744
    %v749 = vadd.f32 %v741, %v747
    %v750 = vadd.f32 %v742, %v748
    %v753 = vrot.slane %v749, 4
    %v754 = vrot.slane %v750, 3
    %v755 = vsel %vm205, %v754, %v753
    %756 = vrot.lane.b32.xlu0 %v755, 96
    %v757 = vpop.permute.xlu0 %756
    %v758 = vsel %vm74, %v757, 0
    %760 = vmatprep.subr.mxu0 0.0
    %761 = vmatpush1.msra.mxu0 0.0
    %762 = vmatprep.subr.mxu0 0.0
    %763 = vmatpush1.msra.mxu0 0.0
    %764 = vmatprep.subr.mxu0 0.0
    %765 = vmatpush1.msra.mxu0 0.0
    %766 = vmatprep.subr.mxu0 0.0
    %767 = vmatpush1.msra.mxu0 0.0
    %768 = vmatprep.subr.mxu0 0.0
    %769 = vmatpush1.msra.mxu0 0.0
    %770 = vmatprep.subr.mxu0 0.0
    %771 = vmatpush1.msra.mxu0 0.0
    %772 = vmatprep.subr.mxu0 0.0
    %773 = vmatpush1.msra.mxu0 0.0
    %774 = vmatprep.subr.mxu0 0.0
    %775 = vmatpush1.msra.mxu0 0.0
    %776 = vmatprep.subr.mxu0 0.0
    %777 = vmatpush1.msra.mxu0 0.0
    %778 = vmatprep.subr.mxu0 0.0
    %779 = vmatpush1.msra.mxu0 0.0
    %780 = vmatprep.subr.mxu0 0.0
    %781 = vmatpush1.msra.mxu0 0.0
    %782 = vmatprep.subr.mxu0 0.0
    %783 = vmatpush1.msra.mxu0 0.0
    %784 = vmatprep.subr.mxu0 0.0
    %785 = vmatpush1.msra.mxu0 %v66
    %786 = vmatprep.subr.mxu0 0.0
    %787 = vmatpush1.msra.mxu0 %v65
    %788 = vmatprep.subr.mxu0 0.0
    %789 = vmatpush1.msra.mxu0 %v64
    %790 = vmatprep.subr.mxu0 0.0
    %791 = vmatpush1.msra.mxu0 %v63
    %792 = vmatprep.subr.mxu0 0.0
    %793 = vmatpush2.msra.mxu0 0.0
    %794 = vmatprep.subr.mxu0 0.0
    %795 = vmatpush2.msra.mxu0 0.0
    %796 = vmatprep.subr.mxu0 0.0
    %797 = vmatpush2.msra.mxu0 0.0
    %798 = vmatprep.subr.mxu0 0.0
    %799 = vmatpush2.msra.mxu0 0.0
    %800 = vmatprep.subr.mxu0 0.0
    %801 = vmatpush2.msra.mxu0 0.0
    %802 = vmatprep.subr.mxu0 0.0
    %803 = vmatpush2.msra.mxu0 0.0
    %804 = vmatprep.subr.mxu0 0.0
    %805 = vmatpush2.msra.mxu0 0.0
    %806 = vmatprep.subr.mxu0 0.0
    %807 = vmatpush2.msra.mxu0 0.0
    %808 = vmatprep.subr.mxu0 0.0
    %809 = vmatpush2.msra.mxu0 0.0
    %810 = vmatprep.subr.mxu0 0.0
    %811 = vmatpush2.msra.mxu0 0.0
    %812 = vmatprep.subr.mxu0 0.0
    %813 = vmatpush2.msra.mxu0 0.0
    %814 = vmatprep.subr.mxu0 0.0
    %815 = vmatpush2.msra.mxu0 0.0
    %816 = vmatprep.subr.mxu0 0.0
    %817 = vmatpush2.msra.mxu0 0.0
    %818 = vmatprep.subr.mxu0 0.0
    %819 = vmatpush2.msra.mxu0 0.0
    %820 = vmatprep.subr.mxu0 0.0
    %821 = vmatpush2.msra.mxu0 0.0
    %822 = vmatprep.subr.mxu0 0.0
    %823 = vmatpush2.msra.mxu0 0.0
    %824 = vmatprep.mubr.f32.mxu0 0.0
    %825 = vmatmul.mubr.f32.gmra.mxu0 %v758
    %v826 = vpop.f32.mrf.mxu0
    %v827 = vadd.f32 %v72, %v826
    %v828 = vpop.f32.mrf.mxu0
    %829 = vdwg.mxu0
    %v831 = vrot.slane %v827, 3
    %v832 = vrot.slane %v827, 4
    %v835 = vadd.f32 %v61, %v831
    %v836 = vadd.f32 %v62, %v832
    %v837 = vxor.u32 %v835, 2147483648
    %v838 = vxor.u32 %v836, 2147483648
    %v839 = vmul.f32 %v837, 1.442695
    %v840 = vpow.pop %v839
    %v841 = vmul.f32 %v838, 1.442695
    %v842 = vpow.pop %v841
    %v843 = vadd.f32 %v840, 1.0
    %v844 = vadd.f32 %v842, 1.0
    %v845 = vrcp.pop %v843
    %v846 = vmul.f32 1.0, %v845
    %v847 = vrcp.pop %v844
    %v848 = vmul.f32 1.0, %v847
    %849 = vrot.lane.b32.xlu0 %v831, 64
    %v850 = vpop.permute.xlu0 %849
    %851 = vrot.lane.b32.xlu0 %v832, 64
    %v852 = vpop.permute.xlu0 %851
    %v855 = vmul.f32 %v846, %v850
    %v856 = vmul.f32 %v848, %v852
    %859 = vrot.lane.b32.xlu0 %v855, 64
    %v860 = vpop.permute.xlu0 %859
    %861 = vrot.lane.b32.xlu0 %v856, 64
    %v862 = vpop.permute.xlu0 %861
    %v865 = vadd.f32 %v61, %v860
    %v866 = vadd.f32 %v62, %v862
    %v867 = vtanh.pop %v865
    %v868 = vtanh.pop %v866
    %v869 = vsub.f32 1.0, %v846
    %v870 = vsub.f32 1.0, %v848
    %873 = vrot.lane.b32.xlu0 %v867, 96
    %v874 = vpop.permute.xlu0 %873
    %875 = vrot.lane.b32.xlu0 %v868, 96
    %v876 = vpop.permute.xlu0 %875
    %v879 = vmul.f32 %v869, %v874
    %v880 = vmul.f32 %v870, %v876
    %v881 = vrot.slane %v749, 7
    %v882 = vrot.slane %v750, 7
    %v885 = vmul.f32 %v846, %v881
    %v886 = vmul.f32 %v848, %v882
    %v887 = vadd.f32 %v879, %v885
    %v888 = vadd.f32 %v880, %v886
    %v891 = vrot.slane %v887, 5
    %v892 = vrot.slane %v888, 4
    %v893 = vsel %vm205, %v892, %v891
    %894 = vrot.lane.b32.xlu0 %v893, 96
    %v895 = vpop.permute.xlu0 %894
    %v896 = vsel %vm74, %v895, 0
    %898 = vmatprep.subr.mxu0 0.0
    %899 = vmatpush1.msra.mxu0 0.0
    %900 = vmatprep.subr.mxu0 0.0
    %901 = vmatpush1.msra.mxu0 0.0
    %902 = vmatprep.subr.mxu0 0.0
    %903 = vmatpush1.msra.mxu0 0.0
    %904 = vmatprep.subr.mxu0 0.0
    %905 = vmatpush1.msra.mxu0 0.0
    %906 = vmatprep.subr.mxu0 0.0
    %907 = vmatpush1.msra.mxu0 0.0
    %908 = vmatprep.subr.mxu0 0.0
    %909 = vmatpush1.msra.mxu0 0.0
    %910 = vmatprep.subr.mxu0 0.0
    %911 = vmatpush1.msra.mxu0 0.0
    %912 = vmatprep.subr.mxu0 0.0
    %913 = vmatpush1.msra.mxu0 0.0
    %914 = vmatprep.subr.mxu0 0.0
    %915 = vmatpush1.msra.mxu0 0.0
    %916 = vmatprep.subr.mxu0 0.0
    %917 = vmatpush1.msra.mxu0 0.0
    %918 = vmatprep.subr.mxu0 0.0
    %919 = vmatpush1.msra.mxu0 0.0
    %920 = vmatprep.subr.mxu0 0.0
    %921 = vmatpush1.msra.mxu0 0.0
    %922 = vmatprep.subr.mxu0 0.0
    %923 = vmatpush1.msra.mxu0 %v66
    %924 = vmatprep.subr.mxu0 0.0
    %925 = vmatpush1.msra.mxu0 %v65
    %926 = vmatprep.subr.mxu0 0.0
    %927 = vmatpush1.msra.mxu0 %v64
    %928 = vmatprep.subr.mxu0 0.0
    %929 = vmatpush1.msra.mxu0 %v63
    %930 = vmatprep.subr.mxu0 0.0
    %931 = vmatpush2.msra.mxu0 0.0
    %932 = vmatprep.subr.mxu0 0.0
    %933 = vmatpush2.msra.mxu0 0.0
    %934 = vmatprep.subr.mxu0 0.0
    %935 = vmatpush2.msra.mxu0 0.0
    %936 = vmatprep.subr.mxu0 0.0
    %937 = vmatpush2.msra.mxu0 0.0
    %938 = vmatprep.subr.mxu0 0.0
    %939 = vmatpush2.msra.mxu0 0.0
    %940 = vmatprep.subr.mxu0 0.0
    %941 = vmatpush2.msra.mxu0 0.0
    %942 = vmatprep.subr.mxu0 0.0
    %943 = vmatpush2.msra.mxu0 0.0
    %944 = vmatprep.subr.mxu0 0.0
    %945 = vmatpush2.msra.mxu0 0.0
    %946 = vmatprep.subr.mxu0 0.0
    %947 = vmatpush2.msra.mxu0 0.0
    %948 = vmatprep.subr.mxu0 0.0
    %949 = vmatpush2.msra.mxu0 0.0
    %950 = vmatprep.subr.mxu0 0.0
    %951 = vmatpush2.msra.mxu0 0.0
    %952 = vmatprep.subr.mxu0 0.0
    %953 = vmatpush2.msra.mxu0 0.0
    %954 = vmatprep.subr.mxu0 0.0
    %955 = vmatpush2.msra.mxu0 0.0
    %956 = vmatprep.subr.mxu0 0.0
    %957 = vmatpush2.msra.mxu0 0.0
    %958 = vmatprep.subr.mxu0 0.0
    %959 = vmatpush2.msra.mxu0 0.0
    %960 = vmatprep.subr.mxu0 0.0
    %961 = vmatpush2.msra.mxu0 0.0
    %962 = vmatprep.mubr.f32.mxu0 0.0
    %963 = vmatmul.mubr.f32.gmra.mxu0 %v896
    %v964 = vpop.f32.mrf.mxu0
    %v965 = vadd.f32 %v72, %v964
    %v966 = vpop.f32.mrf.mxu0
    %967 = vdwg.mxu0
    %v969 = vrot.slane %v965, 2
    %v970 = vrot.slane %v965, 3
    %v973 = vadd.f32 %v61, %v969
    %v974 = vadd.f32 %v62, %v970
    %v975 = vxor.u32 %v973, 2147483648
    %v976 = vxor.u32 %v974, 2147483648
    %v977 = vmul.f32 %v975, 1.442695
    %v978 = vpow.pop %v977
    %v979 = vmul.f32 %v976, 1.442695
    %v980 = vpow.pop %v979
    %v981 = vadd.f32 %v978, 1.0
    %v982 = vadd.f32 %v980, 1.0
    %v983 = vrcp.pop %v981
    %v984 = vmul.f32 1.0, %v983
    %v985 = vrcp.pop %v982
    %v986 = vmul.f32 1.0, %v985
    %987 = vrot.lane.b32.xlu0 %v969, 64
    %v988 = vpop.permute.xlu0 %987
    %989 = vrot.lane.b32.xlu0 %v970, 64
    %v990 = vpop.permute.xlu0 %989
    %v993 = vmul.f32 %v984, %v988
    %v994 = vmul.f32 %v986, %v990
    %997 = vrot.lane.b32.xlu0 %v993, 64
    %v998 = vpop.permute.xlu0 %997
    %999 = vrot.lane.b32.xlu0 %v994, 64
    %v1000 = vpop.permute.xlu0 %999
    %v1003 = vadd.f32 %v61, %v998
    %v1004 = vadd.f32 %v62, %v1000
    %v1005 = vtanh.pop %v1003
    %v1006 = vtanh.pop %v1004
    %v1007 = vsub.f32 1.0, %v984
    %v1008 = vsub.f32 1.0, %v986
    %1011 = vrot.lane.b32.xlu0 %v1005, 96
    %v1012 = vpop.permute.xlu0 %1011
    %1013 = vrot.lane.b32.xlu0 %v1006, 96
    %v1014 = vpop.permute.xlu0 %1013
    %v1017 = vmul.f32 %v1007, %v1012
    %v1018 = vmul.f32 %v1008, %v1014
    %v1019 = vrot.slane %v887, 7
    %v1020 = vrot.slane %v888, 7
    %v1023 = vmul.f32 %v984, %v1019
    %v1024 = vmul.f32 %v986, %v1020
    %v1025 = vadd.f32 %v1017, %v1023
    %v1026 = vadd.f32 %v1018, %v1024
    %v1029 = vrot.slane %v1025, 6
    %v1030 = vrot.slane %v1026, 5
    %v1031 = vsel %vm205, %v1030, %v1029
    %1032 = vrot.lane.b32.xlu0 %v1031, 96
    %v1033 = vpop.permute.xlu0 %1032
    %v1034 = vsel %vm74, %v1033, 0
    %1036 = vmatprep.subr.mxu0 0.0
    %1037 = vmatpush1.msra.mxu0 0.0
    %1038 = vmatprep.subr.mxu0 0.0
    %1039 = vmatpush1.msra.mxu0 0.0
    %1040 = vmatprep.subr.mxu0 0.0
    %1041 = vmatpush1.msra.mxu0 0.0
    %1042 = vmatprep.subr.mxu0 0.0
    %1043 = vmatpush1.msra.mxu0 0.0
    %1044 = vmatprep.subr.mxu0 0.0
    %1045 = vmatpush1.msra.mxu0 0.0
    %1046 = vmatprep.subr.mxu0 0.0
    %1047 = vmatpush1.msra.mxu0 0.0
    %1048 = vmatprep.subr.mxu0 0.0
    %1049 = vmatpush1.msra.mxu0 0.0
    %1050 = vmatprep.subr.mxu0 0.0
    %1051 = vmatpush1.msra.mxu0 0.0
    %1052 = vmatprep.subr.mxu0 0.0
    %1053 = vmatpush1.msra.mxu0 0.0
    %1054 = vmatprep.subr.mxu0 0.0
    %1055 = vmatpush1.msra.mxu0 0.0
    %1056 = vmatprep.subr.mxu0 0.0
    %1057 = vmatpush1.msra.mxu0 0.0
    %1058 = vmatprep.subr.mxu0 0.0
    %1059 = vmatpush1.msra.mxu0 0.0
    %1060 = vmatprep.subr.mxu0 0.0
    %1061 = vmatpush1.msra.mxu0 %v66
    %1062 = vmatprep.subr.mxu0 0.0
    %1063 = vmatpush1.msra.mxu0 %v65
    %1064 = vmatprep.subr.mxu0 0.0
    %1065 = vmatpush1.msra.mxu0 %v64
    %1066 = vmatprep.subr.mxu0 0.0
    %1067 = vmatpush1.msra.mxu0 %v63
    %1068 = vmatprep.subr.mxu0 0.0
    %1069 = vmatpush2.msra.mxu0 0.0
    %1070 = vmatprep.subr.mxu0 0.0
    %1071 = vmatpush2.msra.mxu0 0.0
    %1072 = vmatprep.subr.mxu0 0.0
    %1073 = vmatpush2.msra.mxu0 0.0
    %1074 = vmatprep.subr.mxu0 0.0
    %1075 = vmatpush2.msra.mxu0 0.0
    %1076 = vmatprep.subr.mxu0 0.0
    %1077 = vmatpush2.msra.mxu0 0.0
    %1078 = vmatprep.subr.mxu0 0.0
    %1079 = vmatpush2.msra.mxu0 0.0
    %1080 = vmatprep.subr.mxu0 0.0
    %1081 = vmatpush2.msra.mxu0 0.0
    %1082 = vmatprep.subr.mxu0 0.0
    %1083 = vmatpush2.msra.mxu0 0.0
    %1084 = vmatprep.subr.mxu0 0.0
    %1085 = vmatpush2.msra.mxu0 0.0
    %1086 = vmatprep.subr.mxu0 0.0
    %1087 = vmatpush2.msra.mxu0 0.0
    %1088 = vmatprep.subr.mxu0 0.0
    %1089 = vmatpush2.msra.mxu0 0.0
    %1090 = vmatprep.subr.mxu0 0.0
    %1091 = vmatpush2.msra.mxu0 0.0
    %1092 = vmatprep.subr.mxu0 0.0
    %1093 = vmatpush2.msra.mxu0 0.0
    %1094 = vmatprep.subr.mxu0 0.0
    %1095 = vmatpush2.msra.mxu0 0.0
    %1096 = vmatprep.subr.mxu0 0.0
    %1097 = vmatpush2.msra.mxu0 0.0
    %1098 = vmatprep.subr.mxu0 0.0
    %1099 = vmatpush2.msra.mxu0 0.0
    %1100 = vmatprep.mubr.f32.mxu0 0.0
    %1101 = vmatmul.mubr.f32.gmra.mxu0 %v1034
    %v1102 = vpop.f32.mrf.mxu0
    %v1103 = vadd.f32 %v72, %v1102
    %v1104 = vpop.f32.mrf.mxu0
    %1105 = vdwg.mxu0
    %v1107 = vrot.slane %v1103, 1
    %v1108 = vrot.slane %v1103, 2
    %v1111 = vadd.f32 %v61, %v1107
    %v1112 = vadd.f32 %v62, %v1108
    %v1113 = vxor.u32 %v1111, 2147483648
    %v1114 = vxor.u32 %v1112, 2147483648
    %v1115 = vmul.f32 %v1113, 1.442695
    %v1116 = vpow.pop %v1115
    %v1117 = vmul.f32 %v1114, 1.442695
    %v1118 = vpow.pop %v1117
    %v1119 = vadd.f32 %v1116, 1.0
    %v1120 = vadd.f32 %v1118, 1.0
    %v1121 = vrcp.pop %v1119
    %v1122 = vmul.f32 1.0, %v1121
    %v1123 = vrcp.pop %v1120
    %v1124 = vmul.f32 1.0, %v1123
    %1125 = vrot.lane.b32.xlu0 %v1107, 64
    %v1126 = vpop.permute.xlu0 %1125
    %1127 = vrot.lane.b32.xlu0 %v1108, 64
    %v1128 = vpop.permute.xlu0 %1127
    %v1131 = vmul.f32 %v1122, %v1126
    %v1132 = vmul.f32 %v1124, %v1128
    %1135 = vrot.lane.b32.xlu0 %v1131, 64
    %v1136 = vpop.permute.xlu0 %1135
    %1137 = vrot.lane.b32.xlu0 %v1132, 64
    %v1138 = vpop.permute.xlu0 %1137
    %v1141 = vadd.f32 %v61, %v1136
    %v1142 = vadd.f32 %v62, %v1138
    %v1143 = vtanh.pop %v1141
    %v1144 = vtanh.pop %v1142
    %v1145 = vsub.f32 1.0, %v1122
    %v1146 = vsub.f32 1.0, %v1124
    %1149 = vrot.lane.b32.xlu0 %v1143, 96
    %v1150 = vpop.permute.xlu0 %1149
    %1151 = vrot.lane.b32.xlu0 %v1144, 96
    %v1152 = vpop.permute.xlu0 %1151
    %v1155 = vmul.f32 %v1145, %v1150
    %v1156 = vmul.f32 %v1146, %v1152
    %v1157 = vrot.slane %v1025, 7
    %v1158 = vrot.slane %v1026, 7
    %v1161 = vmul.f32 %v1122, %v1157
    %v1162 = vmul.f32 %v1124, %v1158
    %v1163 = vadd.f32 %v1155, %v1161
    %v1164 = vadd.f32 %v1156, %v1162
    %v1165 = vld [vmem:[%s3] sm:$0xff]
    %v1166 = vld [vmem:[%s3 + $0x8] sm:$0xff]
    %v1167 = vld [vmem:[%s3 + $0x10] sm:$0xff]
    %v1168 = vld [vmem:[%s3 + $0x18] sm:$0xff]
    %v1169 = vld [vmem:[%s4] sm:$0x1]
    %v1171 = vlaneseq
    %v1172 = vshrl.u32 %v1171, 7
    %v1173 = vsub.s32 0, %v1172
    %v1174 = vrot.slane %v1169, %v1173
    %v1178 = vrot.slane %v1163, 7
    %v1179 = vrot.slane %v1164, 6
    %v1180 = vsel %vm205, %v1179, %v1178
    %1181 = vrot.lane.b32.xlu0 %v1180, 96
    %v1182 = vpop.permute.xlu0 %1181
    %v1183 = vsel %vm74, %v1182, 0
    %1185 = vmatprep.subr.mxu0 0.0
    %1186 = vmatpush1.msra.mxu0 0.0
    %1187 = vmatprep.subr.mxu0 0.0
    %1188 = vmatpush1.msra.mxu0 0.0
    %1189 = vmatprep.subr.mxu0 0.0
    %1190 = vmatpush1.msra.mxu0 0.0
    %1191 = vmatprep.subr.mxu0 0.0
    %1192 = vmatpush1.msra.mxu0 0.0
    %1193 = vmatprep.subr.mxu0 0.0
    %1194 = vmatpush1.msra.mxu0 0.0
    %1195 = vmatprep.subr.mxu0 0.0
    %1196 = vmatpush1.msra.mxu0 0.0
    %1197 = vmatprep.subr.mxu0 0.0
    %1198 = vmatpush1.msra.mxu0 0.0
    %1199 = vmatprep.subr.mxu0 0.0
    %1200 = vmatpush1.msra.mxu0 0.0
    %1201 = vmatprep.subr.mxu0 0.0
    %1202 = vmatpush1.msra.mxu0 0.0
    %1203 = vmatprep.subr.mxu0 0.0
    %1204 = vmatpush1.msra.mxu0 0.0
    %1205 = vmatprep.subr.mxu0 0.0
    %1206 = vmatpush1.msra.mxu0 0.0
    %1207 = vmatprep.subr.mxu0 0.0
    %1208 = vmatpush1.msra.mxu0 0.0
    %1209 = vmatprep.subr.mxu0 0.0
    %1210 = vmatpush1.msra.mxu0 %v1168
    %1211 = vmatprep.subr.mxu0 0.0
    %1212 = vmatpush1.msra.mxu0 %v1167
    %1213 = vmatprep.subr.mxu0 0.0
    %1214 = vmatpush1.msra.mxu0 %v1166
    %1215 = vmatprep.subr.mxu0 0.0
    %1216 = vmatpush1.msra.mxu0 %v1165
    %1217 = vmatprep.subr.mxu0 0.0
    %1218 = vmatpush2.msra.mxu0 0.0
    %1219 = vmatprep.subr.mxu0 0.0
    %1220 = vmatpush2.msra.mxu0 0.0
    %1221 = vmatprep.subr.mxu0 0.0
    %1222 = vmatpush2.msra.mxu0 0.0
    %1223 = vmatprep.subr.mxu0 0.0
    %1224 = vmatpush2.msra.mxu0 0.0
    %1225 = vmatprep.subr.mxu0 0.0
    %1226 = vmatpush2.msra.mxu0 0.0
    %1227 = vmatprep.subr.mxu0 0.0
    %1228 = vmatpush2.msra.mxu0 0.0
    %1229 = vmatprep.subr.mxu0 0.0
    %1230 = vmatpush2.msra.mxu0 0.0
    %1231 = vmatprep.subr.mxu0 0.0
    %1232 = vmatpush2.msra.mxu0 0.0
    %1233 = vmatprep.subr.mxu0 0.0
    %1234 = vmatpush2.msra.mxu0 0.0
    %1235 = vmatprep.subr.mxu0 0.0
    %1236 = vmatpush2.msra.mxu0 0.0
    %1237 = vmatprep.subr.mxu0 0.0
    %1238 = vmatpush2.msra.mxu0 0.0
    %1239 = vmatprep.subr.mxu0 0.0
    %1240 = vmatpush2.msra.mxu0 0.0
    %1241 = vmatprep.subr.mxu0 0.0
    %1242 = vmatpush2.msra.mxu0 0.0
    %1243 = vmatprep.subr.mxu0 0.0
    %1244 = vmatpush2.msra.mxu0 0.0
    %1245 = vmatprep.subr.mxu0 0.0
    %1246 = vmatpush2.msra.mxu0 0.0
    %1247 = vmatprep.subr.mxu0 0.0
    %1248 = vmatpush2.msra.mxu0 0.0
    %1249 = vmatprep.mubr.f32.mxu0 0.0
    %1250 = vmatmul.mubr.f32.gmra.mxu0 %v1183
    %v1251 = vpop.f32.mrf.mxu0
    %v1252 = vadd.f32 %v1174, %v1251
    %v1253 = vpop.f32.mrf.mxu0
    %1254 = vdwg.mxu0
    %v1255 = vmax.f32 %v1252, 0.0
    %v1256 = vld [vmem:[%s5] sm:$0xff]
    %v1257 = vld [vmem:[%s5 + $0x8] sm:$0xff]
    %v1258 = vld [vmem:[%s5 + $0x10] sm:$0xff]
    %v1259 = vld [vmem:[%s5 + $0x18] sm:$0xff]
    %v1260 = vld [vmem:[%s6] sm:$0x1]
    %v1262 = vlaneseq
    %v1263 = vshrl.u32 %v1262, 7
    %v1264 = vsub.s32 0, %v1263
    %v1265 = vrot.slane %v1260, %v1264
    %v1268 = vsel %vm74, %v1255, 0
    %1270 = vmatprep.subr.mxu0 0.0
    %1271 = vmatpush1.msra.mxu0 0.0
    %1272 = vmatprep.subr.mxu0 0.0
    %1273 = vmatpush1.msra.mxu0 0.0
    %1274 = vmatprep.subr.mxu0 0.0
    %1275 = vmatpush1.msra.mxu0 0.0
    %1276 = vmatprep.subr.mxu0 0.0
    %1277 = vmatpush1.msra.mxu0 0.0
    %1278 = vmatprep.subr.mxu0 0.0
    %1279 = vmatpush1.msra.mxu0 0.0
    %1280 = vmatprep.subr.mxu0 0.0
    %1281 = vmatpush1.msra.mxu0 0.0
    %1282 = vmatprep.subr.mxu0 0.0
    %1283 = vmatpush1.msra.mxu0 0.0
    %1284 = vmatprep.subr.mxu0 0.0
    %1285 = vmatpush1.msra.mxu0 0.0
    %1286 = vmatprep.subr.mxu0 0.0
    %1287 = vmatpush1.msra.mxu0 0.0
    %1288 = vmatprep.subr.mxu0 0.0
    %1289 = vmatpush1.msra.mxu0 0.0
    %1290 = vmatprep.subr.mxu0 0.0
    %1291 = vmatpush1.msra.mxu0 0.0
    %1292 = vmatprep.subr.mxu0 0.0
    %1293 = vmatpush1.msra.mxu0 0.0
    %1294 = vmatprep.subr.mxu0 0.0
    %1295 = vmatpush1.msra.mxu0 %v1259
    %1296 = vmatprep.subr.mxu0 0.0
    %1297 = vmatpush1.msra.mxu0 %v1258
    %1298 = vmatprep.subr.mxu0 0.0
    %1299 = vmatpush1.msra.mxu0 %v1257
    %1300 = vmatprep.subr.mxu0 0.0
    %1301 = vmatpush1.msra.mxu0 %v1256
    %1302 = vmatprep.subr.mxu0 0.0
    %1303 = vmatpush2.msra.mxu0 0.0
    %1304 = vmatprep.subr.mxu0 0.0
    %1305 = vmatpush2.msra.mxu0 0.0
    %1306 = vmatprep.subr.mxu0 0.0
    %1307 = vmatpush2.msra.mxu0 0.0
    %1308 = vmatprep.subr.mxu0 0.0
    %1309 = vmatpush2.msra.mxu0 0.0
    %1310 = vmatprep.subr.mxu0 0.0
    %1311 = vmatpush2.msra.mxu0 0.0
    %1312 = vmatprep.subr.mxu0 0.0
    %1313 = vmatpush2.msra.mxu0 0.0
    %1314 = vmatprep.subr.mxu0 0.0
    %1315 = vmatpush2.msra.mxu0 0.0
    %1316 = vmatprep.subr.mxu0 0.0
    %1317 = vmatpush2.msra.mxu0 0.0
    %1318 = vmatprep.subr.mxu0 0.0
    %1319 = vmatpush2.msra.mxu0 0.0
    %1320 = vmatprep.subr.mxu0 0.0
    %1321 = vmatpush2.msra.mxu0 0.0
    %1322 = vmatprep.subr.mxu0 0.0
    %1323 = vmatpush2.msra.mxu0 0.0
    %1324 = vmatprep.subr.mxu0 0.0
    %1325 = vmatpush2.msra.mxu0 0.0
    %1326 = vmatprep.subr.mxu0 0.0
    %1327 = vmatpush2.msra.mxu0 0.0
    %1328 = vmatprep.subr.mxu0 0.0
    %1329 = vmatpush2.msra.mxu0 0.0
    %1330 = vmatprep.subr.mxu0 0.0
    %1331 = vmatpush2.msra.mxu0 0.0
    %1332 = vmatprep.subr.mxu0 0.0
    %1333 = vmatpush2.msra.mxu0 0.0
    %1334 = vmatprep.mubr.f32.mxu0 0.0
    %1335 = vmatmul.mubr.f32.gmra.mxu0 %v1268
    %v1336 = vpop.f32.mrf.mxu0
    %v1337 = vadd.f32 %v1265, %v1336
    %v1338 = vpop.f32.mrf.mxu0
    %1339 = vdwg.mxu0
    %vm1340 = vcmask 25600
    %1341 = vst.msk [vmem:[#allocation5] sm:$0x3] %vm1340, %v1337
    %v1342 = vld [vmem:[%s8] sm:$0x1]
    %v1343 = vld [vmem:[%s9] sm:$0xff]
    %v1344 = vld [vmem:[%s9 + $0x8] sm:$0xff]
    %v1345 = vld [vmem:[%s9 + $0x10] sm:$0xff]
    %v1346 = vld [vmem:[%s9 + $0x18] sm:$0xff]
    %v1347 = vld [vmem:[%s10] sm:$0x1]
    %v1348 = vld [vmem:[%s11] sm:$0xff]
    %v1349 = vld [vmem:[%s11 + $0x8] sm:$0xff]
    %v1350 = vld [vmem:[%s11 + $0x10] sm:$0xff]
    %v1351 = vld [vmem:[%s11 + $0x18] sm:$0xff]
    %v1352 = vld [vmem:[%s12] sm:$0x1]
    %v1353 = vld [vmem:[#allocation2] sm:$0xff]
    %v1354 = vld [vmem:[#allocation2 + $0x8] sm:$0xff]
    %v1355 = vld [vmem:[#allocation2 + $0x10] sm:$0xff]
    %v1356 = vld [vmem:[#allocation2 + $0x18] sm:$0xff]
    %v1358 = vlaneseq
    %v1359 = vshrl.u32 %v1358, 7
    %v1360 = vsub.s32 0, %v1359
    %v1361 = vrot.slane %v1342, %v1360
    %1363 = vmatprep.subr.mxu0 0.0
    %1364 = vmatpush1.msra.mxu0 0.0
    %1365 = vmatprep.subr.mxu0 0.0
    %1366 = vmatpush1.msra.mxu0 0.0
    %1367 = vmatprep.subr.mxu0 0.0
    %1368 = vmatpush1.msra.mxu0 0.0
    %1369 = vmatprep.subr.mxu0 0.0
    %1370 = vmatpush1.msra.mxu0 0.0
    %1371 = vmatprep.subr.mxu0 0.0
    %1372 = vmatpush1.msra.mxu0 0.0
    %1373 = vmatprep.subr.mxu0 0.0
    %1374 = vmatpush1.msra.mxu0 0.0
    %1375 = vmatprep.subr.mxu0 0.0
    %1376 = vmatpush1.msra.mxu0 0.0
    %1377 = vmatprep.subr.mxu0 0.0
    %1378 = vmatpush1.msra.mxu0 0.0
    %1379 = vmatprep.subr.mxu0 0.0
    %1380 = vmatpush1.msra.mxu0 0.0
    %1381 = vmatprep.subr.mxu0 0.0
    %1382 = vmatpush1.msra.mxu0 0.0
    %1383 = vmatprep.subr.mxu0 0.0
    %1384 = vmatpush1.msra.mxu0 0.0
    %1385 = vmatprep.subr.mxu0 0.0
    %1386 = vmatpush1.msra.mxu0 0.0
    %1387 = vmatprep.subr.mxu0 0.0
    %1388 = vmatpush1.msra.mxu0 %v1356
    %1389 = vmatprep.subr.mxu0 0.0
    %1390 = vmatpush1.msra.mxu0 %v1355
    %1391 = vmatprep.subr.mxu0 0.0
    %1392 = vmatpush1.msra.mxu0 %v1354
    %1393 = vmatprep.subr.mxu0 0.0
    %1394 = vmatpush1.msra.mxu0 %v1353
    %1395 = vmatprep.subr.mxu0 0.0
    %1396 = vmatpush2.msra.mxu0 0.0
    %1397 = vmatprep.subr.mxu0 0.0
    %1398 = vmatpush2.msra.mxu0 0.0
    %1399 = vmatprep.subr.mxu0 0.0
    %1400 = vmatpush2.msra.mxu0 0.0
    %1401 = vmatprep.subr.mxu0 0.0
    %1402 = vmatpush2.msra.mxu0 0.0
    %1403 = vmatprep.subr.mxu0 0.0
    %1404 = vmatpush2.msra.mxu0 0.0
    %1405 = vmatprep.subr.mxu0 0.0
    %1406 = vmatpush2.msra.mxu0 0.0
    %1407 = vmatprep.subr.mxu0 0.0
    %1408 = vmatpush2.msra.mxu0 0.0
    %1409 = vmatprep.subr.mxu0 0.0
    %1410 = vmatpush2.msra.mxu0 0.0
    %1411 = vmatprep.subr.mxu0 0.0
    %1412 = vmatpush2.msra.mxu0 0.0
    %1413 = vmatprep.subr.mxu0 0.0
    %1414 = vmatpush2.msra.mxu0 0.0
    %1415 = vmatprep.subr.mxu0 0.0
    %1416 = vmatpush2.msra.mxu0 0.0
    %1417 = vmatprep.subr.mxu0 0.0
    %1418 = vmatpush2.msra.mxu0 0.0
    %1419 = vmatprep.subr.mxu0 0.0
    %1420 = vmatpush2.msra.mxu0 0.0
    %1421 = vmatprep.subr.mxu0 0.0
    %1422 = vmatpush2.msra.mxu0 0.0
    %1423 = vmatprep.subr.mxu0 0.0
    %1424 = vmatpush2.msra.mxu0 0.0
    %1425 = vmatprep.subr.mxu0 0.0
    %1426 = vmatpush2.msra.mxu0 0.0
    %1427 = vmatprep.mubr.f32.mxu0 0.0
    %1428 = vmatmul.mubr.f32.gmra.mxu0 %v1183
    %v1429 = vpop.f32.mrf.mxu0
    %v1430 = vadd.f32 %v1361, %v1429
    %v1431 = vpop.f32.mrf.mxu0
    %1432 = vdwg.mxu0
    %s1433 = scalar_lea.vmem [#allocation2], 32
    %v1434 = vld [vmem:[%s1433] sm:$0xff]
    %v1435 = vld [vmem:[%s1433 + $0x8] sm:$0xff]
    %v1436 = vld [vmem:[%s1433 + $0x10] sm:$0xff]
    %v1437 = vld [vmem:[%s1433 + $0x18] sm:$0xff]
    %1438 = vmatprep.subr.mxu0 0.0
    %1439 = vmatpush1.msra.mxu0 0.0
    %1440 = vmatprep.subr.mxu0 0.0
    %1441 = vmatpush1.msra.mxu0 0.0
    %1442 = vmatprep.subr.mxu0 0.0
    %1443 = vmatpush1.msra.mxu0 0.0
    %1444 = vmatprep.subr.mxu0 0.0
    %1445 = vmatpush1.msra.mxu0 0.0
    %1446 = vmatprep.subr.mxu0 0.0
    %1447 = vmatpush1.msra.mxu0 0.0
    %1448 = vmatprep.subr.mxu0 0.0
    %1449 = vmatpush1.msra.mxu0 0.0
    %1450 = vmatprep.subr.mxu0 0.0
    %1451 = vmatpush1.msra.mxu0 0.0
    %1452 = vmatprep.subr.mxu0 0.0
    %1453 = vmatpush1.msra.mxu0 0.0
    %1454 = vmatprep.subr.mxu0 0.0
    %1455 = vmatpush1.msra.mxu0 0.0
    %1456 = vmatprep.subr.mxu0 0.0
    %1457 = vmatpush1.msra.mxu0 0.0
    %1458 = vmatprep.subr.mxu0 0.0
    %1459 = vmatpush1.msra.mxu0 0.0
    %1460 = vmatprep.subr.mxu0 0.0
    %1461 = vmatpush1.msra.mxu0 0.0
    %1462 = vmatprep.subr.mxu0 0.0
    %1463 = vmatpush1.msra.mxu0 %v1437
    %1464 = vmatprep.subr.mxu0 0.0
    %1465 = vmatpush1.msra.mxu0 %v1436
    %1466 = vmatprep.subr.mxu0 0.0
    %1467 = vmatpush1.msra.mxu0 %v1435
    %1468 = vmatprep.subr.mxu0 0.0
    %1469 = vmatpush1.msra.mxu0 %v1434
    %1470 = vmatprep.subr.mxu0 0.0
    %1471 = vmatpush2.msra.mxu0 0.0
    %1472 = vmatprep.subr.mxu0 0.0
    %1473 = vmatpush2.msra.mxu0 0.0
    %1474 = vmatprep.subr.mxu0 0.0
    %1475 = vmatpush2.msra.mxu0 0.0
    %1476 = vmatprep.subr.mxu0 0.0
    %1477 = vmatpush2.msra.mxu0 0.0
    %1478 = vmatprep.subr.mxu0 0.0
    %1479 = vmatpush2.msra.mxu0 0.0
    %1480 = vmatprep.subr.mxu0 0.0
    %1481 = vmatpush2.msra.mxu0 0.0
    %1482 = vmatprep.subr.mxu0 0.0
    %1483 = vmatpush2.msra.mxu0 0.0
    %1484 = vmatprep.subr.mxu0 0.0
    %1485 = vmatpush2.msra.mxu0 0.0
    %1486 = vmatprep.subr.mxu0 0.0
    %1487 = vmatpush2.msra.mxu0 0.0
    %1488 = vmatprep.subr.mxu0 0.0
    %1489 = vmatpush2.msra.mxu0 0.0
    %1490 = vmatprep.subr.mxu0 0.0
    %1491 = vmatpush2.msra.mxu0 0.0
    %1492 = vmatprep.subr.mxu0 0.0
    %1493 = vmatpush2.msra.mxu0 0.0
    %1494 = vmatprep.subr.mxu0 0.0
    %1495 = vmatpush2.msra.mxu0 0.0
    %1496 = vmatprep.subr.mxu0 0.0
    %1497 = vmatpush2.msra.mxu0 0.0
    %1498 = vmatprep.subr.mxu0 0.0
    %1499 = vmatpush2.msra.mxu0 0.0
    %1500 = vmatprep.subr.mxu0 0.0
    %1501 = vmatpush2.msra.mxu0 0.0
    %1502 = vmatprep.mubr.f32.mxu0 0.0
    %1503 = vmatmul.mubr.f32.gmra.mxu0 %v1183
    %v1504 = vpop.f32.mrf.mxu0
    %v1505 = vadd.f32 %v1361, %v1504
    %v1506 = vpop.f32.mrf.mxu0
    %1507 = vdwg.mxu0
    %s1508 = scalar_lea.vmem [#allocation2], 64
    %v1509 = vld [vmem:[%s1508] sm:$0xff]
    %v1510 = vld [vmem:[%s1508 + $0x8] sm:$0xff]
    %v1511 = vld [vmem:[%s1508 + $0x10] sm:$0xff]
    %v1512 = vld [vmem:[%s1508 + $0x18] sm:$0xff]
    %1513 = vmatprep.subr.mxu0 0.0
    %1514 = vmatpush1.msra.mxu0 0.0
    %1515 = vmatprep.subr.mxu0 0.0
    %1516 = vmatpush1.msra.mxu0 0.0
    %1517 = vmatprep.subr.mxu0 0.0
    %1518 = vmatpush1.msra.mxu0 0.0
    %1519 = vmatprep.subr.mxu0 0.0
    %1520 = vmatpush1.msra.mxu0 0.0
    %1521 = vmatprep.subr.mxu0 0.0
    %1522 = vmatpush1.msra.mxu0 0.0
    %1523 = vmatprep.subr.mxu0 0.0
    %1524 = vmatpush1.msra.mxu0 0.0
    %1525 = vmatprep.subr.mxu0 0.0
    %1526 = vmatpush1.msra.mxu0 0.0
    %1527 = vmatprep.subr.mxu0 0.0
    %1528 = vmatpush1.msra.mxu0 0.0
    %1529 = vmatprep.subr.mxu0 0.0
    %1530 = vmatpush1.msra.mxu0 0.0
    %1531 = vmatprep.subr.mxu0 0.0
    %1532 = vmatpush1.msra.mxu0 0.0
    %1533 = vmatprep.subr.mxu0 0.0
    %1534 = vmatpush1.msra.mxu0 0.0
    %1535 = vmatprep.subr.mxu0 0.0
    %1536 = vmatpush1.msra.mxu0 0.0
    %1537 = vmatprep.subr.mxu0 0.0
    %1538 = vmatpush1.msra.mxu0 %v1512
    %1539 = vmatprep.subr.mxu0 0.0
    %1540 = vmatpush1.msra.mxu0 %v1511
    %1541 = vmatprep.subr.mxu0 0.0
    %1542 = vmatpush1.msra.mxu0 %v1510
    %1543 = vmatprep.subr.mxu0 0.0
    %1544 = vmatpush1.msra.mxu0 %v1509
    %1545 = vmatprep.subr.mxu0 0.0
    %1546 = vmatpush2.msra.mxu0 0.0
    %1547 = vmatprep.subr.mxu0 0.0
    %1548 = vmatpush2.msra.mxu0 0.0
    %1549 = vmatprep.subr.mxu0 0.0
    %1550 = vmatpush2.msra.mxu0 0.0
    %1551 = vmatprep.subr.mxu0 0.0
    %1552 = vmatpush2.msra.mxu0 0.0
    %1553 = vmatprep.subr.mxu0 0.0
    %1554 = vmatpush2.msra.mxu0 0.0
    %1555 = vmatprep.subr.mxu0 0.0
    %1556 = vmatpush2.msra.mxu0 0.0
    %1557 = vmatprep.subr.mxu0 0.0
    %1558 = vmatpush2.msra.mxu0 0.0
    %1559 = vmatprep.subr.mxu0 0.0
    %1560 = vmatpush2.msra.mxu0 0.0
    %1561 = vmatprep.subr.mxu0 0.0
    %1562 = vmatpush2.msra.mxu0 0.0
    %1563 = vmatprep.subr.mxu0 0.0
    %1564 = vmatpush2.msra.mxu0 0.0
    %1565 = vmatprep.subr.mxu0 0.0
    %1566 = vmatpush2.msra.mxu0 0.0
    %1567 = vmatprep.subr.mxu0 0.0
    %1568 = vmatpush2.msra.mxu0 0.0
    %1569 = vmatprep.subr.mxu0 0.0
    %1570 = vmatpush2.msra.mxu0 0.0
    %1571 = vmatprep.subr.mxu0 0.0
    %1572 = vmatpush2.msra.mxu0 0.0
    %1573 = vmatprep.subr.mxu0 0.0
    %1574 = vmatpush2.msra.mxu0 0.0
    %1575 = vmatprep.subr.mxu0 0.0
    %1576 = vmatpush2.msra.mxu0 0.0
    %1577 = vmatprep.mubr.f32.mxu0 0.0
    %1578 = vmatmul.mubr.f32.gmra.mxu0 %v1183
    %v1579 = vpop.f32.mrf.mxu0
    %v1580 = vadd.f32 %v1361, %v1579
    %v1581 = vpop.f32.mrf.mxu0
    %1582 = vdwg.mxu0
    %s1583 = scalar_lea.vmem [#allocation2], 96
    %v1584 = vld [vmem:[%s1583] sm:$0xff]
    %v1585 = vld [vmem:[%s1583 + $0x8] sm:$0xff]
    %v1586 = vld [vmem:[%s1583 + $0x10] sm:$0xff]
    %v1587 = vld [vmem:[%s1583 + $0x18] sm:$0xff]
    %1588 = vmatprep.subr.mxu0 0.0
    %1589 = vmatpush1.msra.mxu0 0.0
    %1590 = vmatprep.subr.mxu0 0.0
    %1591 = vmatpush1.msra.mxu0 0.0
    %1592 = vmatprep.subr.mxu0 0.0
    %1593 = vmatpush1.msra.mxu0 0.0
    %1594 = vmatprep.subr.mxu0 0.0
    %1595 = vmatpush1.msra.mxu0 0.0
    %1596 = vmatprep.subr.mxu0 0.0
    %1597 = vmatpush1.msra.mxu0 0.0
    %1598 = vmatprep.subr.mxu0 0.0
    %1599 = vmatpush1.msra.mxu0 0.0
    %1600 = vmatprep.subr.mxu0 0.0
    %1601 = vmatpush1.msra.mxu0 0.0
    %1602 = vmatprep.subr.mxu0 0.0
    %1603 = vmatpush1.msra.mxu0 0.0
    %1604 = vmatprep.subr.mxu0 0.0
    %1605 = vmatpush1.msra.mxu0 0.0
    %1606 = vmatprep.subr.mxu0 0.0
    %1607 = vmatpush1.msra.mxu0 0.0
    %1608 = vmatprep.subr.mxu0 0.0
    %1609 = vmatpush1.msra.mxu0 0.0
    %1610 = vmatprep.subr.mxu0 0.0
    %1611 = vmatpush1.msra.mxu0 0.0
    %1612 = vmatprep.subr.mxu0 0.0
    %1613 = vmatpush1.msra.mxu0 %v1587
    %1614 = vmatprep.subr.mxu0 0.0
    %1615 = vmatpush1.msra.mxu0 %v1586
    %1616 = vmatprep.subr.mxu0 0.0
    %1617 = vmatpush1.msra.mxu0 %v1585
    %1618 = vmatprep.subr.mxu0 0.0
    %1619 = vmatpush1.msra.mxu0 %v1584
    %1620 = vmatprep.subr.mxu0 0.0
    %1621 = vmatpush2.msra.mxu0 0.0
    %1622 = vmatprep.subr.mxu0 0.0
    %1623 = vmatpush2.msra.mxu0 0.0
    %1624 = vmatprep.subr.mxu0 0.0
    %1625 = vmatpush2.msra.mxu0 0.0
    %1626 = vmatprep.subr.mxu0 0.0
    %1627 = vmatpush2.msra.mxu0 0.0
    %1628 = vmatprep.subr.mxu0 0.0
    %1629 = vmatpush2.msra.mxu0 0.0
    %1630 = vmatprep.subr.mxu0 0.0
    %1631 = vmatpush2.msra.mxu0 0.0
    %1632 = vmatprep.subr.mxu0 0.0
    %1633 = vmatpush2.msra.mxu0 0.0
    %1634 = vmatprep.subr.mxu0 0.0
    %1635 = vmatpush2.msra.mxu0 0.0
    %1636 = vmatprep.subr.mxu0 0.0
    %1637 = vmatpush2.msra.mxu0 0.0
    %1638 = vmatprep.subr.mxu0 0.0
    %1639 = vmatpush2.msra.mxu0 0.0
    %1640 = vmatprep.subr.mxu0 0.0
    %1641 = vmatpush2.msra.mxu0 0.0
    %1642 = vmatprep.subr.mxu0 0.0
    %1643 = vmatpush2.msra.mxu0 0.0
    %1644 = vmatprep.subr.mxu0 0.0
    %1645 = vmatpush2.msra.mxu0 0.0
    %1646 = vmatprep.subr.mxu0 0.0
    %1647 = vmatpush2.msra.mxu0 0.0
    %1648 = vmatprep.subr.mxu0 0.0
    %1649 = vmatpush2.msra.mxu0 0.0
    %1650 = vmatprep.subr.mxu0 0.0
    %1651 = vmatpush2.msra.mxu0 0.0
    %1652 = vmatprep.mubr.f32.mxu0 0.0
    %1653 = vmatmul.mubr.f32.gmra.mxu0 %v1183
    %v1654 = vpop.f32.mrf.mxu0
    %v1655 = vadd.f32 %v1361, %v1654
    %v1656 = vpop.f32.mrf.mxu0
    %1657 = vdwg.mxu0
    %s1658 = scalar_lea.vmem [#allocation2], 128
    %v1659 = vld [vmem:[%s1658] sm:$0xff]
    %v1660 = vld [vmem:[%s1658 + $0x8] sm:$0xff]
    %v1661 = vld [vmem:[%s1658 + $0x10] sm:$0xff]
    %v1662 = vld [vmem:[%s1658 + $0x18] sm:$0xff]
    %1663 = vmatprep.subr.mxu0 0.0
    %1664 = vmatpush1.msra.mxu0 0.0
    %1665 = vmatprep.subr.mxu0 0.0
    %1666 = vmatpush1.msra.mxu0 0.0
    %1667 = vmatprep.subr.mxu0 0.0
    %1668 = vmatpush1.msra.mxu0 0.0
    %1669 = vmatprep.subr.mxu0 0.0
    %1670 = vmatpush1.msra.mxu0 0.0
    %1671 = vmatprep.subr.mxu0 0.0
    %1672 = vmatpush1.msra.mxu0 0.0
    %1673 = vmatprep.subr.mxu0 0.0
    %1674 = vmatpush1.msra.mxu0 0.0
    %1675 = vmatprep.subr.mxu0 0.0
    %1676 = vmatpush1.msra.mxu0 0.0
    %1677 = vmatprep.subr.mxu0 0.0
    %1678 = vmatpush1.msra.mxu0 0.0
    %1679 = vmatprep.subr.mxu0 0.0
    %1680 = vmatpush1.msra.mxu0 0.0
    %1681 = vmatprep.subr.mxu0 0.0
    %1682 = vmatpush1.msra.mxu0 0.0
    %1683 = vmatprep.subr.mxu0 0.0
    %1684 = vmatpush1.msra.mxu0 0.0
    %1685 = vmatprep.subr.mxu0 0.0
    %1686 = vmatpush1.msra.mxu0 0.0
    %1687 = vmatprep.subr.mxu0 0.0
    %1688 = vmatpush1.msra.mxu0 %v1662
    %1689 = vmatprep.subr.mxu0 0.0
    %1690 = vmatpush1.msra.mxu0 %v1661
    %1691 = vmatprep.subr.mxu0 0.0
    %1692 = vmatpush1.msra.mxu0 %v1660
    %1693 = vmatprep.subr.mxu0 0.0
    %1694 = vmatpush1.msra.mxu0 %v1659
    %1695 = vmatprep.subr.mxu0 0.0
    %1696 = vmatpush2.msra.mxu0 0.0
    %1697 = vmatprep.subr.mxu0 0.0
    %1698 = vmatpush2.msra.mxu0 0.0
    %1699 = vmatprep.subr.mxu0 0.0
    %1700 = vmatpush2.msra.mxu0 0.0
    %1701 = vmatprep.subr.mxu0 0.0
    %1702 = vmatpush2.msra.mxu0 0.0
    %1703 = vmatprep.subr.mxu0 0.0
    %1704 = vmatpush2.msra.mxu0 0.0
    %1705 = vmatprep.subr.mxu0 0.0
    %1706 = vmatpush2.msra.mxu0 0.0
    %1707 = vmatprep.subr.mxu0 0.0
    %1708 = vmatpush2.msra.mxu0 0.0
    %1709 = vmatprep.subr.mxu0 0.0
    %1710 = vmatpush2.msra.mxu0 0.0
    %1711 = vmatprep.subr.mxu0 0.0
    %1712 = vmatpush2.msra.mxu0 0.0
    %1713 = vmatprep.subr.mxu0 0.0
    %1714 = vmatpush2.msra.mxu0 0.0
    %1715 = vmatprep.subr.mxu0 0.0
    %1716 = vmatpush2.msra.mxu0 0.0
    %1717 = vmatprep.subr.mxu0 0.0
    %1718 = vmatpush2.msra.mxu0 0.0
    %1719 = vmatprep.subr.mxu0 0.0
    %1720 = vmatpush2.msra.mxu0 0.0
    %1721 = vmatprep.subr.mxu0 0.0
    %1722 = vmatpush2.msra.mxu0 0.0
    %1723 = vmatprep.subr.mxu0 0.0
    %1724 = vmatpush2.msra.mxu0 0.0
    %1725 = vmatprep.subr.mxu0 0.0
    %1726 = vmatpush2.msra.mxu0 0.0
    %1727 = vmatprep.mubr.f32.mxu0 0.0
    %1728 = vmatmul.mubr.f32.gmra.mxu0 %v1183
    %v1729 = vpop.f32.mrf.mxu0
    %v1730 = vadd.f32 %v1361, %v1729
    %v1731 = vpop.f32.mrf.mxu0
    %1732 = vdwg.mxu0
    %s1733 = scalar_lea.vmem [#allocation2], 160
    %v1734 = vld [vmem:[%s1733] sm:$0xff]
    %v1735 = vld [vmem:[%s1733 + $0x8] sm:$0xff]
    %v1736 = vld [vmem:[%s1733 + $0x10] sm:$0xff]
    %v1737 = vld [vmem:[%s1733 + $0x18] sm:$0xff]
    %1738 = vmatprep.subr.mxu0 0.0
    %1739 = vmatpush1.msra.mxu0 0.0
    %1740 = vmatprep.subr.mxu0 0.0
    %1741 = vmatpush1.msra.mxu0 0.0
    %1742 = vmatprep.subr.mxu0 0.0
    %1743 = vmatpush1.msra.mxu0 0.0
    %1744 = vmatprep.subr.mxu0 0.0
    %1745 = vmatpush1.msra.mxu0 0.0
    %1746 = vmatprep.subr.mxu0 0.0
    %1747 = vmatpush1.msra.mxu0 0.0
    %1748 = vmatprep.subr.mxu0 0.0
    %1749 = vmatpush1.msra.mxu0 0.0
    %1750 = vmatprep.subr.mxu0 0.0
    %1751 = vmatpush1.msra.mxu0 0.0
    %1752 = vmatprep.subr.mxu0 0.0
    %1753 = vmatpush1.msra.mxu0 0.0
    %1754 = vmatprep.subr.mxu0 0.0
    %1755 = vmatpush1.msra.mxu0 0.0
    %1756 = vmatprep.subr.mxu0 0.0
    %1757 = vmatpush1.msra.mxu0 0.0
    %1758 = vmatprep.subr.mxu0 0.0
    %1759 = vmatpush1.msra.mxu0 0.0
    %1760 = vmatprep.subr.mxu0 0.0
    %1761 = vmatpush1.msra.mxu0 0.0
    %1762 = vmatprep.subr.mxu0 0.0
    %1763 = vmatpush1.msra.mxu0 %v1737
    %1764 = vmatprep.subr.mxu0 0.0
    %1765 = vmatpush1.msra.mxu0 %v1736
    %1766 = vmatprep.subr.mxu0 0.0
    %1767 = vmatpush1.msra.mxu0 %v1735
    %1768 = vmatprep.subr.mxu0 0.0
    %1769 = vmatpush1.msra.mxu0 %v1734
    %1770 = vmatprep.subr.mxu0 0.0
    %1771 = vmatpush2.msra.mxu0 0.0
    %1772 = vmatprep.subr.mxu0 0.0
    %1773 = vmatpush2.msra.mxu0 0.0
    %1774 = vmatprep.subr.mxu0 0.0
    %1775 = vmatpush2.msra.mxu0 0.0
    %1776 = vmatprep.subr.mxu0 0.0
    %1777 = vmatpush2.msra.mxu0 0.0
    %1778 = vmatprep.subr.mxu0 0.0
    %1779 = vmatpush2.msra.mxu0 0.0
    %1780 = vmatprep.subr.mxu0 0.0
    %1781 = vmatpush2.msra.mxu0 0.0
    %1782 = vmatprep.subr.mxu0 0.0
    %1783 = vmatpush2.msra.mxu0 0.0
    %1784 = vmatprep.subr.mxu0 0.0
    %1785 = vmatpush2.msra.mxu0 0.0
    %1786 = vmatprep.subr.mxu0 0.0
    %1787 = vmatpush2.msra.mxu0 0.0
    %1788 = vmatprep.subr.mxu0 0.0
    %1789 = vmatpush2.msra.mxu0 0.0
    %1790 = vmatprep.subr.mxu0 0.0
    %1791 = vmatpush2.msra.mxu0 0.0
    %1792 = vmatprep.subr.mxu0 0.0
    %1793 = vmatpush2.msra.mxu0 0.0
    %1794 = vmatprep.subr.mxu0 0.0
    %1795 = vmatpush2.msra.mxu0 0.0
    %1796 = vmatprep.subr.mxu0 0.0
    %1797 = vmatpush2.msra.mxu0 0.0
    %1798 = vmatprep.subr.mxu0 0.0
    %1799 = vmatpush2.msra.mxu0 0.0
    %1800 = vmatprep.subr.mxu0 0.0
    %1801 = vmatpush2.msra.mxu0 0.0
    %1802 = vmatprep.mubr.f32.mxu0 0.0
    %1803 = vmatmul.mubr.f32.gmra.mxu0 %v1183
    %v1804 = vpop.f32.mrf.mxu0
    %v1805 = vadd.f32 %v1361, %v1804
    %v1806 = vpop.f32.mrf.mxu0
    %1807 = vdwg.mxu0
    %s1808 = scalar_lea.vmem [#allocation2], 192
    %v1809 = vld [vmem:[%s1808] sm:$0xff]
    %v1810 = vld [vmem:[%s1808 + $0x8] sm:$0xff]
    %v1811 = vld [vmem:[%s1808 + $0x10] sm:$0xff]
    %v1812 = vld [vmem:[%s1808 + $0x18] sm:$0xff]
    %1813 = vmatprep.subr.mxu0 0.0
    %1814 = vmatpush1.msra.mxu0 0.0
    %1815 = vmatprep.subr.mxu0 0.0
    %1816 = vmatpush1.msra.mxu0 0.0
    %1817 = vmatprep.subr.mxu0 0.0
    %1818 = vmatpush1.msra.mxu0 0.0
    %1819 = vmatprep.subr.mxu0 0.0
    %1820 = vmatpush1.msra.mxu0 0.0
    %1821 = vmatprep.subr.mxu0 0.0
    %1822 = vmatpush1.msra.mxu0 0.0
    %1823 = vmatprep.subr.mxu0 0.0
    %1824 = vmatpush1.msra.mxu0 0.0
    %1825 = vmatprep.subr.mxu0 0.0
    %1826 = vmatpush1.msra.mxu0 0.0
    %1827 = vmatprep.subr.mxu0 0.0
    %1828 = vmatpush1.msra.mxu0 0.0
    %1829 = vmatprep.subr.mxu0 0.0
    %1830 = vmatpush1.msra.mxu0 0.0
    %1831 = vmatprep.subr.mxu0 0.0
    %1832 = vmatpush1.msra.mxu0 0.0
    %1833 = vmatprep.subr.mxu0 0.0
    %1834 = vmatpush1.msra.mxu0 0.0
    %1835 = vmatprep.subr.mxu0 0.0
    %1836 = vmatpush1.msra.mxu0 0.0
    %1837 = vmatprep.subr.mxu0 0.0
    %1838 = vmatpush1.msra.mxu0 %v1812
    %1839 = vmatprep.subr.mxu0 0.0
    %1840 = vmatpush1.msra.mxu0 %v1811
    %1841 = vmatprep.subr.mxu0 0.0
    %1842 = vmatpush1.msra.mxu0 %v1810
    %1843 = vmatprep.subr.mxu0 0.0
    %1844 = vmatpush1.msra.mxu0 %v1809
    %1845 = vmatprep.subr.mxu0 0.0
    %1846 = vmatpush2.msra.mxu0 0.0
    %1847 = vmatprep.subr.mxu0 0.0
    %1848 = vmatpush2.msra.mxu0 0.0
    %1849 = vmatprep.subr.mxu0 0.0
    %1850 = vmatpush2.msra.mxu0 0.0
    %1851 = vmatprep.subr.mxu0 0.0
    %1852 = vmatpush2.msra.mxu0 0.0
    %1853 = vmatprep.subr.mxu0 0.0
    %1854 = vmatpush2.msra.mxu0 0.0
    %1855 = vmatprep.subr.mxu0 0.0
    %1856 = vmatpush2.msra.mxu0 0.0
    %1857 = vmatprep.subr.mxu0 0.0
    %1858 = vmatpush2.msra.mxu0 0.0
    %1859 = vmatprep.subr.mxu0 0.0
    %1860 = vmatpush2.msra.mxu0 0.0
    %1861 = vmatprep.subr.mxu0 0.0
    %1862 = vmatpush2.msra.mxu0 0.0
    %1863 = vmatprep.subr.mxu0 0.0
    %1864 = vmatpush2.msra.mxu0 0.0
    %1865 = vmatprep.subr.mxu0 0.0
    %1866 = vmatpush2.msra.mxu0 0.0
    %1867 = vmatprep.subr.mxu0 0.0
    %1868 = vmatpush2.msra.mxu0 0.0
    %1869 = vmatprep.subr.mxu0 0.0
    %1870 = vmatpush2.msra.mxu0 0.0
    %1871 = vmatprep.subr.mxu0 0.0
    %1872 = vmatpush2.msra.mxu0 0.0
    %1873 = vmatprep.subr.mxu0 0.0
    %1874 = vmatpush2.msra.mxu0 0.0
    %1875 = vmatprep.subr.mxu0 0.0
    %1876 = vmatpush2.msra.mxu0 0.0
    %1877 = vmatprep.mubr.f32.mxu0 0.0
    %1878 = vmatmul.mubr.f32.gmra.mxu0 %v1183
    %v1879 = vpop.f32.mrf.mxu0
    %v1880 = vadd.f32 %v1361, %v1879
    %v1881 = vpop.f32.mrf.mxu0
    %1882 = vdwg.mxu0
    %s1883 = scalar_lea.vmem [#allocation2], 224
    %v1884 = vld [vmem:[%s1883] sm:$0xff]
    %v1885 = vld [vmem:[%s1883 + $0x8] sm:$0xff]
    %v1886 = vld [vmem:[%s1883 + $0x10] sm:$0xff]
    %v1887 = vld [vmem:[%s1883 + $0x18] sm:$0xff]
    %1888 = vmatprep.subr.mxu0 0.0
    %1889 = vmatpush1.msra.mxu0 0.0
    %1890 = vmatprep.subr.mxu0 0.0
    %1891 = vmatpush1.msra.mxu0 0.0
    %1892 = vmatprep.subr.mxu0 0.0
    %1893 = vmatpush1.msra.mxu0 0.0
    %1894 = vmatprep.subr.mxu0 0.0
    %1895 = vmatpush1.msra.mxu0 0.0
    %1896 = vmatprep.subr.mxu0 0.0
    %1897 = vmatpush1.msra.mxu0 0.0
    %1898 = vmatprep.subr.mxu0 0.0
    %1899 = vmatpush1.msra.mxu0 0.0
    %1900 = vmatprep.subr.mxu0 0.0
    %1901 = vmatpush1.msra.mxu0 0.0
    %1902 = vmatprep.subr.mxu0 0.0
    %1903 = vmatpush1.msra.mxu0 0.0
    %1904 = vmatprep.subr.mxu0 0.0
    %1905 = vmatpush1.msra.mxu0 0.0
    %1906 = vmatprep.subr.mxu0 0.0
    %1907 = vmatpush1.msra.mxu0 0.0
    %1908 = vmatprep.subr.mxu0 0.0
    %1909 = vmatpush1.msra.mxu0 0.0
    %1910 = vmatprep.subr.mxu0 0.0
    %1911 = vmatpush1.msra.mxu0 0.0
    %1912 = vmatprep.subr.mxu0 0.0
    %1913 = vmatpush1.msra.mxu0 %v1887
    %1914 = vmatprep.subr.mxu0 0.0
    %1915 = vmatpush1.msra.mxu0 %v1886
    %1916 = vmatprep.subr.mxu0 0.0
    %1917 = vmatpush1.msra.mxu0 %v1885
    %1918 = vmatprep.subr.mxu0 0.0
    %1919 = vmatpush1.msra.mxu0 %v1884
    %1920 = vmatprep.subr.mxu0 0.0
    %1921 = vmatpush2.msra.mxu0 0.0
    %1922 = vmatprep.subr.mxu0 0.0
    %1923 = vmatpush2.msra.mxu0 0.0
    %1924 = vmatprep.subr.mxu0 0.0
    %1925 = vmatpush2.msra.mxu0 0.0
    %1926 = vmatprep.subr.mxu0 0.0
    %1927 = vmatpush2.msra.mxu0 0.0
    %1928 = vmatprep.subr.mxu0 0.0
    %1929 = vmatpush2.msra.mxu0 0.0
    %1930 = vmatprep.subr.mxu0 0.0
    %1931 = vmatpush2.msra.mxu0 0.0
    %1932 = vmatprep.subr.mxu0 0.0
    %1933 = vmatpush2.msra.mxu0 0.0
    %1934 = vmatprep.subr.mxu0 0.0
    %1935 = vmatpush2.msra.mxu0 0.0
    %1936 = vmatprep.subr.mxu0 0.0
    %1937 = vmatpush2.msra.mxu0 0.0
    %1938 = vmatprep.subr.mxu0 0.0
    %1939 = vmatpush2.msra.mxu0 0.0
    %1940 = vmatprep.subr.mxu0 0.0
    %1941 = vmatpush2.msra.mxu0 0.0
    %1942 = vmatprep.subr.mxu0 0.0
    %1943 = vmatpush2.msra.mxu0 0.0
    %1944 = vmatprep.subr.mxu0 0.0
    %1945 = vmatpush2.msra.mxu0 0.0
    %1946 = vmatprep.subr.mxu0 0.0
    %1947 = vmatpush2.msra.mxu0 0.0
    %1948 = vmatprep.subr.mxu0 0.0
    %1949 = vmatpush2.msra.mxu0 0.0
    %1950 = vmatprep.subr.mxu0 0.0
    %1951 = vmatpush2.msra.mxu0 0.0
    %1952 = vmatprep.mubr.f32.mxu0 0.0
    %1953 = vmatmul.mubr.f32.gmra.mxu0 %v1183
    %v1954 = vpop.f32.mrf.mxu0
    %v1955 = vadd.f32 %v1361, %v1954
    %v1956 = vpop.f32.mrf.mxu0
    %1957 = vdwg.mxu0
    %v1959 = vlaneseq
    %v1960 = vshrl.u32 %v1959, 7
    %v1961 = vsub.s32 0, %v1960
    %v1962 = vrot.slane %v1347, %v1961
    %1964 = vmatprep.subr.mxu0 0.0
    %1965 = vmatpush1.msra.mxu0 0.0
    %1966 = vmatprep.subr.mxu0 0.0
    %1967 = vmatpush1.msra.mxu0 0.0
    %1968 = vmatprep.subr.mxu0 0.0
    %1969 = vmatpush1.msra.mxu0 0.0
    %1970 = vmatprep.subr.mxu0 0.0
    %1971 = vmatpush1.msra.mxu0 0.0
    %1972 = vmatprep.subr.mxu0 0.0
    %1973 = vmatpush1.msra.mxu0 0.0
    %1974 = vmatprep.subr.mxu0 0.0
    %1975 = vmatpush1.msra.mxu0 0.0
    %1976 = vmatprep.subr.mxu0 0.0
    %1977 = vmatpush1.msra.mxu0 0.0
    %1978 = vmatprep.subr.mxu0 0.0
    %1979 = vmatpush1.msra.mxu0 0.0
    %1980 = vmatprep.subr.mxu0 0.0
    %1981 = vmatpush1.msra.mxu0 0.0
    %1982 = vmatprep.subr.mxu0 0.0
    %1983 = vmatpush1.msra.mxu0 0.0
    %1984 = vmatprep.subr.mxu0 0.0
    %1985 = vmatpush1.msra.mxu0 0.0
    %1986 = vmatprep.subr.mxu0 0.0
    %1987 = vmatpush1.msra.mxu0 0.0
    %1988 = vmatprep.subr.mxu0 0.0
    %1989 = vmatpush1.msra.mxu0 %v1346
    %1990 = vmatprep.subr.mxu0 0.0
    %1991 = vmatpush1.msra.mxu0 %v1345
    %1992 = vmatprep.subr.mxu0 0.0
    %1993 = vmatpush1.msra.mxu0 %v1344
    %1994 = vmatprep.subr.mxu0 0.0
    %1995 = vmatpush1.msra.mxu0 %v1343
    %1996 = vmatprep.subr.mxu0 0.0
    %1997 = vmatpush2.msra.mxu0 0.0
    %1998 = vmatprep.subr.mxu0 0.0
    %1999 = vmatpush2.msra.mxu0 0.0
    %2000 = vmatprep.subr.mxu0 0.0
    %2001 = vmatpush2.msra.mxu0 0.0
    %2002 = vmatprep.subr.mxu0 0.0
    %2003 = vmatpush2.msra.mxu0 0.0
    %2004 = vmatprep.subr.mxu0 0.0
    %2005 = vmatpush2.msra.mxu0 0.0
    %2006 = vmatprep.subr.mxu0 0.0
    %2007 = vmatpush2.msra.mxu0 0.0
    %2008 = vmatprep.subr.mxu0 0.0
    %2009 = vmatpush2.msra.mxu0 0.0
    %2010 = vmatprep.subr.mxu0 0.0
    %2011 = vmatpush2.msra.mxu0 0.0
    %2012 = vmatprep.subr.mxu0 0.0
    %2013 = vmatpush2.msra.mxu0 0.0
    %2014 = vmatprep.subr.mxu0 0.0
    %2015 = vmatpush2.msra.mxu0 0.0
    %2016 = vmatprep.subr.mxu0 0.0
    %2017 = vmatpush2.msra.mxu0 0.0
    %2018 = vmatprep.subr.mxu0 0.0
    %2019 = vmatpush2.msra.mxu0 0.0
    %2020 = vmatprep.subr.mxu0 0.0
    %2021 = vmatpush2.msra.mxu0 0.0
    %2022 = vmatprep.subr.mxu0 0.0
    %2023 = vmatpush2.msra.mxu0 0.0
    %2024 = vmatprep.subr.mxu0 0.0
    %2025 = vmatpush2.msra.mxu0 0.0
    %2026 = vmatprep.subr.mxu0 0.0
    %2027 = vmatpush2.msra.mxu0 0.0
    %2028 = vmatprep.mubr.f32.mxu0 0.0
    %2029 = vmatmul.mubr.f32.gmra.mxu0 %v76
    %v2030 = vpop.f32.mrf.mxu0
    %v2031 = vadd.f32 %v1962, %v2030
    %v2032 = vpop.f32.mrf.mxu0
    %2033 = vdwg.mxu0
    %v2034 = vadd.f32 %v1430, %v2031
    %v2035 = vxor.u32 %v2034, 2147483648
    %v2036 = vmul.f32 %v2035, 1.442695
    %v2037 = vpow.pop %v2036
    %v2038 = vadd.f32 %v2037, 1.0
    %v2039 = vrcp.pop %v2038
    %v2040 = vmul.f32 1.0, %v2039
    %2042 = vrot.lane.b32.xlu0 %v2031, 64
    %v2043 = vpop.permute.xlu0 %2042
    %v2045 = vmul.f32 %v2040, %v2043
    %2047 = vrot.lane.b32.xlu0 %v2045, 64
    %v2048 = vpop.permute.xlu0 %2047
    %v2050 = vadd.f32 %v1430, %v2048
    %v2051 = vtanh.pop %v2050
    %v2052 = vsub.f32 1.0, %v2040
    %2054 = vrot.lane.b32.xlu0 %v2051, 96
    %v2055 = vpop.permute.xlu0 %2054
    %v2057 = vmul.f32 %v2052, %v2055
    %v2058 = vmul.f32 %v2040, 0.0
    %v2059 = vadd.f32 %v2057, %v2058
    %v2061 = vlaneseq
    %v2062 = vshrl.u32 %v2061, 7
    %v2063 = vsub.s32 0, %v2062
    %v2064 = vrot.slane %v1352, %v2063
    %2067 = vrot.lane.b32.xlu0 %v2059, 96
    %v2068 = vpop.permute.xlu0 %2067
    %v2069 = vsel %vm74, %v2068, 0
    %2071 = vmatprep.subr.mxu0 0.0
    %2072 = vmatpush1.msra.mxu0 0.0
    %2073 = vmatprep.subr.mxu0 0.0
    %2074 = vmatpush1.msra.mxu0 0.0
    %2075 = vmatprep.subr.mxu0 0.0
    %2076 = vmatpush1.msra.mxu0 0.0
    %2077 = vmatprep.subr.mxu0 0.0
    %2078 = vmatpush1.msra.mxu0 0.0
    %2079 = vmatprep.subr.mxu0 0.0
    %2080 = vmatpush1.msra.mxu0 0.0
    %2081 = vmatprep.subr.mxu0 0.0
    %2082 = vmatpush1.msra.mxu0 0.0
    %2083 = vmatprep.subr.mxu0 0.0
    %2084 = vmatpush1.msra.mxu0 0.0
    %2085 = vmatprep.subr.mxu0 0.0
    %2086 = vmatpush1.msra.mxu0 0.0
    %2087 = vmatprep.subr.mxu0 0.0
    %2088 = vmatpush1.msra.mxu0 0.0
    %2089 = vmatprep.subr.mxu0 0.0
    %2090 = vmatpush1.msra.mxu0 0.0
    %2091 = vmatprep.subr.mxu0 0.0
    %2092 = vmatpush1.msra.mxu0 0.0
    %2093 = vmatprep.subr.mxu0 0.0
    %2094 = vmatpush1.msra.mxu0 0.0
    %2095 = vmatprep.subr.mxu0 0.0
    %2096 = vmatpush1.msra.mxu0 %v1351
    %2097 = vmatprep.subr.mxu0 0.0
    %2098 = vmatpush1.msra.mxu0 %v1350
    %2099 = vmatprep.subr.mxu0 0.0
    %2100 = vmatpush1.msra.mxu0 %v1349
    %2101 = vmatprep.subr.mxu0 0.0
    %2102 = vmatpush1.msra.mxu0 %v1348
    %2103 = vmatprep.subr.mxu0 0.0
    %2104 = vmatpush2.msra.mxu0 0.0
    %2105 = vmatprep.subr.mxu0 0.0
    %2106 = vmatpush2.msra.mxu0 0.0
    %2107 = vmatprep.subr.mxu0 0.0
    %2108 = vmatpush2.msra.mxu0 0.0
    %2109 = vmatprep.subr.mxu0 0.0
    %2110 = vmatpush2.msra.mxu0 0.0
    %2111 = vmatprep.subr.mxu0 0.0
    %2112 = vmatpush2.msra.mxu0 0.0
    %2113 = vmatprep.subr.mxu0 0.0
    %2114 = vmatpush2.msra.mxu0 0.0
    %2115 = vmatprep.subr.mxu0 0.0
    %2116 = vmatpush2.msra.mxu0 0.0
    %2117 = vmatprep.subr.mxu0 0.0
    %2118 = vmatpush2.msra.mxu0 0.0
    %2119 = vmatprep.subr.mxu0 0.0
    %2120 = vmatpush2.msra.mxu0 0.0
    %2121 = vmatprep.subr.mxu0 0.0
    %2122 = vmatpush2.msra.mxu0 0.0
    %2123 = vmatprep.subr.mxu0 0.0
    %2124 = vmatpush2.msra.mxu0 0.0
    %2125 = vmatprep.subr.mxu0 0.0
    %2126 = vmatpush2.msra.mxu0 0.0
    %2127 = vmatprep.subr.mxu0 0.0
    %2128 = vmatpush2.msra.mxu0 0.0
    %2129 = vmatprep.subr.mxu0 0.0
    %2130 = vmatpush2.msra.mxu0 0.0
    %2131 = vmatprep.subr.mxu0 0.0
    %2132 = vmatpush2.msra.mxu0 0.0
    %2133 = vmatprep.subr.mxu0 0.0
    %2134 = vmatpush2.msra.mxu0 0.0
    %2135 = vmatprep.mubr.f32.mxu0 0.0
    %2136 = vmatmul.mubr.f32.gmra.mxu0 %v2069
    %v2137 = vpop.f32.mrf.mxu0
    %v2138 = vadd.f32 %v2064, %v2137
    %v2139 = vpop.f32.mrf.mxu0
    %2140 = vdwg.mxu0
    %v2143 = vunpack.c.l.s4 1966171168
    %v2144 = vunpack.c.0.s8 %v2143
    %v2145 = vlaneseq
    %v2146 = vshrl.u32 %v2145, 7
    %v2147 = vsub.s32 %v2144, %v2146
    %v2148 = vrot.slane %v2138, %v2147
    %v2149 = vcombine.high %v2148, %v2148
    %v2151 = vunpack.c.l.s4 1966171168
    %v2152 = vunpack.c.0.s8 %v2151
    %v2153 = vlaneseq
    %v2154 = vshrl.u32 %v2153, 7
    %v2155 = vsub.s32 %v2152, %v2154
    %v2156 = vrot.slane %v2148, %v2155
    %v2158 = vunpack.c.l.s4 1966171168
    %v2159 = vunpack.c.0.s8 %v2158
    %v2160 = vlaneseq
    %v2161 = vshrl.u32 %v2160, 7
    %v2162 = vsub.s32 %v2159, %v2161
    %v2163 = vrot.slane %v2149, %v2162
    %vm2166 = vcmask 24576
    %2167 = vst.msk [vmem:[%s14] sm:$0x1] %vm2166, %v2156
    %2168 = vst.msk [vmem:[%s14 + $0x8] sm:$0x1] %vm2166, %v2163
    %2169 = vmatprep.subr.mxu0 0.0
    %2170 = vmatpush1.msra.mxu0 0.0
    %2171 = vmatprep.subr.mxu0 0.0
    %2172 = vmatpush1.msra.mxu0 0.0
    %2173 = vmatprep.subr.mxu0 0.0
    %2174 = vmatpush1.msra.mxu0 0.0
    %2175 = vmatprep.subr.mxu0 0.0
    %2176 = vmatpush1.msra.mxu0 0.0
    %2177 = vmatprep.subr.mxu0 0.0
    %2178 = vmatpush1.msra.mxu0 0.0
    %2179 = vmatprep.subr.mxu0 0.0
    %2180 = vmatpush1.msra.mxu0 0.0
    %2181 = vmatprep.subr.mxu0 0.0
    %2182 = vmatpush1.msra.mxu0 0.0
    %2183 = vmatprep.subr.mxu0 0.0
    %2184 = vmatpush1.msra.mxu0 0.0
    %2185 = vmatprep.subr.mxu0 0.0
    %2186 = vmatpush1.msra.mxu0 0.0
    %2187 = vmatprep.subr.mxu0 0.0
    %2188 = vmatpush1.msra.mxu0 0.0
    %2189 = vmatprep.subr.mxu0 0.0
    %2190 = vmatpush1.msra.mxu0 0.0
    %2191 = vmatprep.subr.mxu0 0.0
    %2192 = vmatpush1.msra.mxu0 0.0
    %2193 = vmatprep.subr.mxu0 0.0
    %2194 = vmatpush1.msra.mxu0 %v1346
    %2195 = vmatprep.subr.mxu0 0.0
    %2196 = vmatpush1.msra.mxu0 %v1345
    %2197 = vmatprep.subr.mxu0 0.0
    %2198 = vmatpush1.msra.mxu0 %v1344
    %2199 = vmatprep.subr.mxu0 0.0
    %2200 = vmatpush1.msra.mxu0 %v1343
    %2201 = vmatprep.subr.mxu0 0.0
    %2202 = vmatpush2.msra.mxu0 0.0
    %2203 = vmatprep.subr.mxu0 0.0
    %2204 = vmatpush2.msra.mxu0 0.0
    %2205 = vmatprep.subr.mxu0 0.0
    %2206 = vmatpush2.msra.mxu0 0.0
    %2207 = vmatprep.subr.mxu0 0.0
    %2208 = vmatpush2.msra.mxu0 0.0
    %2209 = vmatprep.subr.mxu0 0.0
    %2210 = vmatpush2.msra.mxu0 0.0
    %2211 = vmatprep.subr.mxu0 0.0
    %2212 = vmatpush2.msra.mxu0 0.0
    %2213 = vmatprep.subr.mxu0 0.0
    %2214 = vmatpush2.msra.mxu0 0.0
    %2215 = vmatprep.subr.mxu0 0.0
    %2216 = vmatpush2.msra.mxu0 0.0
    %2217 = vmatprep.subr.mxu0 0.0
    %2218 = vmatpush2.msra.mxu0 0.0
    %2219 = vmatprep.subr.mxu0 0.0
    %2220 = vmatpush2.msra.mxu0 0.0
    %2221 = vmatprep.subr.mxu0 0.0
    %2222 = vmatpush2.msra.mxu0 0.0
    %2223 = vmatprep.subr.mxu0 0.0
    %2224 = vmatpush2.msra.mxu0 0.0
    %2225 = vmatprep.subr.mxu0 0.0
    %2226 = vmatpush2.msra.mxu0 0.0
    %2227 = vmatprep.subr.mxu0 0.0
    %2228 = vmatpush2.msra.mxu0 0.0
    %2229 = vmatprep.subr.mxu0 0.0
    %2230 = vmatpush2.msra.mxu0 0.0
    %2231 = vmatprep.subr.mxu0 0.0
    %2232 = vmatpush2.msra.mxu0 0.0
    %2233 = vmatprep.mubr.f32.mxu0 0.0
    %2234 = vmatmul.mubr.f32.gmra.mxu0 %v2069
    %v2235 = vpop.f32.mrf.mxu0
    %v2236 = vadd.f32 %v1962, %v2235
    %v2237 = vpop.f32.mrf.mxu0
    %2238 = vdwg.mxu0
    %v2239 = vadd.f32 %v1505, %v2236
    %v2240 = vxor.u32 %v2239, 2147483648
    %v2241 = vmul.f32 %v2240, 1.442695
    %v2242 = vpow.pop %v2241
    %v2243 = vadd.f32 %v2242, 1.0
    %v2244 = vrcp.pop %v2243
    %v2245 = vmul.f32 1.0, %v2244
    %2247 = vrot.lane.b32.xlu0 %v2236, 64
    %v2248 = vpop.permute.xlu0 %2247
    %v2250 = vmul.f32 %v2245, %v2248
    %2252 = vrot.lane.b32.xlu0 %v2250, 64
    %v2253 = vpop.permute.xlu0 %2252
    %v2255 = vadd.f32 %v1505, %v2253
    %v2256 = vtanh.pop %v2255
    %v2257 = vsub.f32 1.0, %v2245
    %2259 = vrot.lane.b32.xlu0 %v2256, 96
    %v2260 = vpop.permute.xlu0 %2259
    %v2262 = vmul.f32 %v2257, %v2260
    %v2263 = vmul.f32 %v2245, %v2059
    %v2264 = vadd.f32 %v2262, %v2263
    %2266 = vrot.lane.b32.xlu0 %v2264, 96
    %v2267 = vpop.permute.xlu0 %2266
    %v2268 = vsel %vm74, %v2267, 0
    %2270 = vmatprep.subr.mxu0 0.0
    %2271 = vmatpush1.msra.mxu0 0.0
    %2272 = vmatprep.subr.mxu0 0.0
    %2273 = vmatpush1.msra.mxu0 0.0
    %2274 = vmatprep.subr.mxu0 0.0
    %2275 = vmatpush1.msra.mxu0 0.0
    %2276 = vmatprep.subr.mxu0 0.0
    %2277 = vmatpush1.msra.mxu0 0.0
    %2278 = vmatprep.subr.mxu0 0.0
    %2279 = vmatpush1.msra.mxu0 0.0
    %2280 = vmatprep.subr.mxu0 0.0
    %2281 = vmatpush1.msra.mxu0 0.0
    %2282 = vmatprep.subr.mxu0 0.0
    %2283 = vmatpush1.msra.mxu0 0.0
    %2284 = vmatprep.subr.mxu0 0.0
    %2285 = vmatpush1.msra.mxu0 0.0
    %2286 = vmatprep.subr.mxu0 0.0
    %2287 = vmatpush1.msra.mxu0 0.0
    %2288 = vmatprep.subr.mxu0 0.0
    %2289 = vmatpush1.msra.mxu0 0.0
    %2290 = vmatprep.subr.mxu0 0.0
    %2291 = vmatpush1.msra.mxu0 0.0
    %2292 = vmatprep.subr.mxu0 0.0
    %2293 = vmatpush1.msra.mxu0 0.0
    %2294 = vmatprep.subr.mxu0 0.0
    %2295 = vmatpush1.msra.mxu0 %v1351
    %2296 = vmatprep.subr.mxu0 0.0
    %2297 = vmatpush1.msra.mxu0 %v1350
    %2298 = vmatprep.subr.mxu0 0.0
    %2299 = vmatpush1.msra.mxu0 %v1349
    %2300 = vmatprep.subr.mxu0 0.0
    %2301 = vmatpush1.msra.mxu0 %v1348
    %2302 = vmatprep.subr.mxu0 0.0
    %2303 = vmatpush2.msra.mxu0 0.0
    %2304 = vmatprep.subr.mxu0 0.0
    %2305 = vmatpush2.msra.mxu0 0.0
    %2306 = vmatprep.subr.mxu0 0.0
    %2307 = vmatpush2.msra.mxu0 0.0
    %2308 = vmatprep.subr.mxu0 0.0
    %2309 = vmatpush2.msra.mxu0 0.0
    %2310 = vmatprep.subr.mxu0 0.0
    %2311 = vmatpush2.msra.mxu0 0.0
    %2312 = vmatprep.subr.mxu0 0.0
    %2313 = vmatpush2.msra.mxu0 0.0
    %2314 = vmatprep.subr.mxu0 0.0
    %2315 = vmatpush2.msra.mxu0 0.0
    %2316 = vmatprep.subr.mxu0 0.0
    %2317 = vmatpush2.msra.mxu0 0.0
    %2318 = vmatprep.subr.mxu0 0.0
    %2319 = vmatpush2.msra.mxu0 0.0
    %2320 = vmatprep.subr.mxu0 0.0
    %2321 = vmatpush2.msra.mxu0 0.0
    %2322 = vmatprep.subr.mxu0 0.0
    %2323 = vmatpush2.msra.mxu0 0.0
    %2324 = vmatprep.subr.mxu0 0.0
    %2325 = vmatpush2.msra.mxu0 0.0
    %2326 = vmatprep.subr.mxu0 0.0
    %2327 = vmatpush2.msra.mxu0 0.0
    %2328 = vmatprep.subr.mxu0 0.0
    %2329 = vmatpush2.msra.mxu0 0.0
    %2330 = vmatprep.subr.mxu0 0.0
    %2331 = vmatpush2.msra.mxu0 0.0
    %2332 = vmatprep.subr.mxu0 0.0
    %2333 = vmatpush2.msra.mxu0 0.0
    %2334 = vmatprep.mubr.f32.mxu0 0.0
    %2335 = vmatmul.mubr.f32.gmra.mxu0 %v2268
    %v2336 = vpop.f32.mrf.mxu0
    %v2337 = vadd.f32 %v2064, %v2336
    %v2338 = vpop.f32.mrf.mxu0
    %2339 = vdwg.mxu0
    %v2342 = vunpack.c.l.s4 1966171168
    %v2343 = vunpack.c.0.s8 %v2342
    %v2344 = vlaneseq
    %v2345 = vshrl.u32 %v2344, 7
    %v2346 = vsub.s32 %v2343, %v2345
    %v2347 = vrot.slane %v2337, %v2346
    %v2348 = vcombine.high %v2347, %v2347
    %v2350 = vunpack.c.l.s4 1966171168
    %v2351 = vunpack.c.0.s8 %v2350
    %v2352 = vlaneseq
    %v2353 = vshrl.u32 %v2352, 7
    %v2354 = vsub.s32 %v2351, %v2353
    %v2355 = vrot.slane %v2347, %v2354
    %v2357 = vunpack.c.l.s4 1966171168
    %v2358 = vunpack.c.0.s8 %v2357
    %v2359 = vlaneseq
    %v2360 = vshrl.u32 %v2359, 7
    %v2361 = vsub.s32 %v2358, %v2360
    %v2362 = vrot.slane %v2348, %v2361
    %2365 = vst.msk [vmem:[%s14 + $0x1] sm:$0x1] %vm2166, %v2355
    %2366 = vst.msk [vmem:[%s14 + $0x9] sm:$0x1] %vm2166, %v2362
    %2367 = vmatprep.subr.mxu0 0.0
    %2368 = vmatpush1.msra.mxu0 0.0
    %2369 = vmatprep.subr.mxu0 0.0
    %2370 = vmatpush1.msra.mxu0 0.0
    %2371 = vmatprep.subr.mxu0 0.0
    %2372 = vmatpush1.msra.mxu0 0.0
    %2373 = vmatprep.subr.mxu0 0.0
    %2374 = vmatpush1.msra.mxu0 0.0
    %2375 = vmatprep.subr.mxu0 0.0
    %2376 = vmatpush1.msra.mxu0 0.0
    %2377 = vmatprep.subr.mxu0 0.0
    %2378 = vmatpush1.msra.mxu0 0.0
    %2379 = vmatprep.subr.mxu0 0.0
    %2380 = vmatpush1.msra.mxu0 0.0
    %2381 = vmatprep.subr.mxu0 0.0
    %2382 = vmatpush1.msra.mxu0 0.0
    %2383 = vmatprep.subr.mxu0 0.0
    %2384 = vmatpush1.msra.mxu0 0.0
    %2385 = vmatprep.subr.mxu0 0.0
    %2386 = vmatpush1.msra.mxu0 0.0
    %2387 = vmatprep.subr.mxu0 0.0
    %2388 = vmatpush1.msra.mxu0 0.0
    %2389 = vmatprep.subr.mxu0 0.0
    %2390 = vmatpush1.msra.mxu0 0.0
    %2391 = vmatprep.subr.mxu0 0.0
    %2392 = vmatpush1.msra.mxu0 %v1346
    %2393 = vmatprep.subr.mxu0 0.0
    %2394 = vmatpush1.msra.mxu0 %v1345
    %2395 = vmatprep.subr.mxu0 0.0
    %2396 = vmatpush1.msra.mxu0 %v1344
    %2397 = vmatprep.subr.mxu0 0.0
    %2398 = vmatpush1.msra.mxu0 %v1343
    %2399 = vmatprep.subr.mxu0 0.0
    %2400 = vmatpush2.msra.mxu0 0.0
    %2401 = vmatprep.subr.mxu0 0.0
    %2402 = vmatpush2.msra.mxu0 0.0
    %2403 = vmatprep.subr.mxu0 0.0
    %2404 = vmatpush2.msra.mxu0 0.0
    %2405 = vmatprep.subr.mxu0 0.0
    %2406 = vmatpush2.msra.mxu0 0.0
    %2407 = vmatprep.subr.mxu0 0.0
    %2408 = vmatpush2.msra.mxu0 0.0
    %2409 = vmatprep.subr.mxu0 0.0
    %2410 = vmatpush2.msra.mxu0 0.0
    %2411 = vmatprep.subr.mxu0 0.0
    %2412 = vmatpush2.msra.mxu0 0.0
    %2413 = vmatprep.subr.mxu0 0.0
    %2414 = vmatpush2.msra.mxu0 0.0
    %2415 = vmatprep.subr.mxu0 0.0
    %2416 = vmatpush2.msra.mxu0 0.0
    %2417 = vmatprep.subr.mxu0 0.0
    %2418 = vmatpush2.msra.mxu0 0.0
    %2419 = vmatprep.subr.mxu0 0.0
    %2420 = vmatpush2.msra.mxu0 0.0
    %2421 = vmatprep.subr.mxu0 0.0
    %2422 = vmatpush2.msra.mxu0 0.0
    %2423 = vmatprep.subr.mxu0 0.0
    %2424 = vmatpush2.msra.mxu0 0.0
    %2425 = vmatprep.subr.mxu0 0.0
    %2426 = vmatpush2.msra.mxu0 0.0
    %2427 = vmatprep.subr.mxu0 0.0
    %2428 = vmatpush2.msra.mxu0 0.0
    %2429 = vmatprep.subr.mxu0 0.0
    %2430 = vmatpush2.msra.mxu0 0.0
    %2431 = vmatprep.mubr.f32.mxu0 0.0
    %2432 = vmatmul.mubr.f32.gmra.mxu0 %v2268
    %v2433 = vpop.f32.mrf.mxu0
    %v2434 = vadd.f32 %v1962, %v2433
    %v2435 = vpop.f32.mrf.mxu0
    %2436 = vdwg.mxu0
    %v2437 = vadd.f32 %v1580, %v2434
    %v2438 = vxor.u32 %v2437, 2147483648
    %v2439 = vmul.f32 %v2438, 1.442695
    %v2440 = vpow.pop %v2439
    %v2441 = vadd.f32 %v2440, 1.0
    %v2442 = vrcp.pop %v2441
    %v2443 = vmul.f32 1.0, %v2442
    %2445 = vrot.lane.b32.xlu0 %v2434, 64
    %v2446 = vpop.permute.xlu0 %2445
    %v2448 = vmul.f32 %v2443, %v2446
    %2450 = vrot.lane.b32.xlu0 %v2448, 64
    %v2451 = vpop.permute.xlu0 %2450
    %v2453 = vadd.f32 %v1580, %v2451
    %v2454 = vtanh.pop %v2453
    %v2455 = vsub.f32 1.0, %v2443
    %2457 = vrot.lane.b32.xlu0 %v2454, 96
    %v2458 = vpop.permute.xlu0 %2457
    %v2460 = vmul.f32 %v2455, %v2458
    %v2461 = vmul.f32 %v2443, %v2264
    %v2462 = vadd.f32 %v2460, %v2461
    %2464 = vrot.lane.b32.xlu0 %v2462, 96
    %v2465 = vpop.permute.xlu0 %2464
    %v2466 = vsel %vm74, %v2465, 0
    %2468 = vmatprep.subr.mxu0 0.0
    %2469 = vmatpush1.msra.mxu0 0.0
    %2470 = vmatprep.subr.mxu0 0.0
    %2471 = vmatpush1.msra.mxu0 0.0
    %2472 = vmatprep.subr.mxu0 0.0
    %2473 = vmatpush1.msra.mxu0 0.0
    %2474 = vmatprep.subr.mxu0 0.0
    %2475 = vmatpush1.msra.mxu0 0.0
    %2476 = vmatprep.subr.mxu0 0.0
    %2477 = vmatpush1.msra.mxu0 0.0
    %2478 = vmatprep.subr.mxu0 0.0
    %2479 = vmatpush1.msra.mxu0 0.0
    %2480 = vmatprep.subr.mxu0 0.0
    %2481 = vmatpush1.msra.mxu0 0.0
    %2482 = vmatprep.subr.mxu0 0.0
    %2483 = vmatpush1.msra.mxu0 0.0
    %2484 = vmatprep.subr.mxu0 0.0
    %2485 = vmatpush1.msra.mxu0 0.0
    %2486 = vmatprep.subr.mxu0 0.0
    %2487 = vmatpush1.msra.mxu0 0.0
    %2488 = vmatprep.subr.mxu0 0.0
    %2489 = vmatpush1.msra.mxu0 0.0
    %2490 = vmatprep.subr.mxu0 0.0
    %2491 = vmatpush1.msra.mxu0 0.0
    %2492 = vmatprep.subr.mxu0 0.0
    %2493 = vmatpush1.msra.mxu0 %v1351
    %2494 = vmatprep.subr.mxu0 0.0
    %2495 = vmatpush1.msra.mxu0 %v1350
    %2496 = vmatprep.subr.mxu0 0.0
    %2497 = vmatpush1.msra.mxu0 %v1349
    %2498 = vmatprep.subr.mxu0 0.0
    %2499 = vmatpush1.msra.mxu0 %v1348
    %2500 = vmatprep.subr.mxu0 0.0
    %2501 = vmatpush2.msra.mxu0 0.0
    %2502 = vmatprep.subr.mxu0 0.0
    %2503 = vmatpush2.msra.mxu0 0.0
    %2504 = vmatprep.subr.mxu0 0.0
    %2505 = vmatpush2.msra.mxu0 0.0
    %2506 = vmatprep.subr.mxu0 0.0
    %2507 = vmatpush2.msra.mxu0 0.0
    %2508 = vmatprep.subr.mxu0 0.0
    %2509 = vmatpush2.msra.mxu0 0.0
    %2510 = vmatprep.subr.mxu0 0.0
    %2511 = vmatpush2.msra.mxu0 0.0
    %2512 = vmatprep.subr.mxu0 0.0
    %2513 = vmatpush2.msra.mxu0 0.0
    %2514 = vmatprep.subr.mxu0 0.0
    %2515 = vmatpush2.msra.mxu0 0.0
    %2516 = vmatprep.subr.mxu0 0.0
    %2517 = vmatpush2.msra.mxu0 0.0
    %2518 = vmatprep.subr.mxu0 0.0
    %2519 = vmatpush2.msra.mxu0 0.0
    %2520 = vmatprep.subr.mxu0 0.0
    %2521 = vmatpush2.msra.mxu0 0.0
    %2522 = vmatprep.subr.mxu0 0.0
    %2523 = vmatpush2.msra.mxu0 0.0
    %2524 = vmatprep.subr.mxu0 0.0
    %2525 = vmatpush2.msra.mxu0 0.0
    %2526 = vmatprep.subr.mxu0 0.0
    %2527 = vmatpush2.msra.mxu0 0.0
    %2528 = vmatprep.subr.mxu0 0.0
    %2529 = vmatpush2.msra.mxu0 0.0
    %2530 = vmatprep.subr.mxu0 0.0
    %2531 = vmatpush2.msra.mxu0 0.0
    %2532 = vmatprep.mubr.f32.mxu0 0.0
    %2533 = vmatmul.mubr.f32.gmra.mxu0 %v2466
    %v2534 = vpop.f32.mrf.mxu0
    %v2535 = vadd.f32 %v2064, %v2534
    %v2536 = vpop.f32.mrf.mxu0
    %2537 = vdwg.mxu0
    %v2540 = vunpack.c.l.s4 1966171168
    %v2541 = vunpack.c.0.s8 %v2540
    %v2542 = vlaneseq
    %v2543 = vshrl.u32 %v2542, 7
    %v2544 = vsub.s32 %v2541, %v2543
    %v2545 = vrot.slane %v2535, %v2544
    %v2546 = vcombine.high %v2545, %v2545
    %v2548 = vunpack.c.l.s4 1966171168
    %v2549 = vunpack.c.0.s8 %v2548
    %v2550 = vlaneseq
    %v2551 = vshrl.u32 %v2550, 7
    %v2552 = vsub.s32 %v2549, %v2551
    %v2553 = vrot.slane %v2545, %v2552
    %v2555 = vunpack.c.l.s4 1966171168
    %v2556 = vunpack.c.0.s8 %v2555
    %v2557 = vlaneseq
    %v2558 = vshrl.u32 %v2557, 7
    %v2559 = vsub.s32 %v2556, %v2558
    %v2560 = vrot.slane %v2546, %v2559
    %2563 = vst.msk [vmem:[%s14 + $0x2] sm:$0x1] %vm2166, %v2553
    %2564 = vst.msk [vmem:[%s14 + $0xa] sm:$0x1] %vm2166, %v2560
    %2565 = vmatprep.subr.mxu0 0.0
    %2566 = vmatpush1.msra.mxu0 0.0
    %2567 = vmatprep.subr.mxu0 0.0
    %2568 = vmatpush1.msra.mxu0 0.0
    %2569 = vmatprep.subr.mxu0 0.0
    %2570 = vmatpush1.msra.mxu0 0.0
    %2571 = vmatprep.subr.mxu0 0.0
    %2572 = vmatpush1.msra.mxu0 0.0
    %2573 = vmatprep.subr.mxu0 0.0
    %2574 = vmatpush1.msra.mxu0 0.0
    %2575 = vmatprep.subr.mxu0 0.0
    %2576 = vmatpush1.msra.mxu0 0.0
    %2577 = vmatprep.subr.mxu0 0.0
    %2578 = vmatpush1.msra.mxu0 0.0
    %2579 = vmatprep.subr.mxu0 0.0
    %2580 = vmatpush1.msra.mxu0 0.0
    %2581 = vmatprep.subr.mxu0 0.0
    %2582 = vmatpush1.msra.mxu0 0.0
    %2583 = vmatprep.subr.mxu0 0.0
    %2584 = vmatpush1.msra.mxu0 0.0
    %2585 = vmatprep.subr.mxu0 0.0
    %2586 = vmatpush1.msra.mxu0 0.0
    %2587 = vmatprep.subr.mxu0 0.0
    %2588 = vmatpush1.msra.mxu0 0.0
    %2589 = vmatprep.subr.mxu0 0.0
    %2590 = vmatpush1.msra.mxu0 %v1346
    %2591 = vmatprep.subr.mxu0 0.0
    %2592 = vmatpush1.msra.mxu0 %v1345
    %2593 = vmatprep.subr.mxu0 0.0
    %2594 = vmatpush1.msra.mxu0 %v1344
    %2595 = vmatprep.subr.mxu0 0.0
    %2596 = vmatpush1.msra.mxu0 %v1343
    %2597 = vmatprep.subr.mxu0 0.0
    %2598 = vmatpush2.msra.mxu0 0.0
    %2599 = vmatprep.subr.mxu0 0.0
    %2600 = vmatpush2.msra.mxu0 0.0
    %2601 = vmatprep.subr.mxu0 0.0
    %2602 = vmatpush2.msra.mxu0 0.0
    %2603 = vmatprep.subr.mxu0 0.0
    %2604 = vmatpush2.msra.mxu0 0.0
    %2605 = vmatprep.subr.mxu0 0.0
    %2606 = vmatpush2.msra.mxu0 0.0
    %2607 = vmatprep.subr.mxu0 0.0
    %2608 = vmatpush2.msra.mxu0 0.0
    %2609 = vmatprep.subr.mxu0 0.0
    %2610 = vmatpush2.msra.mxu0 0.0
    %2611 = vmatprep.subr.mxu0 0.0
    %2612 = vmatpush2.msra.mxu0 0.0
    %2613 = vmatprep.subr.mxu0 0.0
    %2614 = vmatpush2.msra.mxu0 0.0
    %2615 = vmatprep.subr.mxu0 0.0
    %2616 = vmatpush2.msra.mxu0 0.0
    %2617 = vmatprep.subr.mxu0 0.0
    %2618 = vmatpush2.msra.mxu0 0.0
    %2619 = vmatprep.subr.mxu0 0.0
    %2620 = vmatpush2.msra.mxu0 0.0
    %2621 = vmatprep.subr.mxu0 0.0
    %2622 = vmatpush2.msra.mxu0 0.0
    %2623 = vmatprep.subr.mxu0 0.0
    %2624 = vmatpush2.msra.mxu0 0.0
    %2625 = vmatprep.subr.mxu0 0.0
    %2626 = vmatpush2.msra.mxu0 0.0
    %2627 = vmatprep.subr.mxu0 0.0
    %2628 = vmatpush2.msra.mxu0 0.0
    %2629 = vmatprep.mubr.f32.mxu0 0.0
    %2630 = vmatmul.mubr.f32.gmra.mxu0 %v2466
    %v2631 = vpop.f32.mrf.mxu0
    %v2632 = vadd.f32 %v1962, %v2631
    %v2633 = vpop.f32.mrf.mxu0
    %2634 = vdwg.mxu0
    %v2635 = vadd.f32 %v1655, %v2632
    %v2636 = vxor.u32 %v2635, 2147483648
    %v2637 = vmul.f32 %v2636, 1.442695
    %v2638 = vpow.pop %v2637
    %v2639 = vadd.f32 %v2638, 1.0
    %v2640 = vrcp.pop %v2639
    %v2641 = vmul.f32 1.0, %v2640
    %2643 = vrot.lane.b32.xlu0 %v2632, 64
    %v2644 = vpop.permute.xlu0 %2643
    %v2646 = vmul.f32 %v2641, %v2644
    %2648 = vrot.lane.b32.xlu0 %v2646, 64
    %v2649 = vpop.permute.xlu0 %2648
    %v2651 = vadd.f32 %v1655, %v2649
    %v2652 = vtanh.pop %v2651
    %v2653 = vsub.f32 1.0, %v2641
    %2655 = vrot.lane.b32.xlu0 %v2652, 96
    %v2656 = vpop.permute.xlu0 %2655
    %v2658 = vmul.f32 %v2653, %v2656
    %v2659 = vmul.f32 %v2641, %v2462
    %v2660 = vadd.f32 %v2658, %v2659
    %2662 = vrot.lane.b32.xlu0 %v2660, 96
    %v2663 = vpop.permute.xlu0 %2662
    %v2664 = vsel %vm74, %v2663, 0
    %2666 = vmatprep.subr.mxu0 0.0
    %2667 = vmatpush1.msra.mxu0 0.0
    %2668 = vmatprep.subr.mxu0 0.0
    %2669 = vmatpush1.msra.mxu0 0.0
    %2670 = vmatprep.subr.mxu0 0.0
    %2671 = vmatpush1.msra.mxu0 0.0
    %2672 = vmatprep.subr.mxu0 0.0
    %2673 = vmatpush1.msra.mxu0 0.0
    %2674 = vmatprep.subr.mxu0 0.0
    %2675 = vmatpush1.msra.mxu0 0.0
    %2676 = vmatprep.subr.mxu0 0.0
    %2677 = vmatpush1.msra.mxu0 0.0
    %2678 = vmatprep.subr.mxu0 0.0
    %2679 = vmatpush1.msra.mxu0 0.0
    %2680 = vmatprep.subr.mxu0 0.0
    %2681 = vmatpush1.msra.mxu0 0.0
    %2682 = vmatprep.subr.mxu0 0.0
    %2683 = vmatpush1.msra.mxu0 0.0
    %2684 = vmatprep.subr.mxu0 0.0
    %2685 = vmatpush1.msra.mxu0 0.0
    %2686 = vmatprep.subr.mxu0 0.0
    %2687 = vmatpush1.msra.mxu0 0.0
    %2688 = vmatprep.subr.mxu0 0.0
    %2689 = vmatpush1.msra.mxu0 0.0
    %2690 = vmatprep.subr.mxu0 0.0
    %2691 = vmatpush1.msra.mxu0 %v1351
    %2692 = vmatprep.subr.mxu0 0.0
    %2693 = vmatpush1.msra.mxu0 %v1350
    %2694 = vmatprep.subr.mxu0 0.0
    %2695 = vmatpush1.msra.mxu0 %v1349
    %2696 = vmatprep.subr.mxu0 0.0
    %2697 = vmatpush1.msra.mxu0 %v1348
    %2698 = vmatprep.subr.mxu0 0.0
    %2699 = vmatpush2.msra.mxu0 0.0
    %2700 = vmatprep.subr.mxu0 0.0
    %2701 = vmatpush2.msra.mxu0 0.0
    %2702 = vmatprep.subr.mxu0 0.0
    %2703 = vmatpush2.msra.mxu0 0.0
    %2704 = vmatprep.subr.mxu0 0.0
    %2705 = vmatpush2.msra.mxu0 0.0
    %2706 = vmatprep.subr.mxu0 0.0
    %2707 = vmatpush2.msra.mxu0 0.0
    %2708 = vmatprep.subr.mxu0 0.0
    %2709 = vmatpush2.msra.mxu0 0.0
    %2710 = vmatprep.subr.mxu0 0.0
    %2711 = vmatpush2.msra.mxu0 0.0
    %2712 = vmatprep.subr.mxu0 0.0
    %2713 = vmatpush2.msra.mxu0 0.0
    %2714 = vmatprep.subr.mxu0 0.0
    %2715 = vmatpush2.msra.mxu0 0.0
    %2716 = vmatprep.subr.mxu0 0.0
    %2717 = vmatpush2.msra.mxu0 0.0
    %2718 = vmatprep.subr.mxu0 0.0
    %2719 = vmatpush2.msra.mxu0 0.0
    %2720 = vmatprep.subr.mxu0 0.0
    %2721 = vmatpush2.msra.mxu0 0.0
    %2722 = vmatprep.subr.mxu0 0.0
    %2723 = vmatpush2.msra.mxu0 0.0
    %2724 = vmatprep.subr.mxu0 0.0
    %2725 = vmatpush2.msra.mxu0 0.0
    %2726 = vmatprep.subr.mxu0 0.0
    %2727 = vmatpush2.msra.mxu0 0.0
    %2728 = vmatprep.subr.mxu0 0.0
    %2729 = vmatpush2.msra.mxu0 0.0
    %2730 = vmatprep.mubr.f32.mxu0 0.0
    %2731 = vmatmul.mubr.f32.gmra.mxu0 %v2664
    %v2732 = vpop.f32.mrf.mxu0
    %v2733 = vadd.f32 %v2064, %v2732
    %v2734 = vpop.f32.mrf.mxu0
    %2735 = vdwg.mxu0
    %v2738 = vunpack.c.l.s4 1966171168
    %v2739 = vunpack.c.0.s8 %v2738
    %v2740 = vlaneseq
    %v2741 = vshrl.u32 %v2740, 7
    %v2742 = vsub.s32 %v2739, %v2741
    %v2743 = vrot.slane %v2733, %v2742
    %v2744 = vcombine.high %v2743, %v2743
    %v2746 = vunpack.c.l.s4 1966171168
    %v2747 = vunpack.c.0.s8 %v2746
    %v2748 = vlaneseq
    %v2749 = vshrl.u32 %v2748, 7
    %v2750 = vsub.s32 %v2747, %v2749
    %v2751 = vrot.slane %v2743, %v2750
    %v2753 = vunpack.c.l.s4 1966171168
    %v2754 = vunpack.c.0.s8 %v2753
    %v2755 = vlaneseq
    %v2756 = vshrl.u32 %v2755, 7
    %v2757 = vsub.s32 %v2754, %v2756
    %v2758 = vrot.slane %v2744, %v2757
    %2761 = vst.msk [vmem:[%s14 + $0x3] sm:$0x1] %vm2166, %v2751
    %2762 = vst.msk [vmem:[%s14 + $0xb] sm:$0x1] %vm2166, %v2758
    %2763 = vmatprep.subr.mxu0 0.0
    %2764 = vmatpush1.msra.mxu0 0.0
    %2765 = vmatprep.subr.mxu0 0.0
    %2766 = vmatpush1.msra.mxu0 0.0
    %2767 = vmatprep.subr.mxu0 0.0
    %2768 = vmatpush1.msra.mxu0 0.0
    %2769 = vmatprep.subr.mxu0 0.0
    %2770 = vmatpush1.msra.mxu0 0.0
    %2771 = vmatprep.subr.mxu0 0.0
    %2772 = vmatpush1.msra.mxu0 0.0
    %2773 = vmatprep.subr.mxu0 0.0
    %2774 = vmatpush1.msra.mxu0 0.0
    %2775 = vmatprep.subr.mxu0 0.0
    %2776 = vmatpush1.msra.mxu0 0.0
    %2777 = vmatprep.subr.mxu0 0.0
    %2778 = vmatpush1.msra.mxu0 0.0
    %2779 = vmatprep.subr.mxu0 0.0
    %2780 = vmatpush1.msra.mxu0 0.0
    %2781 = vmatprep.subr.mxu0 0.0
    %2782 = vmatpush1.msra.mxu0 0.0
    %2783 = vmatprep.subr.mxu0 0.0
    %2784 = vmatpush1.msra.mxu0 0.0
    %2785 = vmatprep.subr.mxu0 0.0
    %2786 = vmatpush1.msra.mxu0 0.0
    %2787 = vmatprep.subr.mxu0 0.0
    %2788 = vmatpush1.msra.mxu0 %v1346
    %2789 = vmatprep.subr.mxu0 0.0
    %2790 = vmatpush1.msra.mxu0 %v1345
    %2791 = vmatprep.subr.mxu0 0.0
    %2792 = vmatpush1.msra.mxu0 %v1344
    %2793 = vmatprep.subr.mxu0 0.0
    %2794 = vmatpush1.msra.mxu0 %v1343
    %2795 = vmatprep.subr.mxu0 0.0
    %2796 = vmatpush2.msra.mxu0 0.0
    %2797 = vmatprep.subr.mxu0 0.0
    %2798 = vmatpush2.msra.mxu0 0.0
    %2799 = vmatprep.subr.mxu0 0.0
    %2800 = vmatpush2.msra.mxu0 0.0
    %2801 = vmatprep.subr.mxu0 0.0
    %2802 = vmatpush2.msra.mxu0 0.0
    %2803 = vmatprep.subr.mxu0 0.0
    %2804 = vmatpush2.msra.mxu0 0.0
    %2805 = vmatprep.subr.mxu0 0.0
    %2806 = vmatpush2.msra.mxu0 0.0
    %2807 = vmatprep.subr.mxu0 0.0
    %2808 = vmatpush2.msra.mxu0 0.0
    %2809 = vmatprep.subr.mxu0 0.0
    %2810 = vmatpush2.msra.mxu0 0.0
    %2811 = vmatprep.subr.mxu0 0.0
    %2812 = vmatpush2.msra.mxu0 0.0
    %2813 = vmatprep.subr.mxu0 0.0
    %2814 = vmatpush2.msra.mxu0 0.0
    %2815 = vmatprep.subr.mxu0 0.0
    %2816 = vmatpush2.msra.mxu0 0.0
    %2817 = vmatprep.subr.mxu0 0.0
    %2818 = vmatpush2.msra.mxu0 0.0
    %2819 = vmatprep.subr.mxu0 0.0
    %2820 = vmatpush2.msra.mxu0 0.0
    %2821 = vmatprep.subr.mxu0 0.0
    %2822 = vmatpush2.msra.mxu0 0.0
    %2823 = vmatprep.subr.mxu0 0.0
    %2824 = vmatpush2.msra.mxu0 0.0
    %2825 = vmatprep.subr.mxu0 0.0
    %2826 = vmatpush2.msra.mxu0 0.0
    %2827 = vmatprep.mubr.f32.mxu0 0.0
    %2828 = vmatmul.mubr.f32.gmra.mxu0 %v2664
    %v2829 = vpop.f32.mrf.mxu0
    %v2830 = vadd.f32 %v1962, %v2829
    %v2831 = vpop.f32.mrf.mxu0
    %2832 = vdwg.mxu0
    %v2833 = vadd.f32 %v1730, %v2830
    %v2834 = vxor.u32 %v2833, 2147483648
    %v2835 = vmul.f32 %v2834, 1.442695
    %v2836 = vpow.pop %v2835
    %v2837 = vadd.f32 %v2836, 1.0
    %v2838 = vrcp.pop %v2837
    %v2839 = vmul.f32 1.0, %v2838
    %2841 = vrot.lane.b32.xlu0 %v2830, 64
    %v2842 = vpop.permute.xlu0 %2841
    %v2844 = vmul.f32 %v2839, %v2842
    %2846 = vrot.lane.b32.xlu0 %v2844, 64
    %v2847 = vpop.permute.xlu0 %2846
    %v2849 = vadd.f32 %v1730, %v2847
    %v2850 = vtanh.pop %v2849
    %v2851 = vsub.f32 1.0, %v2839
    %2853 = vrot.lane.b32.xlu0 %v2850, 96
    %v2854 = vpop.permute.xlu0 %2853
    %v2856 = vmul.f32 %v2851, %v2854
    %v2857 = vmul.f32 %v2839, %v2660
    %v2858 = vadd.f32 %v2856, %v2857
    %2860 = vrot.lane.b32.xlu0 %v2858, 96
    %v2861 = vpop.permute.xlu0 %2860
    %v2862 = vsel %vm74, %v2861, 0
    %2864 = vmatprep.subr.mxu0 0.0
    %2865 = vmatpush1.msra.mxu0 0.0
    %2866 = vmatprep.subr.mxu0 0.0
    %2867 = vmatpush1.msra.mxu0 0.0
    %2868 = vmatprep.subr.mxu0 0.0
    %2869 = vmatpush1.msra.mxu0 0.0
    %2870 = vmatprep.subr.mxu0 0.0
    %2871 = vmatpush1.msra.mxu0 0.0
    %2872 = vmatprep.subr.mxu0 0.0
    %2873 = vmatpush1.msra.mxu0 0.0
    %2874 = vmatprep.subr.mxu0 0.0
    %2875 = vmatpush1.msra.mxu0 0.0
    %2876 = vmatprep.subr.mxu0 0.0
    %2877 = vmatpush1.msra.mxu0 0.0
    %2878 = vmatprep.subr.mxu0 0.0
    %2879 = vmatpush1.msra.mxu0 0.0
    %2880 = vmatprep.subr.mxu0 0.0
    %2881 = vmatpush1.msra.mxu0 0.0
    %2882 = vmatprep.subr.mxu0 0.0
    %2883 = vmatpush1.msra.mxu0 0.0
    %2884 = vmatprep.subr.mxu0 0.0
    %2885 = vmatpush1.msra.mxu0 0.0
    %2886 = vmatprep.subr.mxu0 0.0
    %2887 = vmatpush1.msra.mxu0 0.0
    %2888 = vmatprep.subr.mxu0 0.0
    %2889 = vmatpush1.msra.mxu0 %v1351
    %2890 = vmatprep.subr.mxu0 0.0
    %2891 = vmatpush1.msra.mxu0 %v1350
    %2892 = vmatprep.subr.mxu0 0.0
    %2893 = vmatpush1.msra.mxu0 %v1349
    %2894 = vmatprep.subr.mxu0 0.0
    %2895 = vmatpush1.msra.mxu0 %v1348
    %2896 = vmatprep.subr.mxu0 0.0
    %2897 = vmatpush2.msra.mxu0 0.0
    %2898 = vmatprep.subr.mxu0 0.0
    %2899 = vmatpush2.msra.mxu0 0.0
    %2900 = vmatprep.subr.mxu0 0.0
    %2901 = vmatpush2.msra.mxu0 0.0
    %2902 = vmatprep.subr.mxu0 0.0
    %2903 = vmatpush2.msra.mxu0 0.0
    %2904 = vmatprep.subr.mxu0 0.0
    %2905 = vmatpush2.msra.mxu0 0.0
    %2906 = vmatprep.subr.mxu0 0.0
    %2907 = vmatpush2.msra.mxu0 0.0
    %2908 = vmatprep.subr.mxu0 0.0
    %2909 = vmatpush2.msra.mxu0 0.0
    %2910 = vmatprep.subr.mxu0 0.0
    %2911 = vmatpush2.msra.mxu0 0.0
    %2912 = vmatprep.subr.mxu0 0.0
    %2913 = vmatpush2.msra.mxu0 0.0
    %2914 = vmatprep.subr.mxu0 0.0
    %2915 = vmatpush2.msra.mxu0 0.0
    %2916 = vmatprep.subr.mxu0 0.0
    %2917 = vmatpush2.msra.mxu0 0.0
    %2918 = vmatprep.subr.mxu0 0.0
    %2919 = vmatpush2.msra.mxu0 0.0
    %2920 = vmatprep.subr.mxu0 0.0
    %2921 = vmatpush2.msra.mxu0 0.0
    %2922 = vmatprep.subr.mxu0 0.0
    %2923 = vmatpush2.msra.mxu0 0.0
    %2924 = vmatprep.subr.mxu0 0.0
    %2925 = vmatpush2.msra.mxu0 0.0
    %2926 = vmatprep.subr.mxu0 0.0
    %2927 = vmatpush2.msra.mxu0 0.0
    %2928 = vmatprep.mubr.f32.mxu0 0.0
    %2929 = vmatmul.mubr.f32.gmra.mxu0 %v2862
    %v2930 = vpop.f32.mrf.mxu0
    %v2931 = vadd.f32 %v2064, %v2930
    %v2932 = vpop.f32.mrf.mxu0
    %2933 = vdwg.mxu0
    %v2936 = vunpack.c.l.s4 1966171168
    %v2937 = vunpack.c.0.s8 %v2936
    %v2938 = vlaneseq
    %v2939 = vshrl.u32 %v2938, 7
    %v2940 = vsub.s32 %v2937, %v2939
    %v2941 = vrot.slane %v2931, %v2940
    %v2942 = vcombine.high %v2941, %v2941
    %v2944 = vunpack.c.l.s4 1966171168
    %v2945 = vunpack.c.0.s8 %v2944
    %v2946 = vlaneseq
    %v2947 = vshrl.u32 %v2946, 7
    %v2948 = vsub.s32 %v2945, %v2947
    %v2949 = vrot.slane %v2941, %v2948
    %v2951 = vunpack.c.l.s4 1966171168
    %v2952 = vunpack.c.0.s8 %v2951
    %v2953 = vlaneseq
    %v2954 = vshrl.u32 %v2953, 7
    %v2955 = vsub.s32 %v2952, %v2954
    %v2956 = vrot.slane %v2942, %v2955
    %2959 = vst.msk [vmem:[%s14 + $0x4] sm:$0x1] %vm2166, %v2949
    %2960 = vst.msk [vmem:[%s14 + $0xc] sm:$0x1] %vm2166, %v2956
    %2961 = vmatprep.subr.mxu0 0.0
    %2962 = vmatpush1.msra.mxu0 0.0
    %2963 = vmatprep.subr.mxu0 0.0
    %2964 = vmatpush1.msra.mxu0 0.0
    %2965 = vmatprep.subr.mxu0 0.0
    %2966 = vmatpush1.msra.mxu0 0.0
    %2967 = vmatprep.subr.mxu0 0.0
    %2968 = vmatpush1.msra.mxu0 0.0
    %2969 = vmatprep.subr.mxu0 0.0
    %2970 = vmatpush1.msra.mxu0 0.0
    %2971 = vmatprep.subr.mxu0 0.0
    %2972 = vmatpush1.msra.mxu0 0.0
    %2973 = vmatprep.subr.mxu0 0.0
    %2974 = vmatpush1.msra.mxu0 0.0
    %2975 = vmatprep.subr.mxu0 0.0
    %2976 = vmatpush1.msra.mxu0 0.0
    %2977 = vmatprep.subr.mxu0 0.0
    %2978 = vmatpush1.msra.mxu0 0.0
    %2979 = vmatprep.subr.mxu0 0.0
    %2980 = vmatpush1.msra.mxu0 0.0
    %2981 = vmatprep.subr.mxu0 0.0
    %2982 = vmatpush1.msra.mxu0 0.0
    %2983 = vmatprep.subr.mxu0 0.0
    %2984 = vmatpush1.msra.mxu0 0.0
    %2985 = vmatprep.subr.mxu0 0.0
    %2986 = vmatpush1.msra.mxu0 %v1346
    %2987 = vmatprep.subr.mxu0 0.0
    %2988 = vmatpush1.msra.mxu0 %v1345
    %2989 = vmatprep.subr.mxu0 0.0
    %2990 = vmatpush1.msra.mxu0 %v1344
    %2991 = vmatprep.subr.mxu0 0.0
    %2992 = vmatpush1.msra.mxu0 %v1343
    %2993 = vmatprep.subr.mxu0 0.0
    %2994 = vmatpush2.msra.mxu0 0.0
    %2995 = vmatprep.subr.mxu0 0.0
    %2996 = vmatpush2.msra.mxu0 0.0
    %2997 = vmatprep.subr.mxu0 0.0
    %2998 = vmatpush2.msra.mxu0 0.0
    %2999 = vmatprep.subr.mxu0 0.0
    %3000 = vmatpush2.msra.mxu0 0.0
    %3001 = vmatprep.subr.mxu0 0.0
    %3002 = vmatpush2.msra.mxu0 0.0
    %3003 = vmatprep.subr.mxu0 0.0
    %3004 = vmatpush2.msra.mxu0 0.0
    %3005 = vmatprep.subr.mxu0 0.0
    %3006 = vmatpush2.msra.mxu0 0.0
    %3007 = vmatprep.subr.mxu0 0.0
    %3008 = vmatpush2.msra.mxu0 0.0
    %3009 = vmatprep.subr.mxu0 0.0
    %3010 = vmatpush2.msra.mxu0 0.0
    %3011 = vmatprep.subr.mxu0 0.0
    %3012 = vmatpush2.msra.mxu0 0.0
    %3013 = vmatprep.subr.mxu0 0.0
    %3014 = vmatpush2.msra.mxu0 0.0
    %3015 = vmatprep.subr.mxu0 0.0
    %3016 = vmatpush2.msra.mxu0 0.0
    %3017 = vmatprep.subr.mxu0 0.0
    %3018 = vmatpush2.msra.mxu0 0.0
    %3019 = vmatprep.subr.mxu0 0.0
    %3020 = vmatpush2.msra.mxu0 0.0
    %3021 = vmatprep.subr.mxu0 0.0
    %3022 = vmatpush2.msra.mxu0 0.0
    %3023 = vmatprep.subr.mxu0 0.0
    %3024 = vmatpush2.msra.mxu0 0.0
    %3025 = vmatprep.mubr.f32.mxu0 0.0
    %3026 = vmatmul.mubr.f32.gmra.mxu0 %v2862
    %v3027 = vpop.f32.mrf.mxu0
    %v3028 = vadd.f32 %v1962, %v3027
    %v3029 = vpop.f32.mrf.mxu0
    %3030 = vdwg.mxu0
    %v3031 = vadd.f32 %v1805, %v3028
    %v3032 = vxor.u32 %v3031, 2147483648
    %v3033 = vmul.f32 %v3032, 1.442695
    %v3034 = vpow.pop %v3033
    %v3035 = vadd.f32 %v3034, 1.0
    %v3036 = vrcp.pop %v3035
    %v3037 = vmul.f32 1.0, %v3036
    %3039 = vrot.lane.b32.xlu0 %v3028, 64
    %v3040 = vpop.permute.xlu0 %3039
    %v3042 = vmul.f32 %v3037, %v3040
    %3044 = vrot.lane.b32.xlu0 %v3042, 64
    %v3045 = vpop.permute.xlu0 %3044
    %v3047 = vadd.f32 %v1805, %v3045
    %v3048 = vtanh.pop %v3047
    %v3049 = vsub.f32 1.0, %v3037
    %3051 = vrot.lane.b32.xlu0 %v3048, 96
    %v3052 = vpop.permute.xlu0 %3051
    %v3054 = vmul.f32 %v3049, %v3052
    %v3055 = vmul.f32 %v3037, %v2858
    %v3056 = vadd.f32 %v3054, %v3055
    %3058 = vrot.lane.b32.xlu0 %v3056, 96
    %v3059 = vpop.permute.xlu0 %3058
    %v3060 = vsel %vm74, %v3059, 0
    %3062 = vmatprep.subr.mxu0 0.0
    %3063 = vmatpush1.msra.mxu0 0.0
    %3064 = vmatprep.subr.mxu0 0.0
    %3065 = vmatpush1.msra.mxu0 0.0
    %3066 = vmatprep.subr.mxu0 0.0
    %3067 = vmatpush1.msra.mxu0 0.0
    %3068 = vmatprep.subr.mxu0 0.0
    %3069 = vmatpush1.msra.mxu0 0.0
    %3070 = vmatprep.subr.mxu0 0.0
    %3071 = vmatpush1.msra.mxu0 0.0
    %3072 = vmatprep.subr.mxu0 0.0
    %3073 = vmatpush1.msra.mxu0 0.0
    %3074 = vmatprep.subr.mxu0 0.0
    %3075 = vmatpush1.msra.mxu0 0.0
    %3076 = vmatprep.subr.mxu0 0.0
    %3077 = vmatpush1.msra.mxu0 0.0
    %3078 = vmatprep.subr.mxu0 0.0
    %3079 = vmatpush1.msra.mxu0 0.0
    %3080 = vmatprep.subr.mxu0 0.0
    %3081 = vmatpush1.msra.mxu0 0.0
    %3082 = vmatprep.subr.mxu0 0.0
    %3083 = vmatpush1.msra.mxu0 0.0
    %3084 = vmatprep.subr.mxu0 0.0
    %3085 = vmatpush1.msra.mxu0 0.0
    %3086 = vmatprep.subr.mxu0 0.0
    %3087 = vmatpush1.msra.mxu0 %v1351
    %3088 = vmatprep.subr.mxu0 0.0
    %3089 = vmatpush1.msra.mxu0 %v1350
    %3090 = vmatprep.subr.mxu0 0.0
    %3091 = vmatpush1.msra.mxu0 %v1349
    %3092 = vmatprep.subr.mxu0 0.0
    %3093 = vmatpush1.msra.mxu0 %v1348
    %3094 = vmatprep.subr.mxu0 0.0
    %3095 = vmatpush2.msra.mxu0 0.0
    %3096 = vmatprep.subr.mxu0 0.0
    %3097 = vmatpush2.msra.mxu0 0.0
    %3098 = vmatprep.subr.mxu0 0.0
    %3099 = vmatpush2.msra.mxu0 0.0
    %3100 = vmatprep.subr.mxu0 0.0
    %3101 = vmatpush2.msra.mxu0 0.0
    %3102 = vmatprep.subr.mxu0 0.0
    %3103 = vmatpush2.msra.mxu0 0.0
    %3104 = vmatprep.subr.mxu0 0.0
    %3105 = vmatpush2.msra.mxu0 0.0
    %3106 = vmatprep.subr.mxu0 0.0
    %3107 = vmatpush2.msra.mxu0 0.0
    %3108 = vmatprep.subr.mxu0 0.0
    %3109 = vmatpush2.msra.mxu0 0.0
    %3110 = vmatprep.subr.mxu0 0.0
    %3111 = vmatpush2.msra.mxu0 0.0
    %3112 = vmatprep.subr.mxu0 0.0
    %3113 = vmatpush2.msra.mxu0 0.0
    %3114 = vmatprep.subr.mxu0 0.0
    %3115 = vmatpush2.msra.mxu0 0.0
    %3116 = vmatprep.subr.mxu0 0.0
    %3117 = vmatpush2.msra.mxu0 0.0
    %3118 = vmatprep.subr.mxu0 0.0
    %3119 = vmatpush2.msra.mxu0 0.0
    %3120 = vmatprep.subr.mxu0 0.0
    %3121 = vmatpush2.msra.mxu0 0.0
    %3122 = vmatprep.subr.mxu0 0.0
    %3123 = vmatpush2.msra.mxu0 0.0
    %3124 = vmatprep.subr.mxu0 0.0
    %3125 = vmatpush2.msra.mxu0 0.0
    %3126 = vmatprep.mubr.f32.mxu0 0.0
    %3127 = vmatmul.mubr.f32.gmra.mxu0 %v3060
    %v3128 = vpop.f32.mrf.mxu0
    %v3129 = vadd.f32 %v2064, %v3128
    %v3130 = vpop.f32.mrf.mxu0
    %3131 = vdwg.mxu0
    %v3134 = vunpack.c.l.s4 1966171168
    %v3135 = vunpack.c.0.s8 %v3134
    %v3136 = vlaneseq
    %v3137 = vshrl.u32 %v3136, 7
    %v3138 = vsub.s32 %v3135, %v3137
    %v3139 = vrot.slane %v3129, %v3138
    %v3140 = vcombine.high %v3139, %v3139
    %v3142 = vunpack.c.l.s4 1966171168
    %v3143 = vunpack.c.0.s8 %v3142
    %v3144 = vlaneseq
    %v3145 = vshrl.u32 %v3144, 7
    %v3146 = vsub.s32 %v3143, %v3145
    %v3147 = vrot.slane %v3139, %v3146
    %v3149 = vunpack.c.l.s4 1966171168
    %v3150 = vunpack.c.0.s8 %v3149
    %v3151 = vlaneseq
    %v3152 = vshrl.u32 %v3151, 7
    %v3153 = vsub.s32 %v3150, %v3152
    %v3154 = vrot.slane %v3140, %v3153
    %3157 = vst.msk [vmem:[%s14 + $0x5] sm:$0x1] %vm2166, %v3147
    %3158 = vst.msk [vmem:[%s14 + $0xd] sm:$0x1] %vm2166, %v3154
    %3159 = vmatprep.subr.mxu0 0.0
    %3160 = vmatpush1.msra.mxu0 0.0
    %3161 = vmatprep.subr.mxu0 0.0
    %3162 = vmatpush1.msra.mxu0 0.0
    %3163 = vmatprep.subr.mxu0 0.0
    %3164 = vmatpush1.msra.mxu0 0.0
    %3165 = vmatprep.subr.mxu0 0.0
    %3166 = vmatpush1.msra.mxu0 0.0
    %3167 = vmatprep.subr.mxu0 0.0
    %3168 = vmatpush1.msra.mxu0 0.0
    %3169 = vmatprep.subr.mxu0 0.0
    %3170 = vmatpush1.msra.mxu0 0.0
    %3171 = vmatprep.subr.mxu0 0.0
    %3172 = vmatpush1.msra.mxu0 0.0
    %3173 = vmatprep.subr.mxu0 0.0
    %3174 = vmatpush1.msra.mxu0 0.0
    %3175 = vmatprep.subr.mxu0 0.0
    %3176 = vmatpush1.msra.mxu0 0.0
    %3177 = vmatprep.subr.mxu0 0.0
    %3178 = vmatpush1.msra.mxu0 0.0
    %3179 = vmatprep.subr.mxu0 0.0
    %3180 = vmatpush1.msra.mxu0 0.0
    %3181 = vmatprep.subr.mxu0 0.0
    %3182 = vmatpush1.msra.mxu0 0.0
    %3183 = vmatprep.subr.mxu0 0.0
    %3184 = vmatpush1.msra.mxu0 %v1346
    %3185 = vmatprep.subr.mxu0 0.0
    %3186 = vmatpush1.msra.mxu0 %v1345
    %3187 = vmatprep.subr.mxu0 0.0
    %3188 = vmatpush1.msra.mxu0 %v1344
    %3189 = vmatprep.subr.mxu0 0.0
    %3190 = vmatpush1.msra.mxu0 %v1343
    %3191 = vmatprep.subr.mxu0 0.0
    %3192 = vmatpush2.msra.mxu0 0.0
    %3193 = vmatprep.subr.mxu0 0.0
    %3194 = vmatpush2.msra.mxu0 0.0
    %3195 = vmatprep.subr.mxu0 0.0
    %3196 = vmatpush2.msra.mxu0 0.0
    %3197 = vmatprep.subr.mxu0 0.0
    %3198 = vmatpush2.msra.mxu0 0.0
    %3199 = vmatprep.subr.mxu0 0.0
    %3200 = vmatpush2.msra.mxu0 0.0
    %3201 = vmatprep.subr.mxu0 0.0
    %3202 = vmatpush2.msra.mxu0 0.0
    %3203 = vmatprep.subr.mxu0 0.0
    %3204 = vmatpush2.msra.mxu0 0.0
    %3205 = vmatprep.subr.mxu0 0.0
    %3206 = vmatpush2.msra.mxu0 0.0
    %3207 = vmatprep.subr.mxu0 0.0
    %3208 = vmatpush2.msra.mxu0 0.0
    %3209 = vmatprep.subr.mxu0 0.0
    %3210 = vmatpush2.msra.mxu0 0.0
    %3211 = vmatprep.subr.mxu0 0.0
    %3212 = vmatpush2.msra.mxu0 0.0
    %3213 = vmatprep.subr.mxu0 0.0
    %3214 = vmatpush2.msra.mxu0 0.0
    %3215 = vmatprep.subr.mxu0 0.0
    %3216 = vmatpush2.msra.mxu0 0.0
    %3217 = vmatprep.subr.mxu0 0.0
    %3218 = vmatpush2.msra.mxu0 0.0
    %3219 = vmatprep.subr.mxu0 0.0
    %3220 = vmatpush2.msra.mxu0 0.0
    %3221 = vmatprep.subr.mxu0 0.0
    %3222 = vmatpush2.msra.mxu0 0.0
    %3223 = vmatprep.mubr.f32.mxu0 0.0
    %3224 = vmatmul.mubr.f32.gmra.mxu0 %v3060
    %v3225 = vpop.f32.mrf.mxu0
    %v3226 = vadd.f32 %v1962, %v3225
    %v3227 = vpop.f32.mrf.mxu0
    %3228 = vdwg.mxu0
    %v3229 = vadd.f32 %v1880, %v3226
    %v3230 = vxor.u32 %v3229, 2147483648
    %v3231 = vmul.f32 %v3230, 1.442695
    %v3232 = vpow.pop %v3231
    %v3233 = vadd.f32 %v3232, 1.0
    %v3234 = vrcp.pop %v3233
    %v3235 = vmul.f32 1.0, %v3234
    %3237 = vrot.lane.b32.xlu0 %v3226, 64
    %v3238 = vpop.permute.xlu0 %3237
    %v3240 = vmul.f32 %v3235, %v3238
    %3242 = vrot.lane.b32.xlu0 %v3240, 64
    %v3243 = vpop.permute.xlu0 %3242
    %v3245 = vadd.f32 %v1880, %v3243
    %v3246 = vtanh.pop %v3245
    %v3247 = vsub.f32 1.0, %v3235
    %3249 = vrot.lane.b32.xlu0 %v3246, 96
    %v3250 = vpop.permute.xlu0 %3249
    %v3252 = vmul.f32 %v3247, %v3250
    %v3253 = vmul.f32 %v3235, %v3056
    %v3254 = vadd.f32 %v3252, %v3253
    %3256 = vrot.lane.b32.xlu0 %v3254, 96
    %v3257 = vpop.permute.xlu0 %3256
    %v3258 = vsel %vm74, %v3257, 0
    %3260 = vmatprep.subr.mxu0 0.0
    %3261 = vmatpush1.msra.mxu0 0.0
    %3262 = vmatprep.subr.mxu0 0.0
    %3263 = vmatpush1.msra.mxu0 0.0
    %3264 = vmatprep.subr.mxu0 0.0
    %3265 = vmatpush1.msra.mxu0 0.0
    %3266 = vmatprep.subr.mxu0 0.0
    %3267 = vmatpush1.msra.mxu0 0.0
    %3268 = vmatprep.subr.mxu0 0.0
    %3269 = vmatpush1.msra.mxu0 0.0
    %3270 = vmatprep.subr.mxu0 0.0
    %3271 = vmatpush1.msra.mxu0 0.0
    %3272 = vmatprep.subr.mxu0 0.0
    %3273 = vmatpush1.msra.mxu0 0.0
    %3274 = vmatprep.subr.mxu0 0.0
    %3275 = vmatpush1.msra.mxu0 0.0
    %3276 = vmatprep.subr.mxu0 0.0
    %3277 = vmatpush1.msra.mxu0 0.0
    %3278 = vmatprep.subr.mxu0 0.0
    %3279 = vmatpush1.msra.mxu0 0.0
    %3280 = vmatprep.subr.mxu0 0.0
    %3281 = vmatpush1.msra.mxu0 0.0
    %3282 = vmatprep.subr.mxu0 0.0
    %3283 = vmatpush1.msra.mxu0 0.0
    %3284 = vmatprep.subr.mxu0 0.0
    %3285 = vmatpush1.msra.mxu0 %v1351
    %3286 = vmatprep.subr.mxu0 0.0
    %3287 = vmatpush1.msra.mxu0 %v1350
    %3288 = vmatprep.subr.mxu0 0.0
    %3289 = vmatpush1.msra.mxu0 %v1349
    %3290 = vmatprep.subr.mxu0 0.0
    %3291 = vmatpush1.msra.mxu0 %v1348
    %3292 = vmatprep.subr.mxu0 0.0
    %3293 = vmatpush2.msra.mxu0 0.0
    %3294 = vmatprep.subr.mxu0 0.0
    %3295 = vmatpush2.msra.mxu0 0.0
    %3296 = vmatprep.subr.mxu0 0.0
    %3297 = vmatpush2.msra.mxu0 0.0
    %3298 = vmatprep.subr.mxu0 0.0
    %3299 = vmatpush2.msra.mxu0 0.0
    %3300 = vmatprep.subr.mxu0 0.0
    %3301 = vmatpush2.msra.mxu0 0.0
    %3302 = vmatprep.subr.mxu0 0.0
    %3303 = vmatpush2.msra.mxu0 0.0
    %3304 = vmatprep.subr.mxu0 0.0
    %3305 = vmatpush2.msra.mxu0 0.0
    %3306 = vmatprep.subr.mxu0 0.0
    %3307 = vmatpush2.msra.mxu0 0.0
    %3308 = vmatprep.subr.mxu0 0.0
    %3309 = vmatpush2.msra.mxu0 0.0
    %3310 = vmatprep.subr.mxu0 0.0
    %3311 = vmatpush2.msra.mxu0 0.0
    %3312 = vmatprep.subr.mxu0 0.0
    %3313 = vmatpush2.msra.mxu0 0.0
    %3314 = vmatprep.subr.mxu0 0.0
    %3315 = vmatpush2.msra.mxu0 0.0
    %3316 = vmatprep.subr.mxu0 0.0
    %3317 = vmatpush2.msra.mxu0 0.0
    %3318 = vmatprep.subr.mxu0 0.0
    %3319 = vmatpush2.msra.mxu0 0.0
    %3320 = vmatprep.subr.mxu0 0.0
    %3321 = vmatpush2.msra.mxu0 0.0
    %3322 = vmatprep.subr.mxu0 0.0
    %3323 = vmatpush2.msra.mxu0 0.0
    %3324 = vmatprep.mubr.f32.mxu0 0.0
    %3325 = vmatmul.mubr.f32.gmra.mxu0 %v3258
    %v3326 = vpop.f32.mrf.mxu0
    %v3327 = vadd.f32 %v2064, %v3326
    %v3328 = vpop.f32.mrf.mxu0
    %3329 = vdwg.mxu0
    %v3332 = vunpack.c.l.s4 1966171168
    %v3333 = vunpack.c.0.s8 %v3332
    %v3334 = vlaneseq
    %v3335 = vshrl.u32 %v3334, 7
    %v3336 = vsub.s32 %v3333, %v3335
    %v3337 = vrot.slane %v3327, %v3336
    %v3338 = vcombine.high %v3337, %v3337
    %v3340 = vunpack.c.l.s4 1966171168
    %v3341 = vunpack.c.0.s8 %v3340
    %v3342 = vlaneseq
    %v3343 = vshrl.u32 %v3342, 7
    %v3344 = vsub.s32 %v3341, %v3343
    %v3345 = vrot.slane %v3337, %v3344
    %v3347 = vunpack.c.l.s4 1966171168
    %v3348 = vunpack.c.0.s8 %v3347
    %v3349 = vlaneseq
    %v3350 = vshrl.u32 %v3349, 7
    %v3351 = vsub.s32 %v3348, %v3350
    %v3352 = vrot.slane %v3338, %v3351
    %3355 = vst.msk [vmem:[%s14 + $0x6] sm:$0x1] %vm2166, %v3345
    %3356 = vst.msk [vmem:[%s14 + $0xe] sm:$0x1] %vm2166, %v3352
    %3357 = vmatprep.subr.mxu0 0.0
    %3358 = vmatpush1.msra.mxu0 0.0
    %3359 = vmatprep.subr.mxu0 0.0
    %3360 = vmatpush1.msra.mxu0 0.0
    %3361 = vmatprep.subr.mxu0 0.0
    %3362 = vmatpush1.msra.mxu0 0.0
    %3363 = vmatprep.subr.mxu0 0.0
    %3364 = vmatpush1.msra.mxu0 0.0
    %3365 = vmatprep.subr.mxu0 0.0
    %3366 = vmatpush1.msra.mxu0 0.0
    %3367 = vmatprep.subr.mxu0 0.0
    %3368 = vmatpush1.msra.mxu0 0.0
    %3369 = vmatprep.subr.mxu0 0.0
    %3370 = vmatpush1.msra.mxu0 0.0
    %3371 = vmatprep.subr.mxu0 0.0
    %3372 = vmatpush1.msra.mxu0 0.0
    %3373 = vmatprep.subr.mxu0 0.0
    %3374 = vmatpush1.msra.mxu0 0.0
    %3375 = vmatprep.subr.mxu0 0.0
    %3376 = vmatpush1.msra.mxu0 0.0
    %3377 = vmatprep.subr.mxu0 0.0
    %3378 = vmatpush1.msra.mxu0 0.0
    %3379 = vmatprep.subr.mxu0 0.0
    %3380 = vmatpush1.msra.mxu0 0.0
    %3381 = vmatprep.subr.mxu0 0.0
    %3382 = vmatpush1.msra.mxu0 %v1346
    %3383 = vmatprep.subr.mxu0 0.0
    %3384 = vmatpush1.msra.mxu0 %v1345
    %3385 = vmatprep.subr.mxu0 0.0
    %3386 = vmatpush1.msra.mxu0 %v1344
    %3387 = vmatprep.subr.mxu0 0.0
    %3388 = vmatpush1.msra.mxu0 %v1343
    %3389 = vmatprep.subr.mxu0 0.0
    %3390 = vmatpush2.msra.mxu0 0.0
    %3391 = vmatprep.subr.mxu0 0.0
    %3392 = vmatpush2.msra.mxu0 0.0
    %3393 = vmatprep.subr.mxu0 0.0
    %3394 = vmatpush2.msra.mxu0 0.0
    %3395 = vmatprep.subr.mxu0 0.0
    %3396 = vmatpush2.msra.mxu0 0.0
    %3397 = vmatprep.subr.mxu0 0.0
    %3398 = vmatpush2.msra.mxu0 0.0
    %3399 = vmatprep.subr.mxu0 0.0
    %3400 = vmatpush2.msra.mxu0 0.0
    %3401 = vmatprep.subr.mxu0 0.0
    %3402 = vmatpush2.msra.mxu0 0.0
    %3403 = vmatprep.subr.mxu0 0.0
    %3404 = vmatpush2.msra.mxu0 0.0
    %3405 = vmatprep.subr.mxu0 0.0
    %3406 = vmatpush2.msra.mxu0 0.0
    %3407 = vmatprep.subr.mxu0 0.0
    %3408 = vmatpush2.msra.mxu0 0.0
    %3409 = vmatprep.subr.mxu0 0.0
    %3410 = vmatpush2.msra.mxu0 0.0
    %3411 = vmatprep.subr.mxu0 0.0
    %3412 = vmatpush2.msra.mxu0 0.0
    %3413 = vmatprep.subr.mxu0 0.0
    %3414 = vmatpush2.msra.mxu0 0.0
    %3415 = vmatprep.subr.mxu0 0.0
    %3416 = vmatpush2.msra.mxu0 0.0
    %3417 = vmatprep.subr.mxu0 0.0
    %3418 = vmatpush2.msra.mxu0 0.0
    %3419 = vmatprep.subr.mxu0 0.0
    %3420 = vmatpush2.msra.mxu0 0.0
    %3421 = vmatprep.mubr.f32.mxu0 0.0
    %3422 = vmatmul.mubr.f32.gmra.mxu0 %v3258
    %v3423 = vpop.f32.mrf.mxu0
    %v3424 = vadd.f32 %v1962, %v3423
    %v3425 = vpop.f32.mrf.mxu0
    %3426 = vdwg.mxu0
    %v3427 = vadd.f32 %v1955, %v3424
    %v3428 = vxor.u32 %v3427, 2147483648
    %v3429 = vmul.f32 %v3428, 1.442695
    %v3430 = vpow.pop %v3429
    %v3431 = vadd.f32 %v3430, 1.0
    %v3432 = vrcp.pop %v3431
    %v3433 = vmul.f32 1.0, %v3432
    %3435 = vrot.lane.b32.xlu0 %v3424, 64
    %v3436 = vpop.permute.xlu0 %3435
    %v3438 = vmul.f32 %v3433, %v3436
    %3440 = vrot.lane.b32.xlu0 %v3438, 64
    %v3441 = vpop.permute.xlu0 %3440
    %v3443 = vadd.f32 %v1955, %v3441
    %v3444 = vtanh.pop %v3443
    %v3445 = vsub.f32 1.0, %v3433
    %3447 = vrot.lane.b32.xlu0 %v3444, 96
    %v3448 = vpop.permute.xlu0 %3447
    %v3450 = vmul.f32 %v3445, %v3448
    %v3451 = vmul.f32 %v3433, %v3254
    %v3452 = vadd.f32 %v3450, %v3451
    %3454 = vrot.lane.b32.xlu0 %v3452, 96
    %v3455 = vpop.permute.xlu0 %3454
    %v3456 = vsel %vm74, %v3455, 0
    %3458 = vmatprep.subr.mxu0 0.0
    %3459 = vmatpush1.msra.mxu0 0.0
    %3460 = vmatprep.subr.mxu0 0.0
    %3461 = vmatpush1.msra.mxu0 0.0
    %3462 = vmatprep.subr.mxu0 0.0
    %3463 = vmatpush1.msra.mxu0 0.0
    %3464 = vmatprep.subr.mxu0 0.0
    %3465 = vmatpush1.msra.mxu0 0.0
    %3466 = vmatprep.subr.mxu0 0.0
    %3467 = vmatpush1.msra.mxu0 0.0
    %3468 = vmatprep.subr.mxu0 0.0
    %3469 = vmatpush1.msra.mxu0 0.0
    %3470 = vmatprep.subr.mxu0 0.0
    %3471 = vmatpush1.msra.mxu0 0.0
    %3472 = vmatprep.subr.mxu0 0.0
    %3473 = vmatpush1.msra.mxu0 0.0
    %3474 = vmatprep.subr.mxu0 0.0
    %3475 = vmatpush1.msra.mxu0 0.0
    %3476 = vmatprep.subr.mxu0 0.0
    %3477 = vmatpush1.msra.mxu0 0.0
    %3478 = vmatprep.subr.mxu0 0.0
    %3479 = vmatpush1.msra.mxu0 0.0
    %3480 = vmatprep.subr.mxu0 0.0
    %3481 = vmatpush1.msra.mxu0 0.0
    %3482 = vmatprep.subr.mxu0 0.0
    %3483 = vmatpush1.msra.mxu0 %v1351
    %3484 = vmatprep.subr.mxu0 0.0
    %3485 = vmatpush1.msra.mxu0 %v1350
    %3486 = vmatprep.subr.mxu0 0.0
    %3487 = vmatpush1.msra.mxu0 %v1349
    %3488 = vmatprep.subr.mxu0 0.0
    %3489 = vmatpush1.msra.mxu0 %v1348
    %3490 = vmatprep.subr.mxu0 0.0
    %3491 = vmatpush2.msra.mxu0 0.0
    %3492 = vmatprep.subr.mxu0 0.0
    %3493 = vmatpush2.msra.mxu0 0.0
    %3494 = vmatprep.subr.mxu0 0.0
    %3495 = vmatpush2.msra.mxu0 0.0
    %3496 = vmatprep.subr.mxu0 0.0
    %3497 = vmatpush2.msra.mxu0 0.0
    %3498 = vmatprep.subr.mxu0 0.0
    %3499 = vmatpush2.msra.mxu0 0.0
    %3500 = vmatprep.subr.mxu0 0.0
    %3501 = vmatpush2.msra.mxu0 0.0
    %3502 = vmatprep.subr.mxu0 0.0
    %3503 = vmatpush2.msra.mxu0 0.0
    %3504 = vmatprep.subr.mxu0 0.0
    %3505 = vmatpush2.msra.mxu0 0.0
    %3506 = vmatprep.subr.mxu0 0.0
    %3507 = vmatpush2.msra.mxu0 0.0
    %3508 = vmatprep.subr.mxu0 0.0
    %3509 = vmatpush2.msra.mxu0 0.0
    %3510 = vmatprep.subr.mxu0 0.0
    %3511 = vmatpush2.msra.mxu0 0.0
    %3512 = vmatprep.subr.mxu0 0.0
    %3513 = vmatpush2.msra.mxu0 0.0
    %3514 = vmatprep.subr.mxu0 0.0
    %3515 = vmatpush2.msra.mxu0 0.0
    %3516 = vmatprep.subr.mxu0 0.0
    %3517 = vmatpush2.msra.mxu0 0.0
    %3518 = vmatprep.subr.mxu0 0.0
    %3519 = vmatpush2.msra.mxu0 0.0
    %3520 = vmatprep.subr.mxu0 0.0
    %3521 = vmatpush2.msra.mxu0 0.0
    %3522 = vmatprep.mubr.f32.mxu0 0.0
    %3523 = vmatmul.mubr.f32.gmra.mxu0 %v3456
    %v3524 = vpop.f32.mrf.mxu0
    %v3525 = vadd.f32 %v2064, %v3524
    %v3526 = vpop.f32.mrf.mxu0
    %3527 = vdwg.mxu0
    %v3530 = vunpack.c.l.s4 1966171168
    %v3531 = vunpack.c.0.s8 %v3530
    %v3532 = vlaneseq
    %v3533 = vshrl.u32 %v3532, 7
    %v3534 = vsub.s32 %v3531, %v3533
    %v3535 = vrot.slane %v3525, %v3534
    %v3536 = vcombine.high %v3535, %v3535
    %v3538 = vunpack.c.l.s4 1966171168
    %v3539 = vunpack.c.0.s8 %v3538
    %v3540 = vlaneseq
    %v3541 = vshrl.u32 %v3540, 7
    %v3542 = vsub.s32 %v3539, %v3541
    %v3543 = vrot.slane %v3535, %v3542
    %v3545 = vunpack.c.l.s4 1966171168
    %v3546 = vunpack.c.0.s8 %v3545
    %v3547 = vlaneseq
    %v3548 = vshrl.u32 %v3547, 7
    %v3549 = vsub.s32 %v3546, %v3548
    %v3550 = vrot.slane %v3536, %v3549
    %3553 = vst.msk [vmem:[%s14 + $0x7] sm:$0x1] %vm2166, %v3543
    %3554 = vst.msk [vmem:[%s14 + $0xf] sm:$0x1] %vm2166, %v3550
    // Predicated region
    $region58: #{gatrans_forward.3} parent=1 // pred_check
      _
    $region59: #{gatrans_forward.3} parent=1 // pred_check_branch
      %3556 = sbr.rel (0) target = $region61
    $region60: #{gatrans_forward.3} parent=1 // pred_region
      %s3558 = ssub.s32 32, 32
      %3559 = vsyncadd [#allocation4], %s3558
      %s3561 = sshll.u32 [#allocation5], 4
      %s3562 = int_to_ptr.vmem [resolvable:$true] %s3561
      %3564 = dma.vmem_to_hbm [thread:$0]  %s3562, 32, %s13, [#allocation4]
    $region61: #{gatrans_forward.3} parent=1 // pred_fallthru
      _
    // Predicated region
    $region62: #{gatrans_forward.3} parent=1 // pred_check
      _
    $region63: #{gatrans_forward.3} parent=1 // pred_check_branch
      %3566 = sbr.rel (0) target = $region65
    $region64: #{gatrans_forward.3} parent=1 // pred_region
      _
    $region65: #{gatrans_forward.3} parent=1 // pred_fallthru
      _
    // Predicated region
    $region66: #{gatrans_forward.3} parent=1 // pred_check
      _
    $region67: #{gatrans_forward.3} parent=1 // pred_check_branch
      %3568 = sbr.rel (0) target = $region69
    $region68: #{gatrans_forward.3} parent=1 // pred_region
      %3569 = dma.done [#allocation4], 32
    $region69: #{gatrans_forward.3} parent=1 // pred_fallthru
      _
    // Predicated region
    $region70: #{gatrans_forward.3} parent=1 // pred_check
      _
    $region71: #{gatrans_forward.3} parent=1 // pred_check_branch
      %3571 = sbr.rel (0) target = $region73
    $region72: #{gatrans_forward.3} parent=1 // pred_region
      _
    $region73: #{gatrans_forward.3} parent=1 // pred_fallthru
      _
    %3572 = vsyncpa [#allocation3], 1
    %3573 = vsyncpa [#allocation4], 1

</llo_original>
